<compile_context>
chip_gen: v5e
topology: v5e:2x2
jax: 0.10.0
libtpu: 0.0.40
codegen_flags: <defaults>
</compile_context>

<pallas_src>
import functools

import numpy as np

import jax
import jax.numpy as jnp
from jax.experimental import pallas as pl
from jax.experimental.pallas import tpu as pltpu

EPS = 1e-5

# MXU input dtype for the precomputed S/T/w5 matrices.  float32 keeps bit-level
# parity with the f32 reference at the 1e-3 check; flip to jnp.bfloat16 on
# v5e/v6e/v7x for MXU-native throughput (accumulation stays f32 via
# preferred_element_type).  This workload is latency bound, not MXU bound, so
# f32 is the safe default.
MXU_DTYPE = jnp.float32


# ------------------------------ kernel helpers -------------------------------

def _channel_mask(n_lanes, n_ch):
    """[n_lanes, n_lanes] 0/1 matrix with M[i, j] = (i % n_ch == j % n_ch).
    Right-multiplying a [1, n_lanes] row of per-lane sums by it produces the
    per-channel sums broadcast back to every lane (lane index = w*C + c)."""
    ii = jax.lax.broadcasted_iota(jnp.int32, (n_lanes, n_lanes), 0)
    jj = jax.lax.broadcasted_iota(jnp.int32, (n_lanes, n_lanes), 1)
    if (n_ch & (n_ch - 1)) == 0:                       # power of two: cheap AND
        ci, cj = ii & (n_ch - 1), jj & (n_ch - 1)
    else:
        ci, cj = jax.lax.rem(ii, n_ch), jax.lax.rem(jj, n_ch)
    return (ci == cj).astype(jnp.float32)


def _conv_st(y, s_ref, t_ref):
    """4x4 / stride-2 / pad-1 conv on y in [B*Hin, Win*Cin] layout.

    Returns [B*Hout, Wout*Cout] (f32).  Row selection (H axis, incl. padding)
    is the precomputed 0/1 matrix S_kh; the W-axis gather + padding + conv
    weights are folded into T_kh.  8 plain 2-D MXU matmuls, no data reshaping.
    """
    acc = None
    for kh in range(4):
        s = s_ref[kh]                                  # [B*Hout, B*Hin]
        t = t_ref[kh]                                  # [Win*Cin, Wout*Cout]
        rows = jnp.dot(s, y.astype(s.dtype), preferred_element_type=jnp.float32)
        z = jnp.dot(rows.astype(t.dtype), t, preferred_element_type=jnp.float32)
        acc = z if acc is None else acc + z
    return acc


def _batchnorm(y, gb_ref, n_ch, inv_count):
    """Train-mode BatchNorm over lane groups of size n_ch (lane = w*C + c).

    Two-pass statistics (mean, then sum((x-mean)^2)) to avoid E[x^2]-E[x]^2
    cancellation.  gb_ref packs [gamma_tiled; beta_tiled] as one [2, N] block.
    """
    n = y.shape[1]
    p = _channel_mask(n, n_ch)
    mean = jnp.dot(jnp.sum(y, axis=0, keepdims=True), p,
                   preferred_element_type=jnp.float32) * inv_count
    yc = y - mean
    var = jnp.dot(jnp.sum(yc * yc, axis=0, keepdims=True), p,
                  preferred_element_type=jnp.float32) * inv_count
    gamma = gb_ref[0:1, :].astype(jnp.float32)
    beta = gb_ref[1:2, :].astype(jnp.float32)
    return yc * (gamma * jax.lax.rsqrt(var + EPS)) + beta


def _leaky(y, slope):
    return jnp.where(y >= 0, y, slope * y)


# ----------------------------- the fused kernel -------------------------------

def _disc_kernel(x_ref, s1_ref, t1_ref, s2_ref, t2_ref, gb2_ref,
                 s3_ref, t3_ref, gb3_ref, s4_ref, t4_ref, gb4_ref, w5_ref,
                 o_ref, *, slope, n_chs, inv_counts, n_batch):
    # layer 1: conv + LeakyReLU                           [B*H/2, 256]
    y = _leaky(_conv_st(x_ref[...].astype(jnp.float32), s1_ref, t1_ref), slope)
    # layers 2-4: conv + BatchNorm(batch stats) + LeakyReLU
    y = _leaky(_batchnorm(_conv_st(y, s2_ref, t2_ref), gb2_ref,
                          n_chs[0], inv_counts[0]), slope)
    y = _leaky(_batchnorm(_conv_st(y, s3_ref, t3_ref), gb3_ref,
                          n_chs[1], inv_counts[1]), slope)
    y = _leaky(_batchnorm(_conv_st(y, s4_ref, t4_ref), gb4_ref,
                          n_chs[2], inv_counts[2]), slope)        # [B*4, 256]

    # final 4x4 valid conv (Cout=1) + Dropout2d(identity) + Sigmoid
    prod = y * w5_ref[...].astype(jnp.float32)                    # [B*4, 256]
    rows = prod.shape[0]
    rpb = rows // n_batch
    bi = jax.lax.broadcasted_iota(jnp.int32, (n_batch, rows), 0)
    ri = jax.lax.broadcasted_iota(jnp.int32, (n_batch, rows), 1)
    sb = ((ri >= bi * rpb) & (ri < (bi + 1) * rpb)).astype(jnp.float32)
    bsum = jnp.dot(sb, prod, preferred_element_type=jnp.float32)  # [B, 256]
    logits = jnp.sum(bsum, axis=1, keepdims=True)                 # [B, 1]
    o_ref[...] = 1.0 / (1.0 + jnp.exp(-logits))


# ------------------------ one-time host-side parameter prep -------------------

def _prep_constants(params, *, batch, height, width, dtype=MXU_DTYPE):
    """Precompute (outside jit, once) the S/T conv matrices, the tiled BN
    affine rows and the final-conv weight map used by the fused kernel."""
    consts = {}
    h, w = height, width
    for idx in (1, 2, 3, 4):
        wt = np.asarray(params[f"w{idx}"], np.float32)     # [Cout, Cin, 4, 4]
        cout, cin = wt.shape[0], wt.shape[1]
        ho, wo_n = h // 2, w // 2
        s = np.zeros((4, batch * ho, batch * h), np.float32)
        t = np.zeros((4, w * cin, wo_n * cout), np.float32)
        for kh in range(4):
            for b in range(batch):
                for r in range(ho):
                    src = 2 * r + kh - 1                   # pad=1, stride=2
                    if 0 <= src < h:
                        s[kh, b * ho + r, b * h + src] = 1.0
            for wo in range(wo_n):
                for kw in range(4):
                    src = 2 * wo + kw - 1
                    if 0 <= src < w:
                        t[kh, src * cin:(src + 1) * cin,
                          wo * cout:(wo + 1) * cout] = wt[:, :, kh, kw].T
        consts[f"s{idx}"] = jnp.asarray(s, dtype)
        consts[f"t{idx}"] = jnp.asarray(t, dtype)
        if idx >= 2:   # BN affine, tiled to lane layout (w, c), packed [2, N]
            g = np.tile(np.asarray(params[f"g{idx}"], np.float32), wo_n)
            b_ = np.tile(np.asarray(params[f"b{idx}"], np.float32), wo_n)
            consts[f"gb{idx}"] = jnp.asarray(np.stack([g, b_]), jnp.float32)
        h, w = ho, wo_n

    # final 4x4 valid conv taps, laid out as [(b, h), (w, c)] rows x lanes
    w5 = np.asarray(params["w5"], np.float32)[0]           # [C4, 4, 4]
    c4 = w5.shape[0]
    w5map = np.transpose(w5, (1, 2, 0)).reshape(4, 4 * c4)
    consts["w5map"] = jnp.asarray(np.tile(w5map, (batch, 1)), dtype)
    return consts


def make_forward(params, *, batch, in_ch, height, width, hidden_dim,
                 dropout_rate):
    assert height == 64 and width == 64, "final 4x4 valid conv needs 64x64 input"
    consts = _prep_constants(params, batch=batch, height=height, width=width)
    slope = float(dropout_rate)   # torch module passes dropout_rate as the slope

    hs = [height // 2, height // 4, height // 8, height // 16]
    ws = [width // 2, width // 4, width // 8, width // 16]
    n_chs = (hidden_dim * 2, hidden_dim * 4, hidden_dim * 8)
    inv_counts = tuple(1.0 / (batch * hs[i] * ws[i]) for i in (1, 2, 3))

    operand_names = ("s1", "t1", "s2", "t2", "gb2", "s3", "t3", "gb3",
                     "s4", "t4", "gb4", "w5map")
    operands = [consts[k] for k in operand_names]

    # advisory cost estimate for the XLA scheduler
    macs, h, w, cin = 0, height, width, in_ch
    for cout in (hidden_dim, hidden_dim * 2, hidden_dim * 4, hidden_dim * 8):
        ho, wo = h // 2, w // 2
        macs += 4 * (batch * ho * (batch * h) * (w * cin)
                     + batch * ho * (w * cin) * (wo * cout))
        h, w, cin = ho, wo, cout
    macs += 3 * (w * cin) * (w * cin) + batch * 4 * (4 * cin)
    bytes_accessed = int(batch * height * width * in_ch * 4 + batch * 4
                         + sum(a.size * a.dtype.itemsize for a in operands))
    cost = pl.CostEstimate(flops=int(2 * macs), transcendentals=int(3 * 256 + batch),
                           bytes_accessed=bytes_accessed)

    kernel = functools.partial(_disc_kernel, slope=slope, n_chs=n_chs,
                               inv_counts=inv_counts, n_batch=batch)
    call = pl.pallas_call(
        kernel,
        out_shape=jax.ShapeDtypeStruct((batch, 1), jnp.float32),
        cost_estimate=cost,
        compiler_params=pltpu.CompilerParams(vmem_limit_bytes=32 * 1024 * 1024),
    )

    @jax.jit
    def forward(x_nchw):
        # single layout change: NCHW -> [B*H, W*Cin] (channel fastest on lanes)
        x2d = jnp.transpose(x_nchw, (0, 2, 3, 1)).reshape(
            batch * height, width * in_ch)
        out = call(x2d, *operands)
        return out.reshape(batch, 1, 1, 1)

    return forward


# --------------------------- reference (pure JAX) -----------------------------

def _ref_forward(x, params, dropout_rate):
    slope = dropout_rate

    def conv(x, w, s, p):
        return jax.lax.conv_general_dilated(
            x, w, (s, s), [(p, p), (p, p)],
            dimension_numbers=("NCHW", "OIHW", "NCHW"))

    def bn(x, g, b):
        mean = x.mean(axis=(0, 2, 3), keepdims=True)
        var = x.var(axis=(0, 2, 3), keepdims=True)
        return (g.reshape(1, -1, 1, 1) * (x - mean)
                / jnp.sqrt(var + EPS) + b.reshape(1, -1, 1, 1))

    lrelu = lambda v: jnp.where(v >= 0, v, slope * v)
    h = lrelu(conv(x, params["w1"], 2, 1))
    h = lrelu(bn(conv(h, params["w2"], 2, 1), params["g2"], params["b2"]))
    h = lrelu(bn(conv(h, params["w3"], 2, 1), params["g3"], params["b3"]))
    h = lrelu(bn(conv(h, params["w4"], 2, 1), params["g4"], params["b4"]))
    return jax.nn.sigmoid(conv(h, params["w5"], 1, 0))


# --------------------------------- main ---------------------------------------

def _init_params(key, in_ch, hd):
    ks = jax.random.split(key, 8)
    std = 0.02  # DCGAN-style init, deterministic from PRNGKey(0)
    shapes = [(hd, in_ch, 4, 4), (hd * 2, hd, 4, 4), (hd * 4, hd * 2, 4, 4),
              (hd * 8, hd * 4, 4, 4), (1, hd * 8, 4, 4)]
    params = {}
    for n, (k, s) in enumerate(zip(ks[:5], shapes), start=1):
        params[f"w{n}"] = std * jax.random.normal(k, s, dtype=jnp.float32)
    for k, (n, c) in zip(ks[5:], ((2, hd * 2), (3, hd * 4), (4, hd * 8))):
        kg, kb = jax.random.split(k)
        params[f"g{n}"] = 1.0 + 0.1 * jax.random.normal(kg, (c,), jnp.float32)
        params[f"b{n}"] = 0.1 * jax.random.normal(kb, (c,), jnp.float32)
    return params


if __name__ == "__main__":
    key = jax.random.PRNGKey(0)
    k_x, k_p = jax.random.split(key)

    # in_shape=(3, 64, 64): the final 4x4 valid conv requires 64x64 spatial input.
    B, in_ch, H, W = 2, 3, 64, 64
    hidden_dim = 8
    dropout_rate = 0.2   # also the LeakyReLU slope in the torch module (as written)

    x = jax.random.normal(k_x, (B, in_ch, H, W), dtype=jnp.float32)
    params = _init_params(k_p, in_ch, hidden_dim)

    fwd = make_forward(params, batch=B, in_ch=in_ch, height=H, width=W,
                       hidden_dim=hidden_dim, dropout_rate=dropout_rate)
    out = fwd(x)
    jax.block_until_ready(out)

    ref = _ref_forward(x, params, dropout_rate)
    assert out.shape == (B, 1, 1, 1), out.shape
    assert jnp.allclose(out, ref, rtol=1e-3, atol=1e-3), (
        float(jnp.max(jnp.abs(out - ref))))

    print("KERNEL_OK")
</pallas_src>

<mosaic_0001>
module attributes {stable_mosaic.version = 11 : i64} {
  func.func @_disc_kernel(%arg0: memref<128x192xf32, #tpu.memory_space<vmem>>, %arg1: memref<4x64x128xf32, #tpu.memory_space<vmem>>, %arg2: memref<4x192x256xf32, #tpu.memory_space<vmem>>, %arg3: memref<4x32x64xf32, #tpu.memory_space<vmem>>, %arg4: memref<4x256x256xf32, #tpu.memory_space<vmem>>, %arg5: memref<2x256xf32, #tpu.memory_space<vmem>>, %arg6: memref<4x16x32xf32, #tpu.memory_space<vmem>>, %arg7: memref<4x256x256xf32, #tpu.memory_space<vmem>>, %arg8: memref<2x256xf32, #tpu.memory_space<vmem>>, %arg9: memref<4x8x16xf32, #tpu.memory_space<vmem>>, %arg10: memref<4x256x256xf32, #tpu.memory_space<vmem>>, %arg11: memref<2x256xf32, #tpu.memory_space<vmem>>, %arg12: memref<8x256xf32, #tpu.memory_space<vmem>>, %arg13: memref<2x1xf32, #tpu.memory_space<vmem>>) attributes {dimension_semantics = [], scalar_prefetch = 0 : i64, scratch_operands = 0 : i64, tpu.core_type = #tpu.core_type<tc>} {
    %c0 = arith.constant 0 : index
    %c0_0 = arith.constant 0 : index
    %0 = vector.load %arg0[%c0, %c0_0] : memref<128x192xf32, #tpu.memory_space<vmem>>, vector<128x192xf32>
    %c0_1 = arith.constant 0 : index
    %c0_2 = arith.constant 0 : index
    %c0_3 = arith.constant 0 : index
    %1 = vector.load %arg1[%c0_1, %c0_2, %c0_3] : memref<4x64x128xf32, #tpu.memory_space<vmem>>, vector<1x64x128xf32>
    %2 = vector.shape_cast %1 : vector<1x64x128xf32> to vector<64x128xf32>
    %c0_4 = arith.constant 0 : index
    %c0_5 = arith.constant 0 : index
    %c0_6 = arith.constant 0 : index
    %3 = vector.load %arg2[%c0_4, %c0_5, %c0_6] : memref<4x192x256xf32, #tpu.memory_space<vmem>>, vector<1x192x256xf32>
    %4 = vector.shape_cast %3 : vector<1x192x256xf32> to vector<192x256xf32>
    %cst = arith.constant dense<0.000000e+00> : vector<64x192xf32>
    %5 = tpu.matmul %2, %0, %cst {dimension_numbers = #tpu.dot_dimension_numbers<[1], [0], [0], [1], [0, 0, 1, 1], [], []>} : vector<64x128xf32>, vector<128x192xf32>, vector<64x192xf32> -> vector<64x192xf32>
    %cst_7 = arith.constant dense<0.000000e+00> : vector<64x256xf32>
    %6 = tpu.matmul %5, %4, %cst_7 {dimension_numbers = #tpu.dot_dimension_numbers<[1], [0], [0], [1], [0, 0, 1, 1], [], []>} : vector<64x192xf32>, vector<192x256xf32>, vector<64x256xf32> -> vector<64x256xf32>
    %c1 = arith.constant 1 : index
    %c0_8 = arith.constant 0 : index
    %c0_9 = arith.constant 0 : index
    %7 = vector.load %arg1[%c1, %c0_8, %c0_9] : memref<4x64x128xf32, #tpu.memory_space<vmem>>, vector<1x64x128xf32>
    %8 = vector.shape_cast %7 : vector<1x64x128xf32> to vector<64x128xf32>
    %c1_10 = arith.constant 1 : index
    %c0_11 = arith.constant 0 : index
    %c0_12 = arith.constant 0 : index
    %9 = vector.load %arg2[%c1_10, %c0_11, %c0_12] : memref<4x192x256xf32, #tpu.memory_space<vmem>>, vector<1x192x256xf32>
    %10 = vector.shape_cast %9 : vector<1x192x256xf32> to vector<192x256xf32>
    %cst_13 = arith.constant dense<0.000000e+00> : vector<64x192xf32>
    %11 = tpu.matmul %8, %0, %cst_13 {dimension_numbers = #tpu.dot_dimension_numbers<[1], [0], [0], [1], [0, 0, 1, 1], [], []>} : vector<64x128xf32>, vector<128x192xf32>, vector<64x192xf32> -> vector<64x192xf32>
    %cst_14 = arith.constant dense<0.000000e+00> : vector<64x256xf32>
    %12 = tpu.matmul %11, %10, %cst_14 {dimension_numbers = #tpu.dot_dimension_numbers<[1], [0], [0], [1], [0, 0, 1, 1], [], []>} : vector<64x192xf32>, vector<192x256xf32>, vector<64x256xf32> -> vector<64x256xf32>
    %13 = arith.addf %6, %12 : vector<64x256xf32>
    %c2 = arith.constant 2 : index
    %c0_15 = arith.constant 0 : index
    %c0_16 = arith.constant 0 : index
    %14 = vector.load %arg1[%c2, %c0_15, %c0_16] : memref<4x64x128xf32, #tpu.memory_space<vmem>>, vector<1x64x128xf32>
    %15 = vector.shape_cast %14 : vector<1x64x128xf32> to vector<64x128xf32>
    %c2_17 = arith.constant 2 : index
    %c0_18 = arith.constant 0 : index
    %c0_19 = arith.constant 0 : index
    %16 = vector.load %arg2[%c2_17, %c0_18, %c0_19] : memref<4x192x256xf32, #tpu.memory_space<vmem>>, vector<1x192x256xf32>
    %17 = vector.shape_cast %16 : vector<1x192x256xf32> to vector<192x256xf32>
    %cst_20 = arith.constant dense<0.000000e+00> : vector<64x192xf32>
    %18 = tpu.matmul %15, %0, %cst_20 {dimension_numbers = #tpu.dot_dimension_numbers<[1], [0], [0], [1], [0, 0, 1, 1], [], []>} : vector<64x128xf32>, vector<128x192xf32>, vector<64x192xf32> -> vector<64x192xf32>
    %cst_21 = arith.constant dense<0.000000e+00> : vector<64x256xf32>
    %19 = tpu.matmul %18, %17, %cst_21 {dimension_numbers = #tpu.dot_dimension_numbers<[1], [0], [0], [1], [0, 0, 1, 1], [], []>} : vector<64x192xf32>, vector<192x256xf32>, vector<64x256xf32> -> vector<64x256xf32>
    %20 = arith.addf %13, %19 : vector<64x256xf32>
    %c3 = arith.constant 3 : index
    %c0_22 = arith.constant 0 : index
    %c0_23 = arith.constant 0 : index
    %21 = vector.load %arg1[%c3, %c0_22, %c0_23] : memref<4x64x128xf32, #tpu.memory_space<vmem>>, vector<1x64x128xf32>
    %22 = vector.shape_cast %21 : vector<1x64x128xf32> to vector<64x128xf32>
    %c3_24 = arith.constant 3 : index
    %c0_25 = arith.constant 0 : index
    %c0_26 = arith.constant 0 : index
    %23 = vector.load %arg2[%c3_24, %c0_25, %c0_26] : memref<4x192x256xf32, #tpu.memory_space<vmem>>, vector<1x192x256xf32>
    %24 = vector.shape_cast %23 : vector<1x192x256xf32> to vector<192x256xf32>
    %cst_27 = arith.constant dense<0.000000e+00> : vector<64x192xf32>
    %25 = tpu.matmul %22, %0, %cst_27 {dimension_numbers = #tpu.dot_dimension_numbers<[1], [0], [0], [1], [0, 0, 1, 1], [], []>} : vector<64x128xf32>, vector<128x192xf32>, vector<64x192xf32> -> vector<64x192xf32>
    %cst_28 = arith.constant dense<0.000000e+00> : vector<64x256xf32>
    %26 = tpu.matmul %25, %24, %cst_28 {dimension_numbers = #tpu.dot_dimension_numbers<[1], [0], [0], [1], [0, 0, 1, 1], [], []>} : vector<64x192xf32>, vector<192x256xf32>, vector<64x256xf32> -> vector<64x256xf32>
    %27 = arith.addf %20, %26 : vector<64x256xf32>
    %cst_29 = arith.constant 0.000000e+00 : f32
    %28 = vector.broadcast %cst_29 : f32 to vector<64x256xf32>
    %29 = arith.cmpf oge, %27, %28 : vector<64x256xf32>
    %cst_30 = arith.constant 2.000000e-01 : f32
    %30 = vector.broadcast %cst_30 : f32 to vector<64x256xf32>
    %31 = arith.mulf %30, %27 : vector<64x256xf32>
    %32 = arith.select %29, %27, %31 : vector<64x256xi1>, vector<64x256xf32>
    %c0_31 = arith.constant 0 : index
    %c0_32 = arith.constant 0 : index
    %c0_33 = arith.constant 0 : index
    %33 = vector.load %arg3[%c0_31, %c0_32, %c0_33] : memref<4x32x64xf32, #tpu.memory_space<vmem>>, vector<1x32x64xf32>
    %34 = vector.shape_cast %33 : vector<1x32x64xf32> to vector<32x64xf32>
    %c0_34 = arith.constant 0 : index
    %c0_35 = arith.constant 0 : index
    %c0_36 = arith.constant 0 : index
    %35 = vector.load %arg4[%c0_34, %c0_35, %c0_36] : memref<4x256x256xf32, #tpu.memory_space<vmem>>, vector<1x256x256xf32>
    %36 = vector.shape_cast %35 : vector<1x256x256xf32> to vector<256x256xf32>
    %cst_37 = arith.constant dense<0.000000e+00> : vector<32x256xf32>
    %37 = tpu.matmul %34, %32, %cst_37 {dimension_numbers = #tpu.dot_dimension_numbers<[1], [0], [0], [1], [0, 0, 1, 1], [], []>} : vector<32x64xf32>, vector<64x256xf32>, vector<32x256xf32> -> vector<32x256xf32>
    %cst_38 = arith.constant dense<0.000000e+00> : vector<32x256xf32>
    %38 = tpu.matmul %37, %36, %cst_38 {dimension_numbers = #tpu.dot_dimension_numbers<[1], [0], [0], [1], [0, 0, 1, 1], [], []>} : vector<32x256xf32>, vector<256x256xf32>, vector<32x256xf32> -> vector<32x256xf32>
    %c1_39 = arith.constant 1 : index
    %c0_40 = arith.constant 0 : index
    %c0_41 = arith.constant 0 : index
    %39 = vector.load %arg3[%c1_39, %c0_40, %c0_41] : memref<4x32x64xf32, #tpu.memory_space<vmem>>, vector<1x32x64xf32>
    %40 = vector.shape_cast %39 : vector<1x32x64xf32> to vector<32x64xf32>
    %c1_42 = arith.constant 1 : index
    %c0_43 = arith.constant 0 : index
    %c0_44 = arith.constant 0 : index
    %41 = vector.load %arg4[%c1_42, %c0_43, %c0_44] : memref<4x256x256xf32, #tpu.memory_space<vmem>>, vector<1x256x256xf32>
    %42 = vector.shape_cast %41 : vector<1x256x256xf32> to vector<256x256xf32>
    %cst_45 = arith.constant dense<0.000000e+00> : vector<32x256xf32>
    %43 = tpu.matmul %40, %32, %cst_45 {dimension_numbers = #tpu.dot_dimension_numbers<[1], [0], [0], [1], [0, 0, 1, 1], [], []>} : vector<32x64xf32>, vector<64x256xf32>, vector<32x256xf32> -> vector<32x256xf32>
    %cst_46 = arith.constant dense<0.000000e+00> : vector<32x256xf32>
    %44 = tpu.matmul %43, %42, %cst_46 {dimension_numbers = #tpu.dot_dimension_numbers<[1], [0], [0], [1], [0, 0, 1, 1], [], []>} : vector<32x256xf32>, vector<256x256xf32>, vector<32x256xf32> -> vector<32x256xf32>
    %45 = arith.addf %38, %44 : vector<32x256xf32>
    %c2_47 = arith.constant 2 : index
    %c0_48 = arith.constant 0 : index
    %c0_49 = arith.constant 0 : index
    %46 = vector.load %arg3[%c2_47, %c0_48, %c0_49] : memref<4x32x64xf32, #tpu.memory_space<vmem>>, vector<1x32x64xf32>
    %47 = vector.shape_cast %46 : vector<1x32x64xf32> to vector<32x64xf32>
    %c2_50 = arith.constant 2 : index
    %c0_51 = arith.constant 0 : index
    %c0_52 = arith.constant 0 : index
    %48 = vector.load %arg4[%c2_50, %c0_51, %c0_52] : memref<4x256x256xf32, #tpu.memory_space<vmem>>, vector<1x256x256xf32>
    %49 = vector.shape_cast %48 : vector<1x256x256xf32> to vector<256x256xf32>
    %cst_53 = arith.constant dense<0.000000e+00> : vector<32x256xf32>
    %50 = tpu.matmul %47, %32, %cst_53 {dimension_numbers = #tpu.dot_dimension_numbers<[1], [0], [0], [1], [0, 0, 1, 1], [], []>} : vector<32x64xf32>, vector<64x256xf32>, vector<32x256xf32> -> vector<32x256xf32>
    %cst_54 = arith.constant dense<0.000000e+00> : vector<32x256xf32>
    %51 = tpu.matmul %50, %49, %cst_54 {dimension_numbers = #tpu.dot_dimension_numbers<[1], [0], [0], [1], [0, 0, 1, 1], [], []>} : vector<32x256xf32>, vector<256x256xf32>, vector<32x256xf32> -> vector<32x256xf32>
    %52 = arith.addf %45, %51 : vector<32x256xf32>
    %c3_55 = arith.constant 3 : index
    %c0_56 = arith.constant 0 : index
    %c0_57 = arith.constant 0 : index
    %53 = vector.load %arg3[%c3_55, %c0_56, %c0_57] : memref<4x32x64xf32, #tpu.memory_space<vmem>>, vector<1x32x64xf32>
    %54 = vector.shape_cast %53 : vector<1x32x64xf32> to vector<32x64xf32>
    %c3_58 = arith.constant 3 : index
    %c0_59 = arith.constant 0 : index
    %c0_60 = arith.constant 0 : index
    %55 = vector.load %arg4[%c3_58, %c0_59, %c0_60] : memref<4x256x256xf32, #tpu.memory_space<vmem>>, vector<1x256x256xf32>
    %56 = vector.shape_cast %55 : vector<1x256x256xf32> to vector<256x256xf32>
    %cst_61 = arith.constant dense<0.000000e+00> : vector<32x256xf32>
    %57 = tpu.matmul %54, %32, %cst_61 {dimension_numbers = #tpu.dot_dimension_numbers<[1], [0], [0], [1], [0, 0, 1, 1], [], []>} : vector<32x64xf32>, vector<64x256xf32>, vector<32x256xf32> -> vector<32x256xf32>
    %cst_62 = arith.constant dense<0.000000e+00> : vector<32x256xf32>
    %58 = tpu.matmul %57, %56, %cst_62 {dimension_numbers = #tpu.dot_dimension_numbers<[1], [0], [0], [1], [0, 0, 1, 1], [], []>} : vector<32x256xf32>, vector<256x256xf32>, vector<32x256xf32> -> vector<32x256xf32>
    %59 = arith.addf %52, %58 : vector<32x256xf32>
    %60 = tpu.iota {dimensions = array<i32: 0>} : vector<256x256xi32>
    %61 = tpu.iota {dimensions = array<i32: 1>} : vector<256x256xi32>
    %c15_i32 = arith.constant 15 : i32
    %62 = vector.broadcast %c15_i32 : i32 to vector<256x256xi32>
    %63 = arith.andi %60, %62 : vector<256x256xi32>
    %c15_i32_63 = arith.constant 15 : i32
    %64 = vector.broadcast %c15_i32_63 : i32 to vector<256x256xi32>
    %65 = arith.andi %61, %64 : vector<256x256xi32>
    %66 = arith.cmpi eq, %63, %65 : vector<256x256xi32>
    %67 = arith.extui %66 : vector<256x256xi1> to vector<256x256xi32>
    %68 = arith.sitofp %67 : vector<256x256xi32> to vector<256x256xf32>
    %cst_64 = arith.constant dense<0.000000e+00> : vector<256xf32>
    %69 = vector.multi_reduction <add>, %59, %cst_64 [0] : vector<32x256xf32> to vector<256xf32>
    %70 = vector.shape_cast %69 : vector<256xf32> to vector<1x256xf32>
    %cst_65 = arith.constant dense<0.000000e+00> : vector<1x256xf32>
    %71 = tpu.matmul %70, %68, %cst_65 {dimension_numbers = #tpu.dot_dimension_numbers<[1], [0], [0], [1], [0, 0, 1, 1], [], []>} : vector<1x256xf32>, vector<256x256xf32>, vector<1x256xf32> -> vector<1x256xf32>
    %cst_66 = arith.constant 0.001953125 : f32
    %72 = vector.broadcast %cst_66 : f32 to vector<1x256xf32>
    %73 = arith.mulf %71, %72 : vector<1x256xf32>
    %74 = vector.broadcast %73 : vector<1x256xf32> to vector<32x256xf32>
    %75 = arith.subf %59, %74 : vector<32x256xf32>
    %76 = arith.mulf %75, %75 : vector<32x256xf32>
    %cst_67 = arith.constant dense<0.000000e+00> : vector<256xf32>
    %77 = vector.multi_reduction <add>, %76, %cst_67 [0] : vector<32x256xf32> to vector<256xf32>
    %78 = vector.shape_cast %77 : vector<256xf32> to vector<1x256xf32>
    %cst_68 = arith.constant dense<0.000000e+00> : vector<1x256xf32>
    %79 = tpu.matmul %78, %68, %cst_68 {dimension_numbers = #tpu.dot_dimension_numbers<[1], [0], [0], [1], [0, 0, 1, 1], [], []>} : vector<1x256xf32>, vector<256x256xf32>, vector<1x256xf32> -> vector<1x256xf32>
    %cst_69 = arith.constant 0.001953125 : f32
    %80 = vector.broadcast %cst_69 : f32 to vector<1x256xf32>
    %81 = arith.mulf %79, %80 : vector<1x256xf32>
    %c0_70 = arith.constant 0 : index
    %c0_71 = arith.constant 0 : index
    %82 = vector.load %arg5[%c0_70, %c0_71] : memref<2x256xf32, #tpu.memory_space<vmem>>, vector<1x256xf32>
    %c1_72 = arith.constant 1 : index
    %c0_73 = arith.constant 0 : index
    %83 = vector.load %arg5[%c1_72, %c0_73] : memref<2x256xf32, #tpu.memory_space<vmem>>, vector<1x256xf32>
    %cst_74 = arith.constant 9.99999974E-6 : f32
    %84 = vector.broadcast %cst_74 : f32 to vector<1x256xf32>
    %85 = arith.addf %81, %84 : vector<1x256xf32>
    %86 = math.rsqrt %85 : vector<1x256xf32>
    %87 = arith.mulf %82, %86 : vector<1x256xf32>
    %88 = vector.broadcast %87 : vector<1x256xf32> to vector<32x256xf32>
    %89 = arith.mulf %75, %88 : vector<32x256xf32>
    %90 = vector.broadcast %83 : vector<1x256xf32> to vector<32x256xf32>
    %91 = arith.addf %89, %90 : vector<32x256xf32>
    %cst_75 = arith.constant 0.000000e+00 : f32
    %92 = vector.broadcast %cst_75 : f32 to vector<32x256xf32>
    %93 = arith.cmpf oge, %91, %92 : vector<32x256xf32>
    %cst_76 = arith.constant 2.000000e-01 : f32
    %94 = vector.broadcast %cst_76 : f32 to vector<32x256xf32>
    %95 = arith.mulf %94, %91 : vector<32x256xf32>
    %96 = arith.select %93, %91, %95 : vector<32x256xi1>, vector<32x256xf32>
    %c0_77 = arith.constant 0 : index
    %c0_78 = arith.constant 0 : index
    %c0_79 = arith.constant 0 : index
    %97 = vector.load %arg6[%c0_77, %c0_78, %c0_79] : memref<4x16x32xf32, #tpu.memory_space<vmem>>, vector<1x16x32xf32>
    %98 = vector.shape_cast %97 : vector<1x16x32xf32> to vector<16x32xf32>
    %c0_80 = arith.constant 0 : index
    %c0_81 = arith.constant 0 : index
    %c0_82 = arith.constant 0 : index
    %99 = vector.load %arg7[%c0_80, %c0_81, %c0_82] : memref<4x256x256xf32, #tpu.memory_space<vmem>>, vector<1x256x256xf32>
    %100 = vector.shape_cast %99 : vector<1x256x256xf32> to vector<256x256xf32>
    %cst_83 = arith.constant dense<0.000000e+00> : vector<16x256xf32>
    %101 = tpu.matmul %98, %96, %cst_83 {dimension_numbers = #tpu.dot_dimension_numbers<[1], [0], [0], [1], [0, 0, 1, 1], [], []>} : vector<16x32xf32>, vector<32x256xf32>, vector<16x256xf32> -> vector<16x256xf32>
    %cst_84 = arith.constant dense<0.000000e+00> : vector<16x256xf32>
    %102 = tpu.matmul %101, %100, %cst_84 {dimension_numbers = #tpu.dot_dimension_numbers<[1], [0], [0], [1], [0, 0, 1, 1], [], []>} : vector<16x256xf32>, vector<256x256xf32>, vector<16x256xf32> -> vector<16x256xf32>
    %c1_85 = arith.constant 1 : index
    %c0_86 = arith.constant 0 : index
    %c0_87 = arith.constant 0 : index
    %103 = vector.load %arg6[%c1_85, %c0_86, %c0_87] : memref<4x16x32xf32, #tpu.memory_space<vmem>>, vector<1x16x32xf32>
    %104 = vector.shape_cast %103 : vector<1x16x32xf32> to vector<16x32xf32>
    %c1_88 = arith.constant 1 : index
    %c0_89 = arith.constant 0 : index
    %c0_90 = arith.constant 0 : index
    %105 = vector.load %arg7[%c1_88, %c0_89, %c0_90] : memref<4x256x256xf32, #tpu.memory_space<vmem>>, vector<1x256x256xf32>
    %106 = vector.shape_cast %105 : vector<1x256x256xf32> to vector<256x256xf32>
    %cst_91 = arith.constant dense<0.000000e+00> : vector<16x256xf32>
    %107 = tpu.matmul %104, %96, %cst_91 {dimension_numbers = #tpu.dot_dimension_numbers<[1], [0], [0], [1], [0, 0, 1, 1], [], []>} : vector<16x32xf32>, vector<32x256xf32>, vector<16x256xf32> -> vector<16x256xf32>
    %cst_92 = arith.constant dense<0.000000e+00> : vector<16x256xf32>
    %108 = tpu.matmul %107, %106, %cst_92 {dimension_numbers = #tpu.dot_dimension_numbers<[1], [0], [0], [1], [0, 0, 1, 1], [], []>} : vector<16x256xf32>, vector<256x256xf32>, vector<16x256xf32> -> vector<16x256xf32>
    %109 = arith.addf %102, %108 : vector<16x256xf32>
    %c2_93 = arith.constant 2 : index
    %c0_94 = arith.constant 0 : index
    %c0_95 = arith.constant 0 : index
    %110 = vector.load %arg6[%c2_93, %c0_94, %c0_95] : memref<4x16x32xf32, #tpu.memory_space<vmem>>, vector<1x16x32xf32>
    %111 = vector.shape_cast %110 : vector<1x16x32xf32> to vector<16x32xf32>
    %c2_96 = arith.constant 2 : index
    %c0_97 = arith.constant 0 : index
    %c0_98 = arith.constant 0 : index
    %112 = vector.load %arg7[%c2_96, %c0_97, %c0_98] : memref<4x256x256xf32, #tpu.memory_space<vmem>>, vector<1x256x256xf32>
    %113 = vector.shape_cast %112 : vector<1x256x256xf32> to vector<256x256xf32>
    %cst_99 = arith.constant dense<0.000000e+00> : vector<16x256xf32>
    %114 = tpu.matmul %111, %96, %cst_99 {dimension_numbers = #tpu.dot_dimension_numbers<[1], [0], [0], [1], [0, 0, 1, 1], [], []>} : vector<16x32xf32>, vector<32x256xf32>, vector<16x256xf32> -> vector<16x256xf32>
    %cst_100 = arith.constant dense<0.000000e+00> : vector<16x256xf32>
    %115 = tpu.matmul %114, %113, %cst_100 {dimension_numbers = #tpu.dot_dimension_numbers<[1], [0], [0], [1], [0, 0, 1, 1], [], []>} : vector<16x256xf32>, vector<256x256xf32>, vector<16x256xf32> -> vector<16x256xf32>
    %116 = arith.addf %109, %115 : vector<16x256xf32>
    %c3_101 = arith.constant 3 : index
    %c0_102 = arith.constant 0 : index
    %c0_103 = arith.constant 0 : index
    %117 = vector.load %arg6[%c3_101, %c0_102, %c0_103] : memref<4x16x32xf32, #tpu.memory_space<vmem>>, vector<1x16x32xf32>
    %118 = vector.shape_cast %117 : vector<1x16x32xf32> to vector<16x32xf32>
    %c3_104 = arith.constant 3 : index
    %c0_105 = arith.constant 0 : index
    %c0_106 = arith.constant 0 : index
    %119 = vector.load %arg7[%c3_104, %c0_105, %c0_106] : memref<4x256x256xf32, #tpu.memory_space<vmem>>, vector<1x256x256xf32>
    %120 = vector.shape_cast %119 : vector<1x256x256xf32> to vector<256x256xf32>
    %cst_107 = arith.constant dense<0.000000e+00> : vector<16x256xf32>
    %121 = tpu.matmul %118, %96, %cst_107 {dimension_numbers = #tpu.dot_dimension_numbers<[1], [0], [0], [1], [0, 0, 1, 1], [], []>} : vector<16x32xf32>, vector<32x256xf32>, vector<16x256xf32> -> vector<16x256xf32>
    %cst_108 = arith.constant dense<0.000000e+00> : vector<16x256xf32>
    %122 = tpu.matmul %121, %120, %cst_108 {dimension_numbers = #tpu.dot_dimension_numbers<[1], [0], [0], [1], [0, 0, 1, 1], [], []>} : vector<16x256xf32>, vector<256x256xf32>, vector<16x256xf32> -> vector<16x256xf32>
    %123 = arith.addf %116, %122 : vector<16x256xf32>
    %124 = tpu.iota {dimensions = array<i32: 0>} : vector<256x256xi32>
    %125 = tpu.iota {dimensions = array<i32: 1>} : vector<256x256xi32>
    %c31_i32 = arith.constant 31 : i32
    %126 = vector.broadcast %c31_i32 : i32 to vector<256x256xi32>
    %127 = arith.andi %124, %126 : vector<256x256xi32>
    %c31_i32_109 = arith.constant 31 : i32
    %128 = vector.broadcast %c31_i32_109 : i32 to vector<256x256xi32>
    %129 = arith.andi %125, %128 : vector<256x256xi32>
    %130 = arith.cmpi eq, %127, %129 : vector<256x256xi32>
    %131 = arith.extui %130 : vector<256x256xi1> to vector<256x256xi32>
    %132 = arith.sitofp %131 : vector<256x256xi32> to vector<256x256xf32>
    %cst_110 = arith.constant dense<0.000000e+00> : vector<256xf32>
    %133 = vector.multi_reduction <add>, %123, %cst_110 [0] : vector<16x256xf32> to vector<256xf32>
    %134 = vector.shape_cast %133 : vector<256xf32> to vector<1x256xf32>
    %cst_111 = arith.constant dense<0.000000e+00> : vector<1x256xf32>
    %135 = tpu.matmul %134, %132, %cst_111 {dimension_numbers = #tpu.dot_dimension_numbers<[1], [0], [0], [1], [0, 0, 1, 1], [], []>} : vector<1x256xf32>, vector<256x256xf32>, vector<1x256xf32> -> vector<1x256xf32>
    %cst_112 = arith.constant 7.812500e-03 : f32
    %136 = vector.broadcast %cst_112 : f32 to vector<1x256xf32>
    %137 = arith.mulf %135, %136 : vector<1x256xf32>
    %138 = vector.broadcast %137 : vector<1x256xf32> to vector<16x256xf32>
    %139 = arith.subf %123, %138 : vector<16x256xf32>
    %140 = arith.mulf %139, %139 : vector<16x256xf32>
    %cst_113 = arith.constant dense<0.000000e+00> : vector<256xf32>
    %141 = vector.multi_reduction <add>, %140, %cst_113 [0] : vector<16x256xf32> to vector<256xf32>
    %142 = vector.shape_cast %141 : vector<256xf32> to vector<1x256xf32>
    %cst_114 = arith.constant dense<0.000000e+00> : vector<1x256xf32>
    %143 = tpu.matmul %142, %132, %cst_114 {dimension_numbers = #tpu.dot_dimension_numbers<[1], [0], [0], [1], [0, 0, 1, 1], [], []>} : vector<1x256xf32>, vector<256x256xf32>, vector<1x256xf32> -> vector<1x256xf32>
    %cst_115 = arith.constant 7.812500e-03 : f32
    %144 = vector.broadcast %cst_115 : f32 to vector<1x256xf32>
    %145 = arith.mulf %143, %144 : vector<1x256xf32>
    %c0_116 = arith.constant 0 : index
    %c0_117 = arith.constant 0 : index
    %146 = vector.load %arg8[%c0_116, %c0_117] : memref<2x256xf32, #tpu.memory_space<vmem>>, vector<1x256xf32>
    %c1_118 = arith.constant 1 : index
    %c0_119 = arith.constant 0 : index
    %147 = vector.load %arg8[%c1_118, %c0_119] : memref<2x256xf32, #tpu.memory_space<vmem>>, vector<1x256xf32>
    %cst_120 = arith.constant 9.99999974E-6 : f32
    %148 = vector.broadcast %cst_120 : f32 to vector<1x256xf32>
    %149 = arith.addf %145, %148 : vector<1x256xf32>
    %150 = math.rsqrt %149 : vector<1x256xf32>
    %151 = arith.mulf %146, %150 : vector<1x256xf32>
    %152 = vector.broadcast %151 : vector<1x256xf32> to vector<16x256xf32>
    %153 = arith.mulf %139, %152 : vector<16x256xf32>
    %154 = vector.broadcast %147 : vector<1x256xf32> to vector<16x256xf32>
    %155 = arith.addf %153, %154 : vector<16x256xf32>
    %cst_121 = arith.constant 0.000000e+00 : f32
    %156 = vector.broadcast %cst_121 : f32 to vector<16x256xf32>
    %157 = arith.cmpf oge, %155, %156 : vector<16x256xf32>
    %cst_122 = arith.constant 2.000000e-01 : f32
    %158 = vector.broadcast %cst_122 : f32 to vector<16x256xf32>
    %159 = arith.mulf %158, %155 : vector<16x256xf32>
    %160 = arith.select %157, %155, %159 : vector<16x256xi1>, vector<16x256xf32>
    %c0_123 = arith.constant 0 : index
    %c0_124 = arith.constant 0 : index
    %c0_125 = arith.constant 0 : index
    %161 = vector.load %arg9[%c0_123, %c0_124, %c0_125] : memref<4x8x16xf32, #tpu.memory_space<vmem>>, vector<1x8x16xf32>
    %162 = vector.shape_cast %161 : vector<1x8x16xf32> to vector<8x16xf32>
    %c0_126 = arith.constant 0 : index
    %c0_127 = arith.constant 0 : index
    %c0_128 = arith.constant 0 : index
    %163 = vector.load %arg10[%c0_126, %c0_127, %c0_128] : memref<4x256x256xf32, #tpu.memory_space<vmem>>, vector<1x256x256xf32>
    %164 = vector.shape_cast %163 : vector<1x256x256xf32> to vector<256x256xf32>
    %cst_129 = arith.constant dense<0.000000e+00> : vector<8x256xf32>
    %165 = tpu.matmul %162, %160, %cst_129 {dimension_numbers = #tpu.dot_dimension_numbers<[1], [0], [0], [1], [0, 0, 1, 1], [], []>} : vector<8x16xf32>, vector<16x256xf32>, vector<8x256xf32> -> vector<8x256xf32>
    %cst_130 = arith.constant dense<0.000000e+00> : vector<8x256xf32>
    %166 = tpu.matmul %165, %164, %cst_130 {dimension_numbers = #tpu.dot_dimension_numbers<[1], [0], [0], [1], [0, 0, 1, 1], [], []>} : vector<8x256xf32>, vector<256x256xf32>, vector<8x256xf32> -> vector<8x256xf32>
    %c1_131 = arith.constant 1 : index
    %c0_132 = arith.constant 0 : index
    %c0_133 = arith.constant 0 : index
    %167 = vector.load %arg9[%c1_131, %c0_132, %c0_133] : memref<4x8x16xf32, #tpu.memory_space<vmem>>, vector<1x8x16xf32>
    %168 = vector.shape_cast %167 : vector<1x8x16xf32> to vector<8x16xf32>
    %c1_134 = arith.constant 1 : index
    %c0_135 = arith.constant 0 : index
    %c0_136 = arith.constant 0 : index
    %169 = vector.load %arg10[%c1_134, %c0_135, %c0_136] : memref<4x256x256xf32, #tpu.memory_space<vmem>>, vector<1x256x256xf32>
    %170 = vector.shape_cast %169 : vector<1x256x256xf32> to vector<256x256xf32>
    %cst_137 = arith.constant dense<0.000000e+00> : vector<8x256xf32>
    %171 = tpu.matmul %168, %160, %cst_137 {dimension_numbers = #tpu.dot_dimension_numbers<[1], [0], [0], [1], [0, 0, 1, 1], [], []>} : vector<8x16xf32>, vector<16x256xf32>, vector<8x256xf32> -> vector<8x256xf32>
    %cst_138 = arith.constant dense<0.000000e+00> : vector<8x256xf32>
    %172 = tpu.matmul %171, %170, %cst_138 {dimension_numbers = #tpu.dot_dimension_numbers<[1], [0], [0], [1], [0, 0, 1, 1], [], []>} : vector<8x256xf32>, vector<256x256xf32>, vector<8x256xf32> -> vector<8x256xf32>
    %173 = arith.addf %166, %172 : vector<8x256xf32>
    %c2_139 = arith.constant 2 : index
    %c0_140 = arith.constant 0 : index
    %c0_141 = arith.constant 0 : index
    %174 = vector.load %arg9[%c2_139, %c0_140, %c0_141] : memref<4x8x16xf32, #tpu.memory_space<vmem>>, vector<1x8x16xf32>
    %175 = vector.shape_cast %174 : vector<1x8x16xf32> to vector<8x16xf32>
    %c2_142 = arith.constant 2 : index
    %c0_143 = arith.constant 0 : index
    %c0_144 = arith.constant 0 : index
    %176 = vector.load %arg10[%c2_142, %c0_143, %c0_144] : memref<4x256x256xf32, #tpu.memory_space<vmem>>, vector<1x256x256xf32>
    %177 = vector.shape_cast %176 : vector<1x256x256xf32> to vector<256x256xf32>
    %cst_145 = arith.constant dense<0.000000e+00> : vector<8x256xf32>
    %178 = tpu.matmul %175, %160, %cst_145 {dimension_numbers = #tpu.dot_dimension_numbers<[1], [0], [0], [1], [0, 0, 1, 1], [], []>} : vector<8x16xf32>, vector<16x256xf32>, vector<8x256xf32> -> vector<8x256xf32>
    %cst_146 = arith.constant dense<0.000000e+00> : vector<8x256xf32>
    %179 = tpu.matmul %178, %177, %cst_146 {dimension_numbers = #tpu.dot_dimension_numbers<[1], [0], [0], [1], [0, 0, 1, 1], [], []>} : vector<8x256xf32>, vector<256x256xf32>, vector<8x256xf32> -> vector<8x256xf32>
    %180 = arith.addf %173, %179 : vector<8x256xf32>
    %c3_147 = arith.constant 3 : index
    %c0_148 = arith.constant 0 : index
    %c0_149 = arith.constant 0 : index
    %181 = vector.load %arg9[%c3_147, %c0_148, %c0_149] : memref<4x8x16xf32, #tpu.memory_space<vmem>>, vector<1x8x16xf32>
    %182 = vector.shape_cast %181 : vector<1x8x16xf32> to vector<8x16xf32>
    %c3_150 = arith.constant 3 : index
    %c0_151 = arith.constant 0 : index
    %c0_152 = arith.constant 0 : index
    %183 = vector.load %arg10[%c3_150, %c0_151, %c0_152] : memref<4x256x256xf32, #tpu.memory_space<vmem>>, vector<1x256x256xf32>
    %184 = vector.shape_cast %183 : vector<1x256x256xf32> to vector<256x256xf32>
    %cst_153 = arith.constant dense<0.000000e+00> : vector<8x256xf32>
    %185 = tpu.matmul %182, %160, %cst_153 {dimension_numbers = #tpu.dot_dimension_numbers<[1], [0], [0], [1], [0, 0, 1, 1], [], []>} : vector<8x16xf32>, vector<16x256xf32>, vector<8x256xf32> -> vector<8x256xf32>
    %cst_154 = arith.constant dense<0.000000e+00> : vector<8x256xf32>
    %186 = tpu.matmul %185, %184, %cst_154 {dimension_numbers = #tpu.dot_dimension_numbers<[1], [0], [0], [1], [0, 0, 1, 1], [], []>} : vector<8x256xf32>, vector<256x256xf32>, vector<8x256xf32> -> vector<8x256xf32>
    %187 = arith.addf %180, %186 : vector<8x256xf32>
    %188 = tpu.iota {dimensions = array<i32: 0>} : vector<256x256xi32>
    %189 = tpu.iota {dimensions = array<i32: 1>} : vector<256x256xi32>
    %c63_i32 = arith.constant 63 : i32
    %190 = vector.broadcast %c63_i32 : i32 to vector<256x256xi32>
    %191 = arith.andi %188, %190 : vector<256x256xi32>
    %c63_i32_155 = arith.constant 63 : i32
    %192 = vector.broadcast %c63_i32_155 : i32 to vector<256x256xi32>
    %193 = arith.andi %189, %192 : vector<256x256xi32>
    %194 = arith.cmpi eq, %191, %193 : vector<256x256xi32>
    %195 = arith.extui %194 : vector<256x256xi1> to vector<256x256xi32>
    %196 = arith.sitofp %195 : vector<256x256xi32> to vector<256x256xf32>
    %cst_156 = arith.constant dense<0.000000e+00> : vector<256xf32>
    %197 = vector.multi_reduction <add>, %187, %cst_156 [0] : vector<8x256xf32> to vector<256xf32>
    %198 = vector.shape_cast %197 : vector<256xf32> to vector<1x256xf32>
    %cst_157 = arith.constant dense<0.000000e+00> : vector<1x256xf32>
    %199 = tpu.matmul %198, %196, %cst_157 {dimension_numbers = #tpu.dot_dimension_numbers<[1], [0], [0], [1], [0, 0, 1, 1], [], []>} : vector<1x256xf32>, vector<256x256xf32>, vector<1x256xf32> -> vector<1x256xf32>
    %cst_158 = arith.constant 3.125000e-02 : f32
    %200 = vector.broadcast %cst_158 : f32 to vector<1x256xf32>
    %201 = arith.mulf %199, %200 : vector<1x256xf32>
    %202 = vector.broadcast %201 : vector<1x256xf32> to vector<8x256xf32>
    %203 = arith.subf %187, %202 : vector<8x256xf32>
    %204 = arith.mulf %203, %203 : vector<8x256xf32>
    %cst_159 = arith.constant dense<0.000000e+00> : vector<256xf32>
    %205 = vector.multi_reduction <add>, %204, %cst_159 [0] : vector<8x256xf32> to vector<256xf32>
    %206 = vector.shape_cast %205 : vector<256xf32> to vector<1x256xf32>
    %cst_160 = arith.constant dense<0.000000e+00> : vector<1x256xf32>
    %207 = tpu.matmul %206, %196, %cst_160 {dimension_numbers = #tpu.dot_dimension_numbers<[1], [0], [0], [1], [0, 0, 1, 1], [], []>} : vector<1x256xf32>, vector<256x256xf32>, vector<1x256xf32> -> vector<1x256xf32>
    %cst_161 = arith.constant 3.125000e-02 : f32
    %208 = vector.broadcast %cst_161 : f32 to vector<1x256xf32>
    %209 = arith.mulf %207, %208 : vector<1x256xf32>
    %c0_162 = arith.constant 0 : index
    %c0_163 = arith.constant 0 : index
    %210 = vector.load %arg11[%c0_162, %c0_163] : memref<2x256xf32, #tpu.memory_space<vmem>>, vector<1x256xf32>
    %c1_164 = arith.constant 1 : index
    %c0_165 = arith.constant 0 : index
    %211 = vector.load %arg11[%c1_164, %c0_165] : memref<2x256xf32, #tpu.memory_space<vmem>>, vector<1x256xf32>
    %cst_166 = arith.constant 9.99999974E-6 : f32
    %212 = vector.broadcast %cst_166 : f32 to vector<1x256xf32>
    %213 = arith.addf %209, %212 : vector<1x256xf32>
    %214 = math.rsqrt %213 : vector<1x256xf32>
    %215 = arith.mulf %210, %214 : vector<1x256xf32>
    %216 = vector.broadcast %215 : vector<1x256xf32> to vector<8x256xf32>
    %217 = arith.mulf %203, %216 : vector<8x256xf32>
    %218 = vector.broadcast %211 : vector<1x256xf32> to vector<8x256xf32>
    %219 = arith.addf %217, %218 : vector<8x256xf32>
    %cst_167 = arith.constant 0.000000e+00 : f32
    %220 = vector.broadcast %cst_167 : f32 to vector<8x256xf32>
    %221 = arith.cmpf oge, %219, %220 : vector<8x256xf32>
    %cst_168 = arith.constant 2.000000e-01 : f32
    %222 = vector.broadcast %cst_168 : f32 to vector<8x256xf32>
    %223 = arith.mulf %222, %219 : vector<8x256xf32>
    %224 = arith.select %221, %219, %223 : vector<8x256xi1>, vector<8x256xf32>
    %c0_169 = arith.constant 0 : index
    %c0_170 = arith.constant 0 : index
    %225 = vector.load %arg12[%c0_169, %c0_170] : memref<8x256xf32, #tpu.memory_space<vmem>>, vector<8x256xf32>
    %226 = arith.mulf %224, %225 : vector<8x256xf32>
    %227 = tpu.iota {dimensions = array<i32: 0>} : vector<2x8xi32>
    %228 = tpu.iota {dimensions = array<i32: 1>} : vector<2x8xi32>
    %c4_i32 = arith.constant 4 : i32
    %229 = vector.broadcast %c4_i32 : i32 to vector<2x8xi32>
    %230 = arith.muli %227, %229 : vector<2x8xi32>
    %231 = arith.cmpi sge, %228, %230 : vector<2x8xi32>
    %c1_i32 = arith.constant 1 : i32
    %232 = vector.broadcast %c1_i32 : i32 to vector<2x8xi32>
    %233 = arith.addi %227, %232 : vector<2x8xi32>
    %c4_i32_171 = arith.constant 4 : i32
    %234 = vector.broadcast %c4_i32_171 : i32 to vector<2x8xi32>
    %235 = arith.muli %233, %234 : vector<2x8xi32>
    %236 = arith.cmpi slt, %228, %235 : vector<2x8xi32>
    %237 = arith.andi %231, %236 : vector<2x8xi1>
    %238 = arith.extui %237 : vector<2x8xi1> to vector<2x8xi32>
    %239 = arith.sitofp %238 : vector<2x8xi32> to vector<2x8xf32>
    %cst_172 = arith.constant dense<0.000000e+00> : vector<2x256xf32>
    %240 = tpu.matmul %239, %226, %cst_172 {dimension_numbers = #tpu.dot_dimension_numbers<[1], [0], [0], [1], [0, 0, 1, 1], [], []>} : vector<2x8xf32>, vector<8x256xf32>, vector<2x256xf32> -> vector<2x256xf32>
    %cst_173 = arith.constant dense<0.000000e+00> : vector<2xf32>
    %241 = vector.multi_reduction <add>, %240, %cst_173 [1] : vector<2x256xf32> to vector<2xf32>
    %242 = vector.shape_cast %241 : vector<2xf32> to vector<2x1xf32>
    %cst_174 = arith.constant 0.000000e+00 : f32
    %243 = vector.broadcast %cst_174 : f32 to vector<2x1xf32>
    %244 = arith.subf %243, %242 : vector<2x1xf32>
    %245 = math.exp %244 : vector<2x1xf32>
    %cst_175 = arith.constant 1.000000e+00 : f32
    %246 = vector.broadcast %cst_175 : f32 to vector<2x1xf32>
    %247 = arith.addf %246, %245 : vector<2x1xf32>
    %cst_176 = arith.constant 1.000000e+00 : f32
    %248 = vector.broadcast %cst_176 : f32 to vector<2x1xf32>
    %249 = arith.divf %248, %247 : vector<2x1xf32>
    %c0_177 = arith.constant 0 : index
    %c0_178 = arith.constant 0 : index
    %250 = vector.load %arg13[%c0_177, %c0_178] : memref<2x1xf32, #tpu.memory_space<vmem>>, vector<2x1xf32>
    tpu.vector_store %arg13[%c0_177, %c0_178], %249 {strides = array<i32>} : memref<2x1xf32, #tpu.memory_space<vmem>>, vector<2x1xf32>,
    return
  }
}

</mosaic_0001>

<llo_original>
// kernel: forward.1
$region0: #{forward.1}
  #allocation0 [shape = 'u32[]', space=smem, size = 0x4, offset = 0x4, fixed_abs, tag = 'smem constant byte address 0x4 - core index']
  #allocation1 [shape = 'u32[72,128]{1,0:T(1,128)}', space=vmem, size = 0x9000, scoped, tag = 'internal scratch']
  %s0 = inlined_call_operand.vmem [shape: f32[128,192], index: 0, kind: input, shape index: {}]
  %s1 = inlined_call_operand.vmem [shape: f32[4,64,128], index: 1, kind: input, shape index: {}]
  %s2 = inlined_call_operand.vmem [shape: f32[4,192,256], index: 2, kind: input, shape index: {}]
  %s3 = inlined_call_operand.hbm [shape: f32[4,32,64], index: 3, kind: input, shape index: {}]
  %s4 = inlined_call_operand.hbm [shape: f32[4,256,256], index: 4, kind: input, shape index: {}]
  %s5 = inlined_call_operand.hbm [shape: f32[2,256], index: 5, kind: input, shape index: {}]
  %s6 = inlined_call_operand.hbm [shape: f32[4,16,32], index: 6, kind: input, shape index: {}]
  %s7 = inlined_call_operand.hbm [shape: f32[4,256,256], index: 7, kind: input, shape index: {}]
  %s8 = inlined_call_operand.hbm [shape: f32[2,256], index: 8, kind: input, shape index: {}]
  %s9 = inlined_call_operand.hbm [shape: f32[4,8,16], index: 9, kind: input, shape index: {}]
  %s10 = inlined_call_operand.hbm [shape: f32[4,256,256], index: 10, kind: input, shape index: {}]
  %s11 = inlined_call_operand.hbm [shape: f32[2,256], index: 11, kind: input, shape index: {}]
  %s12 = inlined_call_operand.hbm [shape: f32[8,256], index: 12, kind: input, shape index: {}]
  %s13 = inlined_call_operand.vmem [shape: f32[2,1], index: 13, kind: output, shape index: {}]
  %s14 = sld [smem:[#allocation0]]
  $region102: #{forward.1} parent=0
    _
  %s16 = ssub.s32 1, %s14
  %s17 = scalar_select 0, %s16, %s14
  $region1: #{forward.1} parent=0
    #allocation2 [shape = 'u8[65536]{0}', space=vmem, size = 0x10000, scoped, tag = 'input window, operand 3, single buffered']
    #allocation3 [shape = 's32[1]{0}', space=sflag, size = 0x4, scoped, tag = 'scoped memory for forward.1']
    #allocation4 [shape = 'u8[1048576]{0}', space=vmem, size = 0x100000, scoped, tag = 'input window, operand 4, single buffered']
    #allocation5 [shape = 's32[1]{0}', space=sflag, size = 0x4, scoped, tag = 'scoped memory for forward.1']
    #allocation6 [shape = 'u8[2048]{0}', space=vmem, size = 0x800, scoped, tag = 'input window, operand 5, single buffered']
    #allocation7 [shape = 'u8[32768]{0}', space=vmem, size = 0x8000, scoped, tag = 'input window, operand 6, single buffered']
    #allocation8 [shape = 's32[1]{0}', space=sflag, size = 0x4, scoped, tag = 'scoped memory for forward.1']
    #allocation9 [shape = 'u8[1048576]{0}', space=vmem, size = 0x100000, scoped, tag = 'input window, operand 7, single buffered']
    #allocation10 [shape = 'u8[2048]{0}', space=vmem, size = 0x800, scoped, tag = 'input window, operand 8, single buffered']
    #allocation11 [shape = 's32[1]{0}', space=sflag, size = 0x4, scoped, tag = 'scoped memory for forward.1']
    #allocation12 [shape = 'u8[16384]{0}', space=vmem, size = 0x4000, scoped, tag = 'input window, operand 9, single buffered']
    #allocation13 [shape = 'u8[1048576]{0}', space=vmem, size = 0x100000, scoped, tag = 'input window, operand 10, single buffered']
    #allocation14 [shape = 's32[1]{0}', space=sflag, size = 0x4, scoped, tag = 'scoped memory for forward.1']
    #allocation15 [shape = 'u8[2048]{0}', space=vmem, size = 0x800, scoped, tag = 'input window, operand 11, single buffered']
    #allocation16 [shape = 'u8[8192]{0}', space=vmem, size = 0x2000, scoped, tag = 'input window, operand 12, single buffered']
    #allocation17 [shape = 's32[1]{0}', space=sflag, size = 0x4, scoped, tag = 'scoped memory for forward.1']
    %18 = vsyncpa [#allocation3], 0
    %19 = vsyncpa [#allocation5], 0
    %20 = vsyncpa [#allocation8], 0
    %21 = vsyncpa [#allocation11], 0
    %22 = vsyncpa [#allocation14], 0
    %23 = vsyncpa [#allocation17], 0
    // Predicated region
    $region2: #{forward.1} parent=1 // pred_check
      _
    $region3: #{forward.1} parent=1 // pred_check_branch
      %25 = sbr.rel (0) target = $region5
    $region4: #{forward.1} parent=1 // pred_region
      _
    $region5: #{forward.1} parent=1 // pred_fallthru
      _
    // Predicated region
    $region6: #{forward.1} parent=1 // pred_check
      _
    $region7: #{forward.1} parent=1 // pred_check_branch
      %27 = sbr.rel (0) target = $region9
    $region8: #{forward.1} parent=1 // pred_region
      _
    $region9: #{forward.1} parent=1 // pred_fallthru
      _
    // Predicated region
    $region10: #{forward.1} parent=1 // pred_check
      _
    $region11: #{forward.1} parent=1 // pred_check_branch
      %29 = sbr.rel (0) target = $region13
    $region12: #{forward.1} parent=1 // pred_region
      _
    $region13: #{forward.1} parent=1 // pred_fallthru
      _
    // Predicated region
    $region14: #{forward.1} parent=1 // pred_check
      _
    $region15: #{forward.1} parent=1 // pred_check_branch
      %31 = sbr.rel (0) target = $region17
    $region16: #{forward.1} parent=1 // pred_region
      %33 = vsyncadd [#allocation3], 0
      %s34 = sshll.u32 %s3, 4
      %s35 = int_to_ptr.hbm [resolvable:$true] %s34
      %s36 = sshll.u32 [#allocation2], 4
      %s37 = int_to_ptr.vmem [resolvable:$true] %s36
      %42 = dma.hbm_to_vmem [thread:$0]  %s35, 2048, %s37, [#allocation3], 128, 128, 8
    $region17: #{forward.1} parent=1 // pred_fallthru
      _
    // Predicated region
    $region18: #{forward.1} parent=1 // pred_check
      _
    $region19: #{forward.1} parent=1 // pred_check_branch
      %44 = sbr.rel (0) target = $region21
    $region20: #{forward.1} parent=1 // pred_region
      %46 = vsyncadd [#allocation5], 0
      %s47 = sshll.u32 %s4, 4
      %s48 = int_to_ptr.hbm [resolvable:$true] %s47
      %s49 = sshll.u32 [#allocation4], 4
      %s50 = int_to_ptr.vmem [resolvable:$true] %s49
      %55 = dma.hbm_to_vmem [thread:$0]  %s48, 32768, %s50, [#allocation5], 256, 256, 16
    $region21: #{forward.1} parent=1 // pred_fallthru
      _
    // Predicated region
    $region22: #{forward.1} parent=1 // pred_check
      _
    $region23: #{forward.1} parent=1 // pred_check_branch
      %57 = sbr.rel (0) target = $region25
    $region24: #{forward.1} parent=1 // pred_region
      %59 = vsyncadd [#allocation5], 0
      %s61 = sshll.u32 %s5, 4
      %s62 = int_to_ptr.hbm [resolvable:$true] %s61
      %s63 = sshll.u32 [#allocation6], 4
      %s64 = int_to_ptr.vmem [resolvable:$true] %s63
      %66 = dma.hbm_to_vmem [thread:$0]  %s62, 64, %s64, [#allocation5]
    $region25: #{forward.1} parent=1 // pred_fallthru
      _
    // Predicated region
    $region26: #{forward.1} parent=1 // pred_check
      _
    $region27: #{forward.1} parent=1 // pred_check_branch
      %68 = sbr.rel (0) target = $region29
    $region28: #{forward.1} parent=1 // pred_region
      %70 = vsyncadd [#allocation8], 0
      %s71 = sshll.u32 %s6, 4
      %s72 = int_to_ptr.hbm [resolvable:$true] %s71
      %s73 = sshll.u32 [#allocation7], 4
      %s74 = int_to_ptr.vmem [resolvable:$true] %s73
      %79 = dma.hbm_to_vmem [thread:$0]  %s72, 1024, %s74, [#allocation8], 128, 128, 8
    $region29: #{forward.1} parent=1 // pred_fallthru
      _
    // Predicated region
    $region30: #{forward.1} parent=1 // pred_check
      _
    $region31: #{forward.1} parent=1 // pred_check_branch
      %81 = sbr.rel (0) target = $region33
    $region32: #{forward.1} parent=1 // pred_region
      %83 = vsyncadd [#allocation8], 0
      %s84 = sshll.u32 %s7, 4
      %s85 = int_to_ptr.hbm [resolvable:$true] %s84
      %s86 = sshll.u32 [#allocation9], 4
      %s87 = int_to_ptr.vmem [resolvable:$true] %s86
      %92 = dma.hbm_to_vmem [thread:$0]  %s85, 32768, %s87, [#allocation8], 256, 256, 16
    $region33: #{forward.1} parent=1 // pred_fallthru
      _
    // Predicated region
    $region34: #{forward.1} parent=1 // pred_check
      _
    $region35: #{forward.1} parent=1 // pred_check_branch
      %94 = sbr.rel (0) target = $region37
    $region36: #{forward.1} parent=1 // pred_region
      %96 = vsyncadd [#allocation11], 0
      %s98 = sshll.u32 %s8, 4
      %s99 = int_to_ptr.hbm [resolvable:$true] %s98
      %s100 = sshll.u32 [#allocation10], 4
      %s101 = int_to_ptr.vmem [resolvable:$true] %s100
      %103 = dma.hbm_to_vmem [thread:$0]  %s99, 64, %s101, [#allocation11]
    $region37: #{forward.1} parent=1 // pred_fallthru
      _
    // Predicated region
    $region38: #{forward.1} parent=1 // pred_check
      _
    $region39: #{forward.1} parent=1 // pred_check_branch
      %105 = sbr.rel (0) target = $region41
    $region40: #{forward.1} parent=1 // pred_region
      %107 = vsyncadd [#allocation11], 0
      %s108 = sshll.u32 %s9, 4
      %s109 = int_to_ptr.hbm [resolvable:$true] %s108
      %s110 = sshll.u32 [#allocation12], 4
      %s111 = int_to_ptr.vmem [resolvable:$true] %s110
      %116 = dma.hbm_to_vmem [thread:$0]  %s109, 512, %s111, [#allocation11], 128, 128, 8
    $region41: #{forward.1} parent=1 // pred_fallthru
      _
    // Predicated region
    $region42: #{forward.1} parent=1 // pred_check
      _
    $region43: #{forward.1} parent=1 // pred_check_branch
      %118 = sbr.rel (0) target = $region45
    $region44: #{forward.1} parent=1 // pred_region
      %120 = vsyncadd [#allocation14], 0
      %s121 = sshll.u32 %s10, 4
      %s122 = int_to_ptr.hbm [resolvable:$true] %s121
      %s123 = sshll.u32 [#allocation13], 4
      %s124 = int_to_ptr.vmem [resolvable:$true] %s123
      %129 = dma.hbm_to_vmem [thread:$0]  %s122, 32768, %s124, [#allocation14], 256, 256, 16
    $region45: #{forward.1} parent=1 // pred_fallthru
      _
    // Predicated region
    $region46: #{forward.1} parent=1 // pred_check
      _
    $region47: #{forward.1} parent=1 // pred_check_branch
      %131 = sbr.rel (0) target = $region49
    $region48: #{forward.1} parent=1 // pred_region
      %133 = vsyncadd [#allocation14], 0
      %s135 = sshll.u32 %s11, 4
      %s136 = int_to_ptr.hbm [resolvable:$true] %s135
      %s137 = sshll.u32 [#allocation15], 4
      %s138 = int_to_ptr.vmem [resolvable:$true] %s137
      %140 = dma.hbm_to_vmem [thread:$0]  %s136, 64, %s138, [#allocation14]
    $region49: #{forward.1} parent=1 // pred_fallthru
      _
    // Predicated region
    $region50: #{forward.1} parent=1 // pred_check
      _
    $region51: #{forward.1} parent=1 // pred_check_branch
      %142 = sbr.rel (0) target = $region53
    $region52: #{forward.1} parent=1 // pred_region
      %144 = vsyncadd [#allocation17], 0
      %s146 = sshll.u32 %s12, 4
      %s147 = int_to_ptr.hbm [resolvable:$true] %s146
      %s148 = sshll.u32 [#allocation16], 4
      %s149 = int_to_ptr.vmem [resolvable:$true] %s148
      %151 = dma.hbm_to_vmem [thread:$0]  %s147, 256, %s149, [#allocation17]
    $region53: #{forward.1} parent=1 // pred_fallthru
      _
    // Predicated region
    $region54: #{forward.1} parent=1 // pred_check
      _
    $region55: #{forward.1} parent=1 // pred_check_branch
      %153 = sbr.rel (0) target = $region57
    $region56: #{forward.1} parent=1 // pred_region
      %155 = dma.done [#allocation3], 2048
    $region57: #{forward.1} parent=1 // pred_fallthru
      _
    // Predicated region
    $region58: #{forward.1} parent=1 // pred_check
      _
    $region59: #{forward.1} parent=1 // pred_check_branch
      %157 = sbr.rel (0) target = $region61
    $region60: #{forward.1} parent=1 // pred_region
      %159 = dma.done [#allocation5], 32768
    $region61: #{forward.1} parent=1 // pred_fallthru
      _
    // Predicated region
    $region62: #{forward.1} parent=1 // pred_check
      _
    $region63: #{forward.1} parent=1 // pred_check_branch
      %161 = sbr.rel (0) target = $region65
    $region64: #{forward.1} parent=1 // pred_region
      %163 = dma.done [#allocation5], 64
    $region65: #{forward.1} parent=1 // pred_fallthru
      _
    // Predicated region
    $region66: #{forward.1} parent=1 // pred_check
      _
    $region67: #{forward.1} parent=1 // pred_check_branch
      %165 = sbr.rel (0) target = $region69
    $region68: #{forward.1} parent=1 // pred_region
      %167 = dma.done [#allocation8], 1024
    $region69: #{forward.1} parent=1 // pred_fallthru
      _
    // Predicated region
    $region70: #{forward.1} parent=1 // pred_check
      _
    $region71: #{forward.1} parent=1 // pred_check_branch
      %169 = sbr.rel (0) target = $region73
    $region72: #{forward.1} parent=1 // pred_region
      %171 = dma.done [#allocation8], 32768
    $region73: #{forward.1} parent=1 // pred_fallthru
      _
    // Predicated region
    $region74: #{forward.1} parent=1 // pred_check
      _
    $region75: #{forward.1} parent=1 // pred_check_branch
      %173 = sbr.rel (0) target = $region77
    $region76: #{forward.1} parent=1 // pred_region
      %175 = dma.done [#allocation11], 64
    $region77: #{forward.1} parent=1 // pred_fallthru
      _
    // Predicated region
    $region78: #{forward.1} parent=1 // pred_check
      _
    $region79: #{forward.1} parent=1 // pred_check_branch
      %177 = sbr.rel (0) target = $region81
    $region80: #{forward.1} parent=1 // pred_region
      %179 = dma.done [#allocation11], 512
    $region81: #{forward.1} parent=1 // pred_fallthru
      _
    // Predicated region
    $region82: #{forward.1} parent=1 // pred_check
      _
    $region83: #{forward.1} parent=1 // pred_check_branch
      %181 = sbr.rel (0) target = $region85
    $region84: #{forward.1} parent=1 // pred_region
      %183 = dma.done [#allocation14], 32768
    $region85: #{forward.1} parent=1 // pred_fallthru
      _
    // Predicated region
    $region86: #{forward.1} parent=1 // pred_check
      _
    $region87: #{forward.1} parent=1 // pred_check_branch
      %185 = sbr.rel (0) target = $region89
    $region88: #{forward.1} parent=1 // pred_region
      %187 = dma.done [#allocation14], 64
    $region89: #{forward.1} parent=1 // pred_fallthru
      _
    // Predicated region
    $region90: #{forward.1} parent=1 // pred_check
      _
    $region91: #{forward.1} parent=1 // pred_check_branch
      %189 = sbr.rel (0) target = $region93
    $region92: #{forward.1} parent=1 // pred_region
      %191 = dma.done [#allocation17], 256
    $region93: #{forward.1} parent=1 // pred_fallthru
      _
    %v192 = vld [vmem:[%s0] sm:$0xff]
    %v193 = vld [vmem:[%s0 + $0x8] sm:$0xff]
    %v194 = vld [vmem:[%s0 + $0x10] sm:$0xff]
    %v195 = vld [vmem:[%s0 + $0x18] sm:$0xff]
    %v196 = vld [vmem:[%s0 + $0x20] sm:$0xff]
    %v197 = vld [vmem:[%s0 + $0x28] sm:$0xff]
    %v198 = vld [vmem:[%s0 + $0x30] sm:$0xff]
    %v199 = vld [vmem:[%s0 + $0x38] sm:$0xff]
    %v200 = vld [vmem:[%s0 + $0x40] sm:$0xff]
    %v201 = vld [vmem:[%s0 + $0x48] sm:$0xff]
    %v202 = vld [vmem:[%s0 + $0x50] sm:$0xff]
    %v203 = vld [vmem:[%s0 + $0x58] sm:$0xff]
    %v204 = vld [vmem:[%s0 + $0x60] sm:$0xff]
    %v205 = vld [vmem:[%s0 + $0x68] sm:$0xff]
    %v206 = vld [vmem:[%s0 + $0x70] sm:$0xff]
    %v207 = vld [vmem:[%s0 + $0x78] sm:$0xff]
    %v208 = vld [vmem:[%s0 + $0x80] sm:$0xff]
    %v209 = vld [vmem:[%s0 + $0x88] sm:$0xff]
    %v210 = vld [vmem:[%s0 + $0x90] sm:$0xff]
    %v211 = vld [vmem:[%s0 + $0x98] sm:$0xff]
    %v212 = vld [vmem:[%s0 + $0xa0] sm:$0xff]
    %v213 = vld [vmem:[%s0 + $0xa8] sm:$0xff]
    %v214 = vld [vmem:[%s0 + $0xb0] sm:$0xff]
    %v215 = vld [vmem:[%s0 + $0xb8] sm:$0xff]
    %v216 = vld [vmem:[%s0 + $0xc0] sm:$0xff]
    %v217 = vld [vmem:[%s0 + $0xc8] sm:$0xff]
    %v218 = vld [vmem:[%s0 + $0xd0] sm:$0xff]
    %v219 = vld [vmem:[%s0 + $0xd8] sm:$0xff]
    %v220 = vld [vmem:[%s0 + $0xe0] sm:$0xff]
    %v221 = vld [vmem:[%s0 + $0xe8] sm:$0xff]
    %v222 = vld [vmem:[%s0 + $0xf0] sm:$0xff]
    %v223 = vld [vmem:[%s0 + $0xf8] sm:$0xff]
    %v224 = vld [vmem:[%s1] sm:$0xff]
    %v225 = vld [vmem:[%s1 + $0x8] sm:$0xff]
    %v226 = vld [vmem:[%s1 + $0x10] sm:$0xff]
    %v227 = vld [vmem:[%s1 + $0x18] sm:$0xff]
    %v228 = vld [vmem:[%s1 + $0x20] sm:$0xff]
    %v229 = vld [vmem:[%s1 + $0x28] sm:$0xff]
    %v230 = vld [vmem:[%s1 + $0x30] sm:$0xff]
    %v231 = vld [vmem:[%s1 + $0x38] sm:$0xff]
    %v232 = vld [vmem:[%s2] sm:$0xff]
    %v233 = vld [vmem:[%s2 + $0x8] sm:$0xff]
    %v234 = vld [vmem:[%s2 + $0x10] sm:$0xff]
    %v235 = vld [vmem:[%s2 + $0x18] sm:$0xff]
    %v236 = vld [vmem:[%s2 + $0x20] sm:$0xff]
    %v237 = vld [vmem:[%s2 + $0x28] sm:$0xff]
    %v238 = vld [vmem:[%s2 + $0x30] sm:$0xff]
    %v239 = vld [vmem:[%s2 + $0x38] sm:$0xff]
    %v240 = vld [vmem:[%s2 + $0x40] sm:$0xff]
    %v241 = vld [vmem:[%s2 + $0x48] sm:$0xff]
    %v242 = vld [vmem:[%s2 + $0x50] sm:$0xff]
    %v243 = vld [vmem:[%s2 + $0x58] sm:$0xff]
    %v244 = vld [vmem:[%s2 + $0x60] sm:$0xff]
    %v245 = vld [vmem:[%s2 + $0x68] sm:$0xff]
    %v246 = vld [vmem:[%s2 + $0x70] sm:$0xff]
    %v247 = vld [vmem:[%s2 + $0x78] sm:$0xff]
    %v248 = vld [vmem:[%s2 + $0x80] sm:$0xff]
    %v249 = vld [vmem:[%s2 + $0x88] sm:$0xff]
    %v250 = vld [vmem:[%s2 + $0x90] sm:$0xff]
    %v251 = vld [vmem:[%s2 + $0x98] sm:$0xff]
    %v252 = vld [vmem:[%s2 + $0xa0] sm:$0xff]
    %v253 = vld [vmem:[%s2 + $0xa8] sm:$0xff]
    %v254 = vld [vmem:[%s2 + $0xb0] sm:$0xff]
    %v255 = vld [vmem:[%s2 + $0xb8] sm:$0xff]
    %v256 = vld [vmem:[%s2 + $0xc0] sm:$0xff]
    %v257 = vld [vmem:[%s2 + $0xc8] sm:$0xff]
    %v258 = vld [vmem:[%s2 + $0xd0] sm:$0xff]
    %v259 = vld [vmem:[%s2 + $0xd8] sm:$0xff]
    %v260 = vld [vmem:[%s2 + $0xe0] sm:$0xff]
    %v261 = vld [vmem:[%s2 + $0xe8] sm:$0xff]
    %v262 = vld [vmem:[%s2 + $0xf0] sm:$0xff]
    %v263 = vld [vmem:[%s2 + $0xf8] sm:$0xff]
    %v264 = vld [vmem:[%s2 + $0x100] sm:$0xff]
    %v265 = vld [vmem:[%s2 + $0x108] sm:$0xff]
    %v266 = vld [vmem:[%s2 + $0x110] sm:$0xff]
    %v267 = vld [vmem:[%s2 + $0x118] sm:$0xff]
    %v268 = vld [vmem:[%s2 + $0x120] sm:$0xff]
    %v269 = vld [vmem:[%s2 + $0x128] sm:$0xff]
    %v270 = vld [vmem:[%s2 + $0x130] sm:$0xff]
    %v271 = vld [vmem:[%s2 + $0x138] sm:$0xff]
    %v272 = vld [vmem:[%s2 + $0x140] sm:$0xff]
    %v273 = vld [vmem:[%s2 + $0x148] sm:$0xff]
    %v274 = vld [vmem:[%s2 + $0x150] sm:$0xff]
    %v275 = vld [vmem:[%s2 + $0x158] sm:$0xff]
    %v276 = vld [vmem:[%s2 + $0x160] sm:$0xff]
    %v277 = vld [vmem:[%s2 + $0x168] sm:$0xff]
    %v278 = vld [vmem:[%s2 + $0x170] sm:$0xff]
    %v279 = vld [vmem:[%s2 + $0x178] sm:$0xff]
    %280 = vmatpush.msra.mxu0 %v222
    %281 = vmatpush.msra.mxu0 %v220
    %282 = vmatpush.msra.mxu0 %v218
    %283 = vmatpush.msra.mxu0 %v216
    %284 = vmatpush.msra.mxu0 %v214
    %285 = vmatpush.msra.mxu0 %v212
    %286 = vmatpush.msra.mxu0 %v210
    %287 = vmatpush.msra.mxu0 %v208
    %288 = vmatpush.msra.mxu0 %v206
    %289 = vmatpush.msra.mxu0 %v204
    %290 = vmatpush.msra.mxu0 %v202
    %291 = vmatpush.msra.mxu0 %v200
    %292 = vmatpush.msra.mxu0 %v198
    %293 = vmatpush.msra.mxu0 %v196
    %294 = vmatpush.msra.mxu0 %v194
    %295 = vmatpush.msra.mxu0 %v192
    %296 = vmatmul.f32.gmra.mxu0 %v224
    %v297 = vpop.f32.mrf.mxu0
    %v298 = vadd.f32 0.0, %v297
    %299 = vmatmul.f32.gmra.mxu0 %v225
    %v300 = vpop.f32.mrf.mxu0
    %v301 = vadd.f32 0.0, %v300
    %302 = vmatmul.f32.gmra.mxu0 %v226
    %v303 = vpop.f32.mrf.mxu0
    %v304 = vadd.f32 0.0, %v303
    %305 = vmatmul.f32.gmra.mxu0 %v227
    %v306 = vpop.f32.mrf.mxu0
    %v307 = vadd.f32 0.0, %v306
    %308 = vmatmul.f32.gmra.mxu0 %v228
    %v309 = vpop.f32.mrf.mxu0
    %v310 = vadd.f32 0.0, %v309
    %311 = vmatmul.f32.gmra.mxu0 %v229
    %v312 = vpop.f32.mrf.mxu0
    %v313 = vadd.f32 0.0, %v312
    %314 = vmatmul.f32.gmra.mxu0 %v230
    %v315 = vpop.f32.mrf.mxu0
    %v316 = vadd.f32 0.0, %v315
    %317 = vmatmul.f32.gmra.mxu0 %v231
    %v318 = vpop.f32.mrf.mxu0
    %v319 = vadd.f32 0.0, %v318
    %320 = vdwg.mxu0
    %321 = vmatpush.msra.mxu0 %v223
    %322 = vmatpush.msra.mxu0 %v221
    %323 = vmatpush.msra.mxu0 %v219
    %324 = vmatpush.msra.mxu0 %v217
    %325 = vmatpush.msra.mxu0 %v215
    %326 = vmatpush.msra.mxu0 %v213
    %327 = vmatpush.msra.mxu0 %v211
    %328 = vmatpush.msra.mxu0 %v209
    %329 = vmatpush.msra.mxu0 %v207
    %330 = vmatpush.msra.mxu0 %v205
    %331 = vmatpush.msra.mxu0 %v203
    %332 = vmatpush.msra.mxu0 %v201
    %333 = vmatpush.msra.mxu0 %v199
    %334 = vmatpush.msra.mxu0 %v197
    %335 = vmatpush.msra.mxu0 %v195
    %336 = vmatpush.msra.mxu0 %v193
    %337 = vmatmul.f32.gmra.mxu0 %v224
    %v338 = vpop.f32.mrf.mxu0
    %v339 = vadd.f32 0.0, %v338
    %340 = vmatmul.f32.gmra.mxu0 %v225
    %v341 = vpop.f32.mrf.mxu0
    %v342 = vadd.f32 0.0, %v341
    %343 = vmatmul.f32.gmra.mxu0 %v226
    %v344 = vpop.f32.mrf.mxu0
    %v345 = vadd.f32 0.0, %v344
    %346 = vmatmul.f32.gmra.mxu0 %v227
    %v347 = vpop.f32.mrf.mxu0
    %v348 = vadd.f32 0.0, %v347
    %349 = vmatmul.f32.gmra.mxu0 %v228
    %v350 = vpop.f32.mrf.mxu0
    %v351 = vadd.f32 0.0, %v350
    %352 = vmatmul.f32.gmra.mxu0 %v229
    %v353 = vpop.f32.mrf.mxu0
    %v354 = vadd.f32 0.0, %v353
    %355 = vmatmul.f32.gmra.mxu0 %v230
    %v356 = vpop.f32.mrf.mxu0
    %v357 = vadd.f32 0.0, %v356
    %358 = vmatmul.f32.gmra.mxu0 %v231
    %v359 = vpop.f32.mrf.mxu0
    %v360 = vadd.f32 0.0, %v359
    %361 = vdwg.mxu0
    %s362 = scalar_lea.vmem %s1, 64
    %v363 = vld [vmem:[%s362] sm:$0xff]
    %v364 = vld [vmem:[%s362 + $0x8] sm:$0xff]
    %v365 = vld [vmem:[%s362 + $0x10] sm:$0xff]
    %v366 = vld [vmem:[%s362 + $0x18] sm:$0xff]
    %v367 = vld [vmem:[%s362 + $0x20] sm:$0xff]
    %v368 = vld [vmem:[%s362 + $0x28] sm:$0xff]
    %v369 = vld [vmem:[%s362 + $0x30] sm:$0xff]
    %v370 = vld [vmem:[%s362 + $0x38] sm:$0xff]
    %s371 = scalar_lea.vmem %s2, 384
    %v372 = vld [vmem:[%s371] sm:$0xff]
    %v373 = vld [vmem:[%s371 + $0x8] sm:$0xff]
    %v374 = vld [vmem:[%s371 + $0x10] sm:$0xff]
    %v375 = vld [vmem:[%s371 + $0x18] sm:$0xff]
    %v376 = vld [vmem:[%s371 + $0x20] sm:$0xff]
    %v377 = vld [vmem:[%s371 + $0x28] sm:$0xff]
    %v378 = vld [vmem:[%s371 + $0x30] sm:$0xff]
    %v379 = vld [vmem:[%s371 + $0x38] sm:$0xff]
    %v380 = vld [vmem:[%s371 + $0x40] sm:$0xff]
    %v381 = vld [vmem:[%s371 + $0x48] sm:$0xff]
    %v382 = vld [vmem:[%s371 + $0x50] sm:$0xff]
    %v383 = vld [vmem:[%s371 + $0x58] sm:$0xff]
    %v384 = vld [vmem:[%s371 + $0x60] sm:$0xff]
    %v385 = vld [vmem:[%s371 + $0x68] sm:$0xff]
    %v386 = vld [vmem:[%s371 + $0x70] sm:$0xff]
    %v387 = vld [vmem:[%s371 + $0x78] sm:$0xff]
    %v388 = vld [vmem:[%s371 + $0x80] sm:$0xff]
    %v389 = vld [vmem:[%s371 + $0x88] sm:$0xff]
    %v390 = vld [vmem:[%s371 + $0x90] sm:$0xff]
    %v391 = vld [vmem:[%s371 + $0x98] sm:$0xff]
    %v392 = vld [vmem:[%s371 + $0xa0] sm:$0xff]
    %v393 = vld [vmem:[%s371 + $0xa8] sm:$0xff]
    %v394 = vld [vmem:[%s371 + $0xb0] sm:$0xff]
    %v395 = vld [vmem:[%s371 + $0xb8] sm:$0xff]
    %v396 = vld [vmem:[%s371 + $0xc0] sm:$0xff]
    %v397 = vld [vmem:[%s371 + $0xc8] sm:$0xff]
    %v398 = vld [vmem:[%s371 + $0xd0] sm:$0xff]
    %v399 = vld [vmem:[%s371 + $0xd8] sm:$0xff]
    %v400 = vld [vmem:[%s371 + $0xe0] sm:$0xff]
    %v401 = vld [vmem:[%s371 + $0xe8] sm:$0xff]
    %v402 = vld [vmem:[%s371 + $0xf0] sm:$0xff]
    %v403 = vld [vmem:[%s371 + $0xf8] sm:$0xff]
    %v404 = vld [vmem:[%s371 + $0x100] sm:$0xff]
    %v405 = vld [vmem:[%s371 + $0x108] sm:$0xff]
    %v406 = vld [vmem:[%s371 + $0x110] sm:$0xff]
    %v407 = vld [vmem:[%s371 + $0x118] sm:$0xff]
    %v408 = vld [vmem:[%s371 + $0x120] sm:$0xff]
    %v409 = vld [vmem:[%s371 + $0x128] sm:$0xff]
    %v410 = vld [vmem:[%s371 + $0x130] sm:$0xff]
    %v411 = vld [vmem:[%s371 + $0x138] sm:$0xff]
    %v412 = vld [vmem:[%s371 + $0x140] sm:$0xff]
    %v413 = vld [vmem:[%s371 + $0x148] sm:$0xff]
    %v414 = vld [vmem:[%s371 + $0x150] sm:$0xff]
    %v415 = vld [vmem:[%s371 + $0x158] sm:$0xff]
    %v416 = vld [vmem:[%s371 + $0x160] sm:$0xff]
    %v417 = vld [vmem:[%s371 + $0x168] sm:$0xff]
    %v418 = vld [vmem:[%s371 + $0x170] sm:$0xff]
    %v419 = vld [vmem:[%s371 + $0x178] sm:$0xff]
    %420 = vmatpush.msra.mxu0 %v222
    %421 = vmatpush.msra.mxu0 %v220
    %422 = vmatpush.msra.mxu0 %v218
    %423 = vmatpush.msra.mxu0 %v216
    %424 = vmatpush.msra.mxu0 %v214
    %425 = vmatpush.msra.mxu0 %v212
    %426 = vmatpush.msra.mxu0 %v210
    %427 = vmatpush.msra.mxu0 %v208
    %428 = vmatpush.msra.mxu0 %v206
    %429 = vmatpush.msra.mxu0 %v204
    %430 = vmatpush.msra.mxu0 %v202
    %431 = vmatpush.msra.mxu0 %v200
    %432 = vmatpush.msra.mxu0 %v198
    %433 = vmatpush.msra.mxu0 %v196
    %434 = vmatpush.msra.mxu0 %v194
    %435 = vmatpush.msra.mxu0 %v192
    %436 = vmatmul.f32.gmra.mxu0 %v363
    %v437 = vpop.f32.mrf.mxu0
    %v438 = vadd.f32 0.0, %v437
    %439 = vmatmul.f32.gmra.mxu0 %v364
    %v440 = vpop.f32.mrf.mxu0
    %v441 = vadd.f32 0.0, %v440
    %442 = vmatmul.f32.gmra.mxu0 %v365
    %v443 = vpop.f32.mrf.mxu0
    %v444 = vadd.f32 0.0, %v443
    %445 = vmatmul.f32.gmra.mxu0 %v366
    %v446 = vpop.f32.mrf.mxu0
    %v447 = vadd.f32 0.0, %v446
    %448 = vmatmul.f32.gmra.mxu0 %v367
    %v449 = vpop.f32.mrf.mxu0
    %v450 = vadd.f32 0.0, %v449
    %451 = vmatmul.f32.gmra.mxu0 %v368
    %v452 = vpop.f32.mrf.mxu0
    %v453 = vadd.f32 0.0, %v452
    %454 = vmatmul.f32.gmra.mxu0 %v369
    %v455 = vpop.f32.mrf.mxu0
    %v456 = vadd.f32 0.0, %v455
    %457 = vmatmul.f32.gmra.mxu0 %v370
    %v458 = vpop.f32.mrf.mxu0
    %v459 = vadd.f32 0.0, %v458
    %460 = vdwg.mxu0
    %461 = vmatpush.msra.mxu0 %v223
    %462 = vmatpush.msra.mxu0 %v221
    %463 = vmatpush.msra.mxu0 %v219
    %464 = vmatpush.msra.mxu0 %v217
    %465 = vmatpush.msra.mxu0 %v215
    %466 = vmatpush.msra.mxu0 %v213
    %467 = vmatpush.msra.mxu0 %v211
    %468 = vmatpush.msra.mxu0 %v209
    %469 = vmatpush.msra.mxu0 %v207
    %470 = vmatpush.msra.mxu0 %v205
    %471 = vmatpush.msra.mxu0 %v203
    %472 = vmatpush.msra.mxu0 %v201
    %473 = vmatpush.msra.mxu0 %v199
    %474 = vmatpush.msra.mxu0 %v197
    %475 = vmatpush.msra.mxu0 %v195
    %476 = vmatpush.msra.mxu0 %v193
    %477 = vmatmul.f32.gmra.mxu0 %v363
    %v478 = vpop.f32.mrf.mxu0
    %v479 = vadd.f32 0.0, %v478
    %480 = vmatmul.f32.gmra.mxu0 %v364
    %v481 = vpop.f32.mrf.mxu0
    %v482 = vadd.f32 0.0, %v481
    %483 = vmatmul.f32.gmra.mxu0 %v365
    %v484 = vpop.f32.mrf.mxu0
    %v485 = vadd.f32 0.0, %v484
    %486 = vmatmul.f32.gmra.mxu0 %v366
    %v487 = vpop.f32.mrf.mxu0
    %v488 = vadd.f32 0.0, %v487
    %489 = vmatmul.f32.gmra.mxu0 %v367
    %v490 = vpop.f32.mrf.mxu0
    %v491 = vadd.f32 0.0, %v490
    %492 = vmatmul.f32.gmra.mxu0 %v368
    %v493 = vpop.f32.mrf.mxu0
    %v494 = vadd.f32 0.0, %v493
    %495 = vmatmul.f32.gmra.mxu0 %v369
    %v496 = vpop.f32.mrf.mxu0
    %v497 = vadd.f32 0.0, %v496
    %498 = vmatmul.f32.gmra.mxu0 %v370
    %v499 = vpop.f32.mrf.mxu0
    %v500 = vadd.f32 0.0, %v499
    %501 = vdwg.mxu0
    %vm502 = vcmask 523264
    %v504 = vsel %vm502, %v479, 0
    %v507 = vsel %vm502, %v482, 0
    %v510 = vsel %vm502, %v485, 0
    %v513 = vsel %vm502, %v488, 0
    %v516 = vsel %vm502, %v491, 0
    %v519 = vsel %vm502, %v494, 0
    %v522 = vsel %vm502, %v497, 0
    %v525 = vsel %vm502, %v500, 0
    %527 = vmatpush.msra.mxu0 %v402
    %528 = vmatpush.msra.mxu0 %v400
    %529 = vmatpush.msra.mxu0 %v398
    %530 = vmatpush.msra.mxu0 %v396
    %531 = vmatpush.msra.mxu0 %v394
    %532 = vmatpush.msra.mxu0 %v392
    %533 = vmatpush.msra.mxu0 %v390
    %534 = vmatpush.msra.mxu0 %v388
    %535 = vmatpush.msra.mxu0 %v386
    %536 = vmatpush.msra.mxu0 %v384
    %537 = vmatpush.msra.mxu0 %v382
    %538 = vmatpush.msra.mxu0 %v380
    %539 = vmatpush.msra.mxu0 %v378
    %540 = vmatpush.msra.mxu0 %v376
    %541 = vmatpush.msra.mxu0 %v374
    %542 = vmatpush.msra.mxu0 %v372
    %543 = vmatmul.f32.gmra.mxu0 %v438
    %v544 = vpop.f32.mrf.mxu0
    %v545 = vadd.f32 0.0, %v544
    %546 = vmatmul.f32.gmra.mxu0 %v441
    %v547 = vpop.f32.mrf.mxu0
    %v548 = vadd.f32 0.0, %v547
    %549 = vmatmul.f32.gmra.mxu0 %v444
    %v550 = vpop.f32.mrf.mxu0
    %v551 = vadd.f32 0.0, %v550
    %552 = vmatmul.f32.gmra.mxu0 %v447
    %v553 = vpop.f32.mrf.mxu0
    %v554 = vadd.f32 0.0, %v553
    %555 = vmatmul.f32.gmra.mxu0 %v450
    %v556 = vpop.f32.mrf.mxu0
    %v557 = vadd.f32 0.0, %v556
    %558 = vmatmul.f32.gmra.mxu0 %v453
    %v559 = vpop.f32.mrf.mxu0
    %v560 = vadd.f32 0.0, %v559
    %561 = vmatmul.f32.gmra.mxu0 %v456
    %v562 = vpop.f32.mrf.mxu0
    %v563 = vadd.f32 0.0, %v562
    %564 = vmatmul.f32.gmra.mxu0 %v459
    %v565 = vpop.f32.mrf.mxu0
    %v566 = vadd.f32 0.0, %v565
    %567 = vdwg.mxu0
    %568 = vmatpush.msra.mxu0 0.0
    %569 = vmatpush.msra.mxu0 0.0
    %570 = vmatpush.msra.mxu0 0.0
    %571 = vmatpush.msra.mxu0 0.0
    %572 = vmatpush.msra.mxu0 0.0
    %573 = vmatpush.msra.mxu0 0.0
    %574 = vmatpush.msra.mxu0 0.0
    %575 = vmatpush.msra.mxu0 0.0
    %576 = vmatpush.msra.mxu0 %v418
    %577 = vmatpush.msra.mxu0 %v416
    %578 = vmatpush.msra.mxu0 %v414
    %579 = vmatpush.msra.mxu0 %v412
    %580 = vmatpush.msra.mxu0 %v410
    %581 = vmatpush.msra.mxu0 %v408
    %582 = vmatpush.msra.mxu0 %v406
    %583 = vmatpush.msra.mxu0 %v404
    %584 = vmatmul.f32.gmra.mxu0 %v504
    %v585 = vpop.f32.mrf.mxu0
    %v586 = vadd.f32 %v545, %v585
    %587 = vmatmul.f32.gmra.mxu0 %v507
    %v588 = vpop.f32.mrf.mxu0
    %v589 = vadd.f32 %v548, %v588
    %590 = vmatmul.f32.gmra.mxu0 %v510
    %v591 = vpop.f32.mrf.mxu0
    %v592 = vadd.f32 %v551, %v591
    %593 = vmatmul.f32.gmra.mxu0 %v513
    %v594 = vpop.f32.mrf.mxu0
    %v595 = vadd.f32 %v554, %v594
    %596 = vmatmul.f32.gmra.mxu0 %v516
    %v597 = vpop.f32.mrf.mxu0
    %v598 = vadd.f32 %v557, %v597
    %599 = vmatmul.f32.gmra.mxu0 %v519
    %v600 = vpop.f32.mrf.mxu0
    %v601 = vadd.f32 %v560, %v600
    %602 = vmatmul.f32.gmra.mxu0 %v522
    %v603 = vpop.f32.mrf.mxu0
    %v604 = vadd.f32 %v563, %v603
    %605 = vmatmul.f32.gmra.mxu0 %v525
    %v606 = vpop.f32.mrf.mxu0
    %v607 = vadd.f32 %v566, %v606
    %608 = vdwg.mxu0
    %609 = vmatpush.msra.mxu0 %v403
    %610 = vmatpush.msra.mxu0 %v401
    %611 = vmatpush.msra.mxu0 %v399
    %612 = vmatpush.msra.mxu0 %v397
    %613 = vmatpush.msra.mxu0 %v395
    %614 = vmatpush.msra.mxu0 %v393
    %615 = vmatpush.msra.mxu0 %v391
    %616 = vmatpush.msra.mxu0 %v389
    %617 = vmatpush.msra.mxu0 %v387
    %618 = vmatpush.msra.mxu0 %v385
    %619 = vmatpush.msra.mxu0 %v383
    %620 = vmatpush.msra.mxu0 %v381
    %621 = vmatpush.msra.mxu0 %v379
    %622 = vmatpush.msra.mxu0 %v377
    %623 = vmatpush.msra.mxu0 %v375
    %624 = vmatpush.msra.mxu0 %v373
    %625 = vmatmul.f32.gmra.mxu0 %v438
    %v626 = vpop.f32.mrf.mxu0
    %v627 = vadd.f32 0.0, %v626
    %628 = vmatmul.f32.gmra.mxu0 %v441
    %v629 = vpop.f32.mrf.mxu0
    %v630 = vadd.f32 0.0, %v629
    %631 = vmatmul.f32.gmra.mxu0 %v444
    %v632 = vpop.f32.mrf.mxu0
    %v633 = vadd.f32 0.0, %v632
    %634 = vmatmul.f32.gmra.mxu0 %v447
    %v635 = vpop.f32.mrf.mxu0
    %v636 = vadd.f32 0.0, %v635
    %637 = vmatmul.f32.gmra.mxu0 %v450
    %v638 = vpop.f32.mrf.mxu0
    %v639 = vadd.f32 0.0, %v638
    %640 = vmatmul.f32.gmra.mxu0 %v453
    %v641 = vpop.f32.mrf.mxu0
    %v642 = vadd.f32 0.0, %v641
    %643 = vmatmul.f32.gmra.mxu0 %v456
    %v644 = vpop.f32.mrf.mxu0
    %v645 = vadd.f32 0.0, %v644
    %646 = vmatmul.f32.gmra.mxu0 %v459
    %v647 = vpop.f32.mrf.mxu0
    %v648 = vadd.f32 0.0, %v647
    %649 = vdwg.mxu0
    %650 = vmatpush.msra.mxu0 0.0
    %651 = vmatpush.msra.mxu0 0.0
    %652 = vmatpush.msra.mxu0 0.0
    %653 = vmatpush.msra.mxu0 0.0
    %654 = vmatpush.msra.mxu0 0.0
    %655 = vmatpush.msra.mxu0 0.0
    %656 = vmatpush.msra.mxu0 0.0
    %657 = vmatpush.msra.mxu0 0.0
    %658 = vmatpush.msra.mxu0 %v419
    %659 = vmatpush.msra.mxu0 %v417
    %660 = vmatpush.msra.mxu0 %v415
    %661 = vmatpush.msra.mxu0 %v413
    %662 = vmatpush.msra.mxu0 %v411
    %663 = vmatpush.msra.mxu0 %v409
    %664 = vmatpush.msra.mxu0 %v407
    %665 = vmatpush.msra.mxu0 %v405
    %666 = vmatmul.f32.gmra.mxu0 %v504
    %v667 = vpop.f32.mrf.mxu0
    %v668 = vadd.f32 %v627, %v667
    %669 = vmatmul.f32.gmra.mxu0 %v507
    %v670 = vpop.f32.mrf.mxu0
    %v671 = vadd.f32 %v630, %v670
    %672 = vmatmul.f32.gmra.mxu0 %v510
    %v673 = vpop.f32.mrf.mxu0
    %v674 = vadd.f32 %v633, %v673
    %675 = vmatmul.f32.gmra.mxu0 %v513
    %v676 = vpop.f32.mrf.mxu0
    %v677 = vadd.f32 %v636, %v676
    %678 = vmatmul.f32.gmra.mxu0 %v516
    %v679 = vpop.f32.mrf.mxu0
    %v680 = vadd.f32 %v639, %v679
    %681 = vmatmul.f32.gmra.mxu0 %v519
    %v682 = vpop.f32.mrf.mxu0
    %v683 = vadd.f32 %v642, %v682
    %684 = vmatmul.f32.gmra.mxu0 %v522
    %v685 = vpop.f32.mrf.mxu0
    %v686 = vadd.f32 %v645, %v685
    %687 = vmatmul.f32.gmra.mxu0 %v525
    %v688 = vpop.f32.mrf.mxu0
    %v689 = vadd.f32 %v648, %v688
    %690 = vdwg.mxu0
    %v692 = vsel %vm502, %v339, 0
    %v695 = vsel %vm502, %v342, 0
    %v698 = vsel %vm502, %v345, 0
    %v701 = vsel %vm502, %v348, 0
    %v704 = vsel %vm502, %v351, 0
    %v707 = vsel %vm502, %v354, 0
    %v710 = vsel %vm502, %v357, 0
    %v713 = vsel %vm502, %v360, 0
    %715 = vmatpush.msra.mxu0 %v262
    %716 = vmatpush.msra.mxu0 %v260
    %717 = vmatpush.msra.mxu0 %v258
    %718 = vmatpush.msra.mxu0 %v256
    %719 = vmatpush.msra.mxu0 %v254
    %720 = vmatpush.msra.mxu0 %v252
    %721 = vmatpush.msra.mxu0 %v250
    %722 = vmatpush.msra.mxu0 %v248
    %723 = vmatpush.msra.mxu0 %v246
    %724 = vmatpush.msra.mxu0 %v244
    %725 = vmatpush.msra.mxu0 %v242
    %726 = vmatpush.msra.mxu0 %v240
    %727 = vmatpush.msra.mxu0 %v238
    %728 = vmatpush.msra.mxu0 %v236
    %729 = vmatpush.msra.mxu0 %v234
    %730 = vmatpush.msra.mxu0 %v232
    %731 = vmatmul.f32.gmra.mxu0 %v298
    %v732 = vpop.f32.mrf.mxu0
    %v733 = vadd.f32 %v586, %v732
    %734 = vmatmul.f32.gmra.mxu0 %v301
    %v735 = vpop.f32.mrf.mxu0
    %v736 = vadd.f32 %v589, %v735
    %737 = vmatmul.f32.gmra.mxu0 %v304
    %v738 = vpop.f32.mrf.mxu0
    %v739 = vadd.f32 %v592, %v738
    %740 = vmatmul.f32.gmra.mxu0 %v307
    %v741 = vpop.f32.mrf.mxu0
    %v742 = vadd.f32 %v595, %v741
    %743 = vmatmul.f32.gmra.mxu0 %v310
    %v744 = vpop.f32.mrf.mxu0
    %v745 = vadd.f32 %v598, %v744
    %746 = vmatmul.f32.gmra.mxu0 %v313
    %v747 = vpop.f32.mrf.mxu0
    %v748 = vadd.f32 %v601, %v747
    %749 = vmatmul.f32.gmra.mxu0 %v316
    %v750 = vpop.f32.mrf.mxu0
    %v751 = vadd.f32 %v604, %v750
    %752 = vmatmul.f32.gmra.mxu0 %v319
    %v753 = vpop.f32.mrf.mxu0
    %v754 = vadd.f32 %v607, %v753
    %755 = vdwg.mxu0
    %756 = vmatpush.msra.mxu0 0.0
    %757 = vmatpush.msra.mxu0 0.0
    %758 = vmatpush.msra.mxu0 0.0
    %759 = vmatpush.msra.mxu0 0.0
    %760 = vmatpush.msra.mxu0 0.0
    %761 = vmatpush.msra.mxu0 0.0
    %762 = vmatpush.msra.mxu0 0.0
    %763 = vmatpush.msra.mxu0 0.0
    %764 = vmatpush.msra.mxu0 %v278
    %765 = vmatpush.msra.mxu0 %v276
    %766 = vmatpush.msra.mxu0 %v274
    %767 = vmatpush.msra.mxu0 %v272
    %768 = vmatpush.msra.mxu0 %v270
    %769 = vmatpush.msra.mxu0 %v268
    %770 = vmatpush.msra.mxu0 %v266
    %771 = vmatpush.msra.mxu0 %v264
    %772 = vmatmul.f32.gmra.mxu0 %v692
    %v773 = vpop.f32.mrf.mxu0
    %v774 = vadd.f32 %v733, %v773
    %775 = vmatmul.f32.gmra.mxu0 %v695
    %v776 = vpop.f32.mrf.mxu0
    %v777 = vadd.f32 %v736, %v776
    %778 = vmatmul.f32.gmra.mxu0 %v698
    %v779 = vpop.f32.mrf.mxu0
    %v780 = vadd.f32 %v739, %v779
    %781 = vmatmul.f32.gmra.mxu0 %v701
    %v782 = vpop.f32.mrf.mxu0
    %v783 = vadd.f32 %v742, %v782
    %784 = vmatmul.f32.gmra.mxu0 %v704
    %v785 = vpop.f32.mrf.mxu0
    %v786 = vadd.f32 %v745, %v785
    %787 = vmatmul.f32.gmra.mxu0 %v707
    %v788 = vpop.f32.mrf.mxu0
    %v789 = vadd.f32 %v748, %v788
    %790 = vmatmul.f32.gmra.mxu0 %v710
    %v791 = vpop.f32.mrf.mxu0
    %v792 = vadd.f32 %v751, %v791
    %793 = vmatmul.f32.gmra.mxu0 %v713
    %v794 = vpop.f32.mrf.mxu0
    %v795 = vadd.f32 %v754, %v794
    %796 = vdwg.mxu0
    %797 = vmatpush.msra.mxu0 %v263
    %798 = vmatpush.msra.mxu0 %v261
    %799 = vmatpush.msra.mxu0 %v259
    %800 = vmatpush.msra.mxu0 %v257
    %801 = vmatpush.msra.mxu0 %v255
    %802 = vmatpush.msra.mxu0 %v253
    %803 = vmatpush.msra.mxu0 %v251
    %804 = vmatpush.msra.mxu0 %v249
    %805 = vmatpush.msra.mxu0 %v247
    %806 = vmatpush.msra.mxu0 %v245
    %807 = vmatpush.msra.mxu0 %v243
    %808 = vmatpush.msra.mxu0 %v241
    %809 = vmatpush.msra.mxu0 %v239
    %810 = vmatpush.msra.mxu0 %v237
    %811 = vmatpush.msra.mxu0 %v235
    %812 = vmatpush.msra.mxu0 %v233
    %813 = vmatmul.f32.gmra.mxu0 %v298
    %v814 = vpop.f32.mrf.mxu0
    %v815 = vadd.f32 %v668, %v814
    %816 = vmatmul.f32.gmra.mxu0 %v301
    %v817 = vpop.f32.mrf.mxu0
    %v818 = vadd.f32 %v671, %v817
    %819 = vmatmul.f32.gmra.mxu0 %v304
    %v820 = vpop.f32.mrf.mxu0
    %v821 = vadd.f32 %v674, %v820
    %822 = vmatmul.f32.gmra.mxu0 %v307
    %v823 = vpop.f32.mrf.mxu0
    %v824 = vadd.f32 %v677, %v823
    %825 = vmatmul.f32.gmra.mxu0 %v310
    %v826 = vpop.f32.mrf.mxu0
    %v827 = vadd.f32 %v680, %v826
    %828 = vmatmul.f32.gmra.mxu0 %v313
    %v829 = vpop.f32.mrf.mxu0
    %v830 = vadd.f32 %v683, %v829
    %831 = vmatmul.f32.gmra.mxu0 %v316
    %v832 = vpop.f32.mrf.mxu0
    %v833 = vadd.f32 %v686, %v832
    %834 = vmatmul.f32.gmra.mxu0 %v319
    %v835 = vpop.f32.mrf.mxu0
    %v836 = vadd.f32 %v689, %v835
    %837 = vdwg.mxu0
    %838 = vmatpush.msra.mxu0 0.0
    %839 = vmatpush.msra.mxu0 0.0
    %840 = vmatpush.msra.mxu0 0.0
    %841 = vmatpush.msra.mxu0 0.0
    %842 = vmatpush.msra.mxu0 0.0
    %843 = vmatpush.msra.mxu0 0.0
    %844 = vmatpush.msra.mxu0 0.0
    %845 = vmatpush.msra.mxu0 0.0
    %846 = vmatpush.msra.mxu0 %v279
    %847 = vmatpush.msra.mxu0 %v277
    %848 = vmatpush.msra.mxu0 %v275
    %849 = vmatpush.msra.mxu0 %v273
    %850 = vmatpush.msra.mxu0 %v271
    %851 = vmatpush.msra.mxu0 %v269
    %852 = vmatpush.msra.mxu0 %v267
    %853 = vmatpush.msra.mxu0 %v265
    %854 = vmatmul.f32.gmra.mxu0 %v692
    %v855 = vpop.f32.mrf.mxu0
    %v856 = vadd.f32 %v815, %v855
    %857 = vmatmul.f32.gmra.mxu0 %v695
    %v858 = vpop.f32.mrf.mxu0
    %v859 = vadd.f32 %v818, %v858
    %860 = vmatmul.f32.gmra.mxu0 %v698
    %v861 = vpop.f32.mrf.mxu0
    %v862 = vadd.f32 %v821, %v861
    %863 = vmatmul.f32.gmra.mxu0 %v701
    %v864 = vpop.f32.mrf.mxu0
    %v865 = vadd.f32 %v824, %v864
    %866 = vmatmul.f32.gmra.mxu0 %v704
    %v867 = vpop.f32.mrf.mxu0
    %v868 = vadd.f32 %v827, %v867
    %869 = vmatmul.f32.gmra.mxu0 %v707
    %v870 = vpop.f32.mrf.mxu0
    %v871 = vadd.f32 %v830, %v870
    %872 = vmatmul.f32.gmra.mxu0 %v710
    %v873 = vpop.f32.mrf.mxu0
    %v874 = vadd.f32 %v833, %v873
    %875 = vmatmul.f32.gmra.mxu0 %v713
    %v876 = vpop.f32.mrf.mxu0
    %v877 = vadd.f32 %v836, %v876
    %878 = vdwg.mxu0
    %s879 = scalar_lea.vmem %s1, 128
    %v880 = vld [vmem:[%s879] sm:$0xff]
    %v881 = vld [vmem:[%s879 + $0x8] sm:$0xff]
    %v882 = vld [vmem:[%s879 + $0x10] sm:$0xff]
    %v883 = vld [vmem:[%s879 + $0x18] sm:$0xff]
    %v884 = vld [vmem:[%s879 + $0x20] sm:$0xff]
    %v885 = vld [vmem:[%s879 + $0x28] sm:$0xff]
    %v886 = vld [vmem:[%s879 + $0x30] sm:$0xff]
    %v887 = vld [vmem:[%s879 + $0x38] sm:$0xff]
    %s888 = scalar_lea.vmem %s2, 768
    %v889 = vld [vmem:[%s888] sm:$0xff]
    %v890 = vld [vmem:[%s888 + $0x8] sm:$0xff]
    %v891 = vld [vmem:[%s888 + $0x10] sm:$0xff]
    %v892 = vld [vmem:[%s888 + $0x18] sm:$0xff]
    %v893 = vld [vmem:[%s888 + $0x20] sm:$0xff]
    %v894 = vld [vmem:[%s888 + $0x28] sm:$0xff]
    %v895 = vld [vmem:[%s888 + $0x30] sm:$0xff]
    %v896 = vld [vmem:[%s888 + $0x38] sm:$0xff]
    %v897 = vld [vmem:[%s888 + $0x40] sm:$0xff]
    %v898 = vld [vmem:[%s888 + $0x48] sm:$0xff]
    %v899 = vld [vmem:[%s888 + $0x50] sm:$0xff]
    %v900 = vld [vmem:[%s888 + $0x58] sm:$0xff]
    %v901 = vld [vmem:[%s888 + $0x60] sm:$0xff]
    %v902 = vld [vmem:[%s888 + $0x68] sm:$0xff]
    %v903 = vld [vmem:[%s888 + $0x70] sm:$0xff]
    %v904 = vld [vmem:[%s888 + $0x78] sm:$0xff]
    %v905 = vld [vmem:[%s888 + $0x80] sm:$0xff]
    %v906 = vld [vmem:[%s888 + $0x88] sm:$0xff]
    %v907 = vld [vmem:[%s888 + $0x90] sm:$0xff]
    %v908 = vld [vmem:[%s888 + $0x98] sm:$0xff]
    %v909 = vld [vmem:[%s888 + $0xa0] sm:$0xff]
    %v910 = vld [vmem:[%s888 + $0xa8] sm:$0xff]
    %v911 = vld [vmem:[%s888 + $0xb0] sm:$0xff]
    %v912 = vld [vmem:[%s888 + $0xb8] sm:$0xff]
    %v913 = vld [vmem:[%s888 + $0xc0] sm:$0xff]
    %v914 = vld [vmem:[%s888 + $0xc8] sm:$0xff]
    %v915 = vld [vmem:[%s888 + $0xd0] sm:$0xff]
    %v916 = vld [vmem:[%s888 + $0xd8] sm:$0xff]
    %v917 = vld [vmem:[%s888 + $0xe0] sm:$0xff]
    %v918 = vld [vmem:[%s888 + $0xe8] sm:$0xff]
    %v919 = vld [vmem:[%s888 + $0xf0] sm:$0xff]
    %v920 = vld [vmem:[%s888 + $0xf8] sm:$0xff]
    %v921 = vld [vmem:[%s888 + $0x100] sm:$0xff]
    %v922 = vld [vmem:[%s888 + $0x108] sm:$0xff]
    %v923 = vld [vmem:[%s888 + $0x110] sm:$0xff]
    %v924 = vld [vmem:[%s888 + $0x118] sm:$0xff]
    %v925 = vld [vmem:[%s888 + $0x120] sm:$0xff]
    %v926 = vld [vmem:[%s888 + $0x128] sm:$0xff]
    %v927 = vld [vmem:[%s888 + $0x130] sm:$0xff]
    %v928 = vld [vmem:[%s888 + $0x138] sm:$0xff]
    %v929 = vld [vmem:[%s888 + $0x140] sm:$0xff]
    %v930 = vld [vmem:[%s888 + $0x148] sm:$0xff]
    %v931 = vld [vmem:[%s888 + $0x150] sm:$0xff]
    %v932 = vld [vmem:[%s888 + $0x158] sm:$0xff]
    %v933 = vld [vmem:[%s888 + $0x160] sm:$0xff]
    %v934 = vld [vmem:[%s888 + $0x168] sm:$0xff]
    %v935 = vld [vmem:[%s888 + $0x170] sm:$0xff]
    %v936 = vld [vmem:[%s888 + $0x178] sm:$0xff]
    %937 = vmatpush.msra.mxu0 %v222
    %938 = vmatpush.msra.mxu0 %v220
    %939 = vmatpush.msra.mxu0 %v218
    %940 = vmatpush.msra.mxu0 %v216
    %941 = vmatpush.msra.mxu0 %v214
    %942 = vmatpush.msra.mxu0 %v212
    %943 = vmatpush.msra.mxu0 %v210
    %944 = vmatpush.msra.mxu0 %v208
    %945 = vmatpush.msra.mxu0 %v206
    %946 = vmatpush.msra.mxu0 %v204
    %947 = vmatpush.msra.mxu0 %v202
    %948 = vmatpush.msra.mxu0 %v200
    %949 = vmatpush.msra.mxu0 %v198
    %950 = vmatpush.msra.mxu0 %v196
    %951 = vmatpush.msra.mxu0 %v194
    %952 = vmatpush.msra.mxu0 %v192
    %953 = vmatmul.f32.gmra.mxu0 %v880
    %v954 = vpop.f32.mrf.mxu0
    %v955 = vadd.f32 0.0, %v954
    %956 = vmatmul.f32.gmra.mxu0 %v881
    %v957 = vpop.f32.mrf.mxu0
    %v958 = vadd.f32 0.0, %v957
    %959 = vmatmul.f32.gmra.mxu0 %v882
    %v960 = vpop.f32.mrf.mxu0
    %v961 = vadd.f32 0.0, %v960
    %962 = vmatmul.f32.gmra.mxu0 %v883
    %v963 = vpop.f32.mrf.mxu0
    %v964 = vadd.f32 0.0, %v963
    %965 = vmatmul.f32.gmra.mxu0 %v884
    %v966 = vpop.f32.mrf.mxu0
    %v967 = vadd.f32 0.0, %v966
    %968 = vmatmul.f32.gmra.mxu0 %v885
    %v969 = vpop.f32.mrf.mxu0
    %v970 = vadd.f32 0.0, %v969
    %971 = vmatmul.f32.gmra.mxu0 %v886
    %v972 = vpop.f32.mrf.mxu0
    %v973 = vadd.f32 0.0, %v972
    %974 = vmatmul.f32.gmra.mxu0 %v887
    %v975 = vpop.f32.mrf.mxu0
    %v976 = vadd.f32 0.0, %v975
    %977 = vdwg.mxu0
    %978 = vmatpush.msra.mxu0 %v223
    %979 = vmatpush.msra.mxu0 %v221
    %980 = vmatpush.msra.mxu0 %v219
    %981 = vmatpush.msra.mxu0 %v217
    %982 = vmatpush.msra.mxu0 %v215
    %983 = vmatpush.msra.mxu0 %v213
    %984 = vmatpush.msra.mxu0 %v211
    %985 = vmatpush.msra.mxu0 %v209
    %986 = vmatpush.msra.mxu0 %v207
    %987 = vmatpush.msra.mxu0 %v205
    %988 = vmatpush.msra.mxu0 %v203
    %989 = vmatpush.msra.mxu0 %v201
    %990 = vmatpush.msra.mxu0 %v199
    %991 = vmatpush.msra.mxu0 %v197
    %992 = vmatpush.msra.mxu0 %v195
    %993 = vmatpush.msra.mxu0 %v193
    %994 = vmatmul.f32.gmra.mxu0 %v880
    %v995 = vpop.f32.mrf.mxu0
    %v996 = vadd.f32 0.0, %v995
    %997 = vmatmul.f32.gmra.mxu0 %v881
    %v998 = vpop.f32.mrf.mxu0
    %v999 = vadd.f32 0.0, %v998
    %1000 = vmatmul.f32.gmra.mxu0 %v882
    %v1001 = vpop.f32.mrf.mxu0
    %v1002 = vadd.f32 0.0, %v1001
    %1003 = vmatmul.f32.gmra.mxu0 %v883
    %v1004 = vpop.f32.mrf.mxu0
    %v1005 = vadd.f32 0.0, %v1004
    %1006 = vmatmul.f32.gmra.mxu0 %v884
    %v1007 = vpop.f32.mrf.mxu0
    %v1008 = vadd.f32 0.0, %v1007
    %1009 = vmatmul.f32.gmra.mxu0 %v885
    %v1010 = vpop.f32.mrf.mxu0
    %v1011 = vadd.f32 0.0, %v1010
    %1012 = vmatmul.f32.gmra.mxu0 %v886
    %v1013 = vpop.f32.mrf.mxu0
    %v1014 = vadd.f32 0.0, %v1013
    %1015 = vmatmul.f32.gmra.mxu0 %v887
    %v1016 = vpop.f32.mrf.mxu0
    %v1017 = vadd.f32 0.0, %v1016
    %1018 = vdwg.mxu0
    %v1020 = vsel %vm502, %v996, 0
    %v1023 = vsel %vm502, %v999, 0
    %v1026 = vsel %vm502, %v1002, 0
    %v1029 = vsel %vm502, %v1005, 0
    %v1032 = vsel %vm502, %v1008, 0
    %v1035 = vsel %vm502, %v1011, 0
    %v1038 = vsel %vm502, %v1014, 0
    %v1041 = vsel %vm502, %v1017, 0
    %1043 = vmatpush.msra.mxu0 %v919
    %1044 = vmatpush.msra.mxu0 %v917
    %1045 = vmatpush.msra.mxu0 %v915
    %1046 = vmatpush.msra.mxu0 %v913
    %1047 = vmatpush.msra.mxu0 %v911
    %1048 = vmatpush.msra.mxu0 %v909
    %1049 = vmatpush.msra.mxu0 %v907
    %1050 = vmatpush.msra.mxu0 %v905
    %1051 = vmatpush.msra.mxu0 %v903
    %1052 = vmatpush.msra.mxu0 %v901
    %1053 = vmatpush.msra.mxu0 %v899
    %1054 = vmatpush.msra.mxu0 %v897
    %1055 = vmatpush.msra.mxu0 %v895
    %1056 = vmatpush.msra.mxu0 %v893
    %1057 = vmatpush.msra.mxu0 %v891
    %1058 = vmatpush.msra.mxu0 %v889
    %1059 = vmatmul.f32.gmra.mxu0 %v955
    %v1060 = vpop.f32.mrf.mxu0
    %v1061 = vadd.f32 0.0, %v1060
    %1062 = vmatmul.f32.gmra.mxu0 %v958
    %v1063 = vpop.f32.mrf.mxu0
    %v1064 = vadd.f32 0.0, %v1063
    %1065 = vmatmul.f32.gmra.mxu0 %v961
    %v1066 = vpop.f32.mrf.mxu0
    %v1067 = vadd.f32 0.0, %v1066
    %1068 = vmatmul.f32.gmra.mxu0 %v964
    %v1069 = vpop.f32.mrf.mxu0
    %v1070 = vadd.f32 0.0, %v1069
    %1071 = vmatmul.f32.gmra.mxu0 %v967
    %v1072 = vpop.f32.mrf.mxu0
    %v1073 = vadd.f32 0.0, %v1072
    %1074 = vmatmul.f32.gmra.mxu0 %v970
    %v1075 = vpop.f32.mrf.mxu0
    %v1076 = vadd.f32 0.0, %v1075
    %1077 = vmatmul.f32.gmra.mxu0 %v973
    %v1078 = vpop.f32.mrf.mxu0
    %v1079 = vadd.f32 0.0, %v1078
    %1080 = vmatmul.f32.gmra.mxu0 %v976
    %v1081 = vpop.f32.mrf.mxu0
    %v1082 = vadd.f32 0.0, %v1081
    %1083 = vdwg.mxu0
    %1084 = vmatpush.msra.mxu0 0.0
    %1085 = vmatpush.msra.mxu0 0.0
    %1086 = vmatpush.msra.mxu0 0.0
    %1087 = vmatpush.msra.mxu0 0.0
    %1088 = vmatpush.msra.mxu0 0.0
    %1089 = vmatpush.msra.mxu0 0.0
    %1090 = vmatpush.msra.mxu0 0.0
    %1091 = vmatpush.msra.mxu0 0.0
    %1092 = vmatpush.msra.mxu0 %v935
    %1093 = vmatpush.msra.mxu0 %v933
    %1094 = vmatpush.msra.mxu0 %v931
    %1095 = vmatpush.msra.mxu0 %v929
    %1096 = vmatpush.msra.mxu0 %v927
    %1097 = vmatpush.msra.mxu0 %v925
    %1098 = vmatpush.msra.mxu0 %v923
    %1099 = vmatpush.msra.mxu0 %v921
    %1100 = vmatmul.f32.gmra.mxu0 %v1020
    %v1101 = vpop.f32.mrf.mxu0
    %v1102 = vadd.f32 %v1061, %v1101
    %1103 = vmatmul.f32.gmra.mxu0 %v1023
    %v1104 = vpop.f32.mrf.mxu0
    %v1105 = vadd.f32 %v1064, %v1104
    %1106 = vmatmul.f32.gmra.mxu0 %v1026
    %v1107 = vpop.f32.mrf.mxu0
    %v1108 = vadd.f32 %v1067, %v1107
    %1109 = vmatmul.f32.gmra.mxu0 %v1029
    %v1110 = vpop.f32.mrf.mxu0
    %v1111 = vadd.f32 %v1070, %v1110
    %1112 = vmatmul.f32.gmra.mxu0 %v1032
    %v1113 = vpop.f32.mrf.mxu0
    %v1114 = vadd.f32 %v1073, %v1113
    %1115 = vmatmul.f32.gmra.mxu0 %v1035
    %v1116 = vpop.f32.mrf.mxu0
    %v1117 = vadd.f32 %v1076, %v1116
    %1118 = vmatmul.f32.gmra.mxu0 %v1038
    %v1119 = vpop.f32.mrf.mxu0
    %v1120 = vadd.f32 %v1079, %v1119
    %1121 = vmatmul.f32.gmra.mxu0 %v1041
    %v1122 = vpop.f32.mrf.mxu0
    %v1123 = vadd.f32 %v1082, %v1122
    %1124 = vdwg.mxu0
    %1125 = vmatpush.msra.mxu0 %v920
    %1126 = vmatpush.msra.mxu0 %v918
    %1127 = vmatpush.msra.mxu0 %v916
    %1128 = vmatpush.msra.mxu0 %v914
    %1129 = vmatpush.msra.mxu0 %v912
    %1130 = vmatpush.msra.mxu0 %v910
    %1131 = vmatpush.msra.mxu0 %v908
    %1132 = vmatpush.msra.mxu0 %v906
    %1133 = vmatpush.msra.mxu0 %v904
    %1134 = vmatpush.msra.mxu0 %v902
    %1135 = vmatpush.msra.mxu0 %v900
    %1136 = vmatpush.msra.mxu0 %v898
    %1137 = vmatpush.msra.mxu0 %v896
    %1138 = vmatpush.msra.mxu0 %v894
    %1139 = vmatpush.msra.mxu0 %v892
    %1140 = vmatpush.msra.mxu0 %v890
    %1141 = vmatmul.f32.gmra.mxu0 %v955
    %v1142 = vpop.f32.mrf.mxu0
    %v1143 = vadd.f32 0.0, %v1142
    %1144 = vmatmul.f32.gmra.mxu0 %v958
    %v1145 = vpop.f32.mrf.mxu0
    %v1146 = vadd.f32 0.0, %v1145
    %1147 = vmatmul.f32.gmra.mxu0 %v961
    %v1148 = vpop.f32.mrf.mxu0
    %v1149 = vadd.f32 0.0, %v1148
    %1150 = vmatmul.f32.gmra.mxu0 %v964
    %v1151 = vpop.f32.mrf.mxu0
    %v1152 = vadd.f32 0.0, %v1151
    %1153 = vmatmul.f32.gmra.mxu0 %v967
    %v1154 = vpop.f32.mrf.mxu0
    %v1155 = vadd.f32 0.0, %v1154
    %1156 = vmatmul.f32.gmra.mxu0 %v970
    %v1157 = vpop.f32.mrf.mxu0
    %v1158 = vadd.f32 0.0, %v1157
    %1159 = vmatmul.f32.gmra.mxu0 %v973
    %v1160 = vpop.f32.mrf.mxu0
    %v1161 = vadd.f32 0.0, %v1160
    %1162 = vmatmul.f32.gmra.mxu0 %v976
    %v1163 = vpop.f32.mrf.mxu0
    %v1164 = vadd.f32 0.0, %v1163
    %1165 = vdwg.mxu0
    %1166 = vmatpush.msra.mxu0 0.0
    %1167 = vmatpush.msra.mxu0 0.0
    %1168 = vmatpush.msra.mxu0 0.0
    %1169 = vmatpush.msra.mxu0 0.0
    %1170 = vmatpush.msra.mxu0 0.0
    %1171 = vmatpush.msra.mxu0 0.0
    %1172 = vmatpush.msra.mxu0 0.0
    %1173 = vmatpush.msra.mxu0 0.0
    %1174 = vmatpush.msra.mxu0 %v936
    %1175 = vmatpush.msra.mxu0 %v934
    %1176 = vmatpush.msra.mxu0 %v932
    %1177 = vmatpush.msra.mxu0 %v930
    %1178 = vmatpush.msra.mxu0 %v928
    %1179 = vmatpush.msra.mxu0 %v926
    %1180 = vmatpush.msra.mxu0 %v924
    %1181 = vmatpush.msra.mxu0 %v922
    %1182 = vmatmul.f32.gmra.mxu0 %v1020
    %v1183 = vpop.f32.mrf.mxu0
    %v1184 = vadd.f32 %v1143, %v1183
    %1185 = vmatmul.f32.gmra.mxu0 %v1023
    %v1186 = vpop.f32.mrf.mxu0
    %v1187 = vadd.f32 %v1146, %v1186
    %1188 = vmatmul.f32.gmra.mxu0 %v1026
    %v1189 = vpop.f32.mrf.mxu0
    %v1190 = vadd.f32 %v1149, %v1189
    %1191 = vmatmul.f32.gmra.mxu0 %v1029
    %v1192 = vpop.f32.mrf.mxu0
    %v1193 = vadd.f32 %v1152, %v1192
    %1194 = vmatmul.f32.gmra.mxu0 %v1032
    %v1195 = vpop.f32.mrf.mxu0
    %v1196 = vadd.f32 %v1155, %v1195
    %1197 = vmatmul.f32.gmra.mxu0 %v1035
    %v1198 = vpop.f32.mrf.mxu0
    %v1199 = vadd.f32 %v1158, %v1198
    %1200 = vmatmul.f32.gmra.mxu0 %v1038
    %v1201 = vpop.f32.mrf.mxu0
    %v1202 = vadd.f32 %v1161, %v1201
    %1203 = vmatmul.f32.gmra.mxu0 %v1041
    %v1204 = vpop.f32.mrf.mxu0
    %v1205 = vadd.f32 %v1164, %v1204
    %1206 = vdwg.mxu0
    %v1207 = vadd.f32 %v774, %v1102
    %v1208 = vadd.f32 %v856, %v1184
    %v1209 = vadd.f32 %v777, %v1105
    %v1210 = vadd.f32 %v859, %v1187
    %v1211 = vadd.f32 %v780, %v1108
    %v1212 = vadd.f32 %v862, %v1190
    %v1213 = vadd.f32 %v783, %v1111
    %v1214 = vadd.f32 %v865, %v1193
    %v1215 = vadd.f32 %v786, %v1114
    %v1216 = vadd.f32 %v868, %v1196
    %v1217 = vadd.f32 %v789, %v1117
    %v1218 = vadd.f32 %v871, %v1199
    %v1219 = vadd.f32 %v792, %v1120
    %v1220 = vadd.f32 %v874, %v1202
    %v1221 = vadd.f32 %v795, %v1123
    %v1222 = vadd.f32 %v877, %v1205
    %s1223 = scalar_lea.vmem %s1, 192
    %v1224 = vld [vmem:[%s1223] sm:$0xff]
    %v1225 = vld [vmem:[%s1223 + $0x8] sm:$0xff]
    %v1226 = vld [vmem:[%s1223 + $0x10] sm:$0xff]
    %v1227 = vld [vmem:[%s1223 + $0x18] sm:$0xff]
    %v1228 = vld [vmem:[%s1223 + $0x20] sm:$0xff]
    %v1229 = vld [vmem:[%s1223 + $0x28] sm:$0xff]
    %v1230 = vld [vmem:[%s1223 + $0x30] sm:$0xff]
    %v1231 = vld [vmem:[%s1223 + $0x38] sm:$0xff]
    %s1232 = scalar_lea.vmem %s2, 1152
    %v1233 = vld [vmem:[%s1232] sm:$0xff]
    %v1234 = vld [vmem:[%s1232 + $0x8] sm:$0xff]
    %v1235 = vld [vmem:[%s1232 + $0x10] sm:$0xff]
    %v1236 = vld [vmem:[%s1232 + $0x18] sm:$0xff]
    %v1237 = vld [vmem:[%s1232 + $0x20] sm:$0xff]
    %v1238 = vld [vmem:[%s1232 + $0x28] sm:$0xff]
    %v1239 = vld [vmem:[%s1232 + $0x30] sm:$0xff]
    %v1240 = vld [vmem:[%s1232 + $0x38] sm:$0xff]
    %v1241 = vld [vmem:[%s1232 + $0x40] sm:$0xff]
    %v1242 = vld [vmem:[%s1232 + $0x48] sm:$0xff]
    %v1243 = vld [vmem:[%s1232 + $0x50] sm:$0xff]
    %v1244 = vld [vmem:[%s1232 + $0x58] sm:$0xff]
    %v1245 = vld [vmem:[%s1232 + $0x60] sm:$0xff]
    %v1246 = vld [vmem:[%s1232 + $0x68] sm:$0xff]
    %v1247 = vld [vmem:[%s1232 + $0x70] sm:$0xff]
    %v1248 = vld [vmem:[%s1232 + $0x78] sm:$0xff]
    %v1249 = vld [vmem:[%s1232 + $0x80] sm:$0xff]
    %v1250 = vld [vmem:[%s1232 + $0x88] sm:$0xff]
    %v1251 = vld [vmem:[%s1232 + $0x90] sm:$0xff]
    %v1252 = vld [vmem:[%s1232 + $0x98] sm:$0xff]
    %v1253 = vld [vmem:[%s1232 + $0xa0] sm:$0xff]
    %v1254 = vld [vmem:[%s1232 + $0xa8] sm:$0xff]
    %v1255 = vld [vmem:[%s1232 + $0xb0] sm:$0xff]
    %v1256 = vld [vmem:[%s1232 + $0xb8] sm:$0xff]
    %v1257 = vld [vmem:[%s1232 + $0xc0] sm:$0xff]
    %v1258 = vld [vmem:[%s1232 + $0xc8] sm:$0xff]
    %v1259 = vld [vmem:[%s1232 + $0xd0] sm:$0xff]
    %v1260 = vld [vmem:[%s1232 + $0xd8] sm:$0xff]
    %v1261 = vld [vmem:[%s1232 + $0xe0] sm:$0xff]
    %v1262 = vld [vmem:[%s1232 + $0xe8] sm:$0xff]
    %v1263 = vld [vmem:[%s1232 + $0xf0] sm:$0xff]
    %v1264 = vld [vmem:[%s1232 + $0xf8] sm:$0xff]
    %v1265 = vld [vmem:[%s1232 + $0x100] sm:$0xff]
    %v1266 = vld [vmem:[%s1232 + $0x108] sm:$0xff]
    %v1267 = vld [vmem:[%s1232 + $0x110] sm:$0xff]
    %v1268 = vld [vmem:[%s1232 + $0x118] sm:$0xff]
    %v1269 = vld [vmem:[%s1232 + $0x120] sm:$0xff]
    %v1270 = vld [vmem:[%s1232 + $0x128] sm:$0xff]
    %v1271 = vld [vmem:[%s1232 + $0x130] sm:$0xff]
    %v1272 = vld [vmem:[%s1232 + $0x138] sm:$0xff]
    %v1273 = vld [vmem:[%s1232 + $0x140] sm:$0xff]
    %v1274 = vld [vmem:[%s1232 + $0x148] sm:$0xff]
    %v1275 = vld [vmem:[%s1232 + $0x150] sm:$0xff]
    %v1276 = vld [vmem:[%s1232 + $0x158] sm:$0xff]
    %v1277 = vld [vmem:[%s1232 + $0x160] sm:$0xff]
    %v1278 = vld [vmem:[%s1232 + $0x168] sm:$0xff]
    %v1279 = vld [vmem:[%s1232 + $0x170] sm:$0xff]
    %v1280 = vld [vmem:[%s1232 + $0x178] sm:$0xff]
    %1281 = vmatpush.msra.mxu0 %v222
    %1282 = vmatpush.msra.mxu0 %v220
    %1283 = vmatpush.msra.mxu0 %v218
    %1284 = vmatpush.msra.mxu0 %v216
    %1285 = vmatpush.msra.mxu0 %v214
    %1286 = vmatpush.msra.mxu0 %v212
    %1287 = vmatpush.msra.mxu0 %v210
    %1288 = vmatpush.msra.mxu0 %v208
    %1289 = vmatpush.msra.mxu0 %v206
    %1290 = vmatpush.msra.mxu0 %v204
    %1291 = vmatpush.msra.mxu0 %v202
    %1292 = vmatpush.msra.mxu0 %v200
    %1293 = vmatpush.msra.mxu0 %v198
    %1294 = vmatpush.msra.mxu0 %v196
    %1295 = vmatpush.msra.mxu0 %v194
    %1296 = vmatpush.msra.mxu0 %v192
    %1297 = vmatmul.f32.gmra.mxu0 %v1224
    %v1298 = vpop.f32.mrf.mxu0
    %v1299 = vadd.f32 0.0, %v1298
    %1300 = vmatmul.f32.gmra.mxu0 %v1225
    %v1301 = vpop.f32.mrf.mxu0
    %v1302 = vadd.f32 0.0, %v1301
    %1303 = vmatmul.f32.gmra.mxu0 %v1226
    %v1304 = vpop.f32.mrf.mxu0
    %v1305 = vadd.f32 0.0, %v1304
    %1306 = vmatmul.f32.gmra.mxu0 %v1227
    %v1307 = vpop.f32.mrf.mxu0
    %v1308 = vadd.f32 0.0, %v1307
    %1309 = vmatmul.f32.gmra.mxu0 %v1228
    %v1310 = vpop.f32.mrf.mxu0
    %v1311 = vadd.f32 0.0, %v1310
    %1312 = vmatmul.f32.gmra.mxu0 %v1229
    %v1313 = vpop.f32.mrf.mxu0
    %v1314 = vadd.f32 0.0, %v1313
    %1315 = vmatmul.f32.gmra.mxu0 %v1230
    %v1316 = vpop.f32.mrf.mxu0
    %v1317 = vadd.f32 0.0, %v1316
    %1318 = vmatmul.f32.gmra.mxu0 %v1231
    %v1319 = vpop.f32.mrf.mxu0
    %v1320 = vadd.f32 0.0, %v1319
    %1321 = vdwg.mxu0
    %1322 = vmatpush.msra.mxu0 %v223
    %1323 = vmatpush.msra.mxu0 %v221
    %1324 = vmatpush.msra.mxu0 %v219
    %1325 = vmatpush.msra.mxu0 %v217
    %1326 = vmatpush.msra.mxu0 %v215
    %1327 = vmatpush.msra.mxu0 %v213
    %1328 = vmatpush.msra.mxu0 %v211
    %1329 = vmatpush.msra.mxu0 %v209
    %1330 = vmatpush.msra.mxu0 %v207
    %1331 = vmatpush.msra.mxu0 %v205
    %1332 = vmatpush.msra.mxu0 %v203
    %1333 = vmatpush.msra.mxu0 %v201
    %1334 = vmatpush.msra.mxu0 %v199
    %1335 = vmatpush.msra.mxu0 %v197
    %1336 = vmatpush.msra.mxu0 %v195
    %1337 = vmatpush.msra.mxu0 %v193
    %1338 = vmatmul.f32.gmra.mxu0 %v1224
    %v1339 = vpop.f32.mrf.mxu0
    %v1340 = vadd.f32 0.0, %v1339
    %1341 = vmatmul.f32.gmra.mxu0 %v1225
    %v1342 = vpop.f32.mrf.mxu0
    %v1343 = vadd.f32 0.0, %v1342
    %1344 = vmatmul.f32.gmra.mxu0 %v1226
    %v1345 = vpop.f32.mrf.mxu0
    %v1346 = vadd.f32 0.0, %v1345
    %1347 = vmatmul.f32.gmra.mxu0 %v1227
    %v1348 = vpop.f32.mrf.mxu0
    %v1349 = vadd.f32 0.0, %v1348
    %1350 = vmatmul.f32.gmra.mxu0 %v1228
    %v1351 = vpop.f32.mrf.mxu0
    %v1352 = vadd.f32 0.0, %v1351
    %1353 = vmatmul.f32.gmra.mxu0 %v1229
    %v1354 = vpop.f32.mrf.mxu0
    %v1355 = vadd.f32 0.0, %v1354
    %1356 = vmatmul.f32.gmra.mxu0 %v1230
    %v1357 = vpop.f32.mrf.mxu0
    %v1358 = vadd.f32 0.0, %v1357
    %1359 = vmatmul.f32.gmra.mxu0 %v1231
    %v1360 = vpop.f32.mrf.mxu0
    %v1361 = vadd.f32 0.0, %v1360
    %1362 = vdwg.mxu0
    %v1364 = vsel %vm502, %v1340, 0
    %v1367 = vsel %vm502, %v1343, 0
    %v1370 = vsel %vm502, %v1346, 0
    %v1373 = vsel %vm502, %v1349, 0
    %v1376 = vsel %vm502, %v1352, 0
    %v1379 = vsel %vm502, %v1355, 0
    %v1382 = vsel %vm502, %v1358, 0
    %v1385 = vsel %vm502, %v1361, 0
    %1387 = vmatpush.msra.mxu0 %v1263
    %1388 = vmatpush.msra.mxu0 %v1261
    %1389 = vmatpush.msra.mxu0 %v1259
    %1390 = vmatpush.msra.mxu0 %v1257
    %1391 = vmatpush.msra.mxu0 %v1255
    %1392 = vmatpush.msra.mxu0 %v1253
    %1393 = vmatpush.msra.mxu0 %v1251
    %1394 = vmatpush.msra.mxu0 %v1249
    %1395 = vmatpush.msra.mxu0 %v1247
    %1396 = vmatpush.msra.mxu0 %v1245
    %1397 = vmatpush.msra.mxu0 %v1243
    %1398 = vmatpush.msra.mxu0 %v1241
    %1399 = vmatpush.msra.mxu0 %v1239
    %1400 = vmatpush.msra.mxu0 %v1237
    %1401 = vmatpush.msra.mxu0 %v1235
    %1402 = vmatpush.msra.mxu0 %v1233
    %1403 = vmatmul.f32.gmra.mxu0 %v1299
    %v1404 = vpop.f32.mrf.mxu0
    %v1405 = vadd.f32 0.0, %v1404
    %1406 = vmatmul.f32.gmra.mxu0 %v1302
    %v1407 = vpop.f32.mrf.mxu0
    %v1408 = vadd.f32 0.0, %v1407
    %1409 = vmatmul.f32.gmra.mxu0 %v1305
    %v1410 = vpop.f32.mrf.mxu0
    %v1411 = vadd.f32 0.0, %v1410
    %1412 = vmatmul.f32.gmra.mxu0 %v1308
    %v1413 = vpop.f32.mrf.mxu0
    %v1414 = vadd.f32 0.0, %v1413
    %1415 = vmatmul.f32.gmra.mxu0 %v1311
    %v1416 = vpop.f32.mrf.mxu0
    %v1417 = vadd.f32 0.0, %v1416
    %1418 = vmatmul.f32.gmra.mxu0 %v1314
    %v1419 = vpop.f32.mrf.mxu0
    %v1420 = vadd.f32 0.0, %v1419
    %1421 = vmatmul.f32.gmra.mxu0 %v1317
    %v1422 = vpop.f32.mrf.mxu0
    %v1423 = vadd.f32 0.0, %v1422
    %1424 = vmatmul.f32.gmra.mxu0 %v1320
    %v1425 = vpop.f32.mrf.mxu0
    %v1426 = vadd.f32 0.0, %v1425
    %1427 = vdwg.mxu0
    %1428 = vmatpush.msra.mxu0 0.0
    %1429 = vmatpush.msra.mxu0 0.0
    %1430 = vmatpush.msra.mxu0 0.0
    %1431 = vmatpush.msra.mxu0 0.0
    %1432 = vmatpush.msra.mxu0 0.0
    %1433 = vmatpush.msra.mxu0 0.0
    %1434 = vmatpush.msra.mxu0 0.0
    %1435 = vmatpush.msra.mxu0 0.0
    %1436 = vmatpush.msra.mxu0 %v1279
    %1437 = vmatpush.msra.mxu0 %v1277
    %1438 = vmatpush.msra.mxu0 %v1275
    %1439 = vmatpush.msra.mxu0 %v1273
    %1440 = vmatpush.msra.mxu0 %v1271
    %1441 = vmatpush.msra.mxu0 %v1269
    %1442 = vmatpush.msra.mxu0 %v1267
    %1443 = vmatpush.msra.mxu0 %v1265
    %1444 = vmatmul.f32.gmra.mxu0 %v1364
    %v1445 = vpop.f32.mrf.mxu0
    %v1446 = vadd.f32 %v1405, %v1445
    %1447 = vmatmul.f32.gmra.mxu0 %v1367
    %v1448 = vpop.f32.mrf.mxu0
    %v1449 = vadd.f32 %v1408, %v1448
    %1450 = vmatmul.f32.gmra.mxu0 %v1370
    %v1451 = vpop.f32.mrf.mxu0
    %v1452 = vadd.f32 %v1411, %v1451
    %1453 = vmatmul.f32.gmra.mxu0 %v1373
    %v1454 = vpop.f32.mrf.mxu0
    %v1455 = vadd.f32 %v1414, %v1454
    %1456 = vmatmul.f32.gmra.mxu0 %v1376
    %v1457 = vpop.f32.mrf.mxu0
    %v1458 = vadd.f32 %v1417, %v1457
    %1459 = vmatmul.f32.gmra.mxu0 %v1379
    %v1460 = vpop.f32.mrf.mxu0
    %v1461 = vadd.f32 %v1420, %v1460
    %1462 = vmatmul.f32.gmra.mxu0 %v1382
    %v1463 = vpop.f32.mrf.mxu0
    %v1464 = vadd.f32 %v1423, %v1463
    %1465 = vmatmul.f32.gmra.mxu0 %v1385
    %v1466 = vpop.f32.mrf.mxu0
    %v1467 = vadd.f32 %v1426, %v1466
    %1468 = vdwg.mxu0
    %1469 = vmatpush.msra.mxu0 %v1264
    %1470 = vmatpush.msra.mxu0 %v1262
    %1471 = vmatpush.msra.mxu0 %v1260
    %1472 = vmatpush.msra.mxu0 %v1258
    %1473 = vmatpush.msra.mxu0 %v1256
    %1474 = vmatpush.msra.mxu0 %v1254
    %1475 = vmatpush.msra.mxu0 %v1252
    %1476 = vmatpush.msra.mxu0 %v1250
    %1477 = vmatpush.msra.mxu0 %v1248
    %1478 = vmatpush.msra.mxu0 %v1246
    %1479 = vmatpush.msra.mxu0 %v1244
    %1480 = vmatpush.msra.mxu0 %v1242
    %1481 = vmatpush.msra.mxu0 %v1240
    %1482 = vmatpush.msra.mxu0 %v1238
    %1483 = vmatpush.msra.mxu0 %v1236
    %1484 = vmatpush.msra.mxu0 %v1234
    %1485 = vmatmul.f32.gmra.mxu0 %v1299
    %v1486 = vpop.f32.mrf.mxu0
    %v1487 = vadd.f32 0.0, %v1486
    %1488 = vmatmul.f32.gmra.mxu0 %v1302
    %v1489 = vpop.f32.mrf.mxu0
    %v1490 = vadd.f32 0.0, %v1489
    %1491 = vmatmul.f32.gmra.mxu0 %v1305
    %v1492 = vpop.f32.mrf.mxu0
    %v1493 = vadd.f32 0.0, %v1492
    %1494 = vmatmul.f32.gmra.mxu0 %v1308
    %v1495 = vpop.f32.mrf.mxu0
    %v1496 = vadd.f32 0.0, %v1495
    %1497 = vmatmul.f32.gmra.mxu0 %v1311
    %v1498 = vpop.f32.mrf.mxu0
    %v1499 = vadd.f32 0.0, %v1498
    %1500 = vmatmul.f32.gmra.mxu0 %v1314
    %v1501 = vpop.f32.mrf.mxu0
    %v1502 = vadd.f32 0.0, %v1501
    %1503 = vmatmul.f32.gmra.mxu0 %v1317
    %v1504 = vpop.f32.mrf.mxu0
    %v1505 = vadd.f32 0.0, %v1504
    %1506 = vmatmul.f32.gmra.mxu0 %v1320
    %v1507 = vpop.f32.mrf.mxu0
    %v1508 = vadd.f32 0.0, %v1507
    %1509 = vdwg.mxu0
    %1510 = vmatpush.msra.mxu0 0.0
    %1511 = vmatpush.msra.mxu0 0.0
    %1512 = vmatpush.msra.mxu0 0.0
    %1513 = vmatpush.msra.mxu0 0.0
    %1514 = vmatpush.msra.mxu0 0.0
    %1515 = vmatpush.msra.mxu0 0.0
    %1516 = vmatpush.msra.mxu0 0.0
    %1517 = vmatpush.msra.mxu0 0.0
    %1518 = vmatpush.msra.mxu0 %v1280
    %1519 = vmatpush.msra.mxu0 %v1278
    %1520 = vmatpush.msra.mxu0 %v1276
    %1521 = vmatpush.msra.mxu0 %v1274
    %1522 = vmatpush.msra.mxu0 %v1272
    %1523 = vmatpush.msra.mxu0 %v1270
    %1524 = vmatpush.msra.mxu0 %v1268
    %1525 = vmatpush.msra.mxu0 %v1266
    %1526 = vmatmul.f32.gmra.mxu0 %v1364
    %v1527 = vpop.f32.mrf.mxu0
    %v1528 = vadd.f32 %v1487, %v1527
    %1529 = vmatmul.f32.gmra.mxu0 %v1367
    %v1530 = vpop.f32.mrf.mxu0
    %v1531 = vadd.f32 %v1490, %v1530
    %1532 = vmatmul.f32.gmra.mxu0 %v1370
    %v1533 = vpop.f32.mrf.mxu0
    %v1534 = vadd.f32 %v1493, %v1533
    %1535 = vmatmul.f32.gmra.mxu0 %v1373
    %v1536 = vpop.f32.mrf.mxu0
    %v1537 = vadd.f32 %v1496, %v1536
    %1538 = vmatmul.f32.gmra.mxu0 %v1376
    %v1539 = vpop.f32.mrf.mxu0
    %v1540 = vadd.f32 %v1499, %v1539
    %1541 = vmatmul.f32.gmra.mxu0 %v1379
    %v1542 = vpop.f32.mrf.mxu0
    %v1543 = vadd.f32 %v1502, %v1542
    %1544 = vmatmul.f32.gmra.mxu0 %v1382
    %v1545 = vpop.f32.mrf.mxu0
    %v1546 = vadd.f32 %v1505, %v1545
    %1547 = vmatmul.f32.gmra.mxu0 %v1385
    %v1548 = vpop.f32.mrf.mxu0
    %v1549 = vadd.f32 %v1508, %v1548
    %1550 = vdwg.mxu0
    %v1551 = vadd.f32 %v1207, %v1446
    %v1552 = vadd.f32 %v1208, %v1528
    %v1553 = vadd.f32 %v1209, %v1449
    %v1554 = vadd.f32 %v1210, %v1531
    %v1555 = vadd.f32 %v1211, %v1452
    %v1556 = vadd.f32 %v1212, %v1534
    %v1557 = vadd.f32 %v1213, %v1455
    %v1558 = vadd.f32 %v1214, %v1537
    %v1559 = vadd.f32 %v1215, %v1458
    %v1560 = vadd.f32 %v1216, %v1540
    %v1561 = vadd.f32 %v1217, %v1461
    %v1562 = vadd.f32 %v1218, %v1543
    %v1563 = vadd.f32 %v1219, %v1464
    %v1564 = vadd.f32 %v1220, %v1546
    %v1565 = vadd.f32 %v1221, %v1467
    %v1566 = vadd.f32 %v1222, %v1549
    %vm1567 = vcmp.ge.f32.partialorder %v1551, 0.0
    %vm1568 = vcmp.ge.f32.partialorder %v1552, 0.0
    %vm1569 = vcmp.ge.f32.partialorder %v1553, 0.0
    %vm1570 = vcmp.ge.f32.partialorder %v1554, 0.0
    %vm1571 = vcmp.ge.f32.partialorder %v1555, 0.0
    %vm1572 = vcmp.ge.f32.partialorder %v1556, 0.0
    %vm1573 = vcmp.ge.f32.partialorder %v1557, 0.0
    %vm1574 = vcmp.ge.f32.partialorder %v1558, 0.0
    %vm1575 = vcmp.ge.f32.partialorder %v1559, 0.0
    %vm1576 = vcmp.ge.f32.partialorder %v1560, 0.0
    %vm1577 = vcmp.ge.f32.partialorder %v1561, 0.0
    %vm1578 = vcmp.ge.f32.partialorder %v1562, 0.0
    %vm1579 = vcmp.ge.f32.partialorder %v1563, 0.0
    %vm1580 = vcmp.ge.f32.partialorder %v1564, 0.0
    %vm1581 = vcmp.ge.f32.partialorder %v1565, 0.0
    %vm1582 = vcmp.ge.f32.partialorder %v1566, 0.0
    %v1583 = vmul.f32 %v1551, 0.2
    %v1584 = vmul.f32 %v1552, 0.2
    %v1585 = vmul.f32 %v1553, 0.2
    %v1586 = vmul.f32 %v1554, 0.2
    %v1587 = vmul.f32 %v1555, 0.2
    %v1588 = vmul.f32 %v1556, 0.2
    %v1589 = vmul.f32 %v1557, 0.2
    %v1590 = vmul.f32 %v1558, 0.2
    %v1591 = vmul.f32 %v1559, 0.2
    %v1592 = vmul.f32 %v1560, 0.2
    %v1593 = vmul.f32 %v1561, 0.2
    %v1594 = vmul.f32 %v1562, 0.2
    %v1595 = vmul.f32 %v1563, 0.2
    %v1596 = vmul.f32 %v1564, 0.2
    %v1597 = vmul.f32 %v1565, 0.2
    %v1598 = vmul.f32 %v1566, 0.2
    %v1599 = vsel %vm1567, %v1551, %v1583
    %v1600 = vsel %vm1568, %v1552, %v1584
    %v1601 = vsel %vm1569, %v1553, %v1585
    %v1602 = vsel %vm1570, %v1554, %v1586
    %v1603 = vsel %vm1571, %v1555, %v1587
    %v1604 = vsel %vm1572, %v1556, %v1588
    %v1605 = vsel %vm1573, %v1557, %v1589
    %v1606 = vsel %vm1574, %v1558, %v1590
    %v1607 = vsel %vm1575, %v1559, %v1591
    %v1608 = vsel %vm1576, %v1560, %v1592
    %v1609 = vsel %vm1577, %v1561, %v1593
    %v1610 = vsel %vm1578, %v1562, %v1594
    %v1611 = vsel %vm1579, %v1563, %v1595
    %v1612 = vsel %vm1580, %v1564, %v1596
    %v1613 = vsel %vm1581, %v1565, %v1597
    %v1614 = vsel %vm1582, %v1566, %v1598
    %v1615 = vld [vmem:[#allocation2] sm:$0xff]
    %v1616 = vld [vmem:[#allocation2 + $0x8] sm:$0xff]
    %v1617 = vld [vmem:[#allocation2 + $0x10] sm:$0xff]
    %v1618 = vld [vmem:[#allocation2 + $0x18] sm:$0xff]
    %v1619 = vld [vmem:[#allocation4] sm:$0xff]
    %v1620 = vld [vmem:[#allocation4 + $0x8] sm:$0xff]
    %v1621 = vld [vmem:[#allocation4 + $0x10] sm:$0xff]
    %v1622 = vld [vmem:[#allocation4 + $0x18] sm:$0xff]
    %v1623 = vld [vmem:[#allocation4 + $0x20] sm:$0xff]
    %v1624 = vld [vmem:[#allocation4 + $0x28] sm:$0xff]
    %v1625 = vld [vmem:[#allocation4 + $0x30] sm:$0xff]
    %v1626 = vld [vmem:[#allocation4 + $0x38] sm:$0xff]
    %v1627 = vld [vmem:[#allocation4 + $0x40] sm:$0xff]
    %v1628 = vld [vmem:[#allocation4 + $0x48] sm:$0xff]
    %v1629 = vld [vmem:[#allocation4 + $0x50] sm:$0xff]
    %v1630 = vld [vmem:[#allocation4 + $0x58] sm:$0xff]
    %v1631 = vld [vmem:[#allocation4 + $0x60] sm:$0xff]
    %v1632 = vld [vmem:[#allocation4 + $0x68] sm:$0xff]
    %v1633 = vld [vmem:[#allocation4 + $0x70] sm:$0xff]
    %v1634 = vld [vmem:[#allocation4 + $0x78] sm:$0xff]
    %v1635 = vld [vmem:[#allocation4 + $0x80] sm:$0xff]
    %v1636 = vld [vmem:[#allocation4 + $0x88] sm:$0xff]
    %v1637 = vld [vmem:[#allocation4 + $0x90] sm:$0xff]
    %v1638 = vld [vmem:[#allocation4 + $0x98] sm:$0xff]
    %v1639 = vld [vmem:[#allocation4 + $0xa0] sm:$0xff]
    %v1640 = vld [vmem:[#allocation4 + $0xa8] sm:$0xff]
    %v1641 = vld [vmem:[#allocation4 + $0xb0] sm:$0xff]
    %v1642 = vld [vmem:[#allocation4 + $0xb8] sm:$0xff]
    %v1643 = vld [vmem:[#allocation4 + $0xc0] sm:$0xff]
    %v1644 = vld [vmem:[#allocation4 + $0xc8] sm:$0xff]
    %v1645 = vld [vmem:[#allocation4 + $0xd0] sm:$0xff]
    %v1646 = vld [vmem:[#allocation4 + $0xd8] sm:$0xff]
    %v1647 = vld [vmem:[#allocation4 + $0xe0] sm:$0xff]
    %v1648 = vld [vmem:[#allocation4 + $0xe8] sm:$0xff]
    %v1649 = vld [vmem:[#allocation4 + $0xf0] sm:$0xff]
    %v1650 = vld [vmem:[#allocation4 + $0xf8] sm:$0xff]
    %v1651 = vld [vmem:[#allocation4 + $0x100] sm:$0xff]
    %v1652 = vld [vmem:[#allocation4 + $0x108] sm:$0xff]
    %v1653 = vld [vmem:[#allocation4 + $0x110] sm:$0xff]
    %v1654 = vld [vmem:[#allocation4 + $0x118] sm:$0xff]
    %v1655 = vld [vmem:[#allocation4 + $0x120] sm:$0xff]
    %v1656 = vld [vmem:[#allocation4 + $0x128] sm:$0xff]
    %v1657 = vld [vmem:[#allocation4 + $0x130] sm:$0xff]
    %v1658 = vld [vmem:[#allocation4 + $0x138] sm:$0xff]
    %v1659 = vld [vmem:[#allocation4 + $0x140] sm:$0xff]
    %v1660 = vld [vmem:[#allocation4 + $0x148] sm:$0xff]
    %v1661 = vld [vmem:[#allocation4 + $0x150] sm:$0xff]
    %v1662 = vld [vmem:[#allocation4 + $0x158] sm:$0xff]
    %v1663 = vld [vmem:[#allocation4 + $0x160] sm:$0xff]
    %v1664 = vld [vmem:[#allocation4 + $0x168] sm:$0xff]
    %v1665 = vld [vmem:[#allocation4 + $0x170] sm:$0xff]
    %v1666 = vld [vmem:[#allocation4 + $0x178] sm:$0xff]
    %v1667 = vld [vmem:[#allocation4 + $0x180] sm:$0xff]
    %v1668 = vld [vmem:[#allocation4 + $0x188] sm:$0xff]
    %v1669 = vld [vmem:[#allocation4 + $0x190] sm:$0xff]
    %v1670 = vld [vmem:[#allocation4 + $0x198] sm:$0xff]
    %v1671 = vld [vmem:[#allocation4 + $0x1a0] sm:$0xff]
    %v1672 = vld [vmem:[#allocation4 + $0x1a8] sm:$0xff]
    %v1673 = vld [vmem:[#allocation4 + $0x1b0] sm:$0xff]
    %v1674 = vld [vmem:[#allocation4 + $0x1b8] sm:$0xff]
    %v1675 = vld [vmem:[#allocation4 + $0x1c0] sm:$0xff]
    %v1676 = vld [vmem:[#allocation4 + $0x1c8] sm:$0xff]
    %v1677 = vld [vmem:[#allocation4 + $0x1d0] sm:$0xff]
    %v1678 = vld [vmem:[#allocation4 + $0x1d8] sm:$0xff]
    %v1679 = vld [vmem:[#allocation4 + $0x1e0] sm:$0xff]
    %v1680 = vld [vmem:[#allocation4 + $0x1e8] sm:$0xff]
    %v1681 = vld [vmem:[#allocation4 + $0x1f0] sm:$0xff]
    %v1682 = vld [vmem:[#allocation4 + $0x1f8] sm:$0xff]
    %v1684 = vsel %vm502, %v1615, 0
    %v1687 = vsel %vm502, %v1616, 0
    %v1690 = vsel %vm502, %v1617, 0
    %v1693 = vsel %vm502, %v1618, 0
    %1695 = vmatpush.msra.mxu0 0.0
    %1696 = vmatpush.msra.mxu0 0.0
    %1697 = vmatpush.msra.mxu0 0.0
    %1698 = vmatpush.msra.mxu0 0.0
    %1699 = vmatpush.msra.mxu0 0.0
    %1700 = vmatpush.msra.mxu0 0.0
    %1701 = vmatpush.msra.mxu0 0.0
    %1702 = vmatpush.msra.mxu0 0.0
    %1703 = vmatpush.msra.mxu0 %v1613
    %1704 = vmatpush.msra.mxu0 %v1611
    %1705 = vmatpush.msra.mxu0 %v1609
    %1706 = vmatpush.msra.mxu0 %v1607
    %1707 = vmatpush.msra.mxu0 %v1605
    %1708 = vmatpush.msra.mxu0 %v1603
    %1709 = vmatpush.msra.mxu0 %v1601
    %1710 = vmatpush.msra.mxu0 %v1599
    %1711 = vmatmul.f32.gmra.mxu0 %v1684
    %v1712 = vpop.f32.mrf.mxu0
    %v1713 = vadd.f32 0.0, %v1712
    %1714 = vmatmul.f32.gmra.mxu0 %v1687
    %v1715 = vpop.f32.mrf.mxu0
    %v1716 = vadd.f32 0.0, %v1715
    %1717 = vmatmul.f32.gmra.mxu0 %v1690
    %v1718 = vpop.f32.mrf.mxu0
    %v1719 = vadd.f32 0.0, %v1718
    %1720 = vmatmul.f32.gmra.mxu0 %v1693
    %v1721 = vpop.f32.mrf.mxu0
    %v1722 = vadd.f32 0.0, %v1721
    %1723 = vdwg.mxu0
    %1724 = vmatpush.msra.mxu0 0.0
    %1725 = vmatpush.msra.mxu0 0.0
    %1726 = vmatpush.msra.mxu0 0.0
    %1727 = vmatpush.msra.mxu0 0.0
    %1728 = vmatpush.msra.mxu0 0.0
    %1729 = vmatpush.msra.mxu0 0.0
    %1730 = vmatpush.msra.mxu0 0.0
    %1731 = vmatpush.msra.mxu0 0.0
    %1732 = vmatpush.msra.mxu0 %v1614
    %1733 = vmatpush.msra.mxu0 %v1612
    %1734 = vmatpush.msra.mxu0 %v1610
    %1735 = vmatpush.msra.mxu0 %v1608
    %1736 = vmatpush.msra.mxu0 %v1606
    %1737 = vmatpush.msra.mxu0 %v1604
    %1738 = vmatpush.msra.mxu0 %v1602
    %1739 = vmatpush.msra.mxu0 %v1600
    %1740 = vmatmul.f32.gmra.mxu0 %v1684
    %v1741 = vpop.f32.mrf.mxu0
    %v1742 = vadd.f32 0.0, %v1741
    %1743 = vmatmul.f32.gmra.mxu0 %v1687
    %v1744 = vpop.f32.mrf.mxu0
    %v1745 = vadd.f32 0.0, %v1744
    %1746 = vmatmul.f32.gmra.mxu0 %v1690
    %v1747 = vpop.f32.mrf.mxu0
    %v1748 = vadd.f32 0.0, %v1747
    %1749 = vmatmul.f32.gmra.mxu0 %v1693
    %v1750 = vpop.f32.mrf.mxu0
    %v1751 = vadd.f32 0.0, %v1750
    %1752 = vdwg.mxu0
    %s1753 = scalar_lea.vmem [#allocation2], 32
    %v1754 = vld [vmem:[%s1753] sm:$0xff]
    %v1755 = vld [vmem:[%s1753 + $0x8] sm:$0xff]
    %v1756 = vld [vmem:[%s1753 + $0x10] sm:$0xff]
    %v1757 = vld [vmem:[%s1753 + $0x18] sm:$0xff]
    %s1758 = scalar_lea.vmem [#allocation4], 512
    %v1759 = vld [vmem:[%s1758] sm:$0xff]
    %v1760 = vld [vmem:[%s1758 + $0x8] sm:$0xff]
    %v1761 = vld [vmem:[%s1758 + $0x10] sm:$0xff]
    %v1762 = vld [vmem:[%s1758 + $0x18] sm:$0xff]
    %v1763 = vld [vmem:[%s1758 + $0x20] sm:$0xff]
    %v1764 = vld [vmem:[%s1758 + $0x28] sm:$0xff]
    %v1765 = vld [vmem:[%s1758 + $0x30] sm:$0xff]
    %v1766 = vld [vmem:[%s1758 + $0x38] sm:$0xff]
    %v1767 = vld [vmem:[%s1758 + $0x40] sm:$0xff]
    %v1768 = vld [vmem:[%s1758 + $0x48] sm:$0xff]
    %v1769 = vld [vmem:[%s1758 + $0x50] sm:$0xff]
    %v1770 = vld [vmem:[%s1758 + $0x58] sm:$0xff]
    %v1771 = vld [vmem:[%s1758 + $0x60] sm:$0xff]
    %v1772 = vld [vmem:[%s1758 + $0x68] sm:$0xff]
    %v1773 = vld [vmem:[%s1758 + $0x70] sm:$0xff]
    %v1774 = vld [vmem:[%s1758 + $0x78] sm:$0xff]
    %v1775 = vld [vmem:[%s1758 + $0x80] sm:$0xff]
    %v1776 = vld [vmem:[%s1758 + $0x88] sm:$0xff]
    %v1777 = vld [vmem:[%s1758 + $0x90] sm:$0xff]
    %v1778 = vld [vmem:[%s1758 + $0x98] sm:$0xff]
    %v1779 = vld [vmem:[%s1758 + $0xa0] sm:$0xff]
    %v1780 = vld [vmem:[%s1758 + $0xa8] sm:$0xff]
    %v1781 = vld [vmem:[%s1758 + $0xb0] sm:$0xff]
    %v1782 = vld [vmem:[%s1758 + $0xb8] sm:$0xff]
    %v1783 = vld [vmem:[%s1758 + $0xc0] sm:$0xff]
    %v1784 = vld [vmem:[%s1758 + $0xc8] sm:$0xff]
    %v1785 = vld [vmem:[%s1758 + $0xd0] sm:$0xff]
    %v1786 = vld [vmem:[%s1758 + $0xd8] sm:$0xff]
    %v1787 = vld [vmem:[%s1758 + $0xe0] sm:$0xff]
    %v1788 = vld [vmem:[%s1758 + $0xe8] sm:$0xff]
    %v1789 = vld [vmem:[%s1758 + $0xf0] sm:$0xff]
    %v1790 = vld [vmem:[%s1758 + $0xf8] sm:$0xff]
    %v1791 = vld [vmem:[%s1758 + $0x100] sm:$0xff]
    %v1792 = vld [vmem:[%s1758 + $0x108] sm:$0xff]
    %v1793 = vld [vmem:[%s1758 + $0x110] sm:$0xff]
    %v1794 = vld [vmem:[%s1758 + $0x118] sm:$0xff]
    %v1795 = vld [vmem:[%s1758 + $0x120] sm:$0xff]
    %v1796 = vld [vmem:[%s1758 + $0x128] sm:$0xff]
    %v1797 = vld [vmem:[%s1758 + $0x130] sm:$0xff]
    %v1798 = vld [vmem:[%s1758 + $0x138] sm:$0xff]
    %v1799 = vld [vmem:[%s1758 + $0x140] sm:$0xff]
    %v1800 = vld [vmem:[%s1758 + $0x148] sm:$0xff]
    %v1801 = vld [vmem:[%s1758 + $0x150] sm:$0xff]
    %v1802 = vld [vmem:[%s1758 + $0x158] sm:$0xff]
    %v1803 = vld [vmem:[%s1758 + $0x160] sm:$0xff]
    %v1804 = vld [vmem:[%s1758 + $0x168] sm:$0xff]
    %v1805 = vld [vmem:[%s1758 + $0x170] sm:$0xff]
    %v1806 = vld [vmem:[%s1758 + $0x178] sm:$0xff]
    %v1807 = vld [vmem:[%s1758 + $0x180] sm:$0xff]
    %v1808 = vld [vmem:[%s1758 + $0x188] sm:$0xff]
    %v1809 = vld [vmem:[%s1758 + $0x190] sm:$0xff]
    %v1810 = vld [vmem:[%s1758 + $0x198] sm:$0xff]
    %v1811 = vld [vmem:[%s1758 + $0x1a0] sm:$0xff]
    %v1812 = vld [vmem:[%s1758 + $0x1a8] sm:$0xff]
    %v1813 = vld [vmem:[%s1758 + $0x1b0] sm:$0xff]
    %v1814 = vld [vmem:[%s1758 + $0x1b8] sm:$0xff]
    %v1815 = vld [vmem:[%s1758 + $0x1c0] sm:$0xff]
    %v1816 = vld [vmem:[%s1758 + $0x1c8] sm:$0xff]
    %v1817 = vld [vmem:[%s1758 + $0x1d0] sm:$0xff]
    %v1818 = vld [vmem:[%s1758 + $0x1d8] sm:$0xff]
    %v1819 = vld [vmem:[%s1758 + $0x1e0] sm:$0xff]
    %v1820 = vld [vmem:[%s1758 + $0x1e8] sm:$0xff]
    %v1821 = vld [vmem:[%s1758 + $0x1f0] sm:$0xff]
    %v1822 = vld [vmem:[%s1758 + $0x1f8] sm:$0xff]
    %v1824 = vsel %vm502, %v1754, 0
    %v1827 = vsel %vm502, %v1755, 0
    %v1830 = vsel %vm502, %v1756, 0
    %v1833 = vsel %vm502, %v1757, 0
    %1835 = vmatpush.msra.mxu0 0.0
    %1836 = vmatpush.msra.mxu0 0.0
    %1837 = vmatpush.msra.mxu0 0.0
    %1838 = vmatpush.msra.mxu0 0.0
    %1839 = vmatpush.msra.mxu0 0.0
    %1840 = vmatpush.msra.mxu0 0.0
    %1841 = vmatpush.msra.mxu0 0.0
    %1842 = vmatpush.msra.mxu0 0.0
    %1843 = vmatpush.msra.mxu0 %v1613
    %1844 = vmatpush.msra.mxu0 %v1611
    %1845 = vmatpush.msra.mxu0 %v1609
    %1846 = vmatpush.msra.mxu0 %v1607
    %1847 = vmatpush.msra.mxu0 %v1605
    %1848 = vmatpush.msra.mxu0 %v1603
    %1849 = vmatpush.msra.mxu0 %v1601
    %1850 = vmatpush.msra.mxu0 %v1599
    %1851 = vmatmul.f32.gmra.mxu0 %v1824
    %v1852 = vpop.f32.mrf.mxu0
    %v1853 = vadd.f32 0.0, %v1852
    %1854 = vmatmul.f32.gmra.mxu0 %v1827
    %v1855 = vpop.f32.mrf.mxu0
    %v1856 = vadd.f32 0.0, %v1855
    %1857 = vmatmul.f32.gmra.mxu0 %v1830
    %v1858 = vpop.f32.mrf.mxu0
    %v1859 = vadd.f32 0.0, %v1858
    %1860 = vmatmul.f32.gmra.mxu0 %v1833
    %v1861 = vpop.f32.mrf.mxu0
    %v1862 = vadd.f32 0.0, %v1861
    %1863 = vdwg.mxu0
    %1864 = vmatpush.msra.mxu0 0.0
    %1865 = vmatpush.msra.mxu0 0.0
    %1866 = vmatpush.msra.mxu0 0.0
    %1867 = vmatpush.msra.mxu0 0.0
    %1868 = vmatpush.msra.mxu0 0.0
    %1869 = vmatpush.msra.mxu0 0.0
    %1870 = vmatpush.msra.mxu0 0.0
    %1871 = vmatpush.msra.mxu0 0.0
    %1872 = vmatpush.msra.mxu0 %v1614
    %1873 = vmatpush.msra.mxu0 %v1612
    %1874 = vmatpush.msra.mxu0 %v1610
    %1875 = vmatpush.msra.mxu0 %v1608
    %1876 = vmatpush.msra.mxu0 %v1606
    %1877 = vmatpush.msra.mxu0 %v1604
    %1878 = vmatpush.msra.mxu0 %v1602
    %1879 = vmatpush.msra.mxu0 %v1600
    %1880 = vmatmul.f32.gmra.mxu0 %v1824
    %v1881 = vpop.f32.mrf.mxu0
    %v1882 = vadd.f32 0.0, %v1881
    %1883 = vmatmul.f32.gmra.mxu0 %v1827
    %v1884 = vpop.f32.mrf.mxu0
    %v1885 = vadd.f32 0.0, %v1884
    %1886 = vmatmul.f32.gmra.mxu0 %v1830
    %v1887 = vpop.f32.mrf.mxu0
    %v1888 = vadd.f32 0.0, %v1887
    %1889 = vmatmul.f32.gmra.mxu0 %v1833
    %v1890 = vpop.f32.mrf.mxu0
    %v1891 = vadd.f32 0.0, %v1890
    %1892 = vdwg.mxu0
    %1893 = vmatpush.msra.mxu0 %v1789
    %1894 = vmatpush.msra.mxu0 %v1787
    %1895 = vmatpush.msra.mxu0 %v1785
    %1896 = vmatpush.msra.mxu0 %v1783
    %1897 = vmatpush.msra.mxu0 %v1781
    %1898 = vmatpush.msra.mxu0 %v1779
    %1899 = vmatpush.msra.mxu0 %v1777
    %1900 = vmatpush.msra.mxu0 %v1775
    %1901 = vmatpush.msra.mxu0 %v1773
    %1902 = vmatpush.msra.mxu0 %v1771
    %1903 = vmatpush.msra.mxu0 %v1769
    %1904 = vmatpush.msra.mxu0 %v1767
    %1905 = vmatpush.msra.mxu0 %v1765
    %1906 = vmatpush.msra.mxu0 %v1763
    %1907 = vmatpush.msra.mxu0 %v1761
    %1908 = vmatpush.msra.mxu0 %v1759
    %1909 = vmatmul.f32.gmra.mxu0 %v1853
    %v1910 = vpop.f32.mrf.mxu0
    %v1911 = vadd.f32 0.0, %v1910
    %1912 = vmatmul.f32.gmra.mxu0 %v1856
    %v1913 = vpop.f32.mrf.mxu0
    %v1914 = vadd.f32 0.0, %v1913
    %1915 = vmatmul.f32.gmra.mxu0 %v1859
    %v1916 = vpop.f32.mrf.mxu0
    %v1917 = vadd.f32 0.0, %v1916
    %1918 = vmatmul.f32.gmra.mxu0 %v1862
    %v1919 = vpop.f32.mrf.mxu0
    %v1920 = vadd.f32 0.0, %v1919
    %1921 = vdwg.mxu0
    %1922 = vmatpush.msra.mxu0 %v1821
    %1923 = vmatpush.msra.mxu0 %v1819
    %1924 = vmatpush.msra.mxu0 %v1817
    %1925 = vmatpush.msra.mxu0 %v1815
    %1926 = vmatpush.msra.mxu0 %v1813
    %1927 = vmatpush.msra.mxu0 %v1811
    %1928 = vmatpush.msra.mxu0 %v1809
    %1929 = vmatpush.msra.mxu0 %v1807
    %1930 = vmatpush.msra.mxu0 %v1805
    %1931 = vmatpush.msra.mxu0 %v1803
    %1932 = vmatpush.msra.mxu0 %v1801
    %1933 = vmatpush.msra.mxu0 %v1799
    %1934 = vmatpush.msra.mxu0 %v1797
    %1935 = vmatpush.msra.mxu0 %v1795
    %1936 = vmatpush.msra.mxu0 %v1793
    %1937 = vmatpush.msra.mxu0 %v1791
    %1938 = vmatmul.f32.gmra.mxu0 %v1882
    %v1939 = vpop.f32.mrf.mxu0
    %v1940 = vadd.f32 %v1911, %v1939
    %1941 = vmatmul.f32.gmra.mxu0 %v1885
    %v1942 = vpop.f32.mrf.mxu0
    %v1943 = vadd.f32 %v1914, %v1942
    %1944 = vmatmul.f32.gmra.mxu0 %v1888
    %v1945 = vpop.f32.mrf.mxu0
    %v1946 = vadd.f32 %v1917, %v1945
    %1947 = vmatmul.f32.gmra.mxu0 %v1891
    %v1948 = vpop.f32.mrf.mxu0
    %v1949 = vadd.f32 %v1920, %v1948
    %1950 = vdwg.mxu0
    %1951 = vmatpush.msra.mxu0 %v1790
    %1952 = vmatpush.msra.mxu0 %v1788
    %1953 = vmatpush.msra.mxu0 %v1786
    %1954 = vmatpush.msra.mxu0 %v1784
    %1955 = vmatpush.msra.mxu0 %v1782
    %1956 = vmatpush.msra.mxu0 %v1780
    %1957 = vmatpush.msra.mxu0 %v1778
    %1958 = vmatpush.msra.mxu0 %v1776
    %1959 = vmatpush.msra.mxu0 %v1774
    %1960 = vmatpush.msra.mxu0 %v1772
    %1961 = vmatpush.msra.mxu0 %v1770
    %1962 = vmatpush.msra.mxu0 %v1768
    %1963 = vmatpush.msra.mxu0 %v1766
    %1964 = vmatpush.msra.mxu0 %v1764
    %1965 = vmatpush.msra.mxu0 %v1762
    %1966 = vmatpush.msra.mxu0 %v1760
    %1967 = vmatmul.f32.gmra.mxu0 %v1853
    %v1968 = vpop.f32.mrf.mxu0
    %v1969 = vadd.f32 0.0, %v1968
    %1970 = vmatmul.f32.gmra.mxu0 %v1856
    %v1971 = vpop.f32.mrf.mxu0
    %v1972 = vadd.f32 0.0, %v1971
    %1973 = vmatmul.f32.gmra.mxu0 %v1859
    %v1974 = vpop.f32.mrf.mxu0
    %v1975 = vadd.f32 0.0, %v1974
    %1976 = vmatmul.f32.gmra.mxu0 %v1862
    %v1977 = vpop.f32.mrf.mxu0
    %v1978 = vadd.f32 0.0, %v1977
    %1979 = vdwg.mxu0
    %1980 = vmatpush.msra.mxu0 %v1822
    %1981 = vmatpush.msra.mxu0 %v1820
    %1982 = vmatpush.msra.mxu0 %v1818
    %1983 = vmatpush.msra.mxu0 %v1816
    %1984 = vmatpush.msra.mxu0 %v1814
    %1985 = vmatpush.msra.mxu0 %v1812
    %1986 = vmatpush.msra.mxu0 %v1810
    %1987 = vmatpush.msra.mxu0 %v1808
    %1988 = vmatpush.msra.mxu0 %v1806
    %1989 = vmatpush.msra.mxu0 %v1804
    %1990 = vmatpush.msra.mxu0 %v1802
    %1991 = vmatpush.msra.mxu0 %v1800
    %1992 = vmatpush.msra.mxu0 %v1798
    %1993 = vmatpush.msra.mxu0 %v1796
    %1994 = vmatpush.msra.mxu0 %v1794
    %1995 = vmatpush.msra.mxu0 %v1792
    %1996 = vmatmul.f32.gmra.mxu0 %v1882
    %v1997 = vpop.f32.mrf.mxu0
    %v1998 = vadd.f32 %v1969, %v1997
    %1999 = vmatmul.f32.gmra.mxu0 %v1885
    %v2000 = vpop.f32.mrf.mxu0
    %v2001 = vadd.f32 %v1972, %v2000
    %2002 = vmatmul.f32.gmra.mxu0 %v1888
    %v2003 = vpop.f32.mrf.mxu0
    %v2004 = vadd.f32 %v1975, %v2003
    %2005 = vmatmul.f32.gmra.mxu0 %v1891
    %v2006 = vpop.f32.mrf.mxu0
    %v2007 = vadd.f32 %v1978, %v2006
    %2008 = vdwg.mxu0
    %2009 = vmatpush.msra.mxu0 %v1649
    %2010 = vmatpush.msra.mxu0 %v1647
    %2011 = vmatpush.msra.mxu0 %v1645
    %2012 = vmatpush.msra.mxu0 %v1643
    %2013 = vmatpush.msra.mxu0 %v1641
    %2014 = vmatpush.msra.mxu0 %v1639
    %2015 = vmatpush.msra.mxu0 %v1637
    %2016 = vmatpush.msra.mxu0 %v1635
    %2017 = vmatpush.msra.mxu0 %v1633
    %2018 = vmatpush.msra.mxu0 %v1631
    %2019 = vmatpush.msra.mxu0 %v1629
    %2020 = vmatpush.msra.mxu0 %v1627
    %2021 = vmatpush.msra.mxu0 %v1625
    %2022 = vmatpush.msra.mxu0 %v1623
    %2023 = vmatpush.msra.mxu0 %v1621
    %2024 = vmatpush.msra.mxu0 %v1619
    %2025 = vmatmul.f32.gmra.mxu0 %v1713
    %v2026 = vpop.f32.mrf.mxu0
    %v2027 = vadd.f32 %v1940, %v2026
    %2028 = vmatmul.f32.gmra.mxu0 %v1716
    %v2029 = vpop.f32.mrf.mxu0
    %v2030 = vadd.f32 %v1943, %v2029
    %2031 = vmatmul.f32.gmra.mxu0 %v1719
    %v2032 = vpop.f32.mrf.mxu0
    %v2033 = vadd.f32 %v1946, %v2032
    %2034 = vmatmul.f32.gmra.mxu0 %v1722
    %v2035 = vpop.f32.mrf.mxu0
    %v2036 = vadd.f32 %v1949, %v2035
    %2037 = vdwg.mxu0
    %2038 = vmatpush.msra.mxu0 %v1681
    %2039 = vmatpush.msra.mxu0 %v1679
    %2040 = vmatpush.msra.mxu0 %v1677
    %2041 = vmatpush.msra.mxu0 %v1675
    %2042 = vmatpush.msra.mxu0 %v1673
    %2043 = vmatpush.msra.mxu0 %v1671
    %2044 = vmatpush.msra.mxu0 %v1669
    %2045 = vmatpush.msra.mxu0 %v1667
    %2046 = vmatpush.msra.mxu0 %v1665
    %2047 = vmatpush.msra.mxu0 %v1663
    %2048 = vmatpush.msra.mxu0 %v1661
    %2049 = vmatpush.msra.mxu0 %v1659
    %2050 = vmatpush.msra.mxu0 %v1657
    %2051 = vmatpush.msra.mxu0 %v1655
    %2052 = vmatpush.msra.mxu0 %v1653
    %2053 = vmatpush.msra.mxu0 %v1651
    %2054 = vmatmul.f32.gmra.mxu0 %v1742
    %v2055 = vpop.f32.mrf.mxu0
    %v2056 = vadd.f32 %v2027, %v2055
    %2057 = vmatmul.f32.gmra.mxu0 %v1745
    %v2058 = vpop.f32.mrf.mxu0
    %v2059 = vadd.f32 %v2030, %v2058
    %2060 = vmatmul.f32.gmra.mxu0 %v1748
    %v2061 = vpop.f32.mrf.mxu0
    %v2062 = vadd.f32 %v2033, %v2061
    %2063 = vmatmul.f32.gmra.mxu0 %v1751
    %v2064 = vpop.f32.mrf.mxu0
    %v2065 = vadd.f32 %v2036, %v2064
    %2066 = vdwg.mxu0
    %2067 = vmatpush.msra.mxu0 %v1650
    %2068 = vmatpush.msra.mxu0 %v1648
    %2069 = vmatpush.msra.mxu0 %v1646
    %2070 = vmatpush.msra.mxu0 %v1644
    %2071 = vmatpush.msra.mxu0 %v1642
    %2072 = vmatpush.msra.mxu0 %v1640
    %2073 = vmatpush.msra.mxu0 %v1638
    %2074 = vmatpush.msra.mxu0 %v1636
    %2075 = vmatpush.msra.mxu0 %v1634
    %2076 = vmatpush.msra.mxu0 %v1632
    %2077 = vmatpush.msra.mxu0 %v1630
    %2078 = vmatpush.msra.mxu0 %v1628
    %2079 = vmatpush.msra.mxu0 %v1626
    %2080 = vmatpush.msra.mxu0 %v1624
    %2081 = vmatpush.msra.mxu0 %v1622
    %2082 = vmatpush.msra.mxu0 %v1620
    %2083 = vmatmul.f32.gmra.mxu0 %v1713
    %v2084 = vpop.f32.mrf.mxu0
    %v2085 = vadd.f32 %v1998, %v2084
    %2086 = vmatmul.f32.gmra.mxu0 %v1716
    %v2087 = vpop.f32.mrf.mxu0
    %v2088 = vadd.f32 %v2001, %v2087
    %2089 = vmatmul.f32.gmra.mxu0 %v1719
    %v2090 = vpop.f32.mrf.mxu0
    %v2091 = vadd.f32 %v2004, %v2090
    %2092 = vmatmul.f32.gmra.mxu0 %v1722
    %v2093 = vpop.f32.mrf.mxu0
    %v2094 = vadd.f32 %v2007, %v2093
    %2095 = vdwg.mxu0
    %2096 = vmatpush.msra.mxu0 %v1682
    %2097 = vmatpush.msra.mxu0 %v1680
    %2098 = vmatpush.msra.mxu0 %v1678
    %2099 = vmatpush.msra.mxu0 %v1676
    %2100 = vmatpush.msra.mxu0 %v1674
    %2101 = vmatpush.msra.mxu0 %v1672
    %2102 = vmatpush.msra.mxu0 %v1670
    %2103 = vmatpush.msra.mxu0 %v1668
    %2104 = vmatpush.msra.mxu0 %v1666
    %2105 = vmatpush.msra.mxu0 %v1664
    %2106 = vmatpush.msra.mxu0 %v1662
    %2107 = vmatpush.msra.mxu0 %v1660
    %2108 = vmatpush.msra.mxu0 %v1658
    %2109 = vmatpush.msra.mxu0 %v1656
    %2110 = vmatpush.msra.mxu0 %v1654
    %2111 = vmatpush.msra.mxu0 %v1652
    %2112 = vmatmul.f32.gmra.mxu0 %v1742
    %v2113 = vpop.f32.mrf.mxu0
    %v2114 = vadd.f32 %v2085, %v2113
    %2115 = vmatmul.f32.gmra.mxu0 %v1745
    %v2116 = vpop.f32.mrf.mxu0
    %v2117 = vadd.f32 %v2088, %v2116
    %2118 = vmatmul.f32.gmra.mxu0 %v1748
    %v2119 = vpop.f32.mrf.mxu0
    %v2120 = vadd.f32 %v2091, %v2119
    %2121 = vmatmul.f32.gmra.mxu0 %v1751
    %v2122 = vpop.f32.mrf.mxu0
    %v2123 = vadd.f32 %v2094, %v2122
    %2124 = vdwg.mxu0
    %s2125 = scalar_lea.vmem [#allocation2], 64
    %v2126 = vld [vmem:[%s2125] sm:$0xff]
    %v2127 = vld [vmem:[%s2125 + $0x8] sm:$0xff]
    %v2128 = vld [vmem:[%s2125 + $0x10] sm:$0xff]
    %v2129 = vld [vmem:[%s2125 + $0x18] sm:$0xff]
    %s2130 = scalar_lea.vmem [#allocation4], 1024
    %v2131 = vld [vmem:[%s2130] sm:$0xff]
    %v2132 = vld [vmem:[%s2130 + $0x8] sm:$0xff]
    %v2133 = vld [vmem:[%s2130 + $0x10] sm:$0xff]
    %v2134 = vld [vmem:[%s2130 + $0x18] sm:$0xff]
    %v2135 = vld [vmem:[%s2130 + $0x20] sm:$0xff]
    %v2136 = vld [vmem:[%s2130 + $0x28] sm:$0xff]
    %v2137 = vld [vmem:[%s2130 + $0x30] sm:$0xff]
    %v2138 = vld [vmem:[%s2130 + $0x38] sm:$0xff]
    %v2139 = vld [vmem:[%s2130 + $0x40] sm:$0xff]
    %v2140 = vld [vmem:[%s2130 + $0x48] sm:$0xff]
    %v2141 = vld [vmem:[%s2130 + $0x50] sm:$0xff]
    %v2142 = vld [vmem:[%s2130 + $0x58] sm:$0xff]
    %v2143 = vld [vmem:[%s2130 + $0x60] sm:$0xff]
    %v2144 = vld [vmem:[%s2130 + $0x68] sm:$0xff]
    %v2145 = vld [vmem:[%s2130 + $0x70] sm:$0xff]
    %v2146 = vld [vmem:[%s2130 + $0x78] sm:$0xff]
    %v2147 = vld [vmem:[%s2130 + $0x80] sm:$0xff]
    %v2148 = vld [vmem:[%s2130 + $0x88] sm:$0xff]
    %v2149 = vld [vmem:[%s2130 + $0x90] sm:$0xff]
    %v2150 = vld [vmem:[%s2130 + $0x98] sm:$0xff]
    %v2151 = vld [vmem:[%s2130 + $0xa0] sm:$0xff]
    %v2152 = vld [vmem:[%s2130 + $0xa8] sm:$0xff]
    %v2153 = vld [vmem:[%s2130 + $0xb0] sm:$0xff]
    %v2154 = vld [vmem:[%s2130 + $0xb8] sm:$0xff]
    %v2155 = vld [vmem:[%s2130 + $0xc0] sm:$0xff]
    %v2156 = vld [vmem:[%s2130 + $0xc8] sm:$0xff]
    %v2157 = vld [vmem:[%s2130 + $0xd0] sm:$0xff]
    %v2158 = vld [vmem:[%s2130 + $0xd8] sm:$0xff]
    %v2159 = vld [vmem:[%s2130 + $0xe0] sm:$0xff]
    %v2160 = vld [vmem:[%s2130 + $0xe8] sm:$0xff]
    %v2161 = vld [vmem:[%s2130 + $0xf0] sm:$0xff]
    %v2162 = vld [vmem:[%s2130 + $0xf8] sm:$0xff]
    %v2163 = vld [vmem:[%s2130 + $0x100] sm:$0xff]
    %v2164 = vld [vmem:[%s2130 + $0x108] sm:$0xff]
    %v2165 = vld [vmem:[%s2130 + $0x110] sm:$0xff]
    %v2166 = vld [vmem:[%s2130 + $0x118] sm:$0xff]
    %v2167 = vld [vmem:[%s2130 + $0x120] sm:$0xff]
    %v2168 = vld [vmem:[%s2130 + $0x128] sm:$0xff]
    %v2169 = vld [vmem:[%s2130 + $0x130] sm:$0xff]
    %v2170 = vld [vmem:[%s2130 + $0x138] sm:$0xff]
    %v2171 = vld [vmem:[%s2130 + $0x140] sm:$0xff]
    %v2172 = vld [vmem:[%s2130 + $0x148] sm:$0xff]
    %v2173 = vld [vmem:[%s2130 + $0x150] sm:$0xff]
    %v2174 = vld [vmem:[%s2130 + $0x158] sm:$0xff]
    %v2175 = vld [vmem:[%s2130 + $0x160] sm:$0xff]
    %v2176 = vld [vmem:[%s2130 + $0x168] sm:$0xff]
    %v2177 = vld [vmem:[%s2130 + $0x170] sm:$0xff]
    %v2178 = vld [vmem:[%s2130 + $0x178] sm:$0xff]
    %v2179 = vld [vmem:[%s2130 + $0x180] sm:$0xff]
    %v2180 = vld [vmem:[%s2130 + $0x188] sm:$0xff]
    %v2181 = vld [vmem:[%s2130 + $0x190] sm:$0xff]
    %v2182 = vld [vmem:[%s2130 + $0x198] sm:$0xff]
    %v2183 = vld [vmem:[%s2130 + $0x1a0] sm:$0xff]
    %v2184 = vld [vmem:[%s2130 + $0x1a8] sm:$0xff]
    %v2185 = vld [vmem:[%s2130 + $0x1b0] sm:$0xff]
    %v2186 = vld [vmem:[%s2130 + $0x1b8] sm:$0xff]
    %v2187 = vld [vmem:[%s2130 + $0x1c0] sm:$0xff]
    %v2188 = vld [vmem:[%s2130 + $0x1c8] sm:$0xff]
    %v2189 = vld [vmem:[%s2130 + $0x1d0] sm:$0xff]
    %v2190 = vld [vmem:[%s2130 + $0x1d8] sm:$0xff]
    %v2191 = vld [vmem:[%s2130 + $0x1e0] sm:$0xff]
    %v2192 = vld [vmem:[%s2130 + $0x1e8] sm:$0xff]
    %v2193 = vld [vmem:[%s2130 + $0x1f0] sm:$0xff]
    %v2194 = vld [vmem:[%s2130 + $0x1f8] sm:$0xff]
    %v2196 = vsel %vm502, %v2126, 0
    %v2199 = vsel %vm502, %v2127, 0
    %v2202 = vsel %vm502, %v2128, 0
    %v2205 = vsel %vm502, %v2129, 0
    %2207 = vmatpush.msra.mxu0 0.0
    %2208 = vmatpush.msra.mxu0 0.0
    %2209 = vmatpush.msra.mxu0 0.0
    %2210 = vmatpush.msra.mxu0 0.0
    %2211 = vmatpush.msra.mxu0 0.0
    %2212 = vmatpush.msra.mxu0 0.0
    %2213 = vmatpush.msra.mxu0 0.0
    %2214 = vmatpush.msra.mxu0 0.0
    %2215 = vmatpush.msra.mxu0 %v1613
    %2216 = vmatpush.msra.mxu0 %v1611
    %2217 = vmatpush.msra.mxu0 %v1609
    %2218 = vmatpush.msra.mxu0 %v1607
    %2219 = vmatpush.msra.mxu0 %v1605
    %2220 = vmatpush.msra.mxu0 %v1603
    %2221 = vmatpush.msra.mxu0 %v1601
    %2222 = vmatpush.msra.mxu0 %v1599
    %2223 = vmatmul.f32.gmra.mxu0 %v2196
    %v2224 = vpop.f32.mrf.mxu0
    %v2225 = vadd.f32 0.0, %v2224
    %2226 = vmatmul.f32.gmra.mxu0 %v2199
    %v2227 = vpop.f32.mrf.mxu0
    %v2228 = vadd.f32 0.0, %v2227
    %2229 = vmatmul.f32.gmra.mxu0 %v2202
    %v2230 = vpop.f32.mrf.mxu0
    %v2231 = vadd.f32 0.0, %v2230
    %2232 = vmatmul.f32.gmra.mxu0 %v2205
    %v2233 = vpop.f32.mrf.mxu0
    %v2234 = vadd.f32 0.0, %v2233
    %2235 = vdwg.mxu0
    %2236 = vmatpush.msra.mxu0 0.0
    %2237 = vmatpush.msra.mxu0 0.0
    %2238 = vmatpush.msra.mxu0 0.0
    %2239 = vmatpush.msra.mxu0 0.0
    %2240 = vmatpush.msra.mxu0 0.0
    %2241 = vmatpush.msra.mxu0 0.0
    %2242 = vmatpush.msra.mxu0 0.0
    %2243 = vmatpush.msra.mxu0 0.0
    %2244 = vmatpush.msra.mxu0 %v1614
    %2245 = vmatpush.msra.mxu0 %v1612
    %2246 = vmatpush.msra.mxu0 %v1610
    %2247 = vmatpush.msra.mxu0 %v1608
    %2248 = vmatpush.msra.mxu0 %v1606
    %2249 = vmatpush.msra.mxu0 %v1604
    %2250 = vmatpush.msra.mxu0 %v1602
    %2251 = vmatpush.msra.mxu0 %v1600
    %2252 = vmatmul.f32.gmra.mxu0 %v2196
    %v2253 = vpop.f32.mrf.mxu0
    %v2254 = vadd.f32 0.0, %v2253
    %2255 = vmatmul.f32.gmra.mxu0 %v2199
    %v2256 = vpop.f32.mrf.mxu0
    %v2257 = vadd.f32 0.0, %v2256
    %2258 = vmatmul.f32.gmra.mxu0 %v2202
    %v2259 = vpop.f32.mrf.mxu0
    %v2260 = vadd.f32 0.0, %v2259
    %2261 = vmatmul.f32.gmra.mxu0 %v2205
    %v2262 = vpop.f32.mrf.mxu0
    %v2263 = vadd.f32 0.0, %v2262
    %2264 = vdwg.mxu0
    %2265 = vmatpush.msra.mxu0 %v2161
    %2266 = vmatpush.msra.mxu0 %v2159
    %2267 = vmatpush.msra.mxu0 %v2157
    %2268 = vmatpush.msra.mxu0 %v2155
    %2269 = vmatpush.msra.mxu0 %v2153
    %2270 = vmatpush.msra.mxu0 %v2151
    %2271 = vmatpush.msra.mxu0 %v2149
    %2272 = vmatpush.msra.mxu0 %v2147
    %2273 = vmatpush.msra.mxu0 %v2145
    %2274 = vmatpush.msra.mxu0 %v2143
    %2275 = vmatpush.msra.mxu0 %v2141
    %2276 = vmatpush.msra.mxu0 %v2139
    %2277 = vmatpush.msra.mxu0 %v2137
    %2278 = vmatpush.msra.mxu0 %v2135
    %2279 = vmatpush.msra.mxu0 %v2133
    %2280 = vmatpush.msra.mxu0 %v2131
    %2281 = vmatmul.f32.gmra.mxu0 %v2225
    %v2282 = vpop.f32.mrf.mxu0
    %v2283 = vadd.f32 0.0, %v2282
    %2284 = vmatmul.f32.gmra.mxu0 %v2228
    %v2285 = vpop.f32.mrf.mxu0
    %v2286 = vadd.f32 0.0, %v2285
    %2287 = vmatmul.f32.gmra.mxu0 %v2231
    %v2288 = vpop.f32.mrf.mxu0
    %v2289 = vadd.f32 0.0, %v2288
    %2290 = vmatmul.f32.gmra.mxu0 %v2234
    %v2291 = vpop.f32.mrf.mxu0
    %v2292 = vadd.f32 0.0, %v2291
    %2293 = vdwg.mxu0
    %2294 = vmatpush.msra.mxu0 %v2193
    %2295 = vmatpush.msra.mxu0 %v2191
    %2296 = vmatpush.msra.mxu0 %v2189
    %2297 = vmatpush.msra.mxu0 %v2187
    %2298 = vmatpush.msra.mxu0 %v2185
    %2299 = vmatpush.msra.mxu0 %v2183
    %2300 = vmatpush.msra.mxu0 %v2181
    %2301 = vmatpush.msra.mxu0 %v2179
    %2302 = vmatpush.msra.mxu0 %v2177
    %2303 = vmatpush.msra.mxu0 %v2175
    %2304 = vmatpush.msra.mxu0 %v2173
    %2305 = vmatpush.msra.mxu0 %v2171
    %2306 = vmatpush.msra.mxu0 %v2169
    %2307 = vmatpush.msra.mxu0 %v2167
    %2308 = vmatpush.msra.mxu0 %v2165
    %2309 = vmatpush.msra.mxu0 %v2163
    %2310 = vmatmul.f32.gmra.mxu0 %v2254
    %v2311 = vpop.f32.mrf.mxu0
    %v2312 = vadd.f32 %v2283, %v2311
    %2313 = vmatmul.f32.gmra.mxu0 %v2257
    %v2314 = vpop.f32.mrf.mxu0
    %v2315 = vadd.f32 %v2286, %v2314
    %2316 = vmatmul.f32.gmra.mxu0 %v2260
    %v2317 = vpop.f32.mrf.mxu0
    %v2318 = vadd.f32 %v2289, %v2317
    %2319 = vmatmul.f32.gmra.mxu0 %v2263
    %v2320 = vpop.f32.mrf.mxu0
    %v2321 = vadd.f32 %v2292, %v2320
    %2322 = vdwg.mxu0
    %2323 = vmatpush.msra.mxu0 %v2162
    %2324 = vmatpush.msra.mxu0 %v2160
    %2325 = vmatpush.msra.mxu0 %v2158
    %2326 = vmatpush.msra.mxu0 %v2156
    %2327 = vmatpush.msra.mxu0 %v2154
    %2328 = vmatpush.msra.mxu0 %v2152
    %2329 = vmatpush.msra.mxu0 %v2150
    %2330 = vmatpush.msra.mxu0 %v2148
    %2331 = vmatpush.msra.mxu0 %v2146
    %2332 = vmatpush.msra.mxu0 %v2144
    %2333 = vmatpush.msra.mxu0 %v2142
    %2334 = vmatpush.msra.mxu0 %v2140
    %2335 = vmatpush.msra.mxu0 %v2138
    %2336 = vmatpush.msra.mxu0 %v2136
    %2337 = vmatpush.msra.mxu0 %v2134
    %2338 = vmatpush.msra.mxu0 %v2132
    %2339 = vmatmul.f32.gmra.mxu0 %v2225
    %v2340 = vpop.f32.mrf.mxu0
    %v2341 = vadd.f32 0.0, %v2340
    %2342 = vmatmul.f32.gmra.mxu0 %v2228
    %v2343 = vpop.f32.mrf.mxu0
    %v2344 = vadd.f32 0.0, %v2343
    %2345 = vmatmul.f32.gmra.mxu0 %v2231
    %v2346 = vpop.f32.mrf.mxu0
    %v2347 = vadd.f32 0.0, %v2346
    %2348 = vmatmul.f32.gmra.mxu0 %v2234
    %v2349 = vpop.f32.mrf.mxu0
    %v2350 = vadd.f32 0.0, %v2349
    %2351 = vdwg.mxu0
    %2352 = vmatpush.msra.mxu0 %v2194
    %2353 = vmatpush.msra.mxu0 %v2192
    %2354 = vmatpush.msra.mxu0 %v2190
    %2355 = vmatpush.msra.mxu0 %v2188
    %2356 = vmatpush.msra.mxu0 %v2186
    %2357 = vmatpush.msra.mxu0 %v2184
    %2358 = vmatpush.msra.mxu0 %v2182
    %2359 = vmatpush.msra.mxu0 %v2180
    %2360 = vmatpush.msra.mxu0 %v2178
    %2361 = vmatpush.msra.mxu0 %v2176
    %2362 = vmatpush.msra.mxu0 %v2174
    %2363 = vmatpush.msra.mxu0 %v2172
    %2364 = vmatpush.msra.mxu0 %v2170
    %2365 = vmatpush.msra.mxu0 %v2168
    %2366 = vmatpush.msra.mxu0 %v2166
    %2367 = vmatpush.msra.mxu0 %v2164
    %2368 = vmatmul.f32.gmra.mxu0 %v2254
    %v2369 = vpop.f32.mrf.mxu0
    %v2370 = vadd.f32 %v2341, %v2369
    %2371 = vmatmul.f32.gmra.mxu0 %v2257
    %v2372 = vpop.f32.mrf.mxu0
    %v2373 = vadd.f32 %v2344, %v2372
    %2374 = vmatmul.f32.gmra.mxu0 %v2260
    %v2375 = vpop.f32.mrf.mxu0
    %v2376 = vadd.f32 %v2347, %v2375
    %2377 = vmatmul.f32.gmra.mxu0 %v2263
    %v2378 = vpop.f32.mrf.mxu0
    %v2379 = vadd.f32 %v2350, %v2378
    %2380 = vdwg.mxu0
    %v2381 = vadd.f32 %v2056, %v2312
    %v2382 = vadd.f32 %v2114, %v2370
    %v2383 = vadd.f32 %v2059, %v2315
    %v2384 = vadd.f32 %v2117, %v2373
    %v2385 = vadd.f32 %v2062, %v2318
    %v2386 = vadd.f32 %v2120, %v2376
    %v2387 = vadd.f32 %v2065, %v2321
    %v2388 = vadd.f32 %v2123, %v2379
    %s2389 = scalar_lea.vmem [#allocation2], 96
    %v2390 = vld [vmem:[%s2389] sm:$0xff]
    %v2391 = vld [vmem:[%s2389 + $0x8] sm:$0xff]
    %v2392 = vld [vmem:[%s2389 + $0x10] sm:$0xff]
    %v2393 = vld [vmem:[%s2389 + $0x18] sm:$0xff]
    %s2394 = scalar_lea.vmem [#allocation4], 1536
    %v2395 = vld [vmem:[%s2394] sm:$0xff]
    %v2396 = vld [vmem:[%s2394 + $0x8] sm:$0xff]
    %v2397 = vld [vmem:[%s2394 + $0x10] sm:$0xff]
    %v2398 = vld [vmem:[%s2394 + $0x18] sm:$0xff]
    %v2399 = vld [vmem:[%s2394 + $0x20] sm:$0xff]
    %v2400 = vld [vmem:[%s2394 + $0x28] sm:$0xff]
    %v2401 = vld [vmem:[%s2394 + $0x30] sm:$0xff]
    %v2402 = vld [vmem:[%s2394 + $0x38] sm:$0xff]
    %v2403 = vld [vmem:[%s2394 + $0x40] sm:$0xff]
    %v2404 = vld [vmem:[%s2394 + $0x48] sm:$0xff]
    %v2405 = vld [vmem:[%s2394 + $0x50] sm:$0xff]
    %v2406 = vld [vmem:[%s2394 + $0x58] sm:$0xff]
    %v2407 = vld [vmem:[%s2394 + $0x60] sm:$0xff]
    %v2408 = vld [vmem:[%s2394 + $0x68] sm:$0xff]
    %v2409 = vld [vmem:[%s2394 + $0x70] sm:$0xff]
    %v2410 = vld [vmem:[%s2394 + $0x78] sm:$0xff]
    %v2411 = vld [vmem:[%s2394 + $0x80] sm:$0xff]
    %v2412 = vld [vmem:[%s2394 + $0x88] sm:$0xff]
    %v2413 = vld [vmem:[%s2394 + $0x90] sm:$0xff]
    %v2414 = vld [vmem:[%s2394 + $0x98] sm:$0xff]
    %v2415 = vld [vmem:[%s2394 + $0xa0] sm:$0xff]
    %v2416 = vld [vmem:[%s2394 + $0xa8] sm:$0xff]
    %v2417 = vld [vmem:[%s2394 + $0xb0] sm:$0xff]
    %v2418 = vld [vmem:[%s2394 + $0xb8] sm:$0xff]
    %v2419 = vld [vmem:[%s2394 + $0xc0] sm:$0xff]
    %v2420 = vld [vmem:[%s2394 + $0xc8] sm:$0xff]
    %v2421 = vld [vmem:[%s2394 + $0xd0] sm:$0xff]
    %v2422 = vld [vmem:[%s2394 + $0xd8] sm:$0xff]
    %v2423 = vld [vmem:[%s2394 + $0xe0] sm:$0xff]
    %v2424 = vld [vmem:[%s2394 + $0xe8] sm:$0xff]
    %v2425 = vld [vmem:[%s2394 + $0xf0] sm:$0xff]
    %v2426 = vld [vmem:[%s2394 + $0xf8] sm:$0xff]
    %v2427 = vld [vmem:[%s2394 + $0x100] sm:$0xff]
    %v2428 = vld [vmem:[%s2394 + $0x108] sm:$0xff]
    %v2429 = vld [vmem:[%s2394 + $0x110] sm:$0xff]
    %v2430 = vld [vmem:[%s2394 + $0x118] sm:$0xff]
    %v2431 = vld [vmem:[%s2394 + $0x120] sm:$0xff]
    %v2432 = vld [vmem:[%s2394 + $0x128] sm:$0xff]
    %v2433 = vld [vmem:[%s2394 + $0x130] sm:$0xff]
    %v2434 = vld [vmem:[%s2394 + $0x138] sm:$0xff]
    %v2435 = vld [vmem:[%s2394 + $0x140] sm:$0xff]
    %v2436 = vld [vmem:[%s2394 + $0x148] sm:$0xff]
    %v2437 = vld [vmem:[%s2394 + $0x150] sm:$0xff]
    %v2438 = vld [vmem:[%s2394 + $0x158] sm:$0xff]
    %v2439 = vld [vmem:[%s2394 + $0x160] sm:$0xff]
    %v2440 = vld [vmem:[%s2394 + $0x168] sm:$0xff]
    %v2441 = vld [vmem:[%s2394 + $0x170] sm:$0xff]
    %v2442 = vld [vmem:[%s2394 + $0x178] sm:$0xff]
    %v2443 = vld [vmem:[%s2394 + $0x180] sm:$0xff]
    %v2444 = vld [vmem:[%s2394 + $0x188] sm:$0xff]
    %v2445 = vld [vmem:[%s2394 + $0x190] sm:$0xff]
    %v2446 = vld [vmem:[%s2394 + $0x198] sm:$0xff]
    %v2447 = vld [vmem:[%s2394 + $0x1a0] sm:$0xff]
    %v2448 = vld [vmem:[%s2394 + $0x1a8] sm:$0xff]
    %v2449 = vld [vmem:[%s2394 + $0x1b0] sm:$0xff]
    %v2450 = vld [vmem:[%s2394 + $0x1b8] sm:$0xff]
    %v2451 = vld [vmem:[%s2394 + $0x1c0] sm:$0xff]
    %v2452 = vld [vmem:[%s2394 + $0x1c8] sm:$0xff]
    %v2453 = vld [vmem:[%s2394 + $0x1d0] sm:$0xff]
    %v2454 = vld [vmem:[%s2394 + $0x1d8] sm:$0xff]
    %v2455 = vld [vmem:[%s2394 + $0x1e0] sm:$0xff]
    %v2456 = vld [vmem:[%s2394 + $0x1e8] sm:$0xff]
    %v2457 = vld [vmem:[%s2394 + $0x1f0] sm:$0xff]
    %v2458 = vld [vmem:[%s2394 + $0x1f8] sm:$0xff]
    %v2460 = vsel %vm502, %v2390, 0
    %v2463 = vsel %vm502, %v2391, 0
    %v2466 = vsel %vm502, %v2392, 0
    %v2469 = vsel %vm502, %v2393, 0
    %2471 = vmatpush.msra.mxu0 0.0
    %2472 = vmatpush.msra.mxu0 0.0
    %2473 = vmatpush.msra.mxu0 0.0
    %2474 = vmatpush.msra.mxu0 0.0
    %2475 = vmatpush.msra.mxu0 0.0
    %2476 = vmatpush.msra.mxu0 0.0
    %2477 = vmatpush.msra.mxu0 0.0
    %2478 = vmatpush.msra.mxu0 0.0
    %2479 = vmatpush.msra.mxu0 %v1613
    %2480 = vmatpush.msra.mxu0 %v1611
    %2481 = vmatpush.msra.mxu0 %v1609
    %2482 = vmatpush.msra.mxu0 %v1607
    %2483 = vmatpush.msra.mxu0 %v1605
    %2484 = vmatpush.msra.mxu0 %v1603
    %2485 = vmatpush.msra.mxu0 %v1601
    %2486 = vmatpush.msra.mxu0 %v1599
    %2487 = vmatmul.f32.gmra.mxu0 %v2460
    %v2488 = vpop.f32.mrf.mxu0
    %v2489 = vadd.f32 0.0, %v2488
    %2490 = vmatmul.f32.gmra.mxu0 %v2463
    %v2491 = vpop.f32.mrf.mxu0
    %v2492 = vadd.f32 0.0, %v2491
    %2493 = vmatmul.f32.gmra.mxu0 %v2466
    %v2494 = vpop.f32.mrf.mxu0
    %v2495 = vadd.f32 0.0, %v2494
    %2496 = vmatmul.f32.gmra.mxu0 %v2469
    %v2497 = vpop.f32.mrf.mxu0
    %v2498 = vadd.f32 0.0, %v2497
    %2499 = vdwg.mxu0
    %2500 = vmatpush.msra.mxu0 0.0
    %2501 = vmatpush.msra.mxu0 0.0
    %2502 = vmatpush.msra.mxu0 0.0
    %2503 = vmatpush.msra.mxu0 0.0
    %2504 = vmatpush.msra.mxu0 0.0
    %2505 = vmatpush.msra.mxu0 0.0
    %2506 = vmatpush.msra.mxu0 0.0
    %2507 = vmatpush.msra.mxu0 0.0
    %2508 = vmatpush.msra.mxu0 %v1614
    %2509 = vmatpush.msra.mxu0 %v1612
    %2510 = vmatpush.msra.mxu0 %v1610
    %2511 = vmatpush.msra.mxu0 %v1608
    %2512 = vmatpush.msra.mxu0 %v1606
    %2513 = vmatpush.msra.mxu0 %v1604
    %2514 = vmatpush.msra.mxu0 %v1602
    %2515 = vmatpush.msra.mxu0 %v1600
    %2516 = vmatmul.f32.gmra.mxu0 %v2460
    %v2517 = vpop.f32.mrf.mxu0
    %v2518 = vadd.f32 0.0, %v2517
    %2519 = vmatmul.f32.gmra.mxu0 %v2463
    %v2520 = vpop.f32.mrf.mxu0
    %v2521 = vadd.f32 0.0, %v2520
    %2522 = vmatmul.f32.gmra.mxu0 %v2466
    %v2523 = vpop.f32.mrf.mxu0
    %v2524 = vadd.f32 0.0, %v2523
    %2525 = vmatmul.f32.gmra.mxu0 %v2469
    %v2526 = vpop.f32.mrf.mxu0
    %v2527 = vadd.f32 0.0, %v2526
    %2528 = vdwg.mxu0
    %2529 = vmatpush.msra.mxu0 %v2425
    %2530 = vmatpush.msra.mxu0 %v2423
    %2531 = vmatpush.msra.mxu0 %v2421
    %2532 = vmatpush.msra.mxu0 %v2419
    %2533 = vmatpush.msra.mxu0 %v2417
    %2534 = vmatpush.msra.mxu0 %v2415
    %2535 = vmatpush.msra.mxu0 %v2413
    %2536 = vmatpush.msra.mxu0 %v2411
    %2537 = vmatpush.msra.mxu0 %v2409
    %2538 = vmatpush.msra.mxu0 %v2407
    %2539 = vmatpush.msra.mxu0 %v2405
    %2540 = vmatpush.msra.mxu0 %v2403
    %2541 = vmatpush.msra.mxu0 %v2401
    %2542 = vmatpush.msra.mxu0 %v2399
    %2543 = vmatpush.msra.mxu0 %v2397
    %2544 = vmatpush.msra.mxu0 %v2395
    %2545 = vmatmul.f32.gmra.mxu0 %v2489
    %v2546 = vpop.f32.mrf.mxu0
    %v2547 = vadd.f32 0.0, %v2546
    %2548 = vmatmul.f32.gmra.mxu0 %v2492
    %v2549 = vpop.f32.mrf.mxu0
    %v2550 = vadd.f32 0.0, %v2549
    %2551 = vmatmul.f32.gmra.mxu0 %v2495
    %v2552 = vpop.f32.mrf.mxu0
    %v2553 = vadd.f32 0.0, %v2552
    %2554 = vmatmul.f32.gmra.mxu0 %v2498
    %v2555 = vpop.f32.mrf.mxu0
    %v2556 = vadd.f32 0.0, %v2555
    %2557 = vdwg.mxu0
    %2558 = vmatpush.msra.mxu0 %v2457
    %2559 = vmatpush.msra.mxu0 %v2455
    %2560 = vmatpush.msra.mxu0 %v2453
    %2561 = vmatpush.msra.mxu0 %v2451
    %2562 = vmatpush.msra.mxu0 %v2449
    %2563 = vmatpush.msra.mxu0 %v2447
    %2564 = vmatpush.msra.mxu0 %v2445
    %2565 = vmatpush.msra.mxu0 %v2443
    %2566 = vmatpush.msra.mxu0 %v2441
    %2567 = vmatpush.msra.mxu0 %v2439
    %2568 = vmatpush.msra.mxu0 %v2437
    %2569 = vmatpush.msra.mxu0 %v2435
    %2570 = vmatpush.msra.mxu0 %v2433
    %2571 = vmatpush.msra.mxu0 %v2431
    %2572 = vmatpush.msra.mxu0 %v2429
    %2573 = vmatpush.msra.mxu0 %v2427
    %2574 = vmatmul.f32.gmra.mxu0 %v2518
    %v2575 = vpop.f32.mrf.mxu0
    %v2576 = vadd.f32 %v2547, %v2575
    %2577 = vmatmul.f32.gmra.mxu0 %v2521
    %v2578 = vpop.f32.mrf.mxu0
    %v2579 = vadd.f32 %v2550, %v2578
    %2580 = vmatmul.f32.gmra.mxu0 %v2524
    %v2581 = vpop.f32.mrf.mxu0
    %v2582 = vadd.f32 %v2553, %v2581
    %2583 = vmatmul.f32.gmra.mxu0 %v2527
    %v2584 = vpop.f32.mrf.mxu0
    %v2585 = vadd.f32 %v2556, %v2584
    %2586 = vdwg.mxu0
    %2587 = vmatpush.msra.mxu0 %v2426
    %2588 = vmatpush.msra.mxu0 %v2424
    %2589 = vmatpush.msra.mxu0 %v2422
    %2590 = vmatpush.msra.mxu0 %v2420
    %2591 = vmatpush.msra.mxu0 %v2418
    %2592 = vmatpush.msra.mxu0 %v2416
    %2593 = vmatpush.msra.mxu0 %v2414
    %2594 = vmatpush.msra.mxu0 %v2412
    %2595 = vmatpush.msra.mxu0 %v2410
    %2596 = vmatpush.msra.mxu0 %v2408
    %2597 = vmatpush.msra.mxu0 %v2406
    %2598 = vmatpush.msra.mxu0 %v2404
    %2599 = vmatpush.msra.mxu0 %v2402
    %2600 = vmatpush.msra.mxu0 %v2400
    %2601 = vmatpush.msra.mxu0 %v2398
    %2602 = vmatpush.msra.mxu0 %v2396
    %2603 = vmatmul.f32.gmra.mxu0 %v2489
    %v2604 = vpop.f32.mrf.mxu0
    %v2605 = vadd.f32 0.0, %v2604
    %2606 = vmatmul.f32.gmra.mxu0 %v2492
    %v2607 = vpop.f32.mrf.mxu0
    %v2608 = vadd.f32 0.0, %v2607
    %2609 = vmatmul.f32.gmra.mxu0 %v2495
    %v2610 = vpop.f32.mrf.mxu0
    %v2611 = vadd.f32 0.0, %v2610
    %2612 = vmatmul.f32.gmra.mxu0 %v2498
    %v2613 = vpop.f32.mrf.mxu0
    %v2614 = vadd.f32 0.0, %v2613
    %2615 = vdwg.mxu0
    %2616 = vmatpush.msra.mxu0 %v2458
    %2617 = vmatpush.msra.mxu0 %v2456
    %2618 = vmatpush.msra.mxu0 %v2454
    %2619 = vmatpush.msra.mxu0 %v2452
    %2620 = vmatpush.msra.mxu0 %v2450
    %2621 = vmatpush.msra.mxu0 %v2448
    %2622 = vmatpush.msra.mxu0 %v2446
    %2623 = vmatpush.msra.mxu0 %v2444
    %2624 = vmatpush.msra.mxu0 %v2442
    %2625 = vmatpush.msra.mxu0 %v2440
    %2626 = vmatpush.msra.mxu0 %v2438
    %2627 = vmatpush.msra.mxu0 %v2436
    %2628 = vmatpush.msra.mxu0 %v2434
    %2629 = vmatpush.msra.mxu0 %v2432
    %2630 = vmatpush.msra.mxu0 %v2430
    %2631 = vmatpush.msra.mxu0 %v2428
    %2632 = vmatmul.f32.gmra.mxu0 %v2518
    %v2633 = vpop.f32.mrf.mxu0
    %v2634 = vadd.f32 %v2605, %v2633
    %2635 = vmatmul.f32.gmra.mxu0 %v2521
    %v2636 = vpop.f32.mrf.mxu0
    %v2637 = vadd.f32 %v2608, %v2636
    %2638 = vmatmul.f32.gmra.mxu0 %v2524
    %v2639 = vpop.f32.mrf.mxu0
    %v2640 = vadd.f32 %v2611, %v2639
    %2641 = vmatmul.f32.gmra.mxu0 %v2527
    %v2642 = vpop.f32.mrf.mxu0
    %v2643 = vadd.f32 %v2614, %v2642
    %2644 = vdwg.mxu0
    %v2645 = vadd.f32 %v2381, %v2576
    %v2646 = vadd.f32 %v2382, %v2634
    %v2647 = vadd.f32 %v2383, %v2579
    %v2648 = vadd.f32 %v2384, %v2637
    %v2649 = vadd.f32 %v2385, %v2582
    %v2650 = vadd.f32 %v2386, %v2640
    %v2651 = vadd.f32 %v2387, %v2585
    %v2652 = vadd.f32 %v2388, %v2643
    %v2653 = vlaneseq
    %v2654 = vshrl.u32 %v2653, 7
    %v2655 = vadd.s32 %v2654, 8
    %v2656 = vadd.s32 %v2654, 16
    %v2657 = vadd.s32 %v2654, 24
    %v2658 = vadd.s32 %v2654, 32
    %v2659 = vadd.s32 %v2654, 40
    %v2660 = vadd.s32 %v2654, 48
    %v2661 = vadd.s32 %v2654, 56
    %v2662 = vadd.s32 %v2654, 64
    %v2663 = vadd.s32 %v2654, 72
    %v2664 = vadd.s32 %v2654, 80
    %v2665 = vadd.s32 %v2654, 88
    %v2666 = vadd.s32 %v2654, 96
    %v2667 = vadd.s32 %v2654, 104
    %v2668 = vadd.s32 %v2654, 112
    %v2669 = vadd.s32 %v2654, 120
    %v2670 = vadd.s32 %v2654, 128
    %v2671 = vadd.s32 %v2654, 136
    %v2672 = vadd.s32 %v2654, 144
    %v2673 = vadd.s32 %v2654, 152
    %v2674 = vadd.s32 %v2654, 160
    %v2675 = vadd.s32 %v2654, 168
    %v2676 = vadd.s32 %v2654, 176
    %v2677 = vadd.s32 %v2654, 184
    %v2678 = vadd.s32 %v2654, 192
    %v2679 = vadd.s32 %v2654, 200
    %v2680 = vadd.s32 %v2654, 208
    %v2681 = vadd.s32 %v2654, 216
    %v2682 = vadd.s32 %v2654, 224
    %v2683 = vadd.s32 %v2654, 232
    %v2684 = vadd.s32 %v2654, 240
    %v2685 = vadd.s32 %v2654, 248
    %v2686 = vlaneseq
    %v2687 = vand.u32 %v2686, 127
    %v2688 = vadd.s32 %v2687, 128
    %v2689 = vand.u32 %v2654, 15
    %v2690 = vand.u32 %v2655, 15
    %v2691 = vand.u32 %v2656, 15
    %v2692 = vand.u32 %v2657, 15
    %v2693 = vand.u32 %v2658, 15
    %v2694 = vand.u32 %v2659, 15
    %v2695 = vand.u32 %v2660, 15
    %v2696 = vand.u32 %v2661, 15
    %v2697 = vand.u32 %v2662, 15
    %v2698 = vand.u32 %v2663, 15
    %v2699 = vand.u32 %v2664, 15
    %v2700 = vand.u32 %v2665, 15
    %v2701 = vand.u32 %v2666, 15
    %v2702 = vand.u32 %v2667, 15
    %v2703 = vand.u32 %v2668, 15
    %v2704 = vand.u32 %v2669, 15
    %v2705 = vand.u32 %v2670, 15
    %v2706 = vand.u32 %v2671, 15
    %v2707 = vand.u32 %v2672, 15
    %v2708 = vand.u32 %v2673, 15
    %v2709 = vand.u32 %v2674, 15
    %v2710 = vand.u32 %v2675, 15
    %v2711 = vand.u32 %v2676, 15
    %v2712 = vand.u32 %v2677, 15
    %v2713 = vand.u32 %v2678, 15
    %v2714 = vand.u32 %v2679, 15
    %v2715 = vand.u32 %v2680, 15
    %v2716 = vand.u32 %v2681, 15
    %v2717 = vand.u32 %v2682, 15
    %v2718 = vand.u32 %v2683, 15
    %v2719 = vand.u32 %v2684, 15
    %v2720 = vand.u32 %v2685, 15
    %v2721 = vand.u32 %v2687, 15
    %v2722 = vand.u32 %v2688, 15
    %vm2723 = vcmp.eq.s32.totalorder %v2689, %v2721
    %vm2724 = vcmp.eq.s32.totalorder %v2689, %v2722
    %vm2725 = vcmp.eq.s32.totalorder %v2690, %v2721
    %vm2726 = vcmp.eq.s32.totalorder %v2690, %v2722
    %vm2727 = vcmp.eq.s32.totalorder %v2691, %v2721
    %vm2728 = vcmp.eq.s32.totalorder %v2691, %v2722
    %vm2729 = vcmp.eq.s32.totalorder %v2692, %v2721
    %vm2730 = vcmp.eq.s32.totalorder %v2692, %v2722
    %vm2731 = vcmp.eq.s32.totalorder %v2693, %v2721
    %vm2732 = vcmp.eq.s32.totalorder %v2693, %v2722
    %vm2733 = vcmp.eq.s32.totalorder %v2694, %v2721
    %vm2734 = vcmp.eq.s32.totalorder %v2694, %v2722
    %vm2735 = vcmp.eq.s32.totalorder %v2695, %v2721
    %vm2736 = vcmp.eq.s32.totalorder %v2695, %v2722
    %vm2737 = vcmp.eq.s32.totalorder %v2696, %v2721
    %vm2738 = vcmp.eq.s32.totalorder %v2696, %v2722
    %vm2739 = vcmp.eq.s32.totalorder %v2697, %v2721
    %vm2740 = vcmp.eq.s32.totalorder %v2697, %v2722
    %vm2741 = vcmp.eq.s32.totalorder %v2698, %v2721
    %vm2742 = vcmp.eq.s32.totalorder %v2698, %v2722
    %vm2743 = vcmp.eq.s32.totalorder %v2699, %v2721
    %vm2744 = vcmp.eq.s32.totalorder %v2699, %v2722
    %vm2745 = vcmp.eq.s32.totalorder %v2700, %v2721
    %vm2746 = vcmp.eq.s32.totalorder %v2700, %v2722
    %vm2747 = vcmp.eq.s32.totalorder %v2701, %v2721
    %vm2748 = vcmp.eq.s32.totalorder %v2701, %v2722
    %vm2749 = vcmp.eq.s32.totalorder %v2702, %v2721
    %vm2750 = vcmp.eq.s32.totalorder %v2702, %v2722
    %vm2751 = vcmp.eq.s32.totalorder %v2703, %v2721
    %vm2752 = vcmp.eq.s32.totalorder %v2703, %v2722
    %vm2753 = vcmp.eq.s32.totalorder %v2704, %v2721
    %vm2754 = vcmp.eq.s32.totalorder %v2704, %v2722
    %vm2755 = vcmp.eq.s32.totalorder %v2705, %v2721
    %vm2756 = vcmp.eq.s32.totalorder %v2705, %v2722
    %vm2757 = vcmp.eq.s32.totalorder %v2706, %v2721
    %vm2758 = vcmp.eq.s32.totalorder %v2706, %v2722
    %vm2759 = vcmp.eq.s32.totalorder %v2707, %v2721
    %vm2760 = vcmp.eq.s32.totalorder %v2707, %v2722
    %vm2761 = vcmp.eq.s32.totalorder %v2708, %v2721
    %vm2762 = vcmp.eq.s32.totalorder %v2708, %v2722
    %vm2763 = vcmp.eq.s32.totalorder %v2709, %v2721
    %vm2764 = vcmp.eq.s32.totalorder %v2709, %v2722
    %vm2765 = vcmp.eq.s32.totalorder %v2710, %v2721
    %vm2766 = vcmp.eq.s32.totalorder %v2710, %v2722
    %vm2767 = vcmp.eq.s32.totalorder %v2711, %v2721
    %vm2768 = vcmp.eq.s32.totalorder %v2711, %v2722
    %vm2769 = vcmp.eq.s32.totalorder %v2712, %v2721
    %vm2770 = vcmp.eq.s32.totalorder %v2712, %v2722
    %vm2771 = vcmp.eq.s32.totalorder %v2713, %v2721
    %vm2772 = vcmp.eq.s32.totalorder %v2713, %v2722
    %vm2773 = vcmp.eq.s32.totalorder %v2714, %v2721
    %vm2774 = vcmp.eq.s32.totalorder %v2714, %v2722
    %vm2775 = vcmp.eq.s32.totalorder %v2715, %v2721
    %vm2776 = vcmp.eq.s32.totalorder %v2715, %v2722
    %vm2777 = vcmp.eq.s32.totalorder %v2716, %v2721
    %vm2778 = vcmp.eq.s32.totalorder %v2716, %v2722
    %vm2779 = vcmp.eq.s32.totalorder %v2717, %v2721
    %vm2780 = vcmp.eq.s32.totalorder %v2717, %v2722
    %vm2781 = vcmp.eq.s32.totalorder %v2718, %v2721
    %vm2782 = vcmp.eq.s32.totalorder %v2718, %v2722
    %vm2783 = vcmp.eq.s32.totalorder %v2719, %v2721
    %vm2784 = vcmp.eq.s32.totalorder %v2719, %v2722
    %vm2785 = vcmp.eq.s32.totalorder %v2720, %v2721
    %vm2786 = vcmp.eq.s32.totalorder %v2720, %v2722
    %v2787 = vsel %vm2723, 1, 0
    %v2788 = vsel %vm2724, 1, 0
    %v2789 = vsel %vm2725, 1, 0
    %v2790 = vsel %vm2726, 1, 0
    %v2791 = vsel %vm2727, 1, 0
    %v2792 = vsel %vm2728, 1, 0
    %v2793 = vsel %vm2729, 1, 0
    %v2794 = vsel %vm2730, 1, 0
    %v2795 = vsel %vm2731, 1, 0
    %v2796 = vsel %vm2732, 1, 0
    %v2797 = vsel %vm2733, 1, 0
    %v2798 = vsel %vm2734, 1, 0
    %v2799 = vsel %vm2735, 1, 0
    %v2800 = vsel %vm2736, 1, 0
    %v2801 = vsel %vm2737, 1, 0
    %v2802 = vsel %vm2738, 1, 0
    %v2803 = vsel %vm2739, 1, 0
    %v2804 = vsel %vm2740, 1, 0
    %v2805 = vsel %vm2741, 1, 0
    %v2806 = vsel %vm2742, 1, 0
    %v2807 = vsel %vm2743, 1, 0
    %v2808 = vsel %vm2744, 1, 0
    %v2809 = vsel %vm2745, 1, 0
    %v2810 = vsel %vm2746, 1, 0
    %v2811 = vsel %vm2747, 1, 0
    %v2812 = vsel %vm2748, 1, 0
    %v2813 = vsel %vm2749, 1, 0
    %v2814 = vsel %vm2750, 1, 0
    %v2815 = vsel %vm2751, 1, 0
    %v2816 = vsel %vm2752, 1, 0
    %v2817 = vsel %vm2753, 1, 0
    %v2818 = vsel %vm2754, 1, 0
    %v2819 = vsel %vm2755, 1, 0
    %v2820 = vsel %vm2756, 1, 0
    %v2821 = vsel %vm2757, 1, 0
    %v2822 = vsel %vm2758, 1, 0
    %v2823 = vsel %vm2759, 1, 0
    %v2824 = vsel %vm2760, 1, 0
    %v2825 = vsel %vm2761, 1, 0
    %v2826 = vsel %vm2762, 1, 0
    %v2827 = vsel %vm2763, 1, 0
    %v2828 = vsel %vm2764, 1, 0
    %v2829 = vsel %vm2765, 1, 0
    %v2830 = vsel %vm2766, 1, 0
    %v2831 = vsel %vm2767, 1, 0
    %v2832 = vsel %vm2768, 1, 0
    %v2833 = vsel %vm2769, 1, 0
    %v2834 = vsel %vm2770, 1, 0
    %v2835 = vsel %vm2771, 1, 0
    %v2836 = vsel %vm2772, 1, 0
    %v2837 = vsel %vm2773, 1, 0
    %v2838 = vsel %vm2774, 1, 0
    %v2839 = vsel %vm2775, 1, 0
    %v2840 = vsel %vm2776, 1, 0
    %v2841 = vsel %vm2777, 1, 0
    %v2842 = vsel %vm2778, 1, 0
    %v2843 = vsel %vm2779, 1, 0
    %v2844 = vsel %vm2780, 1, 0
    %v2845 = vsel %vm2781, 1, 0
    %v2846 = vsel %vm2782, 1, 0
    %v2847 = vsel %vm2783, 1, 0
    %v2848 = vsel %vm2784, 1, 0
    %v2849 = vsel %vm2785, 1, 0
    %v2850 = vsel %vm2786, 1, 0
    %v2851 = vcvt.s32.f32 %v2787
    %v2852 = vcvt.s32.f32 %v2788
    %v2853 = vcvt.s32.f32 %v2789
    %v2854 = vcvt.s32.f32 %v2790
    %v2855 = vcvt.s32.f32 %v2791
    %v2856 = vcvt.s32.f32 %v2792
    %v2857 = vcvt.s32.f32 %v2793
    %v2858 = vcvt.s32.f32 %v2794
    %v2859 = vcvt.s32.f32 %v2795
    %v2860 = vcvt.s32.f32 %v2796
    %v2861 = vcvt.s32.f32 %v2797
    %v2862 = vcvt.s32.f32 %v2798
    %v2863 = vcvt.s32.f32 %v2799
    %v2864 = vcvt.s32.f32 %v2800
    %v2865 = vcvt.s32.f32 %v2801
    %v2866 = vcvt.s32.f32 %v2802
    %v2867 = vcvt.s32.f32 %v2803
    %v2868 = vcvt.s32.f32 %v2804
    %v2869 = vcvt.s32.f32 %v2805
    %v2870 = vcvt.s32.f32 %v2806
    %v2871 = vcvt.s32.f32 %v2807
    %v2872 = vcvt.s32.f32 %v2808
    %v2873 = vcvt.s32.f32 %v2809
    %v2874 = vcvt.s32.f32 %v2810
    %v2875 = vcvt.s32.f32 %v2811
    %v2876 = vcvt.s32.f32 %v2812
    %v2877 = vcvt.s32.f32 %v2813
    %v2878 = vcvt.s32.f32 %v2814
    %v2879 = vcvt.s32.f32 %v2815
    %v2880 = vcvt.s32.f32 %v2816
    %v2881 = vcvt.s32.f32 %v2817
    %v2882 = vcvt.s32.f32 %v2818
    %v2883 = vcvt.s32.f32 %v2819
    %v2884 = vcvt.s32.f32 %v2820
    %v2885 = vcvt.s32.f32 %v2821
    %v2886 = vcvt.s32.f32 %v2822
    %v2887 = vcvt.s32.f32 %v2823
    %v2888 = vcvt.s32.f32 %v2824
    %v2889 = vcvt.s32.f32 %v2825
    %v2890 = vcvt.s32.f32 %v2826
    %v2891 = vcvt.s32.f32 %v2827
    %v2892 = vcvt.s32.f32 %v2828
    %v2893 = vcvt.s32.f32 %v2829
    %v2894 = vcvt.s32.f32 %v2830
    %v2895 = vcvt.s32.f32 %v2831
    %v2896 = vcvt.s32.f32 %v2832
    %v2897 = vcvt.s32.f32 %v2833
    %v2898 = vcvt.s32.f32 %v2834
    %v2899 = vcvt.s32.f32 %v2835
    %v2900 = vcvt.s32.f32 %v2836
    %v2901 = vcvt.s32.f32 %v2837
    %v2902 = vcvt.s32.f32 %v2838
    %v2903 = vcvt.s32.f32 %v2839
    %v2904 = vcvt.s32.f32 %v2840
    %v2905 = vcvt.s32.f32 %v2841
    %v2906 = vcvt.s32.f32 %v2842
    %v2907 = vcvt.s32.f32 %v2843
    %v2908 = vcvt.s32.f32 %v2844
    %v2909 = vcvt.s32.f32 %v2845
    %v2910 = vcvt.s32.f32 %v2846
    %v2911 = vcvt.s32.f32 %v2847
    %v2912 = vcvt.s32.f32 %v2848
    %v2913 = vcvt.s32.f32 %v2849
    %v2914 = vcvt.s32.f32 %v2850
    %v2915 = vadd.f32 %v2645, %v2647
    %v2916 = vadd.f32 %v2915, %v2649
    %v2917 = vadd.f32 %v2916, %v2651
    %v2918 = vrot.slane %v2917, 4
    %v2919 = vadd.f32 %v2917, %v2918
    %v2920 = vrot.slane %v2919, 2
    %v2921 = vadd.f32 %v2919, %v2920
    %v2922 = vrot.slane %v2921, 1
    %v2923 = vadd.f32 %v2921, %v2922
    %v2924 = vadd.f32 %v2646, %v2648
    %v2925 = vadd.f32 %v2924, %v2650
    %v2926 = vadd.f32 %v2925, %v2652
    %v2927 = vrot.slane %v2926, 4
    %v2928 = vadd.f32 %v2926, %v2927
    %v2929 = vrot.slane %v2928, 2
    %v2930 = vadd.f32 %v2928, %v2929
    %v2931 = vrot.slane %v2930, 1
    %v2932 = vadd.f32 %v2930, %v2931
    %2933 = vmatpush.msra.mxu0 %v2881
    %2934 = vmatpush.msra.mxu0 %v2879
    %2935 = vmatpush.msra.mxu0 %v2877
    %2936 = vmatpush.msra.mxu0 %v2875
    %2937 = vmatpush.msra.mxu0 %v2873
    %2938 = vmatpush.msra.mxu0 %v2871
    %2939 = vmatpush.msra.mxu0 %v2869
    %2940 = vmatpush.msra.mxu0 %v2867
    %2941 = vmatpush.msra.mxu0 %v2865
    %2942 = vmatpush.msra.mxu0 %v2863
    %2943 = vmatpush.msra.mxu0 %v2861
    %2944 = vmatpush.msra.mxu0 %v2859
    %2945 = vmatpush.msra.mxu0 %v2857
    %2946 = vmatpush.msra.mxu0 %v2855
    %2947 = vmatpush.msra.mxu0 %v2853
    %2948 = vmatpush.msra.mxu0 %v2851
    %2949 = vmatmul.f32.gmra.mxu0 %v2923
    %v2950 = vpop.f32.mrf.mxu0
    %v2951 = vadd.f32 0.0, %v2950
    %2952 = vdwg.mxu0
    %2953 = vmatpush.msra.mxu0 %v2913
    %2954 = vmatpush.msra.mxu0 %v2911
    %2955 = vmatpush.msra.mxu0 %v2909
    %2956 = vmatpush.msra.mxu0 %v2907
    %2957 = vmatpush.msra.mxu0 %v2905
    %2958 = vmatpush.msra.mxu0 %v2903
    %2959 = vmatpush.msra.mxu0 %v2901
    %2960 = vmatpush.msra.mxu0 %v2899
    %2961 = vmatpush.msra.mxu0 %v2897
    %2962 = vmatpush.msra.mxu0 %v2895
    %2963 = vmatpush.msra.mxu0 %v2893
    %2964 = vmatpush.msra.mxu0 %v2891
    %2965 = vmatpush.msra.mxu0 %v2889
    %2966 = vmatpush.msra.mxu0 %v2887
    %2967 = vmatpush.msra.mxu0 %v2885
    %2968 = vmatpush.msra.mxu0 %v2883
    %2969 = vmatmul.f32.gmra.mxu0 %v2932
    %v2970 = vpop.f32.mrf.mxu0
    %v2971 = vadd.f32 %v2951, %v2970
    %2972 = vdwg.mxu0
    %2973 = vmatpush.msra.mxu0 %v2882
    %2974 = vmatpush.msra.mxu0 %v2880
    %2975 = vmatpush.msra.mxu0 %v2878
    %2976 = vmatpush.msra.mxu0 %v2876
    %2977 = vmatpush.msra.mxu0 %v2874
    %2978 = vmatpush.msra.mxu0 %v2872
    %2979 = vmatpush.msra.mxu0 %v2870
    %2980 = vmatpush.msra.mxu0 %v2868
    %2981 = vmatpush.msra.mxu0 %v2866
    %2982 = vmatpush.msra.mxu0 %v2864
    %2983 = vmatpush.msra.mxu0 %v2862
    %2984 = vmatpush.msra.mxu0 %v2860
    %2985 = vmatpush.msra.mxu0 %v2858
    %2986 = vmatpush.msra.mxu0 %v2856
    %2987 = vmatpush.msra.mxu0 %v2854
    %2988 = vmatpush.msra.mxu0 %v2852
    %2989 = vmatmul.f32.gmra.mxu0 %v2923
    %v2990 = vpop.f32.mrf.mxu0
    %v2991 = vadd.f32 0.0, %v2990
    %2992 = vdwg.mxu0
    %2993 = vmatpush.msra.mxu0 %v2914
    %2994 = vmatpush.msra.mxu0 %v2912
    %2995 = vmatpush.msra.mxu0 %v2910
    %2996 = vmatpush.msra.mxu0 %v2908
    %2997 = vmatpush.msra.mxu0 %v2906
    %2998 = vmatpush.msra.mxu0 %v2904
    %2999 = vmatpush.msra.mxu0 %v2902
    %3000 = vmatpush.msra.mxu0 %v2900
    %3001 = vmatpush.msra.mxu0 %v2898
    %3002 = vmatpush.msra.mxu0 %v2896
    %3003 = vmatpush.msra.mxu0 %v2894
    %3004 = vmatpush.msra.mxu0 %v2892
    %3005 = vmatpush.msra.mxu0 %v2890
    %3006 = vmatpush.msra.mxu0 %v2888
    %3007 = vmatpush.msra.mxu0 %v2886
    %3008 = vmatpush.msra.mxu0 %v2884
    %3009 = vmatmul.f32.gmra.mxu0 %v2932
    %v3010 = vpop.f32.mrf.mxu0
    %v3011 = vadd.f32 %v2991, %v3010
    %3012 = vdwg.mxu0
    %v3013 = vmul.f32 %v2971, 0.001953125
    %v3014 = vmul.f32 %v3011, 0.001953125
    %v3015 = vperm.slane %v3013, 0
    %v3016 = vperm.slane %v3014, 0
    %v3017 = vsub.f32 %v2645, %v3015
    %v3018 = vsub.f32 %v2646, %v3016
    %v3019 = vsub.f32 %v2647, %v3015
    %v3020 = vsub.f32 %v2648, %v3016
    %v3021 = vsub.f32 %v2649, %v3015
    %v3022 = vsub.f32 %v2650, %v3016
    %v3023 = vsub.f32 %v2651, %v3015
    %v3024 = vsub.f32 %v2652, %v3016
    %v3025 = vmul.f32 %v3017, %v3017
    %v3026 = vmul.f32 %v3018, %v3018
    %v3027 = vmul.f32 %v3019, %v3019
    %v3028 = vmul.f32 %v3020, %v3020
    %v3029 = vmul.f32 %v3021, %v3021
    %v3030 = vmul.f32 %v3022, %v3022
    %v3031 = vmul.f32 %v3023, %v3023
    %v3032 = vmul.f32 %v3024, %v3024
    %v3033 = vadd.f32 %v3025, %v3027
    %v3034 = vadd.f32 %v3033, %v3029
    %v3035 = vadd.f32 %v3034, %v3031
    %v3036 = vrot.slane %v3035, 4
    %v3037 = vadd.f32 %v3035, %v3036
    %v3038 = vrot.slane %v3037, 2
    %v3039 = vadd.f32 %v3037, %v3038
    %v3040 = vrot.slane %v3039, 1
    %v3041 = vadd.f32 %v3039, %v3040
    %v3042 = vadd.f32 %v3026, %v3028
    %v3043 = vadd.f32 %v3042, %v3030
    %v3044 = vadd.f32 %v3043, %v3032
    %v3045 = vrot.slane %v3044, 4
    %v3046 = vadd.f32 %v3044, %v3045
    %v3047 = vrot.slane %v3046, 2
    %v3048 = vadd.f32 %v3046, %v3047
    %v3049 = vrot.slane %v3048, 1
    %v3050 = vadd.f32 %v3048, %v3049
    %3051 = vmatpush.msra.mxu0 %v2881
    %3052 = vmatpush.msra.mxu0 %v2879
    %3053 = vmatpush.msra.mxu0 %v2877
    %3054 = vmatpush.msra.mxu0 %v2875
    %3055 = vmatpush.msra.mxu0 %v2873
    %3056 = vmatpush.msra.mxu0 %v2871
    %3057 = vmatpush.msra.mxu0 %v2869
    %3058 = vmatpush.msra.mxu0 %v2867
    %3059 = vmatpush.msra.mxu0 %v2865
    %3060 = vmatpush.msra.mxu0 %v2863
    %3061 = vmatpush.msra.mxu0 %v2861
    %3062 = vmatpush.msra.mxu0 %v2859
    %3063 = vmatpush.msra.mxu0 %v2857
    %3064 = vmatpush.msra.mxu0 %v2855
    %3065 = vmatpush.msra.mxu0 %v2853
    %3066 = vmatpush.msra.mxu0 %v2851
    %3067 = vmatmul.f32.gmra.mxu0 %v3041
    %v3068 = vpop.f32.mrf.mxu0
    %v3069 = vadd.f32 0.0, %v3068
    %3070 = vdwg.mxu0
    %3071 = vmatpush.msra.mxu0 %v2913
    %3072 = vmatpush.msra.mxu0 %v2911
    %3073 = vmatpush.msra.mxu0 %v2909
    %3074 = vmatpush.msra.mxu0 %v2907
    %3075 = vmatpush.msra.mxu0 %v2905
    %3076 = vmatpush.msra.mxu0 %v2903
    %3077 = vmatpush.msra.mxu0 %v2901
    %3078 = vmatpush.msra.mxu0 %v2899
    %3079 = vmatpush.msra.mxu0 %v2897
    %3080 = vmatpush.msra.mxu0 %v2895
    %3081 = vmatpush.msra.mxu0 %v2893
    %3082 = vmatpush.msra.mxu0 %v2891
    %3083 = vmatpush.msra.mxu0 %v2889
    %3084 = vmatpush.msra.mxu0 %v2887
    %3085 = vmatpush.msra.mxu0 %v2885
    %3086 = vmatpush.msra.mxu0 %v2883
    %3087 = vmatmul.f32.gmra.mxu0 %v3050
    %v3088 = vpop.f32.mrf.mxu0
    %v3089 = vadd.f32 %v3069, %v3088
    %3090 = vdwg.mxu0
    %3091 = vmatpush.msra.mxu0 %v2882
    %3092 = vmatpush.msra.mxu0 %v2880
    %3093 = vmatpush.msra.mxu0 %v2878
    %3094 = vmatpush.msra.mxu0 %v2876
    %3095 = vmatpush.msra.mxu0 %v2874
    %3096 = vmatpush.msra.mxu0 %v2872
    %3097 = vmatpush.msra.mxu0 %v2870
    %3098 = vmatpush.msra.mxu0 %v2868
    %3099 = vmatpush.msra.mxu0 %v2866
    %3100 = vmatpush.msra.mxu0 %v2864
    %3101 = vmatpush.msra.mxu0 %v2862
    %3102 = vmatpush.msra.mxu0 %v2860
    %3103 = vmatpush.msra.mxu0 %v2858
    %3104 = vmatpush.msra.mxu0 %v2856
    %3105 = vmatpush.msra.mxu0 %v2854
    %3106 = vmatpush.msra.mxu0 %v2852
    %3107 = vmatmul.f32.gmra.mxu0 %v3041
    %v3108 = vpop.f32.mrf.mxu0
    %v3109 = vadd.f32 0.0, %v3108
    %3110 = vdwg.mxu0
    %3111 = vmatpush.msra.mxu0 %v2914
    %3112 = vmatpush.msra.mxu0 %v2912
    %3113 = vmatpush.msra.mxu0 %v2910
    %3114 = vmatpush.msra.mxu0 %v2908
    %3115 = vmatpush.msra.mxu0 %v2906
    %3116 = vmatpush.msra.mxu0 %v2904
    %3117 = vmatpush.msra.mxu0 %v2902
    %3118 = vmatpush.msra.mxu0 %v2900
    %3119 = vmatpush.msra.mxu0 %v2898
    %3120 = vmatpush.msra.mxu0 %v2896
    %3121 = vmatpush.msra.mxu0 %v2894
    %3122 = vmatpush.msra.mxu0 %v2892
    %3123 = vmatpush.msra.mxu0 %v2890
    %3124 = vmatpush.msra.mxu0 %v2888
    %3125 = vmatpush.msra.mxu0 %v2886
    %3126 = vmatpush.msra.mxu0 %v2884
    %3127 = vmatmul.f32.gmra.mxu0 %v3050
    %v3128 = vpop.f32.mrf.mxu0
    %v3129 = vadd.f32 %v3109, %v3128
    %3130 = vdwg.mxu0
    %v3131 = vmul.f32 %v3089, 0.001953125
    %v3132 = vmul.f32 %v3129, 0.001953125
    %v3133 = vld [vmem:[#allocation6] ss:$2 sm:$0x3]
    %s3134 = scalar_lea.vmem [#allocation6], 1
    %v3135 = vld [vmem:[%s3134] ss:$2 sm:$0x3]
    %v3136 = vadd.f32 %v3131, 1e-05
    %v3137 = vadd.f32 %v3132, 1e-05
    %v3138 = vrsqrt.pop %v3136
    %v3139 = vmul.f32 %v3138, %v3136
    %v3140 = vmul.f32 %v3139, %v3138
    %v3141 = vmul.f32 0.5, %v3140
    %v3142 = vsub.f32 1.5, %v3141
    %v3143 = vmul.f32 %v3138, %v3142
    %vm3144 = vweird.f32 %v3136
    %vm3145 = vweird.f32 %v3138
    %vm3146 = vmor %vm3144, %vm3145
    %v3147 = vsel %vm3146, %v3138, %v3143
    %v3148 = vrsqrt.pop %v3137
    %v3149 = vmul.f32 %v3148, %v3137
    %v3150 = vmul.f32 %v3149, %v3148
    %v3151 = vmul.f32 0.5, %v3150
    %v3152 = vsub.f32 1.5, %v3151
    %v3153 = vmul.f32 %v3148, %v3152
    %vm3154 = vweird.f32 %v3137
    %vm3155 = vweird.f32 %v3148
    %vm3156 = vmor %vm3154, %vm3155
    %v3157 = vsel %vm3156, %v3148, %v3153
    %v3160 = vrot.slane %v3157, 7
    %vm3161 = vcmask 1040384
    %v3162 = vsel %vm3161, %v3147, %v3160
    %v3164 = vmul.f32 %v3133, %v3162
    %v3166 = vperm.slane %v3164, 0
    %v3167 = vperm.slane %v3164, 1
    %v3170 = vmul.f32 %v3017, %v3166
    %v3171 = vmul.f32 %v3018, %v3167
    %v3172 = vmul.f32 %v3019, %v3166
    %v3173 = vmul.f32 %v3020, %v3167
    %v3174 = vmul.f32 %v3021, %v3166
    %v3175 = vmul.f32 %v3022, %v3167
    %v3176 = vmul.f32 %v3023, %v3166
    %v3177 = vmul.f32 %v3024, %v3167
    %v3179 = vperm.slane %v3135, 0
    %v3180 = vperm.slane %v3135, 1
    %v3183 = vadd.f32 %v3170, %v3179
    %v3184 = vadd.f32 %v3171, %v3180
    %v3185 = vadd.f32 %v3172, %v3179
    %v3186 = vadd.f32 %v3173, %v3180
    %v3187 = vadd.f32 %v3174, %v3179
    %v3188 = vadd.f32 %v3175, %v3180
    %v3189 = vadd.f32 %v3176, %v3179
    %v3190 = vadd.f32 %v3177, %v3180
    %vm3191 = vcmp.ge.f32.partialorder %v3183, 0.0
    %vm3192 = vcmp.ge.f32.partialorder %v3184, 0.0
    %vm3193 = vcmp.ge.f32.partialorder %v3185, 0.0
    %vm3194 = vcmp.ge.f32.partialorder %v3186, 0.0
    %vm3195 = vcmp.ge.f32.partialorder %v3187, 0.0
    %vm3196 = vcmp.ge.f32.partialorder %v3188, 0.0
    %vm3197 = vcmp.ge.f32.partialorder %v3189, 0.0
    %vm3198 = vcmp.ge.f32.partialorder %v3190, 0.0
    %v3199 = vmul.f32 %v3183, 0.2
    %v3200 = vmul.f32 %v3184, 0.2
    %v3201 = vmul.f32 %v3185, 0.2
    %v3202 = vmul.f32 %v3186, 0.2
    %v3203 = vmul.f32 %v3187, 0.2
    %v3204 = vmul.f32 %v3188, 0.2
    %v3205 = vmul.f32 %v3189, 0.2
    %v3206 = vmul.f32 %v3190, 0.2
    %v3207 = vsel %vm3191, %v3183, %v3199
    %v3208 = vsel %vm3192, %v3184, %v3200
    %v3209 = vsel %vm3193, %v3185, %v3201
    %v3210 = vsel %vm3194, %v3186, %v3202
    %v3211 = vsel %vm3195, %v3187, %v3203
    %v3212 = vsel %vm3196, %v3188, %v3204
    %v3213 = vsel %vm3197, %v3189, %v3205
    %v3214 = vsel %vm3198, %v3190, %v3206
    %v3215 = vld [vmem:[#allocation7] sm:$0xff]
    %v3216 = vld [vmem:[#allocation7 + $0x8] sm:$0xff]
    %v3217 = vld [vmem:[#allocation9] sm:$0xff]
    %v3218 = vld [vmem:[#allocation9 + $0x8] sm:$0xff]
    %v3219 = vld [vmem:[#allocation9 + $0x10] sm:$0xff]
    %v3220 = vld [vmem:[#allocation9 + $0x18] sm:$0xff]
    %v3221 = vld [vmem:[#allocation9 + $0x20] sm:$0xff]
    %v3222 = vld [vmem:[#allocation9 + $0x28] sm:$0xff]
    %v3223 = vld [vmem:[#allocation9 + $0x30] sm:$0xff]
    %v3224 = vld [vmem:[#allocation9 + $0x38] sm:$0xff]
    %v3225 = vld [vmem:[#allocation9 + $0x40] sm:$0xff]
    %v3226 = vld [vmem:[#allocation9 + $0x48] sm:$0xff]
    %v3227 = vld [vmem:[#allocation9 + $0x50] sm:$0xff]
    %v3228 = vld [vmem:[#allocation9 + $0x58] sm:$0xff]
    %v3229 = vld [vmem:[#allocation9 + $0x60] sm:$0xff]
    %v3230 = vld [vmem:[#allocation9 + $0x68] sm:$0xff]
    %v3231 = vld [vmem:[#allocation9 + $0x70] sm:$0xff]
    %v3232 = vld [vmem:[#allocation9 + $0x78] sm:$0xff]
    %v3233 = vld [vmem:[#allocation9 + $0x80] sm:$0xff]
    %v3234 = vld [vmem:[#allocation9 + $0x88] sm:$0xff]
    %v3235 = vld [vmem:[#allocation9 + $0x90] sm:$0xff]
    %v3236 = vld [vmem:[#allocation9 + $0x98] sm:$0xff]
    %v3237 = vld [vmem:[#allocation9 + $0xa0] sm:$0xff]
    %v3238 = vld [vmem:[#allocation9 + $0xa8] sm:$0xff]
    %v3239 = vld [vmem:[#allocation9 + $0xb0] sm:$0xff]
    %v3240 = vld [vmem:[#allocation9 + $0xb8] sm:$0xff]
    %v3241 = vld [vmem:[#allocation9 + $0xc0] sm:$0xff]
    %v3242 = vld [vmem:[#allocation9 + $0xc8] sm:$0xff]
    %v3243 = vld [vmem:[#allocation9 + $0xd0] sm:$0xff]
    %v3244 = vld [vmem:[#allocation9 + $0xd8] sm:$0xff]
    %v3245 = vld [vmem:[#allocation9 + $0xe0] sm:$0xff]
    %v3246 = vld [vmem:[#allocation9 + $0xe8] sm:$0xff]
    %v3247 = vld [vmem:[#allocation9 + $0xf0] sm:$0xff]
    %v3248 = vld [vmem:[#allocation9 + $0xf8] sm:$0xff]
    %v3249 = vld [vmem:[#allocation9 + $0x100] sm:$0xff]
    %v3250 = vld [vmem:[#allocation9 + $0x108] sm:$0xff]
    %v3251 = vld [vmem:[#allocation9 + $0x110] sm:$0xff]
    %v3252 = vld [vmem:[#allocation9 + $0x118] sm:$0xff]
    %v3253 = vld [vmem:[#allocation9 + $0x120] sm:$0xff]
    %v3254 = vld [vmem:[#allocation9 + $0x128] sm:$0xff]
    %v3255 = vld [vmem:[#allocation9 + $0x130] sm:$0xff]
    %v3256 = vld [vmem:[#allocation9 + $0x138] sm:$0xff]
    %v3257 = vld [vmem:[#allocation9 + $0x140] sm:$0xff]
    %v3258 = vld [vmem:[#allocation9 + $0x148] sm:$0xff]
    %v3259 = vld [vmem:[#allocation9 + $0x150] sm:$0xff]
    %v3260 = vld [vmem:[#allocation9 + $0x158] sm:$0xff]
    %v3261 = vld [vmem:[#allocation9 + $0x160] sm:$0xff]
    %v3262 = vld [vmem:[#allocation9 + $0x168] sm:$0xff]
    %v3263 = vld [vmem:[#allocation9 + $0x170] sm:$0xff]
    %v3264 = vld [vmem:[#allocation9 + $0x178] sm:$0xff]
    %v3265 = vld [vmem:[#allocation9 + $0x180] sm:$0xff]
    %v3266 = vld [vmem:[#allocation9 + $0x188] sm:$0xff]
    %v3267 = vld [vmem:[#allocation9 + $0x190] sm:$0xff]
    %v3268 = vld [vmem:[#allocation9 + $0x198] sm:$0xff]
    %v3269 = vld [vmem:[#allocation9 + $0x1a0] sm:$0xff]
    %v3270 = vld [vmem:[#allocation9 + $0x1a8] sm:$0xff]
    %v3271 = vld [vmem:[#allocation9 + $0x1b0] sm:$0xff]
    %v3272 = vld [vmem:[#allocation9 + $0x1b8] sm:$0xff]
    %v3273 = vld [vmem:[#allocation9 + $0x1c0] sm:$0xff]
    %v3274 = vld [vmem:[#allocation9 + $0x1c8] sm:$0xff]
    %v3275 = vld [vmem:[#allocation9 + $0x1d0] sm:$0xff]
    %v3276 = vld [vmem:[#allocation9 + $0x1d8] sm:$0xff]
    %v3277 = vld [vmem:[#allocation9 + $0x1e0] sm:$0xff]
    %v3278 = vld [vmem:[#allocation9 + $0x1e8] sm:$0xff]
    %v3279 = vld [vmem:[#allocation9 + $0x1f0] sm:$0xff]
    %v3280 = vld [vmem:[#allocation9 + $0x1f8] sm:$0xff]
    %vm3281 = vcmask 261120
    %v3283 = vsel %vm3281, %v3215, 0
    %v3286 = vsel %vm3281, %v3216, 0
    %3288 = vmatpush.msra.mxu0 0.0
    %3289 = vmatpush.msra.mxu0 0.0
    %3290 = vmatpush.msra.mxu0 0.0
    %3291 = vmatpush.msra.mxu0 0.0
    %3292 = vmatpush.msra.mxu0 0.0
    %3293 = vmatpush.msra.mxu0 0.0
    %3294 = vmatpush.msra.mxu0 0.0
    %3295 = vmatpush.msra.mxu0 0.0
    %3296 = vmatpush.msra.mxu0 0.0
    %3297 = vmatpush.msra.mxu0 0.0
    %3298 = vmatpush.msra.mxu0 0.0
    %3299 = vmatpush.msra.mxu0 0.0
    %3300 = vmatpush.msra.mxu0 %v3213
    %3301 = vmatpush.msra.mxu0 %v3211
    %3302 = vmatpush.msra.mxu0 %v3209
    %3303 = vmatpush.msra.mxu0 %v3207
    %3304 = vmatmul.f32.gmra.mxu0 %v3283
    %v3305 = vpop.f32.mrf.mxu0
    %v3306 = vadd.f32 0.0, %v3305
    %3307 = vmatmul.f32.gmra.mxu0 %v3286
    %v3308 = vpop.f32.mrf.mxu0
    %v3309 = vadd.f32 0.0, %v3308
    %3310 = vdwg.mxu0
    %3311 = vmatpush.msra.mxu0 0.0
    %3312 = vmatpush.msra.mxu0 0.0
    %3313 = vmatpush.msra.mxu0 0.0
    %3314 = vmatpush.msra.mxu0 0.0
    %3315 = vmatpush.msra.mxu0 0.0
    %3316 = vmatpush.msra.mxu0 0.0
    %3317 = vmatpush.msra.mxu0 0.0
    %3318 = vmatpush.msra.mxu0 0.0
    %3319 = vmatpush.msra.mxu0 0.0
    %3320 = vmatpush.msra.mxu0 0.0
    %3321 = vmatpush.msra.mxu0 0.0
    %3322 = vmatpush.msra.mxu0 0.0
    %3323 = vmatpush.msra.mxu0 %v3214
    %3324 = vmatpush.msra.mxu0 %v3212
    %3325 = vmatpush.msra.mxu0 %v3210
    %3326 = vmatpush.msra.mxu0 %v3208
    %3327 = vmatmul.f32.gmra.mxu0 %v3283
    %v3328 = vpop.f32.mrf.mxu0
    %v3329 = vadd.f32 0.0, %v3328
    %3330 = vmatmul.f32.gmra.mxu0 %v3286
    %v3331 = vpop.f32.mrf.mxu0
    %v3332 = vadd.f32 0.0, %v3331
    %3333 = vdwg.mxu0
    %s3334 = scalar_lea.vmem [#allocation7], 16
    %v3335 = vld [vmem:[%s3334] sm:$0xff]
    %v3336 = vld [vmem:[%s3334 + $0x8] sm:$0xff]
    %s3337 = scalar_lea.vmem [#allocation9], 512
    %v3338 = vld [vmem:[%s3337] sm:$0xff]
    %v3339 = vld [vmem:[%s3337 + $0x8] sm:$0xff]
    %v3340 = vld [vmem:[%s3337 + $0x10] sm:$0xff]
    %v3341 = vld [vmem:[%s3337 + $0x18] sm:$0xff]
    %v3342 = vld [vmem:[%s3337 + $0x20] sm:$0xff]
    %v3343 = vld [vmem:[%s3337 + $0x28] sm:$0xff]
    %v3344 = vld [vmem:[%s3337 + $0x30] sm:$0xff]
    %v3345 = vld [vmem:[%s3337 + $0x38] sm:$0xff]
    %v3346 = vld [vmem:[%s3337 + $0x40] sm:$0xff]
    %v3347 = vld [vmem:[%s3337 + $0x48] sm:$0xff]
    %v3348 = vld [vmem:[%s3337 + $0x50] sm:$0xff]
    %v3349 = vld [vmem:[%s3337 + $0x58] sm:$0xff]
    %v3350 = vld [vmem:[%s3337 + $0x60] sm:$0xff]
    %v3351 = vld [vmem:[%s3337 + $0x68] sm:$0xff]
    %v3352 = vld [vmem:[%s3337 + $0x70] sm:$0xff]
    %v3353 = vld [vmem:[%s3337 + $0x78] sm:$0xff]
    %v3354 = vld [vmem:[%s3337 + $0x80] sm:$0xff]
    %v3355 = vld [vmem:[%s3337 + $0x88] sm:$0xff]
    %v3356 = vld [vmem:[%s3337 + $0x90] sm:$0xff]
    %v3357 = vld [vmem:[%s3337 + $0x98] sm:$0xff]
    %v3358 = vld [vmem:[%s3337 + $0xa0] sm:$0xff]
    %v3359 = vld [vmem:[%s3337 + $0xa8] sm:$0xff]
    %v3360 = vld [vmem:[%s3337 + $0xb0] sm:$0xff]
    %v3361 = vld [vmem:[%s3337 + $0xb8] sm:$0xff]
    %v3362 = vld [vmem:[%s3337 + $0xc0] sm:$0xff]
    %v3363 = vld [vmem:[%s3337 + $0xc8] sm:$0xff]
    %v3364 = vld [vmem:[%s3337 + $0xd0] sm:$0xff]
    %v3365 = vld [vmem:[%s3337 + $0xd8] sm:$0xff]
    %v3366 = vld [vmem:[%s3337 + $0xe0] sm:$0xff]
    %v3367 = vld [vmem:[%s3337 + $0xe8] sm:$0xff]
    %v3368 = vld [vmem:[%s3337 + $0xf0] sm:$0xff]
    %v3369 = vld [vmem:[%s3337 + $0xf8] sm:$0xff]
    %v3370 = vld [vmem:[%s3337 + $0x100] sm:$0xff]
    %v3371 = vld [vmem:[%s3337 + $0x108] sm:$0xff]
    %v3372 = vld [vmem:[%s3337 + $0x110] sm:$0xff]
    %v3373 = vld [vmem:[%s3337 + $0x118] sm:$0xff]
    %v3374 = vld [vmem:[%s3337 + $0x120] sm:$0xff]
    %v3375 = vld [vmem:[%s3337 + $0x128] sm:$0xff]
    %v3376 = vld [vmem:[%s3337 + $0x130] sm:$0xff]
    %v3377 = vld [vmem:[%s3337 + $0x138] sm:$0xff]
    %v3378 = vld [vmem:[%s3337 + $0x140] sm:$0xff]
    %v3379 = vld [vmem:[%s3337 + $0x148] sm:$0xff]
    %v3380 = vld [vmem:[%s3337 + $0x150] sm:$0xff]
    %v3381 = vld [vmem:[%s3337 + $0x158] sm:$0xff]
    %v3382 = vld [vmem:[%s3337 + $0x160] sm:$0xff]
    %v3383 = vld [vmem:[%s3337 + $0x168] sm:$0xff]
    %v3384 = vld [vmem:[%s3337 + $0x170] sm:$0xff]
    %v3385 = vld [vmem:[%s3337 + $0x178] sm:$0xff]
    %v3386 = vld [vmem:[%s3337 + $0x180] sm:$0xff]
    %v3387 = vld [vmem:[%s3337 + $0x188] sm:$0xff]
    %v3388 = vld [vmem:[%s3337 + $0x190] sm:$0xff]
    %v3389 = vld [vmem:[%s3337 + $0x198] sm:$0xff]
    %v3390 = vld [vmem:[%s3337 + $0x1a0] sm:$0xff]
    %v3391 = vld [vmem:[%s3337 + $0x1a8] sm:$0xff]
    %v3392 = vld [vmem:[%s3337 + $0x1b0] sm:$0xff]
    %v3393 = vld [vmem:[%s3337 + $0x1b8] sm:$0xff]
    %v3394 = vld [vmem:[%s3337 + $0x1c0] sm:$0xff]
    %v3395 = vld [vmem:[%s3337 + $0x1c8] sm:$0xff]
    %v3396 = vld [vmem:[%s3337 + $0x1d0] sm:$0xff]
    %v3397 = vld [vmem:[%s3337 + $0x1d8] sm:$0xff]
    %v3398 = vld [vmem:[%s3337 + $0x1e0] sm:$0xff]
    %v3399 = vld [vmem:[%s3337 + $0x1e8] sm:$0xff]
    %v3400 = vld [vmem:[%s3337 + $0x1f0] sm:$0xff]
    %v3401 = vld [vmem:[%s3337 + $0x1f8] sm:$0xff]
    %v3403 = vsel %vm3281, %v3335, 0
    %v3406 = vsel %vm3281, %v3336, 0
    %3408 = vmatpush.msra.mxu0 0.0
    %3409 = vmatpush.msra.mxu0 0.0
    %3410 = vmatpush.msra.mxu0 0.0
    %3411 = vmatpush.msra.mxu0 0.0
    %3412 = vmatpush.msra.mxu0 0.0
    %3413 = vmatpush.msra.mxu0 0.0
    %3414 = vmatpush.msra.mxu0 0.0
    %3415 = vmatpush.msra.mxu0 0.0
    %3416 = vmatpush.msra.mxu0 0.0
    %3417 = vmatpush.msra.mxu0 0.0
    %3418 = vmatpush.msra.mxu0 0.0
    %3419 = vmatpush.msra.mxu0 0.0
    %3420 = vmatpush.msra.mxu0 %v3213
    %3421 = vmatpush.msra.mxu0 %v3211
    %3422 = vmatpush.msra.mxu0 %v3209
    %3423 = vmatpush.msra.mxu0 %v3207
    %3424 = vmatmul.f32.gmra.mxu0 %v3403
    %v3425 = vpop.f32.mrf.mxu0
    %v3426 = vadd.f32 0.0, %v3425
    %3427 = vmatmul.f32.gmra.mxu0 %v3406
    %v3428 = vpop.f32.mrf.mxu0
    %v3429 = vadd.f32 0.0, %v3428
    %3430 = vdwg.mxu0
    %3431 = vmatpush.msra.mxu0 0.0
    %3432 = vmatpush.msra.mxu0 0.0
    %3433 = vmatpush.msra.mxu0 0.0
    %3434 = vmatpush.msra.mxu0 0.0
    %3435 = vmatpush.msra.mxu0 0.0
    %3436 = vmatpush.msra.mxu0 0.0
    %3437 = vmatpush.msra.mxu0 0.0
    %3438 = vmatpush.msra.mxu0 0.0
    %3439 = vmatpush.msra.mxu0 0.0
    %3440 = vmatpush.msra.mxu0 0.0
    %3441 = vmatpush.msra.mxu0 0.0
    %3442 = vmatpush.msra.mxu0 0.0
    %3443 = vmatpush.msra.mxu0 %v3214
    %3444 = vmatpush.msra.mxu0 %v3212
    %3445 = vmatpush.msra.mxu0 %v3210
    %3446 = vmatpush.msra.mxu0 %v3208
    %3447 = vmatmul.f32.gmra.mxu0 %v3403
    %v3448 = vpop.f32.mrf.mxu0
    %v3449 = vadd.f32 0.0, %v3448
    %3450 = vmatmul.f32.gmra.mxu0 %v3406
    %v3451 = vpop.f32.mrf.mxu0
    %v3452 = vadd.f32 0.0, %v3451
    %3453 = vdwg.mxu0
    %3454 = vmatpush.msra.mxu0 %v3368
    %3455 = vmatpush.msra.mxu0 %v3366
    %3456 = vmatpush.msra.mxu0 %v3364
    %3457 = vmatpush.msra.mxu0 %v3362
    %3458 = vmatpush.msra.mxu0 %v3360
    %3459 = vmatpush.msra.mxu0 %v3358
    %3460 = vmatpush.msra.mxu0 %v3356
    %3461 = vmatpush.msra.mxu0 %v3354
    %3462 = vmatpush.msra.mxu0 %v3352
    %3463 = vmatpush.msra.mxu0 %v3350
    %3464 = vmatpush.msra.mxu0 %v3348
    %3465 = vmatpush.msra.mxu0 %v3346
    %3466 = vmatpush.msra.mxu0 %v3344
    %3467 = vmatpush.msra.mxu0 %v3342
    %3468 = vmatpush.msra.mxu0 %v3340
    %3469 = vmatpush.msra.mxu0 %v3338
    %3470 = vmatmul.f32.gmra.mxu0 %v3426
    %v3471 = vpop.f32.mrf.mxu0
    %v3472 = vadd.f32 0.0, %v3471
    %3473 = vmatmul.f32.gmra.mxu0 %v3429
    %v3474 = vpop.f32.mrf.mxu0
    %v3475 = vadd.f32 0.0, %v3474
    %3476 = vdwg.mxu0
    %3477 = vmatpush.msra.mxu0 %v3400
    %3478 = vmatpush.msra.mxu0 %v3398
    %3479 = vmatpush.msra.mxu0 %v3396
    %3480 = vmatpush.msra.mxu0 %v3394
    %3481 = vmatpush.msra.mxu0 %v3392
    %3482 = vmatpush.msra.mxu0 %v3390
    %3483 = vmatpush.msra.mxu0 %v3388
    %3484 = vmatpush.msra.mxu0 %v3386
    %3485 = vmatpush.msra.mxu0 %v3384
    %3486 = vmatpush.msra.mxu0 %v3382
    %3487 = vmatpush.msra.mxu0 %v3380
    %3488 = vmatpush.msra.mxu0 %v3378
    %3489 = vmatpush.msra.mxu0 %v3376
    %3490 = vmatpush.msra.mxu0 %v3374
    %3491 = vmatpush.msra.mxu0 %v3372
    %3492 = vmatpush.msra.mxu0 %v3370
    %3493 = vmatmul.f32.gmra.mxu0 %v3449
    %v3494 = vpop.f32.mrf.mxu0
    %v3495 = vadd.f32 %v3472, %v3494
    %3496 = vmatmul.f32.gmra.mxu0 %v3452
    %v3497 = vpop.f32.mrf.mxu0
    %v3498 = vadd.f32 %v3475, %v3497
    %3499 = vdwg.mxu0
    %3500 = vmatpush.msra.mxu0 %v3369
    %3501 = vmatpush.msra.mxu0 %v3367
    %3502 = vmatpush.msra.mxu0 %v3365
    %3503 = vmatpush.msra.mxu0 %v3363
    %3504 = vmatpush.msra.mxu0 %v3361
    %3505 = vmatpush.msra.mxu0 %v3359
    %3506 = vmatpush.msra.mxu0 %v3357
    %3507 = vmatpush.msra.mxu0 %v3355
    %3508 = vmatpush.msra.mxu0 %v3353
    %3509 = vmatpush.msra.mxu0 %v3351
    %3510 = vmatpush.msra.mxu0 %v3349
    %3511 = vmatpush.msra.mxu0 %v3347
    %3512 = vmatpush.msra.mxu0 %v3345
    %3513 = vmatpush.msra.mxu0 %v3343
    %3514 = vmatpush.msra.mxu0 %v3341
    %3515 = vmatpush.msra.mxu0 %v3339
    %3516 = vmatmul.f32.gmra.mxu0 %v3426
    %v3517 = vpop.f32.mrf.mxu0
    %v3518 = vadd.f32 0.0, %v3517
    %3519 = vmatmul.f32.gmra.mxu0 %v3429
    %v3520 = vpop.f32.mrf.mxu0
    %v3521 = vadd.f32 0.0, %v3520
    %3522 = vdwg.mxu0
    %3523 = vmatpush.msra.mxu0 %v3401
    %3524 = vmatpush.msra.mxu0 %v3399
    %3525 = vmatpush.msra.mxu0 %v3397
    %3526 = vmatpush.msra.mxu0 %v3395
    %3527 = vmatpush.msra.mxu0 %v3393
    %3528 = vmatpush.msra.mxu0 %v3391
    %3529 = vmatpush.msra.mxu0 %v3389
    %3530 = vmatpush.msra.mxu0 %v3387
    %3531 = vmatpush.msra.mxu0 %v3385
    %3532 = vmatpush.msra.mxu0 %v3383
    %3533 = vmatpush.msra.mxu0 %v3381
    %3534 = vmatpush.msra.mxu0 %v3379
    %3535 = vmatpush.msra.mxu0 %v3377
    %3536 = vmatpush.msra.mxu0 %v3375
    %3537 = vmatpush.msra.mxu0 %v3373
    %3538 = vmatpush.msra.mxu0 %v3371
    %3539 = vmatmul.f32.gmra.mxu0 %v3449
    %v3540 = vpop.f32.mrf.mxu0
    %v3541 = vadd.f32 %v3518, %v3540
    %3542 = vmatmul.f32.gmra.mxu0 %v3452
    %v3543 = vpop.f32.mrf.mxu0
    %v3544 = vadd.f32 %v3521, %v3543
    %3545 = vdwg.mxu0
    %3546 = vmatpush.msra.mxu0 %v3247
    %3547 = vmatpush.msra.mxu0 %v3245
    %3548 = vmatpush.msra.mxu0 %v3243
    %3549 = vmatpush.msra.mxu0 %v3241
    %3550 = vmatpush.msra.mxu0 %v3239
    %3551 = vmatpush.msra.mxu0 %v3237
    %3552 = vmatpush.msra.mxu0 %v3235
    %3553 = vmatpush.msra.mxu0 %v3233
    %3554 = vmatpush.msra.mxu0 %v3231
    %3555 = vmatpush.msra.mxu0 %v3229
    %3556 = vmatpush.msra.mxu0 %v3227
    %3557 = vmatpush.msra.mxu0 %v3225
    %3558 = vmatpush.msra.mxu0 %v3223
    %3559 = vmatpush.msra.mxu0 %v3221
    %3560 = vmatpush.msra.mxu0 %v3219
    %3561 = vmatpush.msra.mxu0 %v3217
    %3562 = vmatmul.f32.gmra.mxu0 %v3306
    %v3563 = vpop.f32.mrf.mxu0
    %v3564 = vadd.f32 %v3495, %v3563
    %3565 = vmatmul.f32.gmra.mxu0 %v3309
    %v3566 = vpop.f32.mrf.mxu0
    %v3567 = vadd.f32 %v3498, %v3566
    %3568 = vdwg.mxu0
    %3569 = vmatpush.msra.mxu0 %v3279
    %3570 = vmatpush.msra.mxu0 %v3277
    %3571 = vmatpush.msra.mxu0 %v3275
    %3572 = vmatpush.msra.mxu0 %v3273
    %3573 = vmatpush.msra.mxu0 %v3271
    %3574 = vmatpush.msra.mxu0 %v3269
    %3575 = vmatpush.msra.mxu0 %v3267
    %3576 = vmatpush.msra.mxu0 %v3265
    %3577 = vmatpush.msra.mxu0 %v3263
    %3578 = vmatpush.msra.mxu0 %v3261
    %3579 = vmatpush.msra.mxu0 %v3259
    %3580 = vmatpush.msra.mxu0 %v3257
    %3581 = vmatpush.msra.mxu0 %v3255
    %3582 = vmatpush.msra.mxu0 %v3253
    %3583 = vmatpush.msra.mxu0 %v3251
    %3584 = vmatpush.msra.mxu0 %v3249
    %3585 = vmatmul.f32.gmra.mxu0 %v3329
    %v3586 = vpop.f32.mrf.mxu0
    %v3587 = vadd.f32 %v3564, %v3586
    %3588 = vmatmul.f32.gmra.mxu0 %v3332
    %v3589 = vpop.f32.mrf.mxu0
    %v3590 = vadd.f32 %v3567, %v3589
    %3591 = vdwg.mxu0
    %3592 = vmatpush.msra.mxu0 %v3248
    %3593 = vmatpush.msra.mxu0 %v3246
    %3594 = vmatpush.msra.mxu0 %v3244
    %3595 = vmatpush.msra.mxu0 %v3242
    %3596 = vmatpush.msra.mxu0 %v3240
    %3597 = vmatpush.msra.mxu0 %v3238
    %3598 = vmatpush.msra.mxu0 %v3236
    %3599 = vmatpush.msra.mxu0 %v3234
    %3600 = vmatpush.msra.mxu0 %v3232
    %3601 = vmatpush.msra.mxu0 %v3230
    %3602 = vmatpush.msra.mxu0 %v3228
    %3603 = vmatpush.msra.mxu0 %v3226
    %3604 = vmatpush.msra.mxu0 %v3224
    %3605 = vmatpush.msra.mxu0 %v3222
    %3606 = vmatpush.msra.mxu0 %v3220
    %3607 = vmatpush.msra.mxu0 %v3218
    %3608 = vmatmul.f32.gmra.mxu0 %v3306
    %v3609 = vpop.f32.mrf.mxu0
    %v3610 = vadd.f32 %v3541, %v3609
    %3611 = vmatmul.f32.gmra.mxu0 %v3309
    %v3612 = vpop.f32.mrf.mxu0
    %v3613 = vadd.f32 %v3544, %v3612
    %3614 = vdwg.mxu0
    %3615 = vmatpush.msra.mxu0 %v3280
    %3616 = vmatpush.msra.mxu0 %v3278
    %3617 = vmatpush.msra.mxu0 %v3276
    %3618 = vmatpush.msra.mxu0 %v3274
    %3619 = vmatpush.msra.mxu0 %v3272
    %3620 = vmatpush.msra.mxu0 %v3270
    %3621 = vmatpush.msra.mxu0 %v3268
    %3622 = vmatpush.msra.mxu0 %v3266
    %3623 = vmatpush.msra.mxu0 %v3264
    %3624 = vmatpush.msra.mxu0 %v3262
    %3625 = vmatpush.msra.mxu0 %v3260
    %3626 = vmatpush.msra.mxu0 %v3258
    %3627 = vmatpush.msra.mxu0 %v3256
    %3628 = vmatpush.msra.mxu0 %v3254
    %3629 = vmatpush.msra.mxu0 %v3252
    %3630 = vmatpush.msra.mxu0 %v3250
    %3631 = vmatmul.f32.gmra.mxu0 %v3329
    %v3632 = vpop.f32.mrf.mxu0
    %v3633 = vadd.f32 %v3610, %v3632
    %3634 = vmatmul.f32.gmra.mxu0 %v3332
    %v3635 = vpop.f32.mrf.mxu0
    %v3636 = vadd.f32 %v3613, %v3635
    %3637 = vdwg.mxu0
    %s3638 = scalar_lea.vmem [#allocation7], 32
    %v3639 = vld [vmem:[%s3638] sm:$0xff]
    %v3640 = vld [vmem:[%s3638 + $0x8] sm:$0xff]
    %s3641 = scalar_lea.vmem [#allocation9], 1024
    %v3642 = vld [vmem:[%s3641] sm:$0xff]
    %v3643 = vld [vmem:[%s3641 + $0x8] sm:$0xff]
    %v3644 = vld [vmem:[%s3641 + $0x10] sm:$0xff]
    %v3645 = vld [vmem:[%s3641 + $0x18] sm:$0xff]
    %v3646 = vld [vmem:[%s3641 + $0x20] sm:$0xff]
    %v3647 = vld [vmem:[%s3641 + $0x28] sm:$0xff]
    %v3648 = vld [vmem:[%s3641 + $0x30] sm:$0xff]
    %v3649 = vld [vmem:[%s3641 + $0x38] sm:$0xff]
    %v3650 = vld [vmem:[%s3641 + $0x40] sm:$0xff]
    %v3651 = vld [vmem:[%s3641 + $0x48] sm:$0xff]
    %v3652 = vld [vmem:[%s3641 + $0x50] sm:$0xff]
    %v3653 = vld [vmem:[%s3641 + $0x58] sm:$0xff]
    %v3654 = vld [vmem:[%s3641 + $0x60] sm:$0xff]
    %v3655 = vld [vmem:[%s3641 + $0x68] sm:$0xff]
    %v3656 = vld [vmem:[%s3641 + $0x70] sm:$0xff]
    %v3657 = vld [vmem:[%s3641 + $0x78] sm:$0xff]
    %v3658 = vld [vmem:[%s3641 + $0x80] sm:$0xff]
    %v3659 = vld [vmem:[%s3641 + $0x88] sm:$0xff]
    %v3660 = vld [vmem:[%s3641 + $0x90] sm:$0xff]
    %v3661 = vld [vmem:[%s3641 + $0x98] sm:$0xff]
    %v3662 = vld [vmem:[%s3641 + $0xa0] sm:$0xff]
    %v3663 = vld [vmem:[%s3641 + $0xa8] sm:$0xff]
    %v3664 = vld [vmem:[%s3641 + $0xb0] sm:$0xff]
    %v3665 = vld [vmem:[%s3641 + $0xb8] sm:$0xff]
    %v3666 = vld [vmem:[%s3641 + $0xc0] sm:$0xff]
    %v3667 = vld [vmem:[%s3641 + $0xc8] sm:$0xff]
    %v3668 = vld [vmem:[%s3641 + $0xd0] sm:$0xff]
    %v3669 = vld [vmem:[%s3641 + $0xd8] sm:$0xff]
    %v3670 = vld [vmem:[%s3641 + $0xe0] sm:$0xff]
    %v3671 = vld [vmem:[%s3641 + $0xe8] sm:$0xff]
    %v3672 = vld [vmem:[%s3641 + $0xf0] sm:$0xff]
    %v3673 = vld [vmem:[%s3641 + $0xf8] sm:$0xff]
    %v3674 = vld [vmem:[%s3641 + $0x100] sm:$0xff]
    %v3675 = vld [vmem:[%s3641 + $0x108] sm:$0xff]
    %v3676 = vld [vmem:[%s3641 + $0x110] sm:$0xff]
    %v3677 = vld [vmem:[%s3641 + $0x118] sm:$0xff]
    %v3678 = vld [vmem:[%s3641 + $0x120] sm:$0xff]
    %v3679 = vld [vmem:[%s3641 + $0x128] sm:$0xff]
    %v3680 = vld [vmem:[%s3641 + $0x130] sm:$0xff]
    %v3681 = vld [vmem:[%s3641 + $0x138] sm:$0xff]
    %v3682 = vld [vmem:[%s3641 + $0x140] sm:$0xff]
    %v3683 = vld [vmem:[%s3641 + $0x148] sm:$0xff]
    %v3684 = vld [vmem:[%s3641 + $0x150] sm:$0xff]
    %v3685 = vld [vmem:[%s3641 + $0x158] sm:$0xff]
    %v3686 = vld [vmem:[%s3641 + $0x160] sm:$0xff]
    %v3687 = vld [vmem:[%s3641 + $0x168] sm:$0xff]
    %v3688 = vld [vmem:[%s3641 + $0x170] sm:$0xff]
    %v3689 = vld [vmem:[%s3641 + $0x178] sm:$0xff]
    %v3690 = vld [vmem:[%s3641 + $0x180] sm:$0xff]
    %v3691 = vld [vmem:[%s3641 + $0x188] sm:$0xff]
    %v3692 = vld [vmem:[%s3641 + $0x190] sm:$0xff]
    %v3693 = vld [vmem:[%s3641 + $0x198] sm:$0xff]
    %v3694 = vld [vmem:[%s3641 + $0x1a0] sm:$0xff]
    %v3695 = vld [vmem:[%s3641 + $0x1a8] sm:$0xff]
    %v3696 = vld [vmem:[%s3641 + $0x1b0] sm:$0xff]
    %v3697 = vld [vmem:[%s3641 + $0x1b8] sm:$0xff]
    %v3698 = vld [vmem:[%s3641 + $0x1c0] sm:$0xff]
    %v3699 = vld [vmem:[%s3641 + $0x1c8] sm:$0xff]
    %v3700 = vld [vmem:[%s3641 + $0x1d0] sm:$0xff]
    %v3701 = vld [vmem:[%s3641 + $0x1d8] sm:$0xff]
    %v3702 = vld [vmem:[%s3641 + $0x1e0] sm:$0xff]
    %v3703 = vld [vmem:[%s3641 + $0x1e8] sm:$0xff]
    %v3704 = vld [vmem:[%s3641 + $0x1f0] sm:$0xff]
    %v3705 = vld [vmem:[%s3641 + $0x1f8] sm:$0xff]
    %v3707 = vsel %vm3281, %v3639, 0
    %v3710 = vsel %vm3281, %v3640, 0
    %3712 = vmatpush.msra.mxu0 0.0
    %3713 = vmatpush.msra.mxu0 0.0
    %3714 = vmatpush.msra.mxu0 0.0
    %3715 = vmatpush.msra.mxu0 0.0
    %3716 = vmatpush.msra.mxu0 0.0
    %3717 = vmatpush.msra.mxu0 0.0
    %3718 = vmatpush.msra.mxu0 0.0
    %3719 = vmatpush.msra.mxu0 0.0
    %3720 = vmatpush.msra.mxu0 0.0
    %3721 = vmatpush.msra.mxu0 0.0
    %3722 = vmatpush.msra.mxu0 0.0
    %3723 = vmatpush.msra.mxu0 0.0
    %3724 = vmatpush.msra.mxu0 %v3213
    %3725 = vmatpush.msra.mxu0 %v3211
    %3726 = vmatpush.msra.mxu0 %v3209
    %3727 = vmatpush.msra.mxu0 %v3207
    %3728 = vmatmul.f32.gmra.mxu0 %v3707
    %v3729 = vpop.f32.mrf.mxu0
    %v3730 = vadd.f32 0.0, %v3729
    %3731 = vmatmul.f32.gmra.mxu0 %v3710
    %v3732 = vpop.f32.mrf.mxu0
    %v3733 = vadd.f32 0.0, %v3732
    %3734 = vdwg.mxu0
    %3735 = vmatpush.msra.mxu0 0.0
    %3736 = vmatpush.msra.mxu0 0.0
    %3737 = vmatpush.msra.mxu0 0.0
    %3738 = vmatpush.msra.mxu0 0.0
    %3739 = vmatpush.msra.mxu0 0.0
    %3740 = vmatpush.msra.mxu0 0.0
    %3741 = vmatpush.msra.mxu0 0.0
    %3742 = vmatpush.msra.mxu0 0.0
    %3743 = vmatpush.msra.mxu0 0.0
    %3744 = vmatpush.msra.mxu0 0.0
    %3745 = vmatpush.msra.mxu0 0.0
    %3746 = vmatpush.msra.mxu0 0.0
    %3747 = vmatpush.msra.mxu0 %v3214
    %3748 = vmatpush.msra.mxu0 %v3212
    %3749 = vmatpush.msra.mxu0 %v3210
    %3750 = vmatpush.msra.mxu0 %v3208
    %3751 = vmatmul.f32.gmra.mxu0 %v3707
    %v3752 = vpop.f32.mrf.mxu0
    %v3753 = vadd.f32 0.0, %v3752
    %3754 = vmatmul.f32.gmra.mxu0 %v3710
    %v3755 = vpop.f32.mrf.mxu0
    %v3756 = vadd.f32 0.0, %v3755
    %3757 = vdwg.mxu0
    %3758 = vmatpush.msra.mxu0 %v3672
    %3759 = vmatpush.msra.mxu0 %v3670
    %3760 = vmatpush.msra.mxu0 %v3668
    %3761 = vmatpush.msra.mxu0 %v3666
    %3762 = vmatpush.msra.mxu0 %v3664
    %3763 = vmatpush.msra.mxu0 %v3662
    %3764 = vmatpush.msra.mxu0 %v3660
    %3765 = vmatpush.msra.mxu0 %v3658
    %3766 = vmatpush.msra.mxu0 %v3656
    %3767 = vmatpush.msra.mxu0 %v3654
    %3768 = vmatpush.msra.mxu0 %v3652
    %3769 = vmatpush.msra.mxu0 %v3650
    %3770 = vmatpush.msra.mxu0 %v3648
    %3771 = vmatpush.msra.mxu0 %v3646
    %3772 = vmatpush.msra.mxu0 %v3644
    %3773 = vmatpush.msra.mxu0 %v3642
    %3774 = vmatmul.f32.gmra.mxu0 %v3730
    %v3775 = vpop.f32.mrf.mxu0
    %v3776 = vadd.f32 0.0, %v3775
    %3777 = vmatmul.f32.gmra.mxu0 %v3733
    %v3778 = vpop.f32.mrf.mxu0
    %v3779 = vadd.f32 0.0, %v3778
    %3780 = vdwg.mxu0
    %3781 = vmatpush.msra.mxu0 %v3704
    %3782 = vmatpush.msra.mxu0 %v3702
    %3783 = vmatpush.msra.mxu0 %v3700
    %3784 = vmatpush.msra.mxu0 %v3698
    %3785 = vmatpush.msra.mxu0 %v3696
    %3786 = vmatpush.msra.mxu0 %v3694
    %3787 = vmatpush.msra.mxu0 %v3692
    %3788 = vmatpush.msra.mxu0 %v3690
    %3789 = vmatpush.msra.mxu0 %v3688
    %3790 = vmatpush.msra.mxu0 %v3686
    %3791 = vmatpush.msra.mxu0 %v3684
    %3792 = vmatpush.msra.mxu0 %v3682
    %3793 = vmatpush.msra.mxu0 %v3680
    %3794 = vmatpush.msra.mxu0 %v3678
    %3795 = vmatpush.msra.mxu0 %v3676
    %3796 = vmatpush.msra.mxu0 %v3674
    %3797 = vmatmul.f32.gmra.mxu0 %v3753
    %v3798 = vpop.f32.mrf.mxu0
    %v3799 = vadd.f32 %v3776, %v3798
    %3800 = vmatmul.f32.gmra.mxu0 %v3756
    %v3801 = vpop.f32.mrf.mxu0
    %v3802 = vadd.f32 %v3779, %v3801
    %3803 = vdwg.mxu0
    %3804 = vmatpush.msra.mxu0 %v3673
    %3805 = vmatpush.msra.mxu0 %v3671
    %3806 = vmatpush.msra.mxu0 %v3669
    %3807 = vmatpush.msra.mxu0 %v3667
    %3808 = vmatpush.msra.mxu0 %v3665
    %3809 = vmatpush.msra.mxu0 %v3663
    %3810 = vmatpush.msra.mxu0 %v3661
    %3811 = vmatpush.msra.mxu0 %v3659
    %3812 = vmatpush.msra.mxu0 %v3657
    %3813 = vmatpush.msra.mxu0 %v3655
    %3814 = vmatpush.msra.mxu0 %v3653
    %3815 = vmatpush.msra.mxu0 %v3651
    %3816 = vmatpush.msra.mxu0 %v3649
    %3817 = vmatpush.msra.mxu0 %v3647
    %3818 = vmatpush.msra.mxu0 %v3645
    %3819 = vmatpush.msra.mxu0 %v3643
    %3820 = vmatmul.f32.gmra.mxu0 %v3730
    %v3821 = vpop.f32.mrf.mxu0
    %v3822 = vadd.f32 0.0, %v3821
    %3823 = vmatmul.f32.gmra.mxu0 %v3733
    %v3824 = vpop.f32.mrf.mxu0
    %v3825 = vadd.f32 0.0, %v3824
    %3826 = vdwg.mxu0
    %3827 = vmatpush.msra.mxu0 %v3705
    %3828 = vmatpush.msra.mxu0 %v3703
    %3829 = vmatpush.msra.mxu0 %v3701
    %3830 = vmatpush.msra.mxu0 %v3699
    %3831 = vmatpush.msra.mxu0 %v3697
    %3832 = vmatpush.msra.mxu0 %v3695
    %3833 = vmatpush.msra.mxu0 %v3693
    %3834 = vmatpush.msra.mxu0 %v3691
    %3835 = vmatpush.msra.mxu0 %v3689
    %3836 = vmatpush.msra.mxu0 %v3687
    %3837 = vmatpush.msra.mxu0 %v3685
    %3838 = vmatpush.msra.mxu0 %v3683
    %3839 = vmatpush.msra.mxu0 %v3681
    %3840 = vmatpush.msra.mxu0 %v3679
    %3841 = vmatpush.msra.mxu0 %v3677
    %3842 = vmatpush.msra.mxu0 %v3675
    %3843 = vmatmul.f32.gmra.mxu0 %v3753
    %v3844 = vpop.f32.mrf.mxu0
    %v3845 = vadd.f32 %v3822, %v3844
    %3846 = vmatmul.f32.gmra.mxu0 %v3756
    %v3847 = vpop.f32.mrf.mxu0
    %v3848 = vadd.f32 %v3825, %v3847
    %3849 = vdwg.mxu0
    %v3850 = vadd.f32 %v3587, %v3799
    %v3851 = vadd.f32 %v3633, %v3845
    %v3852 = vadd.f32 %v3590, %v3802
    %v3853 = vadd.f32 %v3636, %v3848
    %s3854 = scalar_lea.vmem [#allocation7], 48
    %v3855 = vld [vmem:[%s3854] sm:$0xff]
    %v3856 = vld [vmem:[%s3854 + $0x8] sm:$0xff]
    %s3857 = scalar_lea.vmem [#allocation9], 1536
    %v3858 = vld [vmem:[%s3857] sm:$0xff]
    %v3859 = vld [vmem:[%s3857 + $0x8] sm:$0xff]
    %v3860 = vld [vmem:[%s3857 + $0x10] sm:$0xff]
    %v3861 = vld [vmem:[%s3857 + $0x18] sm:$0xff]
    %v3862 = vld [vmem:[%s3857 + $0x20] sm:$0xff]
    %v3863 = vld [vmem:[%s3857 + $0x28] sm:$0xff]
    %v3864 = vld [vmem:[%s3857 + $0x30] sm:$0xff]
    %v3865 = vld [vmem:[%s3857 + $0x38] sm:$0xff]
    %v3866 = vld [vmem:[%s3857 + $0x40] sm:$0xff]
    %v3867 = vld [vmem:[%s3857 + $0x48] sm:$0xff]
    %v3868 = vld [vmem:[%s3857 + $0x50] sm:$0xff]
    %v3869 = vld [vmem:[%s3857 + $0x58] sm:$0xff]
    %v3870 = vld [vmem:[%s3857 + $0x60] sm:$0xff]
    %v3871 = vld [vmem:[%s3857 + $0x68] sm:$0xff]
    %v3872 = vld [vmem:[%s3857 + $0x70] sm:$0xff]
    %v3873 = vld [vmem:[%s3857 + $0x78] sm:$0xff]
    %v3874 = vld [vmem:[%s3857 + $0x80] sm:$0xff]
    %v3875 = vld [vmem:[%s3857 + $0x88] sm:$0xff]
    %v3876 = vld [vmem:[%s3857 + $0x90] sm:$0xff]
    %v3877 = vld [vmem:[%s3857 + $0x98] sm:$0xff]
    %v3878 = vld [vmem:[%s3857 + $0xa0] sm:$0xff]
    %v3879 = vld [vmem:[%s3857 + $0xa8] sm:$0xff]
    %v3880 = vld [vmem:[%s3857 + $0xb0] sm:$0xff]
    %v3881 = vld [vmem:[%s3857 + $0xb8] sm:$0xff]
    %v3882 = vld [vmem:[%s3857 + $0xc0] sm:$0xff]
    %v3883 = vld [vmem:[%s3857 + $0xc8] sm:$0xff]
    %v3884 = vld [vmem:[%s3857 + $0xd0] sm:$0xff]
    %v3885 = vld [vmem:[%s3857 + $0xd8] sm:$0xff]
    %v3886 = vld [vmem:[%s3857 + $0xe0] sm:$0xff]
    %v3887 = vld [vmem:[%s3857 + $0xe8] sm:$0xff]
    %v3888 = vld [vmem:[%s3857 + $0xf0] sm:$0xff]
    %v3889 = vld [vmem:[%s3857 + $0xf8] sm:$0xff]
    %v3890 = vld [vmem:[%s3857 + $0x100] sm:$0xff]
    %v3891 = vld [vmem:[%s3857 + $0x108] sm:$0xff]
    %v3892 = vld [vmem:[%s3857 + $0x110] sm:$0xff]
    %v3893 = vld [vmem:[%s3857 + $0x118] sm:$0xff]
    %v3894 = vld [vmem:[%s3857 + $0x120] sm:$0xff]
    %v3895 = vld [vmem:[%s3857 + $0x128] sm:$0xff]
    %v3896 = vld [vmem:[%s3857 + $0x130] sm:$0xff]
    %v3897 = vld [vmem:[%s3857 + $0x138] sm:$0xff]
    %v3898 = vld [vmem:[%s3857 + $0x140] sm:$0xff]
    %v3899 = vld [vmem:[%s3857 + $0x148] sm:$0xff]
    %v3900 = vld [vmem:[%s3857 + $0x150] sm:$0xff]
    %v3901 = vld [vmem:[%s3857 + $0x158] sm:$0xff]
    %v3902 = vld [vmem:[%s3857 + $0x160] sm:$0xff]
    %v3903 = vld [vmem:[%s3857 + $0x168] sm:$0xff]
    %v3904 = vld [vmem:[%s3857 + $0x170] sm:$0xff]
    %v3905 = vld [vmem:[%s3857 + $0x178] sm:$0xff]
    %v3906 = vld [vmem:[%s3857 + $0x180] sm:$0xff]
    %v3907 = vld [vmem:[%s3857 + $0x188] sm:$0xff]
    %v3908 = vld [vmem:[%s3857 + $0x190] sm:$0xff]
    %v3909 = vld [vmem:[%s3857 + $0x198] sm:$0xff]
    %v3910 = vld [vmem:[%s3857 + $0x1a0] sm:$0xff]
    %v3911 = vld [vmem:[%s3857 + $0x1a8] sm:$0xff]
    %v3912 = vld [vmem:[%s3857 + $0x1b0] sm:$0xff]
    %v3913 = vld [vmem:[%s3857 + $0x1b8] sm:$0xff]
    %v3914 = vld [vmem:[%s3857 + $0x1c0] sm:$0xff]
    %v3915 = vld [vmem:[%s3857 + $0x1c8] sm:$0xff]
    %v3916 = vld [vmem:[%s3857 + $0x1d0] sm:$0xff]
    %v3917 = vld [vmem:[%s3857 + $0x1d8] sm:$0xff]
    %v3918 = vld [vmem:[%s3857 + $0x1e0] sm:$0xff]
    %v3919 = vld [vmem:[%s3857 + $0x1e8] sm:$0xff]
    %v3920 = vld [vmem:[%s3857 + $0x1f0] sm:$0xff]
    %v3921 = vld [vmem:[%s3857 + $0x1f8] sm:$0xff]
    %v3923 = vsel %vm3281, %v3855, 0
    %v3926 = vsel %vm3281, %v3856, 0
    %3928 = vmatpush.msra.mxu0 0.0
    %3929 = vmatpush.msra.mxu0 0.0
    %3930 = vmatpush.msra.mxu0 0.0
    %3931 = vmatpush.msra.mxu0 0.0
    %3932 = vmatpush.msra.mxu0 0.0
    %3933 = vmatpush.msra.mxu0 0.0
    %3934 = vmatpush.msra.mxu0 0.0
    %3935 = vmatpush.msra.mxu0 0.0
    %3936 = vmatpush.msra.mxu0 0.0
    %3937 = vmatpush.msra.mxu0 0.0
    %3938 = vmatpush.msra.mxu0 0.0
    %3939 = vmatpush.msra.mxu0 0.0
    %3940 = vmatpush.msra.mxu0 %v3213
    %3941 = vmatpush.msra.mxu0 %v3211
    %3942 = vmatpush.msra.mxu0 %v3209
    %3943 = vmatpush.msra.mxu0 %v3207
    %3944 = vmatmul.f32.gmra.mxu0 %v3923
    %v3945 = vpop.f32.mrf.mxu0
    %v3946 = vadd.f32 0.0, %v3945
    %3947 = vmatmul.f32.gmra.mxu0 %v3926
    %v3948 = vpop.f32.mrf.mxu0
    %v3949 = vadd.f32 0.0, %v3948
    %3950 = vdwg.mxu0
    %3951 = vmatpush.msra.mxu0 0.0
    %3952 = vmatpush.msra.mxu0 0.0
    %3953 = vmatpush.msra.mxu0 0.0
    %3954 = vmatpush.msra.mxu0 0.0
    %3955 = vmatpush.msra.mxu0 0.0
    %3956 = vmatpush.msra.mxu0 0.0
    %3957 = vmatpush.msra.mxu0 0.0
    %3958 = vmatpush.msra.mxu0 0.0
    %3959 = vmatpush.msra.mxu0 0.0
    %3960 = vmatpush.msra.mxu0 0.0
    %3961 = vmatpush.msra.mxu0 0.0
    %3962 = vmatpush.msra.mxu0 0.0
    %3963 = vmatpush.msra.mxu0 %v3214
    %3964 = vmatpush.msra.mxu0 %v3212
    %3965 = vmatpush.msra.mxu0 %v3210
    %3966 = vmatpush.msra.mxu0 %v3208
    %3967 = vmatmul.f32.gmra.mxu0 %v3923
    %v3968 = vpop.f32.mrf.mxu0
    %v3969 = vadd.f32 0.0, %v3968
    %3970 = vmatmul.f32.gmra.mxu0 %v3926
    %v3971 = vpop.f32.mrf.mxu0
    %v3972 = vadd.f32 0.0, %v3971
    %3973 = vdwg.mxu0
    %3974 = vmatpush.msra.mxu0 %v3888
    %3975 = vmatpush.msra.mxu0 %v3886
    %3976 = vmatpush.msra.mxu0 %v3884
    %3977 = vmatpush.msra.mxu0 %v3882
    %3978 = vmatpush.msra.mxu0 %v3880
    %3979 = vmatpush.msra.mxu0 %v3878
    %3980 = vmatpush.msra.mxu0 %v3876
    %3981 = vmatpush.msra.mxu0 %v3874
    %3982 = vmatpush.msra.mxu0 %v3872
    %3983 = vmatpush.msra.mxu0 %v3870
    %3984 = vmatpush.msra.mxu0 %v3868
    %3985 = vmatpush.msra.mxu0 %v3866
    %3986 = vmatpush.msra.mxu0 %v3864
    %3987 = vmatpush.msra.mxu0 %v3862
    %3988 = vmatpush.msra.mxu0 %v3860
    %3989 = vmatpush.msra.mxu0 %v3858
    %3990 = vmatmul.f32.gmra.mxu0 %v3946
    %v3991 = vpop.f32.mrf.mxu0
    %v3992 = vadd.f32 0.0, %v3991
    %3993 = vmatmul.f32.gmra.mxu0 %v3949
    %v3994 = vpop.f32.mrf.mxu0
    %v3995 = vadd.f32 0.0, %v3994
    %3996 = vdwg.mxu0
    %3997 = vmatpush.msra.mxu0 %v3920
    %3998 = vmatpush.msra.mxu0 %v3918
    %3999 = vmatpush.msra.mxu0 %v3916
    %4000 = vmatpush.msra.mxu0 %v3914
    %4001 = vmatpush.msra.mxu0 %v3912
    %4002 = vmatpush.msra.mxu0 %v3910
    %4003 = vmatpush.msra.mxu0 %v3908
    %4004 = vmatpush.msra.mxu0 %v3906
    %4005 = vmatpush.msra.mxu0 %v3904
    %4006 = vmatpush.msra.mxu0 %v3902
    %4007 = vmatpush.msra.mxu0 %v3900
    %4008 = vmatpush.msra.mxu0 %v3898
    %4009 = vmatpush.msra.mxu0 %v3896
    %4010 = vmatpush.msra.mxu0 %v3894
    %4011 = vmatpush.msra.mxu0 %v3892
    %4012 = vmatpush.msra.mxu0 %v3890
    %4013 = vmatmul.f32.gmra.mxu0 %v3969
    %v4014 = vpop.f32.mrf.mxu0
    %v4015 = vadd.f32 %v3992, %v4014
    %4016 = vmatmul.f32.gmra.mxu0 %v3972
    %v4017 = vpop.f32.mrf.mxu0
    %v4018 = vadd.f32 %v3995, %v4017
    %4019 = vdwg.mxu0
    %4020 = vmatpush.msra.mxu0 %v3889
    %4021 = vmatpush.msra.mxu0 %v3887
    %4022 = vmatpush.msra.mxu0 %v3885
    %4023 = vmatpush.msra.mxu0 %v3883
    %4024 = vmatpush.msra.mxu0 %v3881
    %4025 = vmatpush.msra.mxu0 %v3879
    %4026 = vmatpush.msra.mxu0 %v3877
    %4027 = vmatpush.msra.mxu0 %v3875
    %4028 = vmatpush.msra.mxu0 %v3873
    %4029 = vmatpush.msra.mxu0 %v3871
    %4030 = vmatpush.msra.mxu0 %v3869
    %4031 = vmatpush.msra.mxu0 %v3867
    %4032 = vmatpush.msra.mxu0 %v3865
    %4033 = vmatpush.msra.mxu0 %v3863
    %4034 = vmatpush.msra.mxu0 %v3861
    %4035 = vmatpush.msra.mxu0 %v3859
    %4036 = vmatmul.f32.gmra.mxu0 %v3946
    %v4037 = vpop.f32.mrf.mxu0
    %v4038 = vadd.f32 0.0, %v4037
    %4039 = vmatmul.f32.gmra.mxu0 %v3949
    %v4040 = vpop.f32.mrf.mxu0
    %v4041 = vadd.f32 0.0, %v4040
    %4042 = vdwg.mxu0
    %4043 = vmatpush.msra.mxu0 %v3921
    %4044 = vmatpush.msra.mxu0 %v3919
    %4045 = vmatpush.msra.mxu0 %v3917
    %4046 = vmatpush.msra.mxu0 %v3915
    %4047 = vmatpush.msra.mxu0 %v3913
    %4048 = vmatpush.msra.mxu0 %v3911
    %4049 = vmatpush.msra.mxu0 %v3909
    %4050 = vmatpush.msra.mxu0 %v3907
    %4051 = vmatpush.msra.mxu0 %v3905
    %4052 = vmatpush.msra.mxu0 %v3903
    %4053 = vmatpush.msra.mxu0 %v3901
    %4054 = vmatpush.msra.mxu0 %v3899
    %4055 = vmatpush.msra.mxu0 %v3897
    %4056 = vmatpush.msra.mxu0 %v3895
    %4057 = vmatpush.msra.mxu0 %v3893
    %4058 = vmatpush.msra.mxu0 %v3891
    %4059 = vmatmul.f32.gmra.mxu0 %v3969
    %v4060 = vpop.f32.mrf.mxu0
    %v4061 = vadd.f32 %v4038, %v4060
    %4062 = vmatmul.f32.gmra.mxu0 %v3972
    %v4063 = vpop.f32.mrf.mxu0
    %v4064 = vadd.f32 %v4041, %v4063
    %4065 = vdwg.mxu0
    %v4066 = vadd.f32 %v3850, %v4015
    %v4067 = vadd.f32 %v3851, %v4061
    %v4068 = vadd.f32 %v3852, %v4018
    %v4069 = vadd.f32 %v3853, %v4064
    %v4070 = vand.u32 %v2654, 31
    %v4071 = vand.u32 %v2655, 31
    %v4072 = vand.u32 %v2656, 31
    %v4073 = vand.u32 %v2657, 31
    %v4074 = vand.u32 %v2658, 31
    %v4075 = vand.u32 %v2659, 31
    %v4076 = vand.u32 %v2660, 31
    %v4077 = vand.u32 %v2661, 31
    %v4078 = vand.u32 %v2662, 31
    %v4079 = vand.u32 %v2663, 31
    %v4080 = vand.u32 %v2664, 31
    %v4081 = vand.u32 %v2665, 31
    %v4082 = vand.u32 %v2666, 31
    %v4083 = vand.u32 %v2667, 31
    %v4084 = vand.u32 %v2668, 31
    %v4085 = vand.u32 %v2669, 31
    %v4086 = vand.u32 %v2670, 31
    %v4087 = vand.u32 %v2671, 31
    %v4088 = vand.u32 %v2672, 31
    %v4089 = vand.u32 %v2673, 31
    %v4090 = vand.u32 %v2674, 31
    %v4091 = vand.u32 %v2675, 31
    %v4092 = vand.u32 %v2676, 31
    %v4093 = vand.u32 %v2677, 31
    %v4094 = vand.u32 %v2678, 31
    %v4095 = vand.u32 %v2679, 31
    %v4096 = vand.u32 %v2680, 31
    %v4097 = vand.u32 %v2681, 31
    %v4098 = vand.u32 %v2682, 31
    %v4099 = vand.u32 %v2683, 31
    %v4100 = vand.u32 %v2684, 31
    %v4101 = vand.u32 %v2685, 31
    %v4102 = vand.u32 %v2687, 31
    %v4103 = vand.u32 %v2688, 31
    %vm4104 = vcmp.eq.s32.totalorder %v4070, %v4102
    %vm4105 = vcmp.eq.s32.totalorder %v4070, %v4103
    %vm4106 = vcmp.eq.s32.totalorder %v4071, %v4102
    %vm4107 = vcmp.eq.s32.totalorder %v4071, %v4103
    %vm4108 = vcmp.eq.s32.totalorder %v4072, %v4102
    %vm4109 = vcmp.eq.s32.totalorder %v4072, %v4103
    %vm4110 = vcmp.eq.s32.totalorder %v4073, %v4102
    %vm4111 = vcmp.eq.s32.totalorder %v4073, %v4103
    %vm4112 = vcmp.eq.s32.totalorder %v4074, %v4102
    %vm4113 = vcmp.eq.s32.totalorder %v4074, %v4103
    %vm4114 = vcmp.eq.s32.totalorder %v4075, %v4102
    %vm4115 = vcmp.eq.s32.totalorder %v4075, %v4103
    %vm4116 = vcmp.eq.s32.totalorder %v4076, %v4102
    %vm4117 = vcmp.eq.s32.totalorder %v4076, %v4103
    %vm4118 = vcmp.eq.s32.totalorder %v4077, %v4102
    %vm4119 = vcmp.eq.s32.totalorder %v4077, %v4103
    %vm4120 = vcmp.eq.s32.totalorder %v4078, %v4102
    %vm4121 = vcmp.eq.s32.totalorder %v4078, %v4103
    %vm4122 = vcmp.eq.s32.totalorder %v4079, %v4102
    %vm4123 = vcmp.eq.s32.totalorder %v4079, %v4103
    %vm4124 = vcmp.eq.s32.totalorder %v4080, %v4102
    %vm4125 = vcmp.eq.s32.totalorder %v4080, %v4103
    %vm4126 = vcmp.eq.s32.totalorder %v4081, %v4102
    %vm4127 = vcmp.eq.s32.totalorder %v4081, %v4103
    %vm4128 = vcmp.eq.s32.totalorder %v4082, %v4102
    %vm4129 = vcmp.eq.s32.totalorder %v4082, %v4103
    %vm4130 = vcmp.eq.s32.totalorder %v4083, %v4102
    %vm4131 = vcmp.eq.s32.totalorder %v4083, %v4103
    %vm4132 = vcmp.eq.s32.totalorder %v4084, %v4102
    %vm4133 = vcmp.eq.s32.totalorder %v4084, %v4103
    %vm4134 = vcmp.eq.s32.totalorder %v4085, %v4102
    %vm4135 = vcmp.eq.s32.totalorder %v4085, %v4103
    %vm4136 = vcmp.eq.s32.totalorder %v4086, %v4102
    %vm4137 = vcmp.eq.s32.totalorder %v4086, %v4103
    %vm4138 = vcmp.eq.s32.totalorder %v4087, %v4102
    %vm4139 = vcmp.eq.s32.totalorder %v4087, %v4103
    %vm4140 = vcmp.eq.s32.totalorder %v4088, %v4102
    %vm4141 = vcmp.eq.s32.totalorder %v4088, %v4103
    %vm4142 = vcmp.eq.s32.totalorder %v4089, %v4102
    %vm4143 = vcmp.eq.s32.totalorder %v4089, %v4103
    %vm4144 = vcmp.eq.s32.totalorder %v4090, %v4102
    %vm4145 = vcmp.eq.s32.totalorder %v4090, %v4103
    %vm4146 = vcmp.eq.s32.totalorder %v4091, %v4102
    %vm4147 = vcmp.eq.s32.totalorder %v4091, %v4103
    %vm4148 = vcmp.eq.s32.totalorder %v4092, %v4102
    %vm4149 = vcmp.eq.s32.totalorder %v4092, %v4103
    %vm4150 = vcmp.eq.s32.totalorder %v4093, %v4102
    %vm4151 = vcmp.eq.s32.totalorder %v4093, %v4103
    %vm4152 = vcmp.eq.s32.totalorder %v4094, %v4102
    %vm4153 = vcmp.eq.s32.totalorder %v4094, %v4103
    %vm4154 = vcmp.eq.s32.totalorder %v4095, %v4102
    %vm4155 = vcmp.eq.s32.totalorder %v4095, %v4103
    %vm4156 = vcmp.eq.s32.totalorder %v4096, %v4102
    %vm4157 = vcmp.eq.s32.totalorder %v4096, %v4103
    %vm4158 = vcmp.eq.s32.totalorder %v4097, %v4102
    %vm4159 = vcmp.eq.s32.totalorder %v4097, %v4103
    %vm4160 = vcmp.eq.s32.totalorder %v4098, %v4102
    %vm4161 = vcmp.eq.s32.totalorder %v4098, %v4103
    %vm4162 = vcmp.eq.s32.totalorder %v4099, %v4102
    %vm4163 = vcmp.eq.s32.totalorder %v4099, %v4103
    %vm4164 = vcmp.eq.s32.totalorder %v4100, %v4102
    %vm4165 = vcmp.eq.s32.totalorder %v4100, %v4103
    %vm4166 = vcmp.eq.s32.totalorder %v4101, %v4102
    %vm4167 = vcmp.eq.s32.totalorder %v4101, %v4103
    %v4168 = vsel %vm4104, 1, 0
    %v4169 = vsel %vm4105, 1, 0
    %v4170 = vsel %vm4106, 1, 0
    %v4171 = vsel %vm4107, 1, 0
    %v4172 = vsel %vm4108, 1, 0
    %v4173 = vsel %vm4109, 1, 0
    %v4174 = vsel %vm4110, 1, 0
    %v4175 = vsel %vm4111, 1, 0
    %v4176 = vsel %vm4112, 1, 0
    %v4177 = vsel %vm4113, 1, 0
    %v4178 = vsel %vm4114, 1, 0
    %v4179 = vsel %vm4115, 1, 0
    %v4180 = vsel %vm4116, 1, 0
    %v4181 = vsel %vm4117, 1, 0
    %v4182 = vsel %vm4118, 1, 0
    %v4183 = vsel %vm4119, 1, 0
    %v4184 = vsel %vm4120, 1, 0
    %v4185 = vsel %vm4121, 1, 0
    %v4186 = vsel %vm4122, 1, 0
    %v4187 = vsel %vm4123, 1, 0
    %v4188 = vsel %vm4124, 1, 0
    %v4189 = vsel %vm4125, 1, 0
    %v4190 = vsel %vm4126, 1, 0
    %v4191 = vsel %vm4127, 1, 0
    %v4192 = vsel %vm4128, 1, 0
    %v4193 = vsel %vm4129, 1, 0
    %v4194 = vsel %vm4130, 1, 0
    %v4195 = vsel %vm4131, 1, 0
    %v4196 = vsel %vm4132, 1, 0
    %v4197 = vsel %vm4133, 1, 0
    %v4198 = vsel %vm4134, 1, 0
    %v4199 = vsel %vm4135, 1, 0
    %v4200 = vsel %vm4136, 1, 0
    %v4201 = vsel %vm4137, 1, 0
    %v4202 = vsel %vm4138, 1, 0
    %v4203 = vsel %vm4139, 1, 0
    %v4204 = vsel %vm4140, 1, 0
    %v4205 = vsel %vm4141, 1, 0
    %v4206 = vsel %vm4142, 1, 0
    %v4207 = vsel %vm4143, 1, 0
    %v4208 = vsel %vm4144, 1, 0
    %v4209 = vsel %vm4145, 1, 0
    %v4210 = vsel %vm4146, 1, 0
    %v4211 = vsel %vm4147, 1, 0
    %v4212 = vsel %vm4148, 1, 0
    %v4213 = vsel %vm4149, 1, 0
    %v4214 = vsel %vm4150, 1, 0
    %v4215 = vsel %vm4151, 1, 0
    %v4216 = vsel %vm4152, 1, 0
    %v4217 = vsel %vm4153, 1, 0
    %v4218 = vsel %vm4154, 1, 0
    %v4219 = vsel %vm4155, 1, 0
    %v4220 = vsel %vm4156, 1, 0
    %v4221 = vsel %vm4157, 1, 0
    %v4222 = vsel %vm4158, 1, 0
    %v4223 = vsel %vm4159, 1, 0
    %v4224 = vsel %vm4160, 1, 0
    %v4225 = vsel %vm4161, 1, 0
    %v4226 = vsel %vm4162, 1, 0
    %v4227 = vsel %vm4163, 1, 0
    %v4228 = vsel %vm4164, 1, 0
    %v4229 = vsel %vm4165, 1, 0
    %v4230 = vsel %vm4166, 1, 0
    %v4231 = vsel %vm4167, 1, 0
    %v4232 = vcvt.s32.f32 %v4168
    %v4233 = vcvt.s32.f32 %v4169
    %v4234 = vcvt.s32.f32 %v4170
    %v4235 = vcvt.s32.f32 %v4171
    %v4236 = vcvt.s32.f32 %v4172
    %v4237 = vcvt.s32.f32 %v4173
    %v4238 = vcvt.s32.f32 %v4174
    %v4239 = vcvt.s32.f32 %v4175
    %v4240 = vcvt.s32.f32 %v4176
    %v4241 = vcvt.s32.f32 %v4177
    %v4242 = vcvt.s32.f32 %v4178
    %v4243 = vcvt.s32.f32 %v4179
    %v4244 = vcvt.s32.f32 %v4180
    %v4245 = vcvt.s32.f32 %v4181
    %v4246 = vcvt.s32.f32 %v4182
    %v4247 = vcvt.s32.f32 %v4183
    %v4248 = vcvt.s32.f32 %v4184
    %v4249 = vcvt.s32.f32 %v4185
    %v4250 = vcvt.s32.f32 %v4186
    %v4251 = vcvt.s32.f32 %v4187
    %v4252 = vcvt.s32.f32 %v4188
    %v4253 = vcvt.s32.f32 %v4189
    %v4254 = vcvt.s32.f32 %v4190
    %v4255 = vcvt.s32.f32 %v4191
    %v4256 = vcvt.s32.f32 %v4192
    %v4257 = vcvt.s32.f32 %v4193
    %v4258 = vcvt.s32.f32 %v4194
    %v4259 = vcvt.s32.f32 %v4195
    %v4260 = vcvt.s32.f32 %v4196
    %v4261 = vcvt.s32.f32 %v4197
    %v4262 = vcvt.s32.f32 %v4198
    %v4263 = vcvt.s32.f32 %v4199
    %v4264 = vcvt.s32.f32 %v4200
    %v4265 = vcvt.s32.f32 %v4201
    %v4266 = vcvt.s32.f32 %v4202
    %v4267 = vcvt.s32.f32 %v4203
    %v4268 = vcvt.s32.f32 %v4204
    %v4269 = vcvt.s32.f32 %v4205
    %v4270 = vcvt.s32.f32 %v4206
    %v4271 = vcvt.s32.f32 %v4207
    %v4272 = vcvt.s32.f32 %v4208
    %v4273 = vcvt.s32.f32 %v4209
    %v4274 = vcvt.s32.f32 %v4210
    %v4275 = vcvt.s32.f32 %v4211
    %v4276 = vcvt.s32.f32 %v4212
    %v4277 = vcvt.s32.f32 %v4213
    %v4278 = vcvt.s32.f32 %v4214
    %v4279 = vcvt.s32.f32 %v4215
    %v4280 = vcvt.s32.f32 %v4216
    %v4281 = vcvt.s32.f32 %v4217
    %v4282 = vcvt.s32.f32 %v4218
    %v4283 = vcvt.s32.f32 %v4219
    %v4284 = vcvt.s32.f32 %v4220
    %v4285 = vcvt.s32.f32 %v4221
    %v4286 = vcvt.s32.f32 %v4222
    %v4287 = vcvt.s32.f32 %v4223
    %v4288 = vcvt.s32.f32 %v4224
    %v4289 = vcvt.s32.f32 %v4225
    %v4290 = vcvt.s32.f32 %v4226
    %v4291 = vcvt.s32.f32 %v4227
    %v4292 = vcvt.s32.f32 %v4228
    %v4293 = vcvt.s32.f32 %v4229
    %v4294 = vcvt.s32.f32 %v4230
    %v4295 = vcvt.s32.f32 %v4231
    %v4296 = vadd.f32 %v4066, %v4068
    %v4297 = vrot.slane %v4296, 4
    %v4298 = vadd.f32 %v4296, %v4297
    %v4299 = vrot.slane %v4298, 2
    %v4300 = vadd.f32 %v4298, %v4299
    %v4301 = vrot.slane %v4300, 1
    %v4302 = vadd.f32 %v4300, %v4301
    %v4303 = vadd.f32 %v4067, %v4069
    %v4304 = vrot.slane %v4303, 4
    %v4305 = vadd.f32 %v4303, %v4304
    %v4306 = vrot.slane %v4305, 2
    %v4307 = vadd.f32 %v4305, %v4306
    %v4308 = vrot.slane %v4307, 1
    %v4309 = vadd.f32 %v4307, %v4308
    %4310 = vmatpush.msra.mxu0 %v4262
    %4311 = vmatpush.msra.mxu0 %v4260
    %4312 = vmatpush.msra.mxu0 %v4258
    %4313 = vmatpush.msra.mxu0 %v4256
    %4314 = vmatpush.msra.mxu0 %v4254
    %4315 = vmatpush.msra.mxu0 %v4252
    %4316 = vmatpush.msra.mxu0 %v4250
    %4317 = vmatpush.msra.mxu0 %v4248
    %4318 = vmatpush.msra.mxu0 %v4246
    %4319 = vmatpush.msra.mxu0 %v4244
    %4320 = vmatpush.msra.mxu0 %v4242
    %4321 = vmatpush.msra.mxu0 %v4240
    %4322 = vmatpush.msra.mxu0 %v4238
    %4323 = vmatpush.msra.mxu0 %v4236
    %4324 = vmatpush.msra.mxu0 %v4234
    %4325 = vmatpush.msra.mxu0 %v4232
    %4326 = vmatmul.f32.gmra.mxu0 %v4302
    %v4327 = vpop.f32.mrf.mxu0
    %v4328 = vadd.f32 0.0, %v4327
    %4329 = vdwg.mxu0
    %4330 = vmatpush.msra.mxu0 %v4294
    %4331 = vmatpush.msra.mxu0 %v4292
    %4332 = vmatpush.msra.mxu0 %v4290
    %4333 = vmatpush.msra.mxu0 %v4288
    %4334 = vmatpush.msra.mxu0 %v4286
    %4335 = vmatpush.msra.mxu0 %v4284
    %4336 = vmatpush.msra.mxu0 %v4282
    %4337 = vmatpush.msra.mxu0 %v4280
    %4338 = vmatpush.msra.mxu0 %v4278
    %4339 = vmatpush.msra.mxu0 %v4276
    %4340 = vmatpush.msra.mxu0 %v4274
    %4341 = vmatpush.msra.mxu0 %v4272
    %4342 = vmatpush.msra.mxu0 %v4270
    %4343 = vmatpush.msra.mxu0 %v4268
    %4344 = vmatpush.msra.mxu0 %v4266
    %4345 = vmatpush.msra.mxu0 %v4264
    %4346 = vmatmul.f32.gmra.mxu0 %v4309
    %v4347 = vpop.f32.mrf.mxu0
    %v4348 = vadd.f32 %v4328, %v4347
    %4349 = vdwg.mxu0
    %4350 = vmatpush.msra.mxu0 %v4263
    %4351 = vmatpush.msra.mxu0 %v4261
    %4352 = vmatpush.msra.mxu0 %v4259
    %4353 = vmatpush.msra.mxu0 %v4257
    %4354 = vmatpush.msra.mxu0 %v4255
    %4355 = vmatpush.msra.mxu0 %v4253
    %4356 = vmatpush.msra.mxu0 %v4251
    %4357 = vmatpush.msra.mxu0 %v4249
    %4358 = vmatpush.msra.mxu0 %v4247
    %4359 = vmatpush.msra.mxu0 %v4245
    %4360 = vmatpush.msra.mxu0 %v4243
    %4361 = vmatpush.msra.mxu0 %v4241
    %4362 = vmatpush.msra.mxu0 %v4239
    %4363 = vmatpush.msra.mxu0 %v4237
    %4364 = vmatpush.msra.mxu0 %v4235
    %4365 = vmatpush.msra.mxu0 %v4233
    %4366 = vmatmul.f32.gmra.mxu0 %v4302
    %v4367 = vpop.f32.mrf.mxu0
    %v4368 = vadd.f32 0.0, %v4367
    %4369 = vdwg.mxu0
    %4370 = vmatpush.msra.mxu0 %v4295
    %4371 = vmatpush.msra.mxu0 %v4293
    %4372 = vmatpush.msra.mxu0 %v4291
    %4373 = vmatpush.msra.mxu0 %v4289
    %4374 = vmatpush.msra.mxu0 %v4287
    %4375 = vmatpush.msra.mxu0 %v4285
    %4376 = vmatpush.msra.mxu0 %v4283
    %4377 = vmatpush.msra.mxu0 %v4281
    %4378 = vmatpush.msra.mxu0 %v4279
    %4379 = vmatpush.msra.mxu0 %v4277
    %4380 = vmatpush.msra.mxu0 %v4275
    %4381 = vmatpush.msra.mxu0 %v4273
    %4382 = vmatpush.msra.mxu0 %v4271
    %4383 = vmatpush.msra.mxu0 %v4269
    %4384 = vmatpush.msra.mxu0 %v4267
    %4385 = vmatpush.msra.mxu0 %v4265
    %4386 = vmatmul.f32.gmra.mxu0 %v4309
    %v4387 = vpop.f32.mrf.mxu0
    %v4388 = vadd.f32 %v4368, %v4387
    %4389 = vdwg.mxu0
    %v4390 = vmul.f32 %v4348, 0.0078125
    %v4391 = vmul.f32 %v4388, 0.0078125
    %v4392 = vperm.slane %v4390, 0
    %v4393 = vperm.slane %v4391, 0
    %v4394 = vsub.f32 %v4066, %v4392
    %v4395 = vsub.f32 %v4067, %v4393
    %v4396 = vsub.f32 %v4068, %v4392
    %v4397 = vsub.f32 %v4069, %v4393
    %v4398 = vmul.f32 %v4394, %v4394
    %v4399 = vmul.f32 %v4395, %v4395
    %v4400 = vmul.f32 %v4396, %v4396
    %v4401 = vmul.f32 %v4397, %v4397
    %v4402 = vadd.f32 %v4398, %v4400
    %v4403 = vrot.slane %v4402, 4
    %v4404 = vadd.f32 %v4402, %v4403
    %v4405 = vrot.slane %v4404, 2
    %v4406 = vadd.f32 %v4404, %v4405
    %v4407 = vrot.slane %v4406, 1
    %v4408 = vadd.f32 %v4406, %v4407
    %v4409 = vadd.f32 %v4399, %v4401
    %v4410 = vrot.slane %v4409, 4
    %v4411 = vadd.f32 %v4409, %v4410
    %v4412 = vrot.slane %v4411, 2
    %v4413 = vadd.f32 %v4411, %v4412
    %v4414 = vrot.slane %v4413, 1
    %v4415 = vadd.f32 %v4413, %v4414
    %4416 = vmatpush.msra.mxu0 %v4262
    %4417 = vmatpush.msra.mxu0 %v4260
    %4418 = vmatpush.msra.mxu0 %v4258
    %4419 = vmatpush.msra.mxu0 %v4256
    %4420 = vmatpush.msra.mxu0 %v4254
    %4421 = vmatpush.msra.mxu0 %v4252
    %4422 = vmatpush.msra.mxu0 %v4250
    %4423 = vmatpush.msra.mxu0 %v4248
    %4424 = vmatpush.msra.mxu0 %v4246
    %4425 = vmatpush.msra.mxu0 %v4244
    %4426 = vmatpush.msra.mxu0 %v4242
    %4427 = vmatpush.msra.mxu0 %v4240
    %4428 = vmatpush.msra.mxu0 %v4238
    %4429 = vmatpush.msra.mxu0 %v4236
    %4430 = vmatpush.msra.mxu0 %v4234
    %4431 = vmatpush.msra.mxu0 %v4232
    %4432 = vmatmul.f32.gmra.mxu0 %v4408
    %v4433 = vpop.f32.mrf.mxu0
    %v4434 = vadd.f32 0.0, %v4433
    %4435 = vdwg.mxu0
    %4436 = vmatpush.msra.mxu0 %v4294
    %4437 = vmatpush.msra.mxu0 %v4292
    %4438 = vmatpush.msra.mxu0 %v4290
    %4439 = vmatpush.msra.mxu0 %v4288
    %4440 = vmatpush.msra.mxu0 %v4286
    %4441 = vmatpush.msra.mxu0 %v4284
    %4442 = vmatpush.msra.mxu0 %v4282
    %4443 = vmatpush.msra.mxu0 %v4280
    %4444 = vmatpush.msra.mxu0 %v4278
    %4445 = vmatpush.msra.mxu0 %v4276
    %4446 = vmatpush.msra.mxu0 %v4274
    %4447 = vmatpush.msra.mxu0 %v4272
    %4448 = vmatpush.msra.mxu0 %v4270
    %4449 = vmatpush.msra.mxu0 %v4268
    %4450 = vmatpush.msra.mxu0 %v4266
    %4451 = vmatpush.msra.mxu0 %v4264
    %4452 = vmatmul.f32.gmra.mxu0 %v4415
    %v4453 = vpop.f32.mrf.mxu0
    %v4454 = vadd.f32 %v4434, %v4453
    %4455 = vdwg.mxu0
    %4456 = vmatpush.msra.mxu0 %v4263
    %4457 = vmatpush.msra.mxu0 %v4261
    %4458 = vmatpush.msra.mxu0 %v4259
    %4459 = vmatpush.msra.mxu0 %v4257
    %4460 = vmatpush.msra.mxu0 %v4255
    %4461 = vmatpush.msra.mxu0 %v4253
    %4462 = vmatpush.msra.mxu0 %v4251
    %4463 = vmatpush.msra.mxu0 %v4249
    %4464 = vmatpush.msra.mxu0 %v4247
    %4465 = vmatpush.msra.mxu0 %v4245
    %4466 = vmatpush.msra.mxu0 %v4243
    %4467 = vmatpush.msra.mxu0 %v4241
    %4468 = vmatpush.msra.mxu0 %v4239
    %4469 = vmatpush.msra.mxu0 %v4237
    %4470 = vmatpush.msra.mxu0 %v4235
    %4471 = vmatpush.msra.mxu0 %v4233
    %4472 = vmatmul.f32.gmra.mxu0 %v4408
    %v4473 = vpop.f32.mrf.mxu0
    %v4474 = vadd.f32 0.0, %v4473
    %4475 = vdwg.mxu0
    %4476 = vmatpush.msra.mxu0 %v4295
    %4477 = vmatpush.msra.mxu0 %v4293
    %4478 = vmatpush.msra.mxu0 %v4291
    %4479 = vmatpush.msra.mxu0 %v4289
    %4480 = vmatpush.msra.mxu0 %v4287
    %4481 = vmatpush.msra.mxu0 %v4285
    %4482 = vmatpush.msra.mxu0 %v4283
    %4483 = vmatpush.msra.mxu0 %v4281
    %4484 = vmatpush.msra.mxu0 %v4279
    %4485 = vmatpush.msra.mxu0 %v4277
    %4486 = vmatpush.msra.mxu0 %v4275
    %4487 = vmatpush.msra.mxu0 %v4273
    %4488 = vmatpush.msra.mxu0 %v4271
    %4489 = vmatpush.msra.mxu0 %v4269
    %4490 = vmatpush.msra.mxu0 %v4267
    %4491 = vmatpush.msra.mxu0 %v4265
    %4492 = vmatmul.f32.gmra.mxu0 %v4415
    %v4493 = vpop.f32.mrf.mxu0
    %v4494 = vadd.f32 %v4474, %v4493
    %4495 = vdwg.mxu0
    %v4496 = vmul.f32 %v4454, 0.0078125
    %v4497 = vmul.f32 %v4494, 0.0078125
    %v4498 = vld [vmem:[#allocation10] ss:$2 sm:$0x3]
    %s4499 = scalar_lea.vmem [#allocation10], 1
    %v4500 = vld [vmem:[%s4499] ss:$2 sm:$0x3]
    %v4501 = vadd.f32 %v4496, 1e-05
    %v4502 = vadd.f32 %v4497, 1e-05
    %v4503 = vrsqrt.pop %v4501
    %v4504 = vmul.f32 %v4503, %v4501
    %v4505 = vmul.f32 %v4504, %v4503
    %v4506 = vmul.f32 0.5, %v4505
    %v4507 = vsub.f32 1.5, %v4506
    %v4508 = vmul.f32 %v4503, %v4507
    %vm4509 = vweird.f32 %v4501
    %vm4510 = vweird.f32 %v4503
    %vm4511 = vmor %vm4509, %vm4510
    %v4512 = vsel %vm4511, %v4503, %v4508
    %v4513 = vrsqrt.pop %v4502
    %v4514 = vmul.f32 %v4513, %v4502
    %v4515 = vmul.f32 %v4514, %v4513
    %v4516 = vmul.f32 0.5, %v4515
    %v4517 = vsub.f32 1.5, %v4516
    %v4518 = vmul.f32 %v4513, %v4517
    %vm4519 = vweird.f32 %v4502
    %vm4520 = vweird.f32 %v4513
    %vm4521 = vmor %vm4519, %vm4520
    %v4522 = vsel %vm4521, %v4513, %v4518
    %v4525 = vrot.slane %v4522, 7
    %v4526 = vsel %vm3161, %v4512, %v4525
    %v4528 = vmul.f32 %v4498, %v4526
    %v4530 = vperm.slane %v4528, 0
    %v4531 = vperm.slane %v4528, 1
    %v4534 = vmul.f32 %v4394, %v4530
    %v4535 = vmul.f32 %v4395, %v4531
    %v4536 = vmul.f32 %v4396, %v4530
    %v4537 = vmul.f32 %v4397, %v4531
    %v4539 = vperm.slane %v4500, 0
    %v4540 = vperm.slane %v4500, 1
    %v4543 = vadd.f32 %v4534, %v4539
    %v4544 = vadd.f32 %v4535, %v4540
    %v4545 = vadd.f32 %v4536, %v4539
    %v4546 = vadd.f32 %v4537, %v4540
    %vm4547 = vcmp.ge.f32.partialorder %v4543, 0.0
    %vm4548 = vcmp.ge.f32.partialorder %v4544, 0.0
    %vm4549 = vcmp.ge.f32.partialorder %v4545, 0.0
    %vm4550 = vcmp.ge.f32.partialorder %v4546, 0.0
    %v4551 = vmul.f32 %v4543, 0.2
    %v4552 = vmul.f32 %v4544, 0.2
    %v4553 = vmul.f32 %v4545, 0.2
    %v4554 = vmul.f32 %v4546, 0.2
    %v4555 = vsel %vm4547, %v4543, %v4551
    %v4556 = vsel %vm4548, %v4544, %v4552
    %v4557 = vsel %vm4549, %v4545, %v4553
    %v4558 = vsel %vm4550, %v4546, %v4554
    %v4559 = vld [vmem:[#allocation12] sm:$0xff]
    %v4560 = vld [vmem:[#allocation13] sm:$0xff]
    %v4561 = vld [vmem:[#allocation13 + $0x8] sm:$0xff]
    %v4562 = vld [vmem:[#allocation13 + $0x10] sm:$0xff]
    %v4563 = vld [vmem:[#allocation13 + $0x18] sm:$0xff]
    %v4564 = vld [vmem:[#allocation13 + $0x20] sm:$0xff]
    %v4565 = vld [vmem:[#allocation13 + $0x28] sm:$0xff]
    %v4566 = vld [vmem:[#allocation13 + $0x30] sm:$0xff]
    %v4567 = vld [vmem:[#allocation13 + $0x38] sm:$0xff]
    %v4568 = vld [vmem:[#allocation13 + $0x40] sm:$0xff]
    %v4569 = vld [vmem:[#allocation13 + $0x48] sm:$0xff]
    %v4570 = vld [vmem:[#allocation13 + $0x50] sm:$0xff]
    %v4571 = vld [vmem:[#allocation13 + $0x58] sm:$0xff]
    %v4572 = vld [vmem:[#allocation13 + $0x60] sm:$0xff]
    %v4573 = vld [vmem:[#allocation13 + $0x68] sm:$0xff]
    %v4574 = vld [vmem:[#allocation13 + $0x70] sm:$0xff]
    %v4575 = vld [vmem:[#allocation13 + $0x78] sm:$0xff]
    %v4576 = vld [vmem:[#allocation13 + $0x80] sm:$0xff]
    %v4577 = vld [vmem:[#allocation13 + $0x88] sm:$0xff]
    %v4578 = vld [vmem:[#allocation13 + $0x90] sm:$0xff]
    %v4579 = vld [vmem:[#allocation13 + $0x98] sm:$0xff]
    %v4580 = vld [vmem:[#allocation13 + $0xa0] sm:$0xff]
    %v4581 = vld [vmem:[#allocation13 + $0xa8] sm:$0xff]
    %v4582 = vld [vmem:[#allocation13 + $0xb0] sm:$0xff]
    %v4583 = vld [vmem:[#allocation13 + $0xb8] sm:$0xff]
    %v4584 = vld [vmem:[#allocation13 + $0xc0] sm:$0xff]
    %v4585 = vld [vmem:[#allocation13 + $0xc8] sm:$0xff]
    %v4586 = vld [vmem:[#allocation13 + $0xd0] sm:$0xff]
    %v4587 = vld [vmem:[#allocation13 + $0xd8] sm:$0xff]
    %v4588 = vld [vmem:[#allocation13 + $0xe0] sm:$0xff]
    %v4589 = vld [vmem:[#allocation13 + $0xe8] sm:$0xff]
    %v4590 = vld [vmem:[#allocation13 + $0xf0] sm:$0xff]
    %v4591 = vld [vmem:[#allocation13 + $0xf8] sm:$0xff]
    %v4592 = vld [vmem:[#allocation13 + $0x100] sm:$0xff]
    %v4593 = vld [vmem:[#allocation13 + $0x108] sm:$0xff]
    %v4594 = vld [vmem:[#allocation13 + $0x110] sm:$0xff]
    %v4595 = vld [vmem:[#allocation13 + $0x118] sm:$0xff]
    %v4596 = vld [vmem:[#allocation13 + $0x120] sm:$0xff]
    %v4597 = vld [vmem:[#allocation13 + $0x128] sm:$0xff]
    %v4598 = vld [vmem:[#allocation13 + $0x130] sm:$0xff]
    %v4599 = vld [vmem:[#allocation13 + $0x138] sm:$0xff]
    %v4600 = vld [vmem:[#allocation13 + $0x140] sm:$0xff]
    %v4601 = vld [vmem:[#allocation13 + $0x148] sm:$0xff]
    %v4602 = vld [vmem:[#allocation13 + $0x150] sm:$0xff]
    %v4603 = vld [vmem:[#allocation13 + $0x158] sm:$0xff]
    %v4604 = vld [vmem:[#allocation13 + $0x160] sm:$0xff]
    %v4605 = vld [vmem:[#allocation13 + $0x168] sm:$0xff]
    %v4606 = vld [vmem:[#allocation13 + $0x170] sm:$0xff]
    %v4607 = vld [vmem:[#allocation13 + $0x178] sm:$0xff]
    %v4608 = vld [vmem:[#allocation13 + $0x180] sm:$0xff]
    %v4609 = vld [vmem:[#allocation13 + $0x188] sm:$0xff]
    %v4610 = vld [vmem:[#allocation13 + $0x190] sm:$0xff]
    %v4611 = vld [vmem:[#allocation13 + $0x198] sm:$0xff]
    %v4612 = vld [vmem:[#allocation13 + $0x1a0] sm:$0xff]
    %v4613 = vld [vmem:[#allocation13 + $0x1a8] sm:$0xff]
    %v4614 = vld [vmem:[#allocation13 + $0x1b0] sm:$0xff]
    %v4615 = vld [vmem:[#allocation13 + $0x1b8] sm:$0xff]
    %v4616 = vld [vmem:[#allocation13 + $0x1c0] sm:$0xff]
    %v4617 = vld [vmem:[#allocation13 + $0x1c8] sm:$0xff]
    %v4618 = vld [vmem:[#allocation13 + $0x1d0] sm:$0xff]
    %v4619 = vld [vmem:[#allocation13 + $0x1d8] sm:$0xff]
    %v4620 = vld [vmem:[#allocation13 + $0x1e0] sm:$0xff]
    %v4621 = vld [vmem:[#allocation13 + $0x1e8] sm:$0xff]
    %v4622 = vld [vmem:[#allocation13 + $0x1f0] sm:$0xff]
    %v4623 = vld [vmem:[#allocation13 + $0x1f8] sm:$0xff]
    %vm4624 = vcmask 130048
    %v4626 = vsel %vm4624, %v4559, 0
    %4628 = vmatpush.msra.mxu0 0.0
    %4629 = vmatpush.msra.mxu0 0.0
    %4630 = vmatpush.msra.mxu0 0.0
    %4631 = vmatpush.msra.mxu0 0.0
    %4632 = vmatpush.msra.mxu0 0.0
    %4633 = vmatpush.msra.mxu0 0.0
    %4634 = vmatpush.msra.mxu0 0.0
    %4635 = vmatpush.msra.mxu0 0.0
    %4636 = vmatpush.msra.mxu0 0.0
    %4637 = vmatpush.msra.mxu0 0.0
    %4638 = vmatpush.msra.mxu0 0.0
    %4639 = vmatpush.msra.mxu0 0.0
    %4640 = vmatpush.msra.mxu0 0.0
    %4641 = vmatpush.msra.mxu0 0.0
    %4642 = vmatpush.msra.mxu0 %v4557
    %4643 = vmatpush.msra.mxu0 %v4555
    %4644 = vmatmul.f32.gmra.mxu0 %v4626
    %v4645 = vpop.f32.mrf.mxu0
    %v4646 = vadd.f32 0.0, %v4645
    %4647 = vdwg.mxu0
    %4648 = vmatpush.msra.mxu0 0.0
    %4649 = vmatpush.msra.mxu0 0.0
    %4650 = vmatpush.msra.mxu0 0.0
    %4651 = vmatpush.msra.mxu0 0.0
    %4652 = vmatpush.msra.mxu0 0.0
    %4653 = vmatpush.msra.mxu0 0.0
    %4654 = vmatpush.msra.mxu0 0.0
    %4655 = vmatpush.msra.mxu0 0.0
    %4656 = vmatpush.msra.mxu0 0.0
    %4657 = vmatpush.msra.mxu0 0.0
    %4658 = vmatpush.msra.mxu0 0.0
    %4659 = vmatpush.msra.mxu0 0.0
    %4660 = vmatpush.msra.mxu0 0.0
    %4661 = vmatpush.msra.mxu0 0.0
    %4662 = vmatpush.msra.mxu0 %v4558
    %4663 = vmatpush.msra.mxu0 %v4556
    %4664 = vmatmul.f32.gmra.mxu0 %v4626
    %v4665 = vpop.f32.mrf.mxu0
    %v4666 = vadd.f32 0.0, %v4665
    %4667 = vdwg.mxu0
    %s4668 = scalar_lea.vmem [#allocation12], 8
    %v4669 = vld [vmem:[%s4668] sm:$0xff]
    %s4670 = scalar_lea.vmem [#allocation13], 512
    %v4671 = vld [vmem:[%s4670] sm:$0xff]
    %v4672 = vld [vmem:[%s4670 + $0x8] sm:$0xff]
    %v4673 = vld [vmem:[%s4670 + $0x10] sm:$0xff]
    %v4674 = vld [vmem:[%s4670 + $0x18] sm:$0xff]
    %v4675 = vld [vmem:[%s4670 + $0x20] sm:$0xff]
    %v4676 = vld [vmem:[%s4670 + $0x28] sm:$0xff]
    %v4677 = vld [vmem:[%s4670 + $0x30] sm:$0xff]
    %v4678 = vld [vmem:[%s4670 + $0x38] sm:$0xff]
    %v4679 = vld [vmem:[%s4670 + $0x40] sm:$0xff]
    %v4680 = vld [vmem:[%s4670 + $0x48] sm:$0xff]
    %v4681 = vld [vmem:[%s4670 + $0x50] sm:$0xff]
    %v4682 = vld [vmem:[%s4670 + $0x58] sm:$0xff]
    %v4683 = vld [vmem:[%s4670 + $0x60] sm:$0xff]
    %v4684 = vld [vmem:[%s4670 + $0x68] sm:$0xff]
    %v4685 = vld [vmem:[%s4670 + $0x70] sm:$0xff]
    %v4686 = vld [vmem:[%s4670 + $0x78] sm:$0xff]
    %v4687 = vld [vmem:[%s4670 + $0x80] sm:$0xff]
    %v4688 = vld [vmem:[%s4670 + $0x88] sm:$0xff]
    %v4689 = vld [vmem:[%s4670 + $0x90] sm:$0xff]
    %v4690 = vld [vmem:[%s4670 + $0x98] sm:$0xff]
    %v4691 = vld [vmem:[%s4670 + $0xa0] sm:$0xff]
    %v4692 = vld [vmem:[%s4670 + $0xa8] sm:$0xff]
    %v4693 = vld [vmem:[%s4670 + $0xb0] sm:$0xff]
    %v4694 = vld [vmem:[%s4670 + $0xb8] sm:$0xff]
    %v4695 = vld [vmem:[%s4670 + $0xc0] sm:$0xff]
    %v4696 = vld [vmem:[%s4670 + $0xc8] sm:$0xff]
    %v4697 = vld [vmem:[%s4670 + $0xd0] sm:$0xff]
    %v4698 = vld [vmem:[%s4670 + $0xd8] sm:$0xff]
    %v4699 = vld [vmem:[%s4670 + $0xe0] sm:$0xff]
    %v4700 = vld [vmem:[%s4670 + $0xe8] sm:$0xff]
    %v4701 = vld [vmem:[%s4670 + $0xf0] sm:$0xff]
    %v4702 = vld [vmem:[%s4670 + $0xf8] sm:$0xff]
    %v4703 = vld [vmem:[%s4670 + $0x100] sm:$0xff]
    %v4704 = vld [vmem:[%s4670 + $0x108] sm:$0xff]
    %v4705 = vld [vmem:[%s4670 + $0x110] sm:$0xff]
    %v4706 = vld [vmem:[%s4670 + $0x118] sm:$0xff]
    %v4707 = vld [vmem:[%s4670 + $0x120] sm:$0xff]
    %v4708 = vld [vmem:[%s4670 + $0x128] sm:$0xff]
    %v4709 = vld [vmem:[%s4670 + $0x130] sm:$0xff]
    %v4710 = vld [vmem:[%s4670 + $0x138] sm:$0xff]
    %v4711 = vld [vmem:[%s4670 + $0x140] sm:$0xff]
    %v4712 = vld [vmem:[%s4670 + $0x148] sm:$0xff]
    %v4713 = vld [vmem:[%s4670 + $0x150] sm:$0xff]
    %v4714 = vld [vmem:[%s4670 + $0x158] sm:$0xff]
    %v4715 = vld [vmem:[%s4670 + $0x160] sm:$0xff]
    %v4716 = vld [vmem:[%s4670 + $0x168] sm:$0xff]
    %v4717 = vld [vmem:[%s4670 + $0x170] sm:$0xff]
    %v4718 = vld [vmem:[%s4670 + $0x178] sm:$0xff]
    %v4719 = vld [vmem:[%s4670 + $0x180] sm:$0xff]
    %v4720 = vld [vmem:[%s4670 + $0x188] sm:$0xff]
    %v4721 = vld [vmem:[%s4670 + $0x190] sm:$0xff]
    %v4722 = vld [vmem:[%s4670 + $0x198] sm:$0xff]
    %v4723 = vld [vmem:[%s4670 + $0x1a0] sm:$0xff]
    %v4724 = vld [vmem:[%s4670 + $0x1a8] sm:$0xff]
    %v4725 = vld [vmem:[%s4670 + $0x1b0] sm:$0xff]
    %v4726 = vld [vmem:[%s4670 + $0x1b8] sm:$0xff]
    %v4727 = vld [vmem:[%s4670 + $0x1c0] sm:$0xff]
    %v4728 = vld [vmem:[%s4670 + $0x1c8] sm:$0xff]
    %v4729 = vld [vmem:[%s4670 + $0x1d0] sm:$0xff]
    %v4730 = vld [vmem:[%s4670 + $0x1d8] sm:$0xff]
    %v4731 = vld [vmem:[%s4670 + $0x1e0] sm:$0xff]
    %v4732 = vld [vmem:[%s4670 + $0x1e8] sm:$0xff]
    %v4733 = vld [vmem:[%s4670 + $0x1f0] sm:$0xff]
    %v4734 = vld [vmem:[%s4670 + $0x1f8] sm:$0xff]
    %v4736 = vsel %vm4624, %v4669, 0
    %4738 = vmatpush.msra.mxu0 0.0
    %4739 = vmatpush.msra.mxu0 0.0
    %4740 = vmatpush.msra.mxu0 0.0
    %4741 = vmatpush.msra.mxu0 0.0
    %4742 = vmatpush.msra.mxu0 0.0
    %4743 = vmatpush.msra.mxu0 0.0
    %4744 = vmatpush.msra.mxu0 0.0
    %4745 = vmatpush.msra.mxu0 0.0
    %4746 = vmatpush.msra.mxu0 0.0
    %4747 = vmatpush.msra.mxu0 0.0
    %4748 = vmatpush.msra.mxu0 0.0
    %4749 = vmatpush.msra.mxu0 0.0
    %4750 = vmatpush.msra.mxu0 0.0
    %4751 = vmatpush.msra.mxu0 0.0
    %4752 = vmatpush.msra.mxu0 %v4557
    %4753 = vmatpush.msra.mxu0 %v4555
    %4754 = vmatmul.f32.gmra.mxu0 %v4736
    %v4755 = vpop.f32.mrf.mxu0
    %v4756 = vadd.f32 0.0, %v4755
    %4757 = vdwg.mxu0
    %4758 = vmatpush.msra.mxu0 0.0
    %4759 = vmatpush.msra.mxu0 0.0
    %4760 = vmatpush.msra.mxu0 0.0
    %4761 = vmatpush.msra.mxu0 0.0
    %4762 = vmatpush.msra.mxu0 0.0
    %4763 = vmatpush.msra.mxu0 0.0
    %4764 = vmatpush.msra.mxu0 0.0
    %4765 = vmatpush.msra.mxu0 0.0
    %4766 = vmatpush.msra.mxu0 0.0
    %4767 = vmatpush.msra.mxu0 0.0
    %4768 = vmatpush.msra.mxu0 0.0
    %4769 = vmatpush.msra.mxu0 0.0
    %4770 = vmatpush.msra.mxu0 0.0
    %4771 = vmatpush.msra.mxu0 0.0
    %4772 = vmatpush.msra.mxu0 %v4558
    %4773 = vmatpush.msra.mxu0 %v4556
    %4774 = vmatmul.f32.gmra.mxu0 %v4736
    %v4775 = vpop.f32.mrf.mxu0
    %v4776 = vadd.f32 0.0, %v4775
    %4777 = vdwg.mxu0
    %4778 = vmatpush.msra.mxu0 %v4701
    %4779 = vmatpush.msra.mxu0 %v4699
    %4780 = vmatpush.msra.mxu0 %v4697
    %4781 = vmatpush.msra.mxu0 %v4695
    %4782 = vmatpush.msra.mxu0 %v4693
    %4783 = vmatpush.msra.mxu0 %v4691
    %4784 = vmatpush.msra.mxu0 %v4689
    %4785 = vmatpush.msra.mxu0 %v4687
    %4786 = vmatpush.msra.mxu0 %v4685
    %4787 = vmatpush.msra.mxu0 %v4683
    %4788 = vmatpush.msra.mxu0 %v4681
    %4789 = vmatpush.msra.mxu0 %v4679
    %4790 = vmatpush.msra.mxu0 %v4677
    %4791 = vmatpush.msra.mxu0 %v4675
    %4792 = vmatpush.msra.mxu0 %v4673
    %4793 = vmatpush.msra.mxu0 %v4671
    %4794 = vmatmul.f32.gmra.mxu0 %v4756
    %v4795 = vpop.f32.mrf.mxu0
    %v4796 = vadd.f32 0.0, %v4795
    %4797 = vdwg.mxu0
    %4798 = vmatpush.msra.mxu0 %v4733
    %4799 = vmatpush.msra.mxu0 %v4731
    %4800 = vmatpush.msra.mxu0 %v4729
    %4801 = vmatpush.msra.mxu0 %v4727
    %4802 = vmatpush.msra.mxu0 %v4725
    %4803 = vmatpush.msra.mxu0 %v4723
    %4804 = vmatpush.msra.mxu0 %v4721
    %4805 = vmatpush.msra.mxu0 %v4719
    %4806 = vmatpush.msra.mxu0 %v4717
    %4807 = vmatpush.msra.mxu0 %v4715
    %4808 = vmatpush.msra.mxu0 %v4713
    %4809 = vmatpush.msra.mxu0 %v4711
    %4810 = vmatpush.msra.mxu0 %v4709
    %4811 = vmatpush.msra.mxu0 %v4707
    %4812 = vmatpush.msra.mxu0 %v4705
    %4813 = vmatpush.msra.mxu0 %v4703
    %4814 = vmatmul.f32.gmra.mxu0 %v4776
    %v4815 = vpop.f32.mrf.mxu0
    %v4816 = vadd.f32 %v4796, %v4815
    %4817 = vdwg.mxu0
    %4818 = vmatpush.msra.mxu0 %v4702
    %4819 = vmatpush.msra.mxu0 %v4700
    %4820 = vmatpush.msra.mxu0 %v4698
    %4821 = vmatpush.msra.mxu0 %v4696
    %4822 = vmatpush.msra.mxu0 %v4694
    %4823 = vmatpush.msra.mxu0 %v4692
    %4824 = vmatpush.msra.mxu0 %v4690
    %4825 = vmatpush.msra.mxu0 %v4688
    %4826 = vmatpush.msra.mxu0 %v4686
    %4827 = vmatpush.msra.mxu0 %v4684
    %4828 = vmatpush.msra.mxu0 %v4682
    %4829 = vmatpush.msra.mxu0 %v4680
    %4830 = vmatpush.msra.mxu0 %v4678
    %4831 = vmatpush.msra.mxu0 %v4676
    %4832 = vmatpush.msra.mxu0 %v4674
    %4833 = vmatpush.msra.mxu0 %v4672
    %4834 = vmatmul.f32.gmra.mxu0 %v4756
    %v4835 = vpop.f32.mrf.mxu0
    %v4836 = vadd.f32 0.0, %v4835
    %4837 = vdwg.mxu0
    %4838 = vmatpush.msra.mxu0 %v4734
    %4839 = vmatpush.msra.mxu0 %v4732
    %4840 = vmatpush.msra.mxu0 %v4730
    %4841 = vmatpush.msra.mxu0 %v4728
    %4842 = vmatpush.msra.mxu0 %v4726
    %4843 = vmatpush.msra.mxu0 %v4724
    %4844 = vmatpush.msra.mxu0 %v4722
    %4845 = vmatpush.msra.mxu0 %v4720
    %4846 = vmatpush.msra.mxu0 %v4718
    %4847 = vmatpush.msra.mxu0 %v4716
    %4848 = vmatpush.msra.mxu0 %v4714
    %4849 = vmatpush.msra.mxu0 %v4712
    %4850 = vmatpush.msra.mxu0 %v4710
    %4851 = vmatpush.msra.mxu0 %v4708
    %4852 = vmatpush.msra.mxu0 %v4706
    %4853 = vmatpush.msra.mxu0 %v4704
    %4854 = vmatmul.f32.gmra.mxu0 %v4776
    %v4855 = vpop.f32.mrf.mxu0
    %v4856 = vadd.f32 %v4836, %v4855
    %4857 = vdwg.mxu0
    %4858 = vmatpush.msra.mxu0 %v4590
    %4859 = vmatpush.msra.mxu0 %v4588
    %4860 = vmatpush.msra.mxu0 %v4586
    %4861 = vmatpush.msra.mxu0 %v4584
    %4862 = vmatpush.msra.mxu0 %v4582
    %4863 = vmatpush.msra.mxu0 %v4580
    %4864 = vmatpush.msra.mxu0 %v4578
    %4865 = vmatpush.msra.mxu0 %v4576
    %4866 = vmatpush.msra.mxu0 %v4574
    %4867 = vmatpush.msra.mxu0 %v4572
    %4868 = vmatpush.msra.mxu0 %v4570
    %4869 = vmatpush.msra.mxu0 %v4568
    %4870 = vmatpush.msra.mxu0 %v4566
    %4871 = vmatpush.msra.mxu0 %v4564
    %4872 = vmatpush.msra.mxu0 %v4562
    %4873 = vmatpush.msra.mxu0 %v4560
    %4874 = vmatmul.f32.gmra.mxu0 %v4646
    %v4875 = vpop.f32.mrf.mxu0
    %v4876 = vadd.f32 %v4816, %v4875
    %4877 = vdwg.mxu0
    %4878 = vmatpush.msra.mxu0 %v4622
    %4879 = vmatpush.msra.mxu0 %v4620
    %4880 = vmatpush.msra.mxu0 %v4618
    %4881 = vmatpush.msra.mxu0 %v4616
    %4882 = vmatpush.msra.mxu0 %v4614
    %4883 = vmatpush.msra.mxu0 %v4612
    %4884 = vmatpush.msra.mxu0 %v4610
    %4885 = vmatpush.msra.mxu0 %v4608
    %4886 = vmatpush.msra.mxu0 %v4606
    %4887 = vmatpush.msra.mxu0 %v4604
    %4888 = vmatpush.msra.mxu0 %v4602
    %4889 = vmatpush.msra.mxu0 %v4600
    %4890 = vmatpush.msra.mxu0 %v4598
    %4891 = vmatpush.msra.mxu0 %v4596
    %4892 = vmatpush.msra.mxu0 %v4594
    %4893 = vmatpush.msra.mxu0 %v4592
    %4894 = vmatmul.f32.gmra.mxu0 %v4666
    %v4895 = vpop.f32.mrf.mxu0
    %v4896 = vadd.f32 %v4876, %v4895
    %4897 = vdwg.mxu0
    %4898 = vmatpush.msra.mxu0 %v4591
    %4899 = vmatpush.msra.mxu0 %v4589
    %4900 = vmatpush.msra.mxu0 %v4587
    %4901 = vmatpush.msra.mxu0 %v4585
    %4902 = vmatpush.msra.mxu0 %v4583
    %4903 = vmatpush.msra.mxu0 %v4581
    %4904 = vmatpush.msra.mxu0 %v4579
    %4905 = vmatpush.msra.mxu0 %v4577
    %4906 = vmatpush.msra.mxu0 %v4575
    %4907 = vmatpush.msra.mxu0 %v4573
    %4908 = vmatpush.msra.mxu0 %v4571
    %4909 = vmatpush.msra.mxu0 %v4569
    %4910 = vmatpush.msra.mxu0 %v4567
    %4911 = vmatpush.msra.mxu0 %v4565
    %4912 = vmatpush.msra.mxu0 %v4563
    %4913 = vmatpush.msra.mxu0 %v4561
    %4914 = vmatmul.f32.gmra.mxu0 %v4646
    %v4915 = vpop.f32.mrf.mxu0
    %v4916 = vadd.f32 %v4856, %v4915
    %4917 = vdwg.mxu0
    %4918 = vmatpush.msra.mxu0 %v4623
    %4919 = vmatpush.msra.mxu0 %v4621
    %4920 = vmatpush.msra.mxu0 %v4619
    %4921 = vmatpush.msra.mxu0 %v4617
    %4922 = vmatpush.msra.mxu0 %v4615
    %4923 = vmatpush.msra.mxu0 %v4613
    %4924 = vmatpush.msra.mxu0 %v4611
    %4925 = vmatpush.msra.mxu0 %v4609
    %4926 = vmatpush.msra.mxu0 %v4607
    %4927 = vmatpush.msra.mxu0 %v4605
    %4928 = vmatpush.msra.mxu0 %v4603
    %4929 = vmatpush.msra.mxu0 %v4601
    %4930 = vmatpush.msra.mxu0 %v4599
    %4931 = vmatpush.msra.mxu0 %v4597
    %4932 = vmatpush.msra.mxu0 %v4595
    %4933 = vmatpush.msra.mxu0 %v4593
    %4934 = vmatmul.f32.gmra.mxu0 %v4666
    %v4935 = vpop.f32.mrf.mxu0
    %v4936 = vadd.f32 %v4916, %v4935
    %4937 = vdwg.mxu0
    %s4938 = scalar_lea.vmem [#allocation12], 16
    %v4939 = vld [vmem:[%s4938] sm:$0xff]
    %s4940 = scalar_lea.vmem [#allocation13], 1024
    %v4941 = vld [vmem:[%s4940] sm:$0xff]
    %v4942 = vld [vmem:[%s4940 + $0x8] sm:$0xff]
    %v4943 = vld [vmem:[%s4940 + $0x10] sm:$0xff]
    %v4944 = vld [vmem:[%s4940 + $0x18] sm:$0xff]
    %v4945 = vld [vmem:[%s4940 + $0x20] sm:$0xff]
    %v4946 = vld [vmem:[%s4940 + $0x28] sm:$0xff]
    %v4947 = vld [vmem:[%s4940 + $0x30] sm:$0xff]
    %v4948 = vld [vmem:[%s4940 + $0x38] sm:$0xff]
    %v4949 = vld [vmem:[%s4940 + $0x40] sm:$0xff]
    %v4950 = vld [vmem:[%s4940 + $0x48] sm:$0xff]
    %v4951 = vld [vmem:[%s4940 + $0x50] sm:$0xff]
    %v4952 = vld [vmem:[%s4940 + $0x58] sm:$0xff]
    %v4953 = vld [vmem:[%s4940 + $0x60] sm:$0xff]
    %v4954 = vld [vmem:[%s4940 + $0x68] sm:$0xff]
    %v4955 = vld [vmem:[%s4940 + $0x70] sm:$0xff]
    %v4956 = vld [vmem:[%s4940 + $0x78] sm:$0xff]
    %v4957 = vld [vmem:[%s4940 + $0x80] sm:$0xff]
    %v4958 = vld [vmem:[%s4940 + $0x88] sm:$0xff]
    %v4959 = vld [vmem:[%s4940 + $0x90] sm:$0xff]
    %v4960 = vld [vmem:[%s4940 + $0x98] sm:$0xff]
    %v4961 = vld [vmem:[%s4940 + $0xa0] sm:$0xff]
    %v4962 = vld [vmem:[%s4940 + $0xa8] sm:$0xff]
    %v4963 = vld [vmem:[%s4940 + $0xb0] sm:$0xff]
    %v4964 = vld [vmem:[%s4940 + $0xb8] sm:$0xff]
    %v4965 = vld [vmem:[%s4940 + $0xc0] sm:$0xff]
    %v4966 = vld [vmem:[%s4940 + $0xc8] sm:$0xff]
    %v4967 = vld [vmem:[%s4940 + $0xd0] sm:$0xff]
    %v4968 = vld [vmem:[%s4940 + $0xd8] sm:$0xff]
    %v4969 = vld [vmem:[%s4940 + $0xe0] sm:$0xff]
    %v4970 = vld [vmem:[%s4940 + $0xe8] sm:$0xff]
    %v4971 = vld [vmem:[%s4940 + $0xf0] sm:$0xff]
    %v4972 = vld [vmem:[%s4940 + $0xf8] sm:$0xff]
    %v4973 = vld [vmem:[%s4940 + $0x100] sm:$0xff]
    %v4974 = vld [vmem:[%s4940 + $0x108] sm:$0xff]
    %v4975 = vld [vmem:[%s4940 + $0x110] sm:$0xff]
    %v4976 = vld [vmem:[%s4940 + $0x118] sm:$0xff]
    %v4977 = vld [vmem:[%s4940 + $0x120] sm:$0xff]
    %v4978 = vld [vmem:[%s4940 + $0x128] sm:$0xff]
    %v4979 = vld [vmem:[%s4940 + $0x130] sm:$0xff]
    %v4980 = vld [vmem:[%s4940 + $0x138] sm:$0xff]
    %v4981 = vld [vmem:[%s4940 + $0x140] sm:$0xff]
    %v4982 = vld [vmem:[%s4940 + $0x148] sm:$0xff]
    %v4983 = vld [vmem:[%s4940 + $0x150] sm:$0xff]
    %v4984 = vld [vmem:[%s4940 + $0x158] sm:$0xff]
    %v4985 = vld [vmem:[%s4940 + $0x160] sm:$0xff]
    %v4986 = vld [vmem:[%s4940 + $0x168] sm:$0xff]
    %v4987 = vld [vmem:[%s4940 + $0x170] sm:$0xff]
    %v4988 = vld [vmem:[%s4940 + $0x178] sm:$0xff]
    %v4989 = vld [vmem:[%s4940 + $0x180] sm:$0xff]
    %v4990 = vld [vmem:[%s4940 + $0x188] sm:$0xff]
    %v4991 = vld [vmem:[%s4940 + $0x190] sm:$0xff]
    %v4992 = vld [vmem:[%s4940 + $0x198] sm:$0xff]
    %v4993 = vld [vmem:[%s4940 + $0x1a0] sm:$0xff]
    %v4994 = vld [vmem:[%s4940 + $0x1a8] sm:$0xff]
    %v4995 = vld [vmem:[%s4940 + $0x1b0] sm:$0xff]
    %v4996 = vld [vmem:[%s4940 + $0x1b8] sm:$0xff]
    %v4997 = vld [vmem:[%s4940 + $0x1c0] sm:$0xff]
    %v4998 = vld [vmem:[%s4940 + $0x1c8] sm:$0xff]
    %v4999 = vld [vmem:[%s4940 + $0x1d0] sm:$0xff]
    %v5000 = vld [vmem:[%s4940 + $0x1d8] sm:$0xff]
    %v5001 = vld [vmem:[%s4940 + $0x1e0] sm:$0xff]
    %v5002 = vld [vmem:[%s4940 + $0x1e8] sm:$0xff]
    %v5003 = vld [vmem:[%s4940 + $0x1f0] sm:$0xff]
    %v5004 = vld [vmem:[%s4940 + $0x1f8] sm:$0xff]
    %v5006 = vsel %vm4624, %v4939, 0
    %5008 = vmatpush.msra.mxu0 0.0
    %5009 = vmatpush.msra.mxu0 0.0
    %5010 = vmatpush.msra.mxu0 0.0
    %5011 = vmatpush.msra.mxu0 0.0
    %5012 = vmatpush.msra.mxu0 0.0
    %5013 = vmatpush.msra.mxu0 0.0
    %5014 = vmatpush.msra.mxu0 0.0
    %5015 = vmatpush.msra.mxu0 0.0
    %5016 = vmatpush.msra.mxu0 0.0
    %5017 = vmatpush.msra.mxu0 0.0
    %5018 = vmatpush.msra.mxu0 0.0
    %5019 = vmatpush.msra.mxu0 0.0
    %5020 = vmatpush.msra.mxu0 0.0
    %5021 = vmatpush.msra.mxu0 0.0
    %5022 = vmatpush.msra.mxu0 %v4557
    %5023 = vmatpush.msra.mxu0 %v4555
    %5024 = vmatmul.f32.gmra.mxu0 %v5006
    %v5025 = vpop.f32.mrf.mxu0
    %v5026 = vadd.f32 0.0, %v5025
    %5027 = vdwg.mxu0
    %5028 = vmatpush.msra.mxu0 0.0
    %5029 = vmatpush.msra.mxu0 0.0
    %5030 = vmatpush.msra.mxu0 0.0
    %5031 = vmatpush.msra.mxu0 0.0
    %5032 = vmatpush.msra.mxu0 0.0
    %5033 = vmatpush.msra.mxu0 0.0
    %5034 = vmatpush.msra.mxu0 0.0
    %5035 = vmatpush.msra.mxu0 0.0
    %5036 = vmatpush.msra.mxu0 0.0
    %5037 = vmatpush.msra.mxu0 0.0
    %5038 = vmatpush.msra.mxu0 0.0
    %5039 = vmatpush.msra.mxu0 0.0
    %5040 = vmatpush.msra.mxu0 0.0
    %5041 = vmatpush.msra.mxu0 0.0
    %5042 = vmatpush.msra.mxu0 %v4558
    %5043 = vmatpush.msra.mxu0 %v4556
    %5044 = vmatmul.f32.gmra.mxu0 %v5006
    %v5045 = vpop.f32.mrf.mxu0
    %v5046 = vadd.f32 0.0, %v5045
    %5047 = vdwg.mxu0
    %5048 = vmatpush.msra.mxu0 %v4971
    %5049 = vmatpush.msra.mxu0 %v4969
    %5050 = vmatpush.msra.mxu0 %v4967
    %5051 = vmatpush.msra.mxu0 %v4965
    %5052 = vmatpush.msra.mxu0 %v4963
    %5053 = vmatpush.msra.mxu0 %v4961
    %5054 = vmatpush.msra.mxu0 %v4959
    %5055 = vmatpush.msra.mxu0 %v4957
    %5056 = vmatpush.msra.mxu0 %v4955
    %5057 = vmatpush.msra.mxu0 %v4953
    %5058 = vmatpush.msra.mxu0 %v4951
    %5059 = vmatpush.msra.mxu0 %v4949
    %5060 = vmatpush.msra.mxu0 %v4947
    %5061 = vmatpush.msra.mxu0 %v4945
    %5062 = vmatpush.msra.mxu0 %v4943
    %5063 = vmatpush.msra.mxu0 %v4941
    %5064 = vmatmul.f32.gmra.mxu0 %v5026
    %v5065 = vpop.f32.mrf.mxu0
    %v5066 = vadd.f32 0.0, %v5065
    %5067 = vdwg.mxu0
    %5068 = vmatpush.msra.mxu0 %v5003
    %5069 = vmatpush.msra.mxu0 %v5001
    %5070 = vmatpush.msra.mxu0 %v4999
    %5071 = vmatpush.msra.mxu0 %v4997
    %5072 = vmatpush.msra.mxu0 %v4995
    %5073 = vmatpush.msra.mxu0 %v4993
    %5074 = vmatpush.msra.mxu0 %v4991
    %5075 = vmatpush.msra.mxu0 %v4989
    %5076 = vmatpush.msra.mxu0 %v4987
    %5077 = vmatpush.msra.mxu0 %v4985
    %5078 = vmatpush.msra.mxu0 %v4983
    %5079 = vmatpush.msra.mxu0 %v4981
    %5080 = vmatpush.msra.mxu0 %v4979
    %5081 = vmatpush.msra.mxu0 %v4977
    %5082 = vmatpush.msra.mxu0 %v4975
    %5083 = vmatpush.msra.mxu0 %v4973
    %5084 = vmatmul.f32.gmra.mxu0 %v5046
    %v5085 = vpop.f32.mrf.mxu0
    %v5086 = vadd.f32 %v5066, %v5085
    %5087 = vdwg.mxu0
    %5088 = vmatpush.msra.mxu0 %v4972
    %5089 = vmatpush.msra.mxu0 %v4970
    %5090 = vmatpush.msra.mxu0 %v4968
    %5091 = vmatpush.msra.mxu0 %v4966
    %5092 = vmatpush.msra.mxu0 %v4964
    %5093 = vmatpush.msra.mxu0 %v4962
    %5094 = vmatpush.msra.mxu0 %v4960
    %5095 = vmatpush.msra.mxu0 %v4958
    %5096 = vmatpush.msra.mxu0 %v4956
    %5097 = vmatpush.msra.mxu0 %v4954
    %5098 = vmatpush.msra.mxu0 %v4952
    %5099 = vmatpush.msra.mxu0 %v4950
    %5100 = vmatpush.msra.mxu0 %v4948
    %5101 = vmatpush.msra.mxu0 %v4946
    %5102 = vmatpush.msra.mxu0 %v4944
    %5103 = vmatpush.msra.mxu0 %v4942
    %5104 = vmatmul.f32.gmra.mxu0 %v5026
    %v5105 = vpop.f32.mrf.mxu0
    %v5106 = vadd.f32 0.0, %v5105
    %5107 = vdwg.mxu0
    %5108 = vmatpush.msra.mxu0 %v5004
    %5109 = vmatpush.msra.mxu0 %v5002
    %5110 = vmatpush.msra.mxu0 %v5000
    %5111 = vmatpush.msra.mxu0 %v4998
    %5112 = vmatpush.msra.mxu0 %v4996
    %5113 = vmatpush.msra.mxu0 %v4994
    %5114 = vmatpush.msra.mxu0 %v4992
    %5115 = vmatpush.msra.mxu0 %v4990
    %5116 = vmatpush.msra.mxu0 %v4988
    %5117 = vmatpush.msra.mxu0 %v4986
    %5118 = vmatpush.msra.mxu0 %v4984
    %5119 = vmatpush.msra.mxu0 %v4982
    %5120 = vmatpush.msra.mxu0 %v4980
    %5121 = vmatpush.msra.mxu0 %v4978
    %5122 = vmatpush.msra.mxu0 %v4976
    %5123 = vmatpush.msra.mxu0 %v4974
    %5124 = vmatmul.f32.gmra.mxu0 %v5046
    %v5125 = vpop.f32.mrf.mxu0
    %v5126 = vadd.f32 %v5106, %v5125
    %5127 = vdwg.mxu0
    %v5128 = vadd.f32 %v4896, %v5086
    %v5129 = vadd.f32 %v4936, %v5126
    %s5130 = scalar_lea.vmem [#allocation12], 24
    %v5131 = vld [vmem:[%s5130] sm:$0xff]
    %s5132 = scalar_lea.vmem [#allocation13], 1536
    %v5133 = vld [vmem:[%s5132] sm:$0xff]
    %v5134 = vld [vmem:[%s5132 + $0x8] sm:$0xff]
    %v5135 = vld [vmem:[%s5132 + $0x10] sm:$0xff]
    %v5136 = vld [vmem:[%s5132 + $0x18] sm:$0xff]
    %v5137 = vld [vmem:[%s5132 + $0x20] sm:$0xff]
    %v5138 = vld [vmem:[%s5132 + $0x28] sm:$0xff]
    %v5139 = vld [vmem:[%s5132 + $0x30] sm:$0xff]
    %v5140 = vld [vmem:[%s5132 + $0x38] sm:$0xff]
    %v5141 = vld [vmem:[%s5132 + $0x40] sm:$0xff]
    %v5142 = vld [vmem:[%s5132 + $0x48] sm:$0xff]
    %v5143 = vld [vmem:[%s5132 + $0x50] sm:$0xff]
    %v5144 = vld [vmem:[%s5132 + $0x58] sm:$0xff]
    %v5145 = vld [vmem:[%s5132 + $0x60] sm:$0xff]
    %v5146 = vld [vmem:[%s5132 + $0x68] sm:$0xff]
    %v5147 = vld [vmem:[%s5132 + $0x70] sm:$0xff]
    %v5148 = vld [vmem:[%s5132 + $0x78] sm:$0xff]
    %v5149 = vld [vmem:[%s5132 + $0x80] sm:$0xff]
    %v5150 = vld [vmem:[%s5132 + $0x88] sm:$0xff]
    %v5151 = vld [vmem:[%s5132 + $0x90] sm:$0xff]
    %v5152 = vld [vmem:[%s5132 + $0x98] sm:$0xff]
    %v5153 = vld [vmem:[%s5132 + $0xa0] sm:$0xff]
    %v5154 = vld [vmem:[%s5132 + $0xa8] sm:$0xff]
    %v5155 = vld [vmem:[%s5132 + $0xb0] sm:$0xff]
    %v5156 = vld [vmem:[%s5132 + $0xb8] sm:$0xff]
    %v5157 = vld [vmem:[%s5132 + $0xc0] sm:$0xff]
    %v5158 = vld [vmem:[%s5132 + $0xc8] sm:$0xff]
    %v5159 = vld [vmem:[%s5132 + $0xd0] sm:$0xff]
    %v5160 = vld [vmem:[%s5132 + $0xd8] sm:$0xff]
    %v5161 = vld [vmem:[%s5132 + $0xe0] sm:$0xff]
    %v5162 = vld [vmem:[%s5132 + $0xe8] sm:$0xff]
    %v5163 = vld [vmem:[%s5132 + $0xf0] sm:$0xff]
    %v5164 = vld [vmem:[%s5132 + $0xf8] sm:$0xff]
    %v5165 = vld [vmem:[%s5132 + $0x100] sm:$0xff]
    %v5166 = vld [vmem:[%s5132 + $0x108] sm:$0xff]
    %v5167 = vld [vmem:[%s5132 + $0x110] sm:$0xff]
    %v5168 = vld [vmem:[%s5132 + $0x118] sm:$0xff]
    %v5169 = vld [vmem:[%s5132 + $0x120] sm:$0xff]
    %v5170 = vld [vmem:[%s5132 + $0x128] sm:$0xff]
    %v5171 = vld [vmem:[%s5132 + $0x130] sm:$0xff]
    %v5172 = vld [vmem:[%s5132 + $0x138] sm:$0xff]
    %v5173 = vld [vmem:[%s5132 + $0x140] sm:$0xff]
    %v5174 = vld [vmem:[%s5132 + $0x148] sm:$0xff]
    %v5175 = vld [vmem:[%s5132 + $0x150] sm:$0xff]
    %v5176 = vld [vmem:[%s5132 + $0x158] sm:$0xff]
    %v5177 = vld [vmem:[%s5132 + $0x160] sm:$0xff]
    %v5178 = vld [vmem:[%s5132 + $0x168] sm:$0xff]
    %v5179 = vld [vmem:[%s5132 + $0x170] sm:$0xff]
    %v5180 = vld [vmem:[%s5132 + $0x178] sm:$0xff]
    %v5181 = vld [vmem:[%s5132 + $0x180] sm:$0xff]
    %v5182 = vld [vmem:[%s5132 + $0x188] sm:$0xff]
    %v5183 = vld [vmem:[%s5132 + $0x190] sm:$0xff]
    %v5184 = vld [vmem:[%s5132 + $0x198] sm:$0xff]
    %v5185 = vld [vmem:[%s5132 + $0x1a0] sm:$0xff]
    %v5186 = vld [vmem:[%s5132 + $0x1a8] sm:$0xff]
    %v5187 = vld [vmem:[%s5132 + $0x1b0] sm:$0xff]
    %v5188 = vld [vmem:[%s5132 + $0x1b8] sm:$0xff]
    %v5189 = vld [vmem:[%s5132 + $0x1c0] sm:$0xff]
    %v5190 = vld [vmem:[%s5132 + $0x1c8] sm:$0xff]
    %v5191 = vld [vmem:[%s5132 + $0x1d0] sm:$0xff]
    %v5192 = vld [vmem:[%s5132 + $0x1d8] sm:$0xff]
    %v5193 = vld [vmem:[%s5132 + $0x1e0] sm:$0xff]
    %v5194 = vld [vmem:[%s5132 + $0x1e8] sm:$0xff]
    %v5195 = vld [vmem:[%s5132 + $0x1f0] sm:$0xff]
    %v5196 = vld [vmem:[%s5132 + $0x1f8] sm:$0xff]
    %v5198 = vsel %vm4624, %v5131, 0
    %5200 = vmatpush.msra.mxu0 0.0
    %5201 = vmatpush.msra.mxu0 0.0
    %5202 = vmatpush.msra.mxu0 0.0
    %5203 = vmatpush.msra.mxu0 0.0
    %5204 = vmatpush.msra.mxu0 0.0
    %5205 = vmatpush.msra.mxu0 0.0
    %5206 = vmatpush.msra.mxu0 0.0
    %5207 = vmatpush.msra.mxu0 0.0
    %5208 = vmatpush.msra.mxu0 0.0
    %5209 = vmatpush.msra.mxu0 0.0
    %5210 = vmatpush.msra.mxu0 0.0
    %5211 = vmatpush.msra.mxu0 0.0
    %5212 = vmatpush.msra.mxu0 0.0
    %5213 = vmatpush.msra.mxu0 0.0
    %5214 = vmatpush.msra.mxu0 %v4557
    %5215 = vmatpush.msra.mxu0 %v4555
    %5216 = vmatmul.f32.gmra.mxu0 %v5198
    %v5217 = vpop.f32.mrf.mxu0
    %v5218 = vadd.f32 0.0, %v5217
    %5219 = vdwg.mxu0
    %5220 = vmatpush.msra.mxu0 0.0
    %5221 = vmatpush.msra.mxu0 0.0
    %5222 = vmatpush.msra.mxu0 0.0
    %5223 = vmatpush.msra.mxu0 0.0
    %5224 = vmatpush.msra.mxu0 0.0
    %5225 = vmatpush.msra.mxu0 0.0
    %5226 = vmatpush.msra.mxu0 0.0
    %5227 = vmatpush.msra.mxu0 0.0
    %5228 = vmatpush.msra.mxu0 0.0
    %5229 = vmatpush.msra.mxu0 0.0
    %5230 = vmatpush.msra.mxu0 0.0
    %5231 = vmatpush.msra.mxu0 0.0
    %5232 = vmatpush.msra.mxu0 0.0
    %5233 = vmatpush.msra.mxu0 0.0
    %5234 = vmatpush.msra.mxu0 %v4558
    %5235 = vmatpush.msra.mxu0 %v4556
    %5236 = vmatmul.f32.gmra.mxu0 %v5198
    %v5237 = vpop.f32.mrf.mxu0
    %v5238 = vadd.f32 0.0, %v5237
    %5239 = vdwg.mxu0
    %5240 = vmatpush.msra.mxu0 %v5163
    %5241 = vmatpush.msra.mxu0 %v5161
    %5242 = vmatpush.msra.mxu0 %v5159
    %5243 = vmatpush.msra.mxu0 %v5157
    %5244 = vmatpush.msra.mxu0 %v5155
    %5245 = vmatpush.msra.mxu0 %v5153
    %5246 = vmatpush.msra.mxu0 %v5151
    %5247 = vmatpush.msra.mxu0 %v5149
    %5248 = vmatpush.msra.mxu0 %v5147
    %5249 = vmatpush.msra.mxu0 %v5145
    %5250 = vmatpush.msra.mxu0 %v5143
    %5251 = vmatpush.msra.mxu0 %v5141
    %5252 = vmatpush.msra.mxu0 %v5139
    %5253 = vmatpush.msra.mxu0 %v5137
    %5254 = vmatpush.msra.mxu0 %v5135
    %5255 = vmatpush.msra.mxu0 %v5133
    %5256 = vmatmul.f32.gmra.mxu0 %v5218
    %v5257 = vpop.f32.mrf.mxu0
    %v5258 = vadd.f32 0.0, %v5257
    %5259 = vdwg.mxu0
    %5260 = vmatpush.msra.mxu0 %v5195
    %5261 = vmatpush.msra.mxu0 %v5193
    %5262 = vmatpush.msra.mxu0 %v5191
    %5263 = vmatpush.msra.mxu0 %v5189
    %5264 = vmatpush.msra.mxu0 %v5187
    %5265 = vmatpush.msra.mxu0 %v5185
    %5266 = vmatpush.msra.mxu0 %v5183
    %5267 = vmatpush.msra.mxu0 %v5181
    %5268 = vmatpush.msra.mxu0 %v5179
    %5269 = vmatpush.msra.mxu0 %v5177
    %5270 = vmatpush.msra.mxu0 %v5175
    %5271 = vmatpush.msra.mxu0 %v5173
    %5272 = vmatpush.msra.mxu0 %v5171
    %5273 = vmatpush.msra.mxu0 %v5169
    %5274 = vmatpush.msra.mxu0 %v5167
    %5275 = vmatpush.msra.mxu0 %v5165
    %5276 = vmatmul.f32.gmra.mxu0 %v5238
    %v5277 = vpop.f32.mrf.mxu0
    %v5278 = vadd.f32 %v5258, %v5277
    %5279 = vdwg.mxu0
    %5280 = vmatpush.msra.mxu0 %v5164
    %5281 = vmatpush.msra.mxu0 %v5162
    %5282 = vmatpush.msra.mxu0 %v5160
    %5283 = vmatpush.msra.mxu0 %v5158
    %5284 = vmatpush.msra.mxu0 %v5156
    %5285 = vmatpush.msra.mxu0 %v5154
    %5286 = vmatpush.msra.mxu0 %v5152
    %5287 = vmatpush.msra.mxu0 %v5150
    %5288 = vmatpush.msra.mxu0 %v5148
    %5289 = vmatpush.msra.mxu0 %v5146
    %5290 = vmatpush.msra.mxu0 %v5144
    %5291 = vmatpush.msra.mxu0 %v5142
    %5292 = vmatpush.msra.mxu0 %v5140
    %5293 = vmatpush.msra.mxu0 %v5138
    %5294 = vmatpush.msra.mxu0 %v5136
    %5295 = vmatpush.msra.mxu0 %v5134
    %5296 = vmatmul.f32.gmra.mxu0 %v5218
    %v5297 = vpop.f32.mrf.mxu0
    %v5298 = vadd.f32 0.0, %v5297
    %5299 = vdwg.mxu0
    %5300 = vmatpush.msra.mxu0 %v5196
    %5301 = vmatpush.msra.mxu0 %v5194
    %5302 = vmatpush.msra.mxu0 %v5192
    %5303 = vmatpush.msra.mxu0 %v5190
    %5304 = vmatpush.msra.mxu0 %v5188
    %5305 = vmatpush.msra.mxu0 %v5186
    %5306 = vmatpush.msra.mxu0 %v5184
    %5307 = vmatpush.msra.mxu0 %v5182
    %5308 = vmatpush.msra.mxu0 %v5180
    %5309 = vmatpush.msra.mxu0 %v5178
    %5310 = vmatpush.msra.mxu0 %v5176
    %5311 = vmatpush.msra.mxu0 %v5174
    %5312 = vmatpush.msra.mxu0 %v5172
    %5313 = vmatpush.msra.mxu0 %v5170
    %5314 = vmatpush.msra.mxu0 %v5168
    %5315 = vmatpush.msra.mxu0 %v5166
    %5316 = vmatmul.f32.gmra.mxu0 %v5238
    %v5317 = vpop.f32.mrf.mxu0
    %v5318 = vadd.f32 %v5298, %v5317
    %5319 = vdwg.mxu0
    %v5320 = vadd.f32 %v5128, %v5278
    %v5321 = vadd.f32 %v5129, %v5318
    %v5322 = vand.u32 %v2654, 63
    %v5323 = vand.u32 %v2655, 63
    %v5324 = vand.u32 %v2656, 63
    %v5325 = vand.u32 %v2657, 63
    %v5326 = vand.u32 %v2658, 63
    %v5327 = vand.u32 %v2659, 63
    %v5328 = vand.u32 %v2660, 63
    %v5329 = vand.u32 %v2661, 63
    %v5330 = vand.u32 %v2662, 63
    %v5331 = vand.u32 %v2663, 63
    %v5332 = vand.u32 %v2664, 63
    %v5333 = vand.u32 %v2665, 63
    %v5334 = vand.u32 %v2666, 63
    %v5335 = vand.u32 %v2667, 63
    %v5336 = vand.u32 %v2668, 63
    %v5337 = vand.u32 %v2669, 63
    %v5338 = vand.u32 %v2670, 63
    %v5339 = vand.u32 %v2671, 63
    %v5340 = vand.u32 %v2672, 63
    %v5341 = vand.u32 %v2673, 63
    %v5342 = vand.u32 %v2674, 63
    %v5343 = vand.u32 %v2675, 63
    %v5344 = vand.u32 %v2676, 63
    %v5345 = vand.u32 %v2677, 63
    %v5346 = vand.u32 %v2678, 63
    %v5347 = vand.u32 %v2679, 63
    %v5348 = vand.u32 %v2680, 63
    %v5349 = vand.u32 %v2681, 63
    %v5350 = vand.u32 %v2682, 63
    %v5351 = vand.u32 %v2683, 63
    %v5352 = vand.u32 %v2684, 63
    %v5353 = vand.u32 %v2685, 63
    %v5354 = vand.u32 %v2687, 63
    %v5355 = vand.u32 %v2688, 63
    %vm5356 = vcmp.eq.s32.totalorder %v5322, %v5354
    %vm5357 = vcmp.eq.s32.totalorder %v5322, %v5355
    %vm5358 = vcmp.eq.s32.totalorder %v5323, %v5354
    %vm5359 = vcmp.eq.s32.totalorder %v5323, %v5355
    %vm5360 = vcmp.eq.s32.totalorder %v5324, %v5354
    %vm5361 = vcmp.eq.s32.totalorder %v5324, %v5355
    %vm5362 = vcmp.eq.s32.totalorder %v5325, %v5354
    %vm5363 = vcmp.eq.s32.totalorder %v5325, %v5355
    %vm5364 = vcmp.eq.s32.totalorder %v5326, %v5354
    %vm5365 = vcmp.eq.s32.totalorder %v5326, %v5355
    %vm5366 = vcmp.eq.s32.totalorder %v5327, %v5354
    %vm5367 = vcmp.eq.s32.totalorder %v5327, %v5355
    %vm5368 = vcmp.eq.s32.totalorder %v5328, %v5354
    %vm5369 = vcmp.eq.s32.totalorder %v5328, %v5355
    %vm5370 = vcmp.eq.s32.totalorder %v5329, %v5354
    %vm5371 = vcmp.eq.s32.totalorder %v5329, %v5355
    %vm5372 = vcmp.eq.s32.totalorder %v5330, %v5354
    %vm5373 = vcmp.eq.s32.totalorder %v5330, %v5355
    %vm5374 = vcmp.eq.s32.totalorder %v5331, %v5354
    %vm5375 = vcmp.eq.s32.totalorder %v5331, %v5355
    %vm5376 = vcmp.eq.s32.totalorder %v5332, %v5354
    %vm5377 = vcmp.eq.s32.totalorder %v5332, %v5355
    %vm5378 = vcmp.eq.s32.totalorder %v5333, %v5354
    %vm5379 = vcmp.eq.s32.totalorder %v5333, %v5355
    %vm5380 = vcmp.eq.s32.totalorder %v5334, %v5354
    %vm5381 = vcmp.eq.s32.totalorder %v5334, %v5355
    %vm5382 = vcmp.eq.s32.totalorder %v5335, %v5354
    %vm5383 = vcmp.eq.s32.totalorder %v5335, %v5355
    %vm5384 = vcmp.eq.s32.totalorder %v5336, %v5354
    %vm5385 = vcmp.eq.s32.totalorder %v5336, %v5355
    %vm5386 = vcmp.eq.s32.totalorder %v5337, %v5354
    %vm5387 = vcmp.eq.s32.totalorder %v5337, %v5355
    %vm5388 = vcmp.eq.s32.totalorder %v5338, %v5354
    %vm5389 = vcmp.eq.s32.totalorder %v5338, %v5355
    %vm5390 = vcmp.eq.s32.totalorder %v5339, %v5354
    %vm5391 = vcmp.eq.s32.totalorder %v5339, %v5355
    %vm5392 = vcmp.eq.s32.totalorder %v5340, %v5354
    %vm5393 = vcmp.eq.s32.totalorder %v5340, %v5355
    %vm5394 = vcmp.eq.s32.totalorder %v5341, %v5354
    %vm5395 = vcmp.eq.s32.totalorder %v5341, %v5355
    %vm5396 = vcmp.eq.s32.totalorder %v5342, %v5354
    %vm5397 = vcmp.eq.s32.totalorder %v5342, %v5355
    %vm5398 = vcmp.eq.s32.totalorder %v5343, %v5354
    %vm5399 = vcmp.eq.s32.totalorder %v5343, %v5355
    %vm5400 = vcmp.eq.s32.totalorder %v5344, %v5354
    %vm5401 = vcmp.eq.s32.totalorder %v5344, %v5355
    %vm5402 = vcmp.eq.s32.totalorder %v5345, %v5354
    %vm5403 = vcmp.eq.s32.totalorder %v5345, %v5355
    %vm5404 = vcmp.eq.s32.totalorder %v5346, %v5354
    %vm5405 = vcmp.eq.s32.totalorder %v5346, %v5355
    %vm5406 = vcmp.eq.s32.totalorder %v5347, %v5354
    %vm5407 = vcmp.eq.s32.totalorder %v5347, %v5355
    %vm5408 = vcmp.eq.s32.totalorder %v5348, %v5354
    %vm5409 = vcmp.eq.s32.totalorder %v5348, %v5355
    %vm5410 = vcmp.eq.s32.totalorder %v5349, %v5354
    %vm5411 = vcmp.eq.s32.totalorder %v5349, %v5355
    %vm5412 = vcmp.eq.s32.totalorder %v5350, %v5354
    %vm5413 = vcmp.eq.s32.totalorder %v5350, %v5355
    %vm5414 = vcmp.eq.s32.totalorder %v5351, %v5354
    %vm5415 = vcmp.eq.s32.totalorder %v5351, %v5355
    %vm5416 = vcmp.eq.s32.totalorder %v5352, %v5354
    %vm5417 = vcmp.eq.s32.totalorder %v5352, %v5355
    %vm5418 = vcmp.eq.s32.totalorder %v5353, %v5354
    %vm5419 = vcmp.eq.s32.totalorder %v5353, %v5355
    %v5420 = vsel %vm5356, 1, 0
    %v5421 = vsel %vm5357, 1, 0
    %v5422 = vsel %vm5358, 1, 0
    %v5423 = vsel %vm5359, 1, 0
    %v5424 = vsel %vm5360, 1, 0
    %v5425 = vsel %vm5361, 1, 0
    %v5426 = vsel %vm5362, 1, 0
    %v5427 = vsel %vm5363, 1, 0
    %v5428 = vsel %vm5364, 1, 0
    %v5429 = vsel %vm5365, 1, 0
    %v5430 = vsel %vm5366, 1, 0
    %v5431 = vsel %vm5367, 1, 0
    %v5432 = vsel %vm5368, 1, 0
    %v5433 = vsel %vm5369, 1, 0
    %v5434 = vsel %vm5370, 1, 0
    %v5435 = vsel %vm5371, 1, 0
    %v5436 = vsel %vm5372, 1, 0
    %v5437 = vsel %vm5373, 1, 0
    %v5438 = vsel %vm5374, 1, 0
    %v5439 = vsel %vm5375, 1, 0
    %v5440 = vsel %vm5376, 1, 0
    %v5441 = vsel %vm5377, 1, 0
    %v5442 = vsel %vm5378, 1, 0
    %v5443 = vsel %vm5379, 1, 0
    %v5444 = vsel %vm5380, 1, 0
    %v5445 = vsel %vm5381, 1, 0
    %v5446 = vsel %vm5382, 1, 0
    %v5447 = vsel %vm5383, 1, 0
    %v5448 = vsel %vm5384, 1, 0
    %v5449 = vsel %vm5385, 1, 0
    %v5450 = vsel %vm5386, 1, 0
    %v5451 = vsel %vm5387, 1, 0
    %v5452 = vsel %vm5388, 1, 0
    %v5453 = vsel %vm5389, 1, 0
    %v5454 = vsel %vm5390, 1, 0
    %v5455 = vsel %vm5391, 1, 0
    %v5456 = vsel %vm5392, 1, 0
    %v5457 = vsel %vm5393, 1, 0
    %v5458 = vsel %vm5394, 1, 0
    %v5459 = vsel %vm5395, 1, 0
    %v5460 = vsel %vm5396, 1, 0
    %v5461 = vsel %vm5397, 1, 0
    %v5462 = vsel %vm5398, 1, 0
    %v5463 = vsel %vm5399, 1, 0
    %v5464 = vsel %vm5400, 1, 0
    %v5465 = vsel %vm5401, 1, 0
    %v5466 = vsel %vm5402, 1, 0
    %v5467 = vsel %vm5403, 1, 0
    %v5468 = vsel %vm5404, 1, 0
    %v5469 = vsel %vm5405, 1, 0
    %v5470 = vsel %vm5406, 1, 0
    %v5471 = vsel %vm5407, 1, 0
    %v5472 = vsel %vm5408, 1, 0
    %v5473 = vsel %vm5409, 1, 0
    %v5474 = vsel %vm5410, 1, 0
    %v5475 = vsel %vm5411, 1, 0
    %v5476 = vsel %vm5412, 1, 0
    %v5477 = vsel %vm5413, 1, 0
    %v5478 = vsel %vm5414, 1, 0
    %v5479 = vsel %vm5415, 1, 0
    %v5480 = vsel %vm5416, 1, 0
    %v5481 = vsel %vm5417, 1, 0
    %v5482 = vsel %vm5418, 1, 0
    %v5483 = vsel %vm5419, 1, 0
    %v5484 = vcvt.s32.f32 %v5420
    %v5485 = vcvt.s32.f32 %v5421
    %v5486 = vcvt.s32.f32 %v5422
    %v5487 = vcvt.s32.f32 %v5423
    %v5488 = vcvt.s32.f32 %v5424
    %v5489 = vcvt.s32.f32 %v5425
    %v5490 = vcvt.s32.f32 %v5426
    %v5491 = vcvt.s32.f32 %v5427
    %v5492 = vcvt.s32.f32 %v5428
    %v5493 = vcvt.s32.f32 %v5429
    %v5494 = vcvt.s32.f32 %v5430
    %v5495 = vcvt.s32.f32 %v5431
    %v5496 = vcvt.s32.f32 %v5432
    %v5497 = vcvt.s32.f32 %v5433
    %v5498 = vcvt.s32.f32 %v5434
    %v5499 = vcvt.s32.f32 %v5435
    %v5500 = vcvt.s32.f32 %v5436
    %v5501 = vcvt.s32.f32 %v5437
    %v5502 = vcvt.s32.f32 %v5438
    %v5503 = vcvt.s32.f32 %v5439
    %v5504 = vcvt.s32.f32 %v5440
    %v5505 = vcvt.s32.f32 %v5441
    %v5506 = vcvt.s32.f32 %v5442
    %v5507 = vcvt.s32.f32 %v5443
    %v5508 = vcvt.s32.f32 %v5444
    %v5509 = vcvt.s32.f32 %v5445
    %v5510 = vcvt.s32.f32 %v5446
    %v5511 = vcvt.s32.f32 %v5447
    %v5512 = vcvt.s32.f32 %v5448
    %v5513 = vcvt.s32.f32 %v5449
    %v5514 = vcvt.s32.f32 %v5450
    %v5515 = vcvt.s32.f32 %v5451
    %v5516 = vcvt.s32.f32 %v5452
    %v5517 = vcvt.s32.f32 %v5453
    %v5518 = vcvt.s32.f32 %v5454
    %v5519 = vcvt.s32.f32 %v5455
    %v5520 = vcvt.s32.f32 %v5456
    %v5521 = vcvt.s32.f32 %v5457
    %v5522 = vcvt.s32.f32 %v5458
    %v5523 = vcvt.s32.f32 %v5459
    %v5524 = vcvt.s32.f32 %v5460
    %v5525 = vcvt.s32.f32 %v5461
    %v5526 = vcvt.s32.f32 %v5462
    %v5527 = vcvt.s32.f32 %v5463
    %v5528 = vcvt.s32.f32 %v5464
    %v5529 = vcvt.s32.f32 %v5465
    %v5530 = vcvt.s32.f32 %v5466
    %v5531 = vcvt.s32.f32 %v5467
    %v5532 = vcvt.s32.f32 %v5468
    %v5533 = vcvt.s32.f32 %v5469
    %v5534 = vcvt.s32.f32 %v5470
    %v5535 = vcvt.s32.f32 %v5471
    %v5536 = vcvt.s32.f32 %v5472
    %v5537 = vcvt.s32.f32 %v5473
    %v5538 = vcvt.s32.f32 %v5474
    %v5539 = vcvt.s32.f32 %v5475
    %v5540 = vcvt.s32.f32 %v5476
    %v5541 = vcvt.s32.f32 %v5477
    %v5542 = vcvt.s32.f32 %v5478
    %v5543 = vcvt.s32.f32 %v5479
    %v5544 = vcvt.s32.f32 %v5480
    %v5545 = vcvt.s32.f32 %v5481
    %v5546 = vcvt.s32.f32 %v5482
    %v5547 = vcvt.s32.f32 %v5483
    %v5548 = vrot.slane %v5320, 4
    %v5549 = vadd.f32 %v5320, %v5548
    %v5550 = vrot.slane %v5549, 2
    %v5551 = vadd.f32 %v5549, %v5550
    %v5552 = vrot.slane %v5551, 1
    %v5553 = vadd.f32 %v5551, %v5552
    %v5554 = vrot.slane %v5321, 4
    %v5555 = vadd.f32 %v5321, %v5554
    %v5556 = vrot.slane %v5555, 2
    %v5557 = vadd.f32 %v5555, %v5556
    %v5558 = vrot.slane %v5557, 1
    %v5559 = vadd.f32 %v5557, %v5558
    %5560 = vmatpush.msra.mxu0 %v5514
    %5561 = vmatpush.msra.mxu0 %v5512
    %5562 = vmatpush.msra.mxu0 %v5510
    %5563 = vmatpush.msra.mxu0 %v5508
    %5564 = vmatpush.msra.mxu0 %v5506
    %5565 = vmatpush.msra.mxu0 %v5504
    %5566 = vmatpush.msra.mxu0 %v5502
    %5567 = vmatpush.msra.mxu0 %v5500
    %5568 = vmatpush.msra.mxu0 %v5498
    %5569 = vmatpush.msra.mxu0 %v5496
    %5570 = vmatpush.msra.mxu0 %v5494
    %5571 = vmatpush.msra.mxu0 %v5492
    %5572 = vmatpush.msra.mxu0 %v5490
    %5573 = vmatpush.msra.mxu0 %v5488
    %5574 = vmatpush.msra.mxu0 %v5486
    %5575 = vmatpush.msra.mxu0 %v5484
    %5576 = vmatmul.f32.gmra.mxu0 %v5553
    %v5577 = vpop.f32.mrf.mxu0
    %v5578 = vadd.f32 0.0, %v5577
    %5579 = vdwg.mxu0
    %5580 = vmatpush.msra.mxu0 %v5546
    %5581 = vmatpush.msra.mxu0 %v5544
    %5582 = vmatpush.msra.mxu0 %v5542
    %5583 = vmatpush.msra.mxu0 %v5540
    %5584 = vmatpush.msra.mxu0 %v5538
    %5585 = vmatpush.msra.mxu0 %v5536
    %5586 = vmatpush.msra.mxu0 %v5534
    %5587 = vmatpush.msra.mxu0 %v5532
    %5588 = vmatpush.msra.mxu0 %v5530
    %5589 = vmatpush.msra.mxu0 %v5528
    %5590 = vmatpush.msra.mxu0 %v5526
    %5591 = vmatpush.msra.mxu0 %v5524
    %5592 = vmatpush.msra.mxu0 %v5522
    %5593 = vmatpush.msra.mxu0 %v5520
    %5594 = vmatpush.msra.mxu0 %v5518
    %5595 = vmatpush.msra.mxu0 %v5516
    %5596 = vmatmul.f32.gmra.mxu0 %v5559
    %v5597 = vpop.f32.mrf.mxu0
    %v5598 = vadd.f32 %v5578, %v5597
    %5599 = vdwg.mxu0
    %5600 = vmatpush.msra.mxu0 %v5515
    %5601 = vmatpush.msra.mxu0 %v5513
    %5602 = vmatpush.msra.mxu0 %v5511
    %5603 = vmatpush.msra.mxu0 %v5509
    %5604 = vmatpush.msra.mxu0 %v5507
    %5605 = vmatpush.msra.mxu0 %v5505
    %5606 = vmatpush.msra.mxu0 %v5503
    %5607 = vmatpush.msra.mxu0 %v5501
    %5608 = vmatpush.msra.mxu0 %v5499
    %5609 = vmatpush.msra.mxu0 %v5497
    %5610 = vmatpush.msra.mxu0 %v5495
    %5611 = vmatpush.msra.mxu0 %v5493
    %5612 = vmatpush.msra.mxu0 %v5491
    %5613 = vmatpush.msra.mxu0 %v5489
    %5614 = vmatpush.msra.mxu0 %v5487
    %5615 = vmatpush.msra.mxu0 %v5485
    %5616 = vmatmul.f32.gmra.mxu0 %v5553
    %v5617 = vpop.f32.mrf.mxu0
    %v5618 = vadd.f32 0.0, %v5617
    %5619 = vdwg.mxu0
    %5620 = vmatpush.msra.mxu0 %v5547
    %5621 = vmatpush.msra.mxu0 %v5545
    %5622 = vmatpush.msra.mxu0 %v5543
    %5623 = vmatpush.msra.mxu0 %v5541
    %5624 = vmatpush.msra.mxu0 %v5539
    %5625 = vmatpush.msra.mxu0 %v5537
    %5626 = vmatpush.msra.mxu0 %v5535
    %5627 = vmatpush.msra.mxu0 %v5533
    %5628 = vmatpush.msra.mxu0 %v5531
    %5629 = vmatpush.msra.mxu0 %v5529
    %5630 = vmatpush.msra.mxu0 %v5527
    %5631 = vmatpush.msra.mxu0 %v5525
    %5632 = vmatpush.msra.mxu0 %v5523
    %5633 = vmatpush.msra.mxu0 %v5521
    %5634 = vmatpush.msra.mxu0 %v5519
    %5635 = vmatpush.msra.mxu0 %v5517
    %5636 = vmatmul.f32.gmra.mxu0 %v5559
    %v5637 = vpop.f32.mrf.mxu0
    %v5638 = vadd.f32 %v5618, %v5637
    %5639 = vdwg.mxu0
    %v5640 = vmul.f32 %v5598, 0.03125
    %v5641 = vmul.f32 %v5638, 0.03125
    %v5642 = vperm.slane %v5640, 0
    %v5643 = vperm.slane %v5641, 0
    %v5644 = vsub.f32 %v5320, %v5642
    %v5645 = vsub.f32 %v5321, %v5643
    %v5646 = vmul.f32 %v5644, %v5644
    %v5647 = vmul.f32 %v5645, %v5645
    %v5648 = vrot.slane %v5646, 4
    %v5649 = vadd.f32 %v5646, %v5648
    %v5650 = vrot.slane %v5649, 2
    %v5651 = vadd.f32 %v5649, %v5650
    %v5652 = vrot.slane %v5651, 1
    %v5653 = vadd.f32 %v5651, %v5652
    %v5654 = vrot.slane %v5647, 4
    %v5655 = vadd.f32 %v5647, %v5654
    %v5656 = vrot.slane %v5655, 2
    %v5657 = vadd.f32 %v5655, %v5656
    %v5658 = vrot.slane %v5657, 1
    %v5659 = vadd.f32 %v5657, %v5658
    %5660 = vmatpush.msra.mxu0 %v5514
    %5661 = vmatpush.msra.mxu0 %v5512
    %5662 = vmatpush.msra.mxu0 %v5510
    %5663 = vmatpush.msra.mxu0 %v5508
    %5664 = vmatpush.msra.mxu0 %v5506
    %5665 = vmatpush.msra.mxu0 %v5504
    %5666 = vmatpush.msra.mxu0 %v5502
    %5667 = vmatpush.msra.mxu0 %v5500
    %5668 = vmatpush.msra.mxu0 %v5498
    %5669 = vmatpush.msra.mxu0 %v5496
    %5670 = vmatpush.msra.mxu0 %v5494
    %5671 = vmatpush.msra.mxu0 %v5492
    %5672 = vmatpush.msra.mxu0 %v5490
    %5673 = vmatpush.msra.mxu0 %v5488
    %5674 = vmatpush.msra.mxu0 %v5486
    %5675 = vmatpush.msra.mxu0 %v5484
    %5676 = vmatmul.f32.gmra.mxu0 %v5653
    %v5677 = vpop.f32.mrf.mxu0
    %v5678 = vadd.f32 0.0, %v5677
    %5679 = vdwg.mxu0
    %5680 = vmatpush.msra.mxu0 %v5546
    %5681 = vmatpush.msra.mxu0 %v5544
    %5682 = vmatpush.msra.mxu0 %v5542
    %5683 = vmatpush.msra.mxu0 %v5540
    %5684 = vmatpush.msra.mxu0 %v5538
    %5685 = vmatpush.msra.mxu0 %v5536
    %5686 = vmatpush.msra.mxu0 %v5534
    %5687 = vmatpush.msra.mxu0 %v5532
    %5688 = vmatpush.msra.mxu0 %v5530
    %5689 = vmatpush.msra.mxu0 %v5528
    %5690 = vmatpush.msra.mxu0 %v5526
    %5691 = vmatpush.msra.mxu0 %v5524
    %5692 = vmatpush.msra.mxu0 %v5522
    %5693 = vmatpush.msra.mxu0 %v5520
    %5694 = vmatpush.msra.mxu0 %v5518
    %5695 = vmatpush.msra.mxu0 %v5516
    %5696 = vmatmul.f32.gmra.mxu0 %v5659
    %v5697 = vpop.f32.mrf.mxu0
    %v5698 = vadd.f32 %v5678, %v5697
    %5699 = vdwg.mxu0
    %5700 = vmatpush.msra.mxu0 %v5515
    %5701 = vmatpush.msra.mxu0 %v5513
    %5702 = vmatpush.msra.mxu0 %v5511
    %5703 = vmatpush.msra.mxu0 %v5509
    %5704 = vmatpush.msra.mxu0 %v5507
    %5705 = vmatpush.msra.mxu0 %v5505
    %5706 = vmatpush.msra.mxu0 %v5503
    %5707 = vmatpush.msra.mxu0 %v5501
    %5708 = vmatpush.msra.mxu0 %v5499
    %5709 = vmatpush.msra.mxu0 %v5497
    %5710 = vmatpush.msra.mxu0 %v5495
    %5711 = vmatpush.msra.mxu0 %v5493
    %5712 = vmatpush.msra.mxu0 %v5491
    %5713 = vmatpush.msra.mxu0 %v5489
    %5714 = vmatpush.msra.mxu0 %v5487
    %5715 = vmatpush.msra.mxu0 %v5485
    %5716 = vmatmul.f32.gmra.mxu0 %v5653
    %v5717 = vpop.f32.mrf.mxu0
    %v5718 = vadd.f32 0.0, %v5717
    %5719 = vdwg.mxu0
    %5720 = vmatpush.msra.mxu0 %v5547
    %5721 = vmatpush.msra.mxu0 %v5545
    %5722 = vmatpush.msra.mxu0 %v5543
    %5723 = vmatpush.msra.mxu0 %v5541
    %5724 = vmatpush.msra.mxu0 %v5539
    %5725 = vmatpush.msra.mxu0 %v5537
    %5726 = vmatpush.msra.mxu0 %v5535
    %5727 = vmatpush.msra.mxu0 %v5533
    %5728 = vmatpush.msra.mxu0 %v5531
    %5729 = vmatpush.msra.mxu0 %v5529
    %5730 = vmatpush.msra.mxu0 %v5527
    %5731 = vmatpush.msra.mxu0 %v5525
    %5732 = vmatpush.msra.mxu0 %v5523
    %5733 = vmatpush.msra.mxu0 %v5521
    %5734 = vmatpush.msra.mxu0 %v5519
    %5735 = vmatpush.msra.mxu0 %v5517
    %5736 = vmatmul.f32.gmra.mxu0 %v5659
    %v5737 = vpop.f32.mrf.mxu0
    %v5738 = vadd.f32 %v5718, %v5737
    %5739 = vdwg.mxu0
    %v5740 = vmul.f32 %v5698, 0.03125
    %v5741 = vmul.f32 %v5738, 0.03125
    %v5742 = vld [vmem:[#allocation15] ss:$2 sm:$0x3]
    %s5743 = scalar_lea.vmem [#allocation15], 1
    %v5744 = vld [vmem:[%s5743] ss:$2 sm:$0x3]
    %v5745 = vadd.f32 %v5740, 1e-05
    %v5746 = vadd.f32 %v5741, 1e-05
    %v5747 = vrsqrt.pop %v5745
    %v5748 = vmul.f32 %v5747, %v5745
    %v5749 = vmul.f32 %v5748, %v5747
    %v5750 = vmul.f32 0.5, %v5749
    %v5751 = vsub.f32 1.5, %v5750
    %v5752 = vmul.f32 %v5747, %v5751
    %vm5753 = vweird.f32 %v5745
    %vm5754 = vweird.f32 %v5747
    %vm5755 = vmor %vm5753, %vm5754
    %v5756 = vsel %vm5755, %v5747, %v5752
    %v5757 = vrsqrt.pop %v5746
    %v5758 = vmul.f32 %v5757, %v5746
    %v5759 = vmul.f32 %v5758, %v5757
    %v5760 = vmul.f32 0.5, %v5759
    %v5761 = vsub.f32 1.5, %v5760
    %v5762 = vmul.f32 %v5757, %v5761
    %vm5763 = vweird.f32 %v5746
    %vm5764 = vweird.f32 %v5757
    %vm5765 = vmor %vm5763, %vm5764
    %v5766 = vsel %vm5765, %v5757, %v5762
    %v5769 = vrot.slane %v5766, 7
    %v5770 = vsel %vm3161, %v5756, %v5769
    %v5772 = vmul.f32 %v5742, %v5770
    %v5774 = vperm.slane %v5772, 0
    %v5775 = vperm.slane %v5772, 1
    %v5778 = vmul.f32 %v5644, %v5774
    %v5779 = vmul.f32 %v5645, %v5775
    %v5781 = vperm.slane %v5744, 0
    %v5782 = vperm.slane %v5744, 1
    %v5785 = vadd.f32 %v5778, %v5781
    %v5786 = vadd.f32 %v5779, %v5782
    %vm5787 = vcmp.ge.f32.partialorder %v5785, 0.0
    %vm5788 = vcmp.ge.f32.partialorder %v5786, 0.0
    %v5789 = vmul.f32 %v5785, 0.2
    %v5790 = vmul.f32 %v5786, 0.2
    %v5791 = vsel %vm5787, %v5785, %v5789
    %v5792 = vsel %vm5788, %v5786, %v5790
    %v5793 = vld [vmem:[#allocation16] sm:$0xff]
    %v5794 = vld [vmem:[#allocation16 + $0x8] sm:$0xff]
    %v5795 = vmul.f32 %v5791, %v5793
    %v5796 = vmul.f32 %v5792, %v5794
    %v5797 = vmul.u32 %v2654, 4
    %vm5798 = vcmp.ge.s32.totalorder %v2687, %v5797
    %v5799 = vadd.s32 %v2654, 1
    %v5800 = vmul.u32 %v5799, 4
    %vm5801 = vcmp.lt.s32.totalorder %v2687, %v5800
    %vm5802 = vmand %vm5798, %vm5801
    %v5803 = vsel %vm5802, 1, 0
    %v5804 = vcvt.s32.f32 %v5803
    %vm5805 = vcmask 64512
    %v5807 = vsel %vm5805, %v5804, 0
    %5809 = vmatpush.msra.mxu0 0.0
    %5810 = vmatpush.msra.mxu0 0.0
    %5811 = vmatpush.msra.mxu0 0.0
    %5812 = vmatpush.msra.mxu0 0.0
    %5813 = vmatpush.msra.mxu0 0.0
    %5814 = vmatpush.msra.mxu0 0.0
    %5815 = vmatpush.msra.mxu0 0.0
    %5816 = vmatpush.msra.mxu0 0.0
    %5817 = vmatpush.msra.mxu0 0.0
    %5818 = vmatpush.msra.mxu0 0.0
    %5819 = vmatpush.msra.mxu0 0.0
    %5820 = vmatpush.msra.mxu0 0.0
    %5821 = vmatpush.msra.mxu0 0.0
    %5822 = vmatpush.msra.mxu0 0.0
    %5823 = vmatpush.msra.mxu0 0.0
    %5824 = vmatpush.msra.mxu0 %v5795
    %5825 = vmatmul.f32.gmra.mxu0 %v5807
    %v5826 = vpop.f32.mrf.mxu0
    %v5827 = vadd.f32 0.0, %v5826
    %5828 = vdwg.mxu0
    %5829 = vmatpush.msra.mxu0 0.0
    %5830 = vmatpush.msra.mxu0 0.0
    %5831 = vmatpush.msra.mxu0 0.0
    %5832 = vmatpush.msra.mxu0 0.0
    %5833 = vmatpush.msra.mxu0 0.0
    %5834 = vmatpush.msra.mxu0 0.0
    %5835 = vmatpush.msra.mxu0 0.0
    %5836 = vmatpush.msra.mxu0 0.0
    %5837 = vmatpush.msra.mxu0 0.0
    %5838 = vmatpush.msra.mxu0 0.0
    %5839 = vmatpush.msra.mxu0 0.0
    %5840 = vmatpush.msra.mxu0 0.0
    %5841 = vmatpush.msra.mxu0 0.0
    %5842 = vmatpush.msra.mxu0 0.0
    %5843 = vmatpush.msra.mxu0 0.0
    %5844 = vmatpush.msra.mxu0 %v5796
    %5845 = vmatmul.f32.gmra.mxu0 %v5807
    %v5846 = vpop.f32.mrf.mxu0
    %v5847 = vadd.f32 0.0, %v5846
    %5848 = vdwg.mxu0
    %vm5849 = vcmask 1041408
    %v5850 = vsel %vm5849, %v5827, 0.0
    %v5851 = vsel %vm5849, %v5847, 0.0
    %v5852 = vadd.f32 %v5850, %v5851
    %5853 = vadd.xlane.f32.xlu0 %v5852
    %v5854 = vpop.xlane.xlu0 %5853
    %v5855 = vsub.f32 0.0, %v5854
    %v5856 = vmul.f32 %v5855, 1.442695
    %v5857 = vpow.pop %v5856
    %v5858 = vadd.f32 %v5857, 1.0
    %v5859 = vrcp.pop %v5858
    %v5860 = vmul.f32 %v5858, %v5859
    %v5861 = vsub.f32 1.0, %v5860
    %v5862 = vmul.f32 %v5859, %v5861
    %v5863 = vadd.f32 %v5859, %v5862
    %vm5864 = vweird.f32 %v5858
    %vm5865 = vweird.f32 %v5859
    %vm5866 = vmor %vm5864, %vm5865
    %v5867 = vsel %vm5866, %v5859, %v5863
    %v5868 = vand.u32 2147483647, %v5858
    %vm5869 = vcmp.eq.f32.partialorder %v5868, 8.507059e+37
    %v5870 = vand.u32 %v5858, 2147483648
    %v5871 = vor.u32 1.1754944e-38, %v5870
    %v5872 = vsel %vm5869, %v5871, %v5867
    %v5873 = vmul.f32 1.0, %v5872
    %vm5874 = vcmask 1024
    %5875 = vst.msk [vmem:[%s13] sm:$0x3] %vm5874, %v5873
    // Predicated region
    $region94: #{forward.1} parent=1 // pred_check
      _
    $region95: #{forward.1} parent=1 // pred_check_branch
      %5877 = sbr.rel (0) target = $region97
    $region96: #{forward.1} parent=1 // pred_region
      _
    $region97: #{forward.1} parent=1 // pred_fallthru
      _
    // Predicated region
    $region98: #{forward.1} parent=1 // pred_check
      _
    $region99: #{forward.1} parent=1 // pred_check_branch
      %5879 = sbr.rel (0) target = $region101
    $region100: #{forward.1} parent=1 // pred_region
      _
    $region101: #{forward.1} parent=1 // pred_fallthru
      _
    %5880 = vsyncpa [#allocation3], 1
    %5881 = vsyncpa [#allocation5], 1
    %5882 = vsyncpa [#allocation8], 1
    %5883 = vsyncpa [#allocation11], 1
    %5884 = vsyncpa [#allocation14], 1
    %5885 = vsyncpa [#allocation17], 1

</llo_original>
